<compile_context>
chip_gen: v5e
topology: v5e:2x2
jax: 0.10.0
libtpu: 0.0.40
codegen_flags: <defaults>
</compile_context>

<pallas_src>
import functools

import jax
import jax.numpy as jnp
from jax.experimental import pallas as pl
from jax.experimental.pallas import tpu as pltpu


def convlstm_cell_kernel(zp_ref, c_ref, w_ref, out_ref, patch_ref,
                         *, H, W, K, Cp, Ch):
    """One batch element per grid step.

    zp_ref  : (1, H+2p, W+2p, Cp)  bf16 zero-padded [x | h] (channel-concat)
    c_ref   : (1, H*W, Ch)         f32 cell state
    w_ref   : (K*K*Cp, 4*Ch)       bf16 fused conv weights (im2col row order)
    out_ref : (1, H*W, 2*Ch)       f32 [h_new | c_new] stacked on the lane axis
    patch_ref: (H*W, K*K*Cp)       bf16 VMEM scratch (im2col patch matrix)
    """
    zp = zp_ref[0]  # (H+2p, W+2p, Cp) bf16

    # --- im2col: one strided copy per conv tap into the patch matrix ---
    for ky in range(K):
        for kx in range(K):
            tap = ky * K + kx
            win = zp[ky:ky + H, kx:kx + W, :].reshape(H * W, Cp)
            patch_ref[:, tap * Cp:(tap + 1) * Cp] = win

    # --- single fused conv_x + conv_h matmul, f32 accumulation on the MXU ---
    acc = jnp.dot(patch_ref[...], w_ref[...],
                  preferred_element_type=jnp.float32)        # (H*W, 4*Ch) f32

    # --- LSTM gate math in f32; channel order along lanes is [i | f | g | o] ---
    i_t = jax.nn.sigmoid(acc[:, 0 * Ch:1 * Ch])
    f_t = jax.nn.sigmoid(acc[:, 1 * Ch:2 * Ch])
    g_t = jnp.tanh(acc[:, 2 * Ch:3 * Ch])
    o_t = jax.nn.sigmoid(acc[:, 3 * Ch:4 * Ch])

    c_prev = c_ref[0]                                        # (H*W, Ch) f32
    c_new = f_t * c_prev + i_t * g_t
    h_new = o_t * g_t  # matches the PyTorch reference exactly (not o*tanh(c))

    out_ref[0] = jnp.concatenate([h_new, c_new], axis=-1).astype(out_ref.dtype)


def conv_lstm_cell_pallas(x, h, c, w_x, w_h, *, filter_size):
    """NCHW in / NCHW out, same convention as the PyTorch module.

    x:   (B, Cin, H, W)
    h,c: (B, Ch,  H, W)
    w_x: (4*Ch, Cin, K, K)   (PyTorch OIHW conv weight, no bias)
    w_h: (4*Ch, Ch,  K, K)
    """
    B, Cin, H, W = x.shape
    Ch = h.shape[1]
    K = filter_size
    p = K // 2
    Cp = Cin + Ch
    Hp, Wp = H + 2 * p, W + 2 * p

    # ---- glue (layout only): NCHW -> NHWC, fuse x/h on channels, pad, bf16 ----
    x_nhwc = jnp.transpose(x, (0, 2, 3, 1))
    h_nhwc = jnp.transpose(h, (0, 2, 3, 1))
    z = jnp.concatenate([x_nhwc, h_nhwc], axis=-1).astype(jnp.bfloat16)
    zp = jnp.pad(z, ((0, 0), (p, p), (p, p), (0, 0)))

    c_in = (jnp.transpose(c, (0, 2, 3, 1))
               .reshape(B, H * W, Ch)
               .astype(jnp.float32))

    # Fused conv weights: OIHW -> HWIO, concat input channels (x first, h
    # second, matching zp's channel order), flatten to the im2col 2D layout.
    wx = jnp.transpose(w_x, (2, 3, 1, 0))                    # (K, K, Cin, 4*Ch)
    wh = jnp.transpose(w_h, (2, 3, 1, 0))                    # (K, K, Ch,  4*Ch)
    w2d = (jnp.concatenate([wx, wh], axis=2)                 # (K, K, Cp, 4*Ch)
              .reshape(K * K * Cp, 4 * Ch)
              .astype(jnp.bfloat16))

    kernel = functools.partial(convlstm_cell_kernel,
                               H=H, W=W, K=K, Cp=Cp, Ch=Ch)

    out = pl.pallas_call(
        kernel,
        out_shape=jax.ShapeDtypeStruct((B, H * W, 2 * Ch), jnp.float32),
        grid_spec=pltpu.PrefetchScalarGridSpec(
            num_scalar_prefetch=0,
            grid=(B,),
            in_specs=[
                pl.BlockSpec((1, Hp, Wp, Cp), lambda b: (b, 0, 0, 0)),
                pl.BlockSpec((1, H * W, Ch), lambda b: (b, 0, 0)),
                pl.BlockSpec((K * K * Cp, 4 * Ch), lambda b: (0, 0)),
            ],
            out_specs=pl.BlockSpec((1, H * W, 2 * Ch), lambda b: (b, 0, 0)),
            scratch_shapes=[pltpu.VMEM((H * W, K * K * Cp), jnp.bfloat16)],
        ),
        compiler_params=pltpu.CompilerParams(
            dimension_semantics=("parallel",),
            vmem_limit_bytes=32 * 1024 * 1024),
    )(zp, c_in, w2d)

    # ---- glue: split lane-stacked [h | c] output and go back to NCHW ----
    hc = out.reshape(B, H, W, 2 * Ch)
    h_new = jnp.transpose(hc[..., :Ch], (0, 3, 1, 2)).astype(x.dtype)
    c_new = jnp.transpose(hc[..., Ch:], (0, 3, 1, 2)).astype(x.dtype)
    return h_new, c_new


def conv_lstm_cell_ref(x, h, c, w_x, w_h, *, filter_size):
    """Pure-JAX f32 reference matching the PyTorch forward, for verification."""
    p = filter_size // 2
    dn = jax.lax.conv_dimension_numbers(x.shape, w_x.shape,
                                        ('NCHW', 'OIHW', 'NCHW'))
    x_concat = jax.lax.conv_general_dilated(
        x, w_x, (1, 1), [(p, p), (p, p)], dimension_numbers=dn,
        precision=jax.lax.Precision.HIGHEST)
    h_concat = jax.lax.conv_general_dilated(
        h, w_h, (1, 1), [(p, p), (p, p)], dimension_numbers=dn,
        precision=jax.lax.Precision.HIGHEST)
    i_x, f_x, g_x, o_x = jnp.split(x_concat, 4, axis=1)
    i_h, f_h, g_h, o_h = jnp.split(h_concat, 4, axis=1)
    i_t = jax.nn.sigmoid(i_x + i_h)
    f_t = jax.nn.sigmoid(f_x + f_h)
    g_t = jnp.tanh(g_x + g_h)
    c_new = f_t * c + i_t * g_t
    o_t = jax.nn.sigmoid(o_x + o_h)
    h_new = o_t * g_t
    return h_new, c_new


if __name__ == "__main__":
    # Small shapes consistent with the module: ConvLSTMCell(4, 32, 16, 16, 5, 1)
    B, Cin, Ch, H, W, K = 2, 4, 32, 16, 16, 5

    key = jax.random.PRNGKey(0)
    kx_, kh_, kwx, kwh, kc = jax.random.split(key, 5)

    x = jax.random.normal(kx_, (B, Cin, H, W), jnp.float32)
    h = jax.random.normal(kh_, (B, Ch, H, W), jnp.float32)
    c = jax.random.normal(kc, (B, Ch, H, W), jnp.float32)

    # Deterministic synthetic conv weights (PyTorch OIHW layout, no bias),
    # scaled ~1/sqrt(fan_in) like the default init.
    w_x = jax.random.normal(kwx, (4 * Ch, Cin, K, K), jnp.float32) / (Cin * K * K) ** 0.5
    w_h = jax.random.normal(kwh, (4 * Ch, Ch, K, K), jnp.float32) / (Ch * K * K) ** 0.5

    h_new, c_new = conv_lstm_cell_pallas(x, h, c, w_x, w_h, filter_size=K)
    jax.block_until_ready((h_new, c_new))

    h_ref, c_ref = conv_lstm_cell_ref(x, h, c, w_x, w_h, filter_size=K)
    assert h_new.shape == (B, Ch, H, W) and c_new.shape == (B, Ch, H, W)
    # Kernel feeds the MXU bf16 inputs (f32 accumulation); tolerance vs. the
    # f32 reference is relaxed accordingly (~2^-9 relative input rounding).
    assert bool(jnp.allclose(h_new, h_ref, atol=2e-2, rtol=2e-2))
    assert bool(jnp.allclose(c_new, c_ref, atol=2e-2, rtol=2e-2))

    print("KERNEL_OK")
</pallas_src>

<mosaic_0001>
module attributes {stable_mosaic.version = 11 : i64} {
  func.func @convlstm_cell_kernel(%arg0: i32, %arg1: memref<1x20x20x36xbf16, #tpu.memory_space<vmem>>, %arg2: memref<1x256x32xf32, #tpu.memory_space<vmem>>, %arg3: memref<900x128xbf16, #tpu.memory_space<vmem>>, %arg4: memref<1x256x64xf32, #tpu.memory_space<vmem>>, %arg5: memref<256x900xbf16, #tpu.memory_space<vmem>>) attributes {dimension_semantics = [#tpu.dimension_semantics<parallel>], iteration_bounds = array<i64: 2>, scalar_prefetch = 0 : i64, scratch_operands = 1 : i64, tpu.core_type = #tpu.core_type<tc>, window_params = [{transform_indices = @transform_0, window_bounds = array<i64: 1, 20, 20, 36>}, {transform_indices = @transform_1, window_bounds = array<i64: 1, 256, 32>}, {pipeline_mode = #tpu.pipeline_mode<synchronous>, transform_indices = @transform_2, window_bounds = array<i64: 900, 128>}, {transform_indices = @transform_3, window_bounds = array<i64: 1, 256, 64>}]} {
    %c0 = arith.constant 0 : index
    %c0_0 = arith.constant 0 : index
    %c0_1 = arith.constant 0 : index
    %c0_2 = arith.constant 0 : index
    %0 = vector.load %arg1[%c0, %c0_0, %c0_1, %c0_2] : memref<1x20x20x36xbf16, #tpu.memory_space<vmem>>, vector<1x20x20x36xbf16>
    %1 = vector.shape_cast %0 : vector<1x20x20x36xbf16> to vector<20x20x36xbf16>
    %2 = vector.extract_strided_slice %1 {offsets = [0, 0, 0], sizes = [16, 16, 36], strides = [1, 1, 1]} : vector<20x20x36xbf16> to vector<16x16x36xbf16>
    %3 = vector.shape_cast %2 : vector<16x16x36xbf16> to vector<256x36xbf16>
    %c0_3 = arith.constant 0 : index
    %c0_4 = arith.constant 0 : index
    %4 = vector.load %arg5[%c0_3, %c0_4] : memref<256x900xbf16, #tpu.memory_space<vmem>>, vector<256x36xbf16>
    tpu.vector_store %arg5[%c0_3, %c0_4], %3 {strides = array<i32>} : memref<256x900xbf16, #tpu.memory_space<vmem>>, vector<256x36xbf16>,
    %5 = vector.extract_strided_slice %1 {offsets = [0, 1, 0], sizes = [16, 16, 36], strides = [1, 1, 1]} : vector<20x20x36xbf16> to vector<16x16x36xbf16>
    %6 = vector.shape_cast %5 : vector<16x16x36xbf16> to vector<256x36xbf16>
    %c0_5 = arith.constant 0 : index
    %c36 = arith.constant 36 : index
    %7 = vector.load %arg5[%c0_5, %c36] : memref<256x900xbf16, #tpu.memory_space<vmem>>, vector<256x36xbf16>
    tpu.vector_store %arg5[%c0_5, %c36], %6 {strides = array<i32>} : memref<256x900xbf16, #tpu.memory_space<vmem>>, vector<256x36xbf16>,
    %8 = vector.extract_strided_slice %1 {offsets = [0, 2, 0], sizes = [16, 16, 36], strides = [1, 1, 1]} : vector<20x20x36xbf16> to vector<16x16x36xbf16>
    %9 = vector.shape_cast %8 : vector<16x16x36xbf16> to vector<256x36xbf16>
    %c0_6 = arith.constant 0 : index
    %c72 = arith.constant 72 : index
    %10 = vector.load %arg5[%c0_6, %c72] : memref<256x900xbf16, #tpu.memory_space<vmem>>, vector<256x36xbf16>
    tpu.vector_store %arg5[%c0_6, %c72], %9 {strides = array<i32>} : memref<256x900xbf16, #tpu.memory_space<vmem>>, vector<256x36xbf16>,
    %11 = vector.extract_strided_slice %1 {offsets = [0, 3, 0], sizes = [16, 16, 36], strides = [1, 1, 1]} : vector<20x20x36xbf16> to vector<16x16x36xbf16>
    %12 = vector.shape_cast %11 : vector<16x16x36xbf16> to vector<256x36xbf16>
    %c0_7 = arith.constant 0 : index
    %c108 = arith.constant 108 : index
    %13 = vector.load %arg5[%c0_7, %c108] : memref<256x900xbf16, #tpu.memory_space<vmem>>, vector<256x36xbf16>
    tpu.vector_store %arg5[%c0_7, %c108], %12 {strides = array<i32>} : memref<256x900xbf16, #tpu.memory_space<vmem>>, vector<256x36xbf16>,
    %14 = vector.extract_strided_slice %1 {offsets = [0, 4, 0], sizes = [16, 16, 36], strides = [1, 1, 1]} : vector<20x20x36xbf16> to vector<16x16x36xbf16>
    %15 = vector.shape_cast %14 : vector<16x16x36xbf16> to vector<256x36xbf16>
    %c0_8 = arith.constant 0 : index
    %c144 = arith.constant 144 : index
    %16 = vector.load %arg5[%c0_8, %c144] : memref<256x900xbf16, #tpu.memory_space<vmem>>, vector<256x36xbf16>
    tpu.vector_store %arg5[%c0_8, %c144], %15 {strides = array<i32>} : memref<256x900xbf16, #tpu.memory_space<vmem>>, vector<256x36xbf16>,
    %17 = vector.extract_strided_slice %1 {offsets = [1, 0, 0], sizes = [16, 16, 36], strides = [1, 1, 1]} : vector<20x20x36xbf16> to vector<16x16x36xbf16>
    %18 = vector.shape_cast %17 : vector<16x16x36xbf16> to vector<256x36xbf16>
    %c0_9 = arith.constant 0 : index
    %c180 = arith.constant 180 : index
    %19 = vector.load %arg5[%c0_9, %c180] : memref<256x900xbf16, #tpu.memory_space<vmem>>, vector<256x36xbf16>
    tpu.vector_store %arg5[%c0_9, %c180], %18 {strides = array<i32>} : memref<256x900xbf16, #tpu.memory_space<vmem>>, vector<256x36xbf16>,
    %20 = vector.extract_strided_slice %1 {offsets = [1, 1, 0], sizes = [16, 16, 36], strides = [1, 1, 1]} : vector<20x20x36xbf16> to vector<16x16x36xbf16>
    %21 = vector.shape_cast %20 : vector<16x16x36xbf16> to vector<256x36xbf16>
    %c0_10 = arith.constant 0 : index
    %c216 = arith.constant 216 : index
    %22 = vector.load %arg5[%c0_10, %c216] : memref<256x900xbf16, #tpu.memory_space<vmem>>, vector<256x36xbf16>
    tpu.vector_store %arg5[%c0_10, %c216], %21 {strides = array<i32>} : memref<256x900xbf16, #tpu.memory_space<vmem>>, vector<256x36xbf16>,
    %23 = vector.extract_strided_slice %1 {offsets = [1, 2, 0], sizes = [16, 16, 36], strides = [1, 1, 1]} : vector<20x20x36xbf16> to vector<16x16x36xbf16>
    %24 = vector.shape_cast %23 : vector<16x16x36xbf16> to vector<256x36xbf16>
    %c0_11 = arith.constant 0 : index
    %c252 = arith.constant 252 : index
    %25 = vector.load %arg5[%c0_11, %c252] : memref<256x900xbf16, #tpu.memory_space<vmem>>, vector<256x36xbf16>
    tpu.vector_store %arg5[%c0_11, %c252], %24 {strides = array<i32>} : memref<256x900xbf16, #tpu.memory_space<vmem>>, vector<256x36xbf16>,
    %26 = vector.extract_strided_slice %1 {offsets = [1, 3, 0], sizes = [16, 16, 36], strides = [1, 1, 1]} : vector<20x20x36xbf16> to vector<16x16x36xbf16>
    %27 = vector.shape_cast %26 : vector<16x16x36xbf16> to vector<256x36xbf16>
    %c0_12 = arith.constant 0 : index
    %c288 = arith.constant 288 : index
    %28 = vector.load %arg5[%c0_12, %c288] : memref<256x900xbf16, #tpu.memory_space<vmem>>, vector<256x36xbf16>
    tpu.vector_store %arg5[%c0_12, %c288], %27 {strides = array<i32>} : memref<256x900xbf16, #tpu.memory_space<vmem>>, vector<256x36xbf16>,
    %29 = vector.extract_strided_slice %1 {offsets = [1, 4, 0], sizes = [16, 16, 36], strides = [1, 1, 1]} : vector<20x20x36xbf16> to vector<16x16x36xbf16>
    %30 = vector.shape_cast %29 : vector<16x16x36xbf16> to vector<256x36xbf16>
    %c0_13 = arith.constant 0 : index
    %c324 = arith.constant 324 : index
    %31 = vector.load %arg5[%c0_13, %c324] : memref<256x900xbf16, #tpu.memory_space<vmem>>, vector<256x36xbf16>
    tpu.vector_store %arg5[%c0_13, %c324], %30 {strides = array<i32>} : memref<256x900xbf16, #tpu.memory_space<vmem>>, vector<256x36xbf16>,
    %32 = vector.extract_strided_slice %1 {offsets = [2, 0, 0], sizes = [16, 16, 36], strides = [1, 1, 1]} : vector<20x20x36xbf16> to vector<16x16x36xbf16>
    %33 = vector.shape_cast %32 : vector<16x16x36xbf16> to vector<256x36xbf16>
    %c0_14 = arith.constant 0 : index
    %c360 = arith.constant 360 : index
    %34 = vector.load %arg5[%c0_14, %c360] : memref<256x900xbf16, #tpu.memory_space<vmem>>, vector<256x36xbf16>
    tpu.vector_store %arg5[%c0_14, %c360], %33 {strides = array<i32>} : memref<256x900xbf16, #tpu.memory_space<vmem>>, vector<256x36xbf16>,
    %35 = vector.extract_strided_slice %1 {offsets = [2, 1, 0], sizes = [16, 16, 36], strides = [1, 1, 1]} : vector<20x20x36xbf16> to vector<16x16x36xbf16>
    %36 = vector.shape_cast %35 : vector<16x16x36xbf16> to vector<256x36xbf16>
    %c0_15 = arith.constant 0 : index
    %c396 = arith.constant 396 : index
    %37 = vector.load %arg5[%c0_15, %c396] : memref<256x900xbf16, #tpu.memory_space<vmem>>, vector<256x36xbf16>
    tpu.vector_store %arg5[%c0_15, %c396], %36 {strides = array<i32>} : memref<256x900xbf16, #tpu.memory_space<vmem>>, vector<256x36xbf16>,
    %38 = vector.extract_strided_slice %1 {offsets = [2, 2, 0], sizes = [16, 16, 36], strides = [1, 1, 1]} : vector<20x20x36xbf16> to vector<16x16x36xbf16>
    %39 = vector.shape_cast %38 : vector<16x16x36xbf16> to vector<256x36xbf16>
    %c0_16 = arith.constant 0 : index
    %c432 = arith.constant 432 : index
    %40 = vector.load %arg5[%c0_16, %c432] : memref<256x900xbf16, #tpu.memory_space<vmem>>, vector<256x36xbf16>
    tpu.vector_store %arg5[%c0_16, %c432], %39 {strides = array<i32>} : memref<256x900xbf16, #tpu.memory_space<vmem>>, vector<256x36xbf16>,
    %41 = vector.extract_strided_slice %1 {offsets = [2, 3, 0], sizes = [16, 16, 36], strides = [1, 1, 1]} : vector<20x20x36xbf16> to vector<16x16x36xbf16>
    %42 = vector.shape_cast %41 : vector<16x16x36xbf16> to vector<256x36xbf16>
    %c0_17 = arith.constant 0 : index
    %c468 = arith.constant 468 : index
    %43 = vector.load %arg5[%c0_17, %c468] : memref<256x900xbf16, #tpu.memory_space<vmem>>, vector<256x36xbf16>
    tpu.vector_store %arg5[%c0_17, %c468], %42 {strides = array<i32>} : memref<256x900xbf16, #tpu.memory_space<vmem>>, vector<256x36xbf16>,
    %44 = vector.extract_strided_slice %1 {offsets = [2, 4, 0], sizes = [16, 16, 36], strides = [1, 1, 1]} : vector<20x20x36xbf16> to vector<16x16x36xbf16>
    %45 = vector.shape_cast %44 : vector<16x16x36xbf16> to vector<256x36xbf16>
    %c0_18 = arith.constant 0 : index
    %c504 = arith.constant 504 : index
    %46 = vector.load %arg5[%c0_18, %c504] : memref<256x900xbf16, #tpu.memory_space<vmem>>, vector<256x36xbf16>
    tpu.vector_store %arg5[%c0_18, %c504], %45 {strides = array<i32>} : memref<256x900xbf16, #tpu.memory_space<vmem>>, vector<256x36xbf16>,
    %47 = vector.extract_strided_slice %1 {offsets = [3, 0, 0], sizes = [16, 16, 36], strides = [1, 1, 1]} : vector<20x20x36xbf16> to vector<16x16x36xbf16>
    %48 = vector.shape_cast %47 : vector<16x16x36xbf16> to vector<256x36xbf16>
    %c0_19 = arith.constant 0 : index
    %c540 = arith.constant 540 : index
    %49 = vector.load %arg5[%c0_19, %c540] : memref<256x900xbf16, #tpu.memory_space<vmem>>, vector<256x36xbf16>
    tpu.vector_store %arg5[%c0_19, %c540], %48 {strides = array<i32>} : memref<256x900xbf16, #tpu.memory_space<vmem>>, vector<256x36xbf16>,
    %50 = vector.extract_strided_slice %1 {offsets = [3, 1, 0], sizes = [16, 16, 36], strides = [1, 1, 1]} : vector<20x20x36xbf16> to vector<16x16x36xbf16>
    %51 = vector.shape_cast %50 : vector<16x16x36xbf16> to vector<256x36xbf16>
    %c0_20 = arith.constant 0 : index
    %c576 = arith.constant 576 : index
    %52 = vector.load %arg5[%c0_20, %c576] : memref<256x900xbf16, #tpu.memory_space<vmem>>, vector<256x36xbf16>
    tpu.vector_store %arg5[%c0_20, %c576], %51 {strides = array<i32>} : memref<256x900xbf16, #tpu.memory_space<vmem>>, vector<256x36xbf16>,
    %53 = vector.extract_strided_slice %1 {offsets = [3, 2, 0], sizes = [16, 16, 36], strides = [1, 1, 1]} : vector<20x20x36xbf16> to vector<16x16x36xbf16>
    %54 = vector.shape_cast %53 : vector<16x16x36xbf16> to vector<256x36xbf16>
    %c0_21 = arith.constant 0 : index
    %c612 = arith.constant 612 : index
    %55 = vector.load %arg5[%c0_21, %c612] : memref<256x900xbf16, #tpu.memory_space<vmem>>, vector<256x36xbf16>
    tpu.vector_store %arg5[%c0_21, %c612], %54 {strides = array<i32>} : memref<256x900xbf16, #tpu.memory_space<vmem>>, vector<256x36xbf16>,
    %56 = vector.extract_strided_slice %1 {offsets = [3, 3, 0], sizes = [16, 16, 36], strides = [1, 1, 1]} : vector<20x20x36xbf16> to vector<16x16x36xbf16>
    %57 = vector.shape_cast %56 : vector<16x16x36xbf16> to vector<256x36xbf16>
    %c0_22 = arith.constant 0 : index
    %c648 = arith.constant 648 : index
    %58 = vector.load %arg5[%c0_22, %c648] : memref<256x900xbf16, #tpu.memory_space<vmem>>, vector<256x36xbf16>
    tpu.vector_store %arg5[%c0_22, %c648], %57 {strides = array<i32>} : memref<256x900xbf16, #tpu.memory_space<vmem>>, vector<256x36xbf16>,
    %59 = vector.extract_strided_slice %1 {offsets = [3, 4, 0], sizes = [16, 16, 36], strides = [1, 1, 1]} : vector<20x20x36xbf16> to vector<16x16x36xbf16>
    %60 = vector.shape_cast %59 : vector<16x16x36xbf16> to vector<256x36xbf16>
    %c0_23 = arith.constant 0 : index
    %c684 = arith.constant 684 : index
    %61 = vector.load %arg5[%c0_23, %c684] : memref<256x900xbf16, #tpu.memory_space<vmem>>, vector<256x36xbf16>
    tpu.vector_store %arg5[%c0_23, %c684], %60 {strides = array<i32>} : memref<256x900xbf16, #tpu.memory_space<vmem>>, vector<256x36xbf16>,
    %62 = vector.extract_strided_slice %1 {offsets = [4, 0, 0], sizes = [16, 16, 36], strides = [1, 1, 1]} : vector<20x20x36xbf16> to vector<16x16x36xbf16>
    %63 = vector.shape_cast %62 : vector<16x16x36xbf16> to vector<256x36xbf16>
    %c0_24 = arith.constant 0 : index
    %c720 = arith.constant 720 : index
    %64 = vector.load %arg5[%c0_24, %c720] : memref<256x900xbf16, #tpu.memory_space<vmem>>, vector<256x36xbf16>
    tpu.vector_store %arg5[%c0_24, %c720], %63 {strides = array<i32>} : memref<256x900xbf16, #tpu.memory_space<vmem>>, vector<256x36xbf16>,
    %65 = vector.extract_strided_slice %1 {offsets = [4, 1, 0], sizes = [16, 16, 36], strides = [1, 1, 1]} : vector<20x20x36xbf16> to vector<16x16x36xbf16>
    %66 = vector.shape_cast %65 : vector<16x16x36xbf16> to vector<256x36xbf16>
    %c0_25 = arith.constant 0 : index
    %c756 = arith.constant 756 : index
    %67 = vector.load %arg5[%c0_25, %c756] : memref<256x900xbf16, #tpu.memory_space<vmem>>, vector<256x36xbf16>
    tpu.vector_store %arg5[%c0_25, %c756], %66 {strides = array<i32>} : memref<256x900xbf16, #tpu.memory_space<vmem>>, vector<256x36xbf16>,
    %68 = vector.extract_strided_slice %1 {offsets = [4, 2, 0], sizes = [16, 16, 36], strides = [1, 1, 1]} : vector<20x20x36xbf16> to vector<16x16x36xbf16>
    %69 = vector.shape_cast %68 : vector<16x16x36xbf16> to vector<256x36xbf16>
    %c0_26 = arith.constant 0 : index
    %c792 = arith.constant 792 : index
    %70 = vector.load %arg5[%c0_26, %c792] : memref<256x900xbf16, #tpu.memory_space<vmem>>, vector<256x36xbf16>
    tpu.vector_store %arg5[%c0_26, %c792], %69 {strides = array<i32>} : memref<256x900xbf16, #tpu.memory_space<vmem>>, vector<256x36xbf16>,
    %71 = vector.extract_strided_slice %1 {offsets = [4, 3, 0], sizes = [16, 16, 36], strides = [1, 1, 1]} : vector<20x20x36xbf16> to vector<16x16x36xbf16>
    %72 = vector.shape_cast %71 : vector<16x16x36xbf16> to vector<256x36xbf16>
    %c0_27 = arith.constant 0 : index
    %c828 = arith.constant 828 : index
    %73 = vector.load %arg5[%c0_27, %c828] : memref<256x900xbf16, #tpu.memory_space<vmem>>, vector<256x36xbf16>
    tpu.vector_store %arg5[%c0_27, %c828], %72 {strides = array<i32>} : memref<256x900xbf16, #tpu.memory_space<vmem>>, vector<256x36xbf16>,
    %74 = vector.extract_strided_slice %1 {offsets = [4, 4, 0], sizes = [16, 16, 36], strides = [1, 1, 1]} : vector<20x20x36xbf16> to vector<16x16x36xbf16>
    %75 = vector.shape_cast %74 : vector<16x16x36xbf16> to vector<256x36xbf16>
    %c0_28 = arith.constant 0 : index
    %c864 = arith.constant 864 : index
    %76 = vector.load %arg5[%c0_28, %c864] : memref<256x900xbf16, #tpu.memory_space<vmem>>, vector<256x36xbf16>
    tpu.vector_store %arg5[%c0_28, %c864], %75 {strides = array<i32>} : memref<256x900xbf16, #tpu.memory_space<vmem>>, vector<256x36xbf16>,
    %c0_29 = arith.constant 0 : index
    %c0_30 = arith.constant 0 : index
    %77 = vector.load %arg5[%c0_29, %c0_30] : memref<256x900xbf16, #tpu.memory_space<vmem>>, vector<256x900xbf16>
    %c0_31 = arith.constant 0 : index
    %c0_32 = arith.constant 0 : index
    %78 = vector.load %arg3[%c0_31, %c0_32] : memref<900x128xbf16, #tpu.memory_space<vmem>>, vector<900x128xbf16>
    %cst = arith.constant dense<0.000000e+00> : vector<256x128xf32>
    %79 = tpu.matmul %77, %78, %cst {dimension_numbers = #tpu.dot_dimension_numbers<[1], [0], [0], [1], [0, 0, 1, 1], [], []>} : vector<256x900xbf16>, vector<900x128xbf16>, vector<256x128xf32> -> vector<256x128xf32>
    %80 = vector.extract_strided_slice %79 {offsets = [0, 0], sizes = [256, 32], strides = [1, 1]} : vector<256x128xf32> to vector<256x32xf32>
    %81 = arith.negf %80 : vector<256x32xf32>
    %82 = math.exp %81 : vector<256x32xf32>
    %cst_33 = arith.constant 1.000000e+00 : f32
    %83 = vector.broadcast %cst_33 : f32 to vector<256x32xf32>
    %84 = arith.addf %83, %82 : vector<256x32xf32>
    %85 = arith.divf %83, %84 : vector<256x32xf32>
    %86 = vector.extract_strided_slice %79 {offsets = [0, 32], sizes = [256, 32], strides = [1, 1]} : vector<256x128xf32> to vector<256x32xf32>
    %87 = arith.negf %86 : vector<256x32xf32>
    %88 = math.exp %87 : vector<256x32xf32>
    %cst_34 = arith.constant 1.000000e+00 : f32
    %89 = vector.broadcast %cst_34 : f32 to vector<256x32xf32>
    %90 = arith.addf %89, %88 : vector<256x32xf32>
    %91 = arith.divf %89, %90 : vector<256x32xf32>
    %92 = vector.extract_strided_slice %79 {offsets = [0, 64], sizes = [256, 32], strides = [1, 1]} : vector<256x128xf32> to vector<256x32xf32>
    %93 = math.tanh %92 : vector<256x32xf32>
    %94 = vector.extract_strided_slice %79 {offsets = [0, 96], sizes = [256, 32], strides = [1, 1]} : vector<256x128xf32> to vector<256x32xf32>
    %95 = arith.negf %94 : vector<256x32xf32>
    %96 = math.exp %95 : vector<256x32xf32>
    %cst_35 = arith.constant 1.000000e+00 : f32
    %97 = vector.broadcast %cst_35 : f32 to vector<256x32xf32>
    %98 = arith.addf %97, %96 : vector<256x32xf32>
    %99 = arith.divf %97, %98 : vector<256x32xf32>
    %c0_36 = arith.constant 0 : index
    %c0_37 = arith.constant 0 : index
    %c0_38 = arith.constant 0 : index
    %100 = vector.load %arg2[%c0_36, %c0_37, %c0_38] : memref<1x256x32xf32, #tpu.memory_space<vmem>>, vector<1x256x32xf32>
    %101 = vector.shape_cast %100 : vector<1x256x32xf32> to vector<256x32xf32>
    %102 = arith.mulf %91, %101 : vector<256x32xf32>
    %103 = arith.mulf %85, %93 : vector<256x32xf32>
    %104 = arith.addf %102, %103 : vector<256x32xf32>
    %105 = arith.mulf %99, %93 : vector<256x32xf32>
    %106 = tpu.concatenate %105, %104 in 1 : vector<256x32xf32>, vector<256x32xf32> -> vector<256x64xf32>
    %c0_39 = arith.constant 0 : index
    %c0_40 = arith.constant 0 : index
    %c0_41 = arith.constant 0 : index
    %107 = vector.load %arg4[%c0_39, %c0_40, %c0_41] : memref<1x256x64xf32, #tpu.memory_space<vmem>>, vector<1x256x64xf32>
    %108 = vector.shape_cast %107 : vector<1x256x64xf32> to vector<256x64xf32>
    %109 = vector.shape_cast %106 : vector<256x64xf32> to vector<1x256x64xf32>
    tpu.vector_store %arg4[%c0_39, %c0_40, %c0_41], %109 {strides = array<i32>} : memref<1x256x64xf32, #tpu.memory_space<vmem>>, vector<1x256x64xf32>,
    return
  }
  func.func @transform_0(%arg0: i32) -> (i32, i32, i32, i32) {
    %c0_i32 = arith.constant 0 : i32
    %c0_i32_0 = arith.constant 0 : i32
    %c0_i32_1 = arith.constant 0 : i32
    %c0_i32_2 = arith.constant 0 : i32
    return %arg0, %c0_i32, %c0_i32_0, %c0_i32_1 : i32, i32, i32, i32
  }
  func.func @transform_1(%arg0: i32) -> (i32, i32, i32) {
    %c0_i32 = arith.constant 0 : i32
    %c0_i32_0 = arith.constant 0 : i32
    %c0_i32_1 = arith.constant 0 : i32
    return %arg0, %c0_i32, %c0_i32_0 : i32, i32, i32
  }
  func.func @transform_2(%arg0: i32) -> (i32, i32) {
    %c0_i32 = arith.constant 0 : i32
    %c0_i32_0 = arith.constant 0 : i32
    %c0_i32_1 = arith.constant 0 : i32
    return %c0_i32, %c0_i32_0 : i32, i32
  }
  func.func @transform_3(%arg0: i32) -> (i32, i32, i32) {
    %c0_i32 = arith.constant 0 : i32
    %c0_i32_0 = arith.constant 0 : i32
    %c0_i32_1 = arith.constant 0 : i32
    return %arg0, %c0_i32, %c0_i32_0 : i32, i32, i32
  }
}

</mosaic_0001>

<llo_original>
// kernel: tpu_custom_call.1
$region0: #{tpu_custom_call.1}
  #allocation0 [shape = 'u32[]', space=smem, size = 0x4, offset = 0x4, fixed_abs, tag = 'smem constant byte address 0x4 - core index']
  #allocation1 [shape = 'u32[72,128]{1,0:T(1,128)}', space=vmem, size = 0x9000, scoped, tag = 'internal scratch']
  #allocation2 [shape = 'bf16[256,900]{1,0:T(8,128)(2,1)}', space=vmem, size = 0x80000, scoped, tag = 'scratch operand']
  %s0 = inlined_call_operand.vmem [shape: bf16[2,20,20,36], index: 0, kind: input, shape index: {}]
  %s1 = inlined_call_operand.vmem [shape: f32[2,256,32], index: 1, kind: input, shape index: {}]
  %s2 = inlined_call_operand.vmem [shape: bf16[900,128], index: 2, kind: input, shape index: {}]
  %s3 = inlined_call_operand.vmem [shape: f32[2,256,64], index: 3, kind: output, shape index: {}]
  %s4 = sld [smem:[#allocation0]]
  $region45: #{tpu_custom_call.1} parent=0
    _
  %s6 = ssub.s32 1, %s4
  %s7 = scalar_select 0, %s6, %s4
  loop: start=0, step=1, limit=4
  $region2: #{tpu_custom_call.1} parent=0 // loop_pre_header
    _
  $region3: #{tpu_custom_call.1} parent=0 // loop_header
    %s9 = sphi 0, %s13
    %p10 = scmp.ge.s32.totalorder %s9, 4
    %s19 = sphi 0, %s21
    %s22 = sphi 0, %s19
    %s23 = sphi 0, %s22
    %s39 = sphi 0, %s23
    %s45 = sphi 0, %s47
    %s48 = sphi 0, %s45
    %s49 = sphi 0, %s48
    %s65 = sphi 0, %s49
    %s69 = sphi 0, %s69
    %s71 = sphi 0, %s69
    %s72 = sphi 0, %s71
    %s86 = sphi 0, %s72
    %s92 = sphi 0, %s94
    %s95 = sphi 0, %s92
    %s96 = sphi 0, %s95
    %s112 = sphi 0, %s96
  $region4: #{tpu_custom_call.1} parent=0 // loop_header_branch
    %12 = sbr.rel (%p10) target = $region8
  $region5: #{tpu_custom_call.1} parent=0 // loop_body
    %s14 = ssub.s32 %s9, 1
    %s15 = ssub.s32 %s9, 2
    %s16 = sadd.s32 %s9, 1
    %s17 = ssub.s32 %s9, %s16
    %p18 = scmp.eq.s32.totalorder %s17, 0
    %s20 = sadd.s32 %s19, 1
    %s21 = scalar_select %p18, %s19, %s20
    %p24 = pneg %p18
    %p25 = scmp.eq.s32.totalorder %s9, 1
    %p26 = por %p24, %p25
    %p27 = scmp.ne.s32.totalorder %s19, %s22
    %p28 = scmp.eq.s32.totalorder %s9, 0
    %p29 = por %p27, %p28
    %p30 = scmp.ne.s32.totalorder %s19, %s22
    %p31 = scmp.eq.s32.totalorder %s14, 1
    %p32 = por %p30, %p31
    %p33 = scmp.ne.s32.totalorder %s22, %s23
    %p34 = scmp.eq.s32.totalorder %s14, 0
    %p35 = por %p33, %p34
    %p36 = scmp.ne.s32.totalorder %s22, %s23
    %p37 = scmp.eq.s32.totalorder %s15, 1
    %p38 = por %p36, %p37
    %p40 = scmp.ne.s32.totalorder %s23, %s39
    %p41 = scmp.eq.s32.totalorder %s15, 0
    %p42 = por %p40, %p41
    %s43 = ssub.s32 %s9, %s16
    %p44 = scmp.eq.s32.totalorder %s43, 0
    %s46 = sadd.s32 %s45, 1
    %s47 = scalar_select %p44, %s45, %s46
    %p50 = pneg %p44
    %p51 = scmp.eq.s32.totalorder %s9, 1
    %p52 = por %p50, %p51
    %p53 = scmp.ne.s32.totalorder %s45, %s48
    %p54 = scmp.eq.s32.totalorder %s9, 0
    %p55 = por %p53, %p54
    %p56 = scmp.ne.s32.totalorder %s45, %s48
    %p57 = scmp.eq.s32.totalorder %s14, 1
    %p58 = por %p56, %p57
    %p59 = scmp.ne.s32.totalorder %s48, %s49
    %p60 = scmp.eq.s32.totalorder %s14, 0
    %p61 = por %p59, %p60
    %p62 = scmp.ne.s32.totalorder %s48, %s49
    %p63 = scmp.eq.s32.totalorder %s15, 1
    %p64 = por %p62, %p63
    %p66 = scmp.ne.s32.totalorder %s49, %s65
    %p67 = scmp.eq.s32.totalorder %s15, 0
    %p68 = por %p66, %p67
    %s70 = sadd.s32 %s69, 1
    %p73 = scmp.eq.s32.totalorder %s9, 1
    %p74 = scmp.ne.s32.totalorder %s69, %s71
    %p75 = scmp.eq.s32.totalorder %s9, 0
    %p76 = por %p74, %p75
    %p77 = scmp.ne.s32.totalorder %s69, %s71
    %p78 = scmp.eq.s32.totalorder %s14, 1
    %p79 = por %p77, %p78
    %p80 = scmp.ne.s32.totalorder %s71, %s72
    %p81 = scmp.eq.s32.totalorder %s14, 0
    %p82 = por %p80, %p81
    %p83 = scmp.ne.s32.totalorder %s71, %s72
    %p84 = scmp.eq.s32.totalorder %s15, 1
    %p85 = por %p83, %p84
    %p87 = scmp.ne.s32.totalorder %s72, %s86
    %p88 = scmp.eq.s32.totalorder %s15, 0
    %p89 = por %p87, %p88
    %s90 = ssub.s32 %s9, %s16
    %p91 = scmp.eq.s32.totalorder %s90, 0
    %s93 = sadd.s32 %s92, 1
    %s94 = scalar_select %p91, %s92, %s93
    %p97 = pneg %p91
    %p98 = scmp.eq.s32.totalorder %s9, 1
    %p99 = por %p97, %p98
    %p100 = scmp.ne.s32.totalorder %s92, %s95
    %p101 = scmp.eq.s32.totalorder %s9, 0
    %p102 = por %p100, %p101
    %p103 = scmp.ne.s32.totalorder %s92, %s95
    %p104 = scmp.eq.s32.totalorder %s14, 1
    %p105 = por %p103, %p104
    %p106 = scmp.ne.s32.totalorder %s95, %s96
    %p107 = scmp.eq.s32.totalorder %s14, 0
    %p108 = por %p106, %p107
    %p109 = scmp.ne.s32.totalorder %s95, %s96
    %p110 = scmp.eq.s32.totalorder %s15, 1
    %p111 = por %p109, %p110
    %p113 = scmp.ne.s32.totalorder %s96, %s112
    %p114 = scmp.eq.s32.totalorder %s15, 0
    %p115 = por %p113, %p114
    %p116 = scmp.le.s32.totalorder 1, %s9
    %p117 = scmp.lt.s32.totalorder %s9, 3
    %p118 = pnand %p116, %p117
    %p119 = pneg %p118
    // Predicated region
    $region9: #{tpu_custom_call.1} parent=5 // pred_check
      _
    $region10: #{tpu_custom_call.1} parent=5 // pred_check_branch
      %121 = sbr.rel (%p118) target = $region12
    $region11: #{tpu_custom_call.1} parent=5 // pred_region
      %s122 = ssub.s32 %s9, 1
      // Predicated region
      $region13: #{tpu_custom_call.1} parent=11 // pred_check
        %p123 = pneg %p82
      $region14: #{tpu_custom_call.1} parent=11 // pred_check_branch
        %125 = sbr.rel (%p123) target = $region16
      $region15: #{tpu_custom_call.1} parent=11 // pred_region
        _
      $region16: #{tpu_custom_call.1} parent=11 // pred_fallthru
        _
    $region12: #{tpu_custom_call.1} parent=5 // pred_fallthru
      _
    %p126 = scmp.lt.s32.totalorder %s9, 2
    // Predicated region
    $region17: #{tpu_custom_call.1} parent=5 // pred_check
      %p127 = pneg %p126
    $region18: #{tpu_custom_call.1} parent=5 // pred_check_branch
      %129 = sbr.rel (%p127) target = $region20
    $region19: #{tpu_custom_call.1} parent=5 // pred_region
      // Predicated region
      $region21: #{tpu_custom_call.1} parent=19 // pred_check
        %p130 = pneg %p29
      $region22: #{tpu_custom_call.1} parent=19 // pred_check_branch
        %132 = sbr.rel (%p130) target = $region24
      $region23: #{tpu_custom_call.1} parent=19 // pred_region
        %p133 = scmp.lt.s32.totalorder %s9, 1
        %s134 = scalar_select %p133, %s9, 1
        %s135 = smul.addr %s134, 60
        %s136 = smul.addr %s135, 4
        %s137 = scalar_lea.vmem %s0, %s136
      $region24: #{tpu_custom_call.1} parent=19 // pred_fallthru
        _
      // Predicated region
      $region25: #{tpu_custom_call.1} parent=19 // pred_check
        %p138 = pneg %p55
      $region26: #{tpu_custom_call.1} parent=19 // pred_check_branch
        %140 = sbr.rel (%p138) target = $region28
      $region27: #{tpu_custom_call.1} parent=19 // pred_region
        %p141 = scmp.lt.s32.totalorder %s9, 1
        %s142 = scalar_select %p141, %s9, 1
        %s143 = smul.addr %s142, 32
        %s144 = smul.addr %s143, 8
        %s145 = scalar_lea.vmem %s1, %s144
      $region28: #{tpu_custom_call.1} parent=19 // pred_fallthru
        _
    $region20: #{tpu_custom_call.1} parent=5 // pred_fallthru
      _
    %p146 = scmp.le.s32.totalorder 1, %s9
    %p147 = scmp.lt.s32.totalorder %s9, 3
    %p148 = pnand %p146, %p147
    %p149 = pneg %p148
    // Predicated region
    $region29: #{tpu_custom_call.1} parent=5 // pred_check
      _
    $region30: #{tpu_custom_call.1} parent=5 // pred_check_branch
      %151 = sbr.rel (%p148) target = $region32
    $region31: #{tpu_custom_call.1} parent=5 // pred_region
      %s152 = ssub.s32 %s9, 1
      %p153 = scmp.lt.s32.totalorder %s14, 1
      %s154 = scalar_select %p153, %s14, 1
      %s155 = smul.addr %s154, 60
      %s156 = smul.addr %s155, 4
      %s157 = scalar_lea.vmem %s0, %s156
      %p158 = pneg %p35
      %p159 = pneg %p32
      %p160 = scmp.lt.s32.totalorder %s14, 1
      %s161 = scalar_select %p160, %s14, 1
      %s162 = smul.addr %s161, 32
      %s163 = smul.addr %s162, 8
      %s164 = scalar_lea.vmem %s1, %s163
      %p165 = pneg %p61
      %p166 = pneg %p58
      %p167 = pneg %p82
      %p168 = pneg %p79
      %p169 = pneg %p108
      %p170 = pneg %p105
      %p171 = scmp.lt.s32.totalorder %s14, 1
      %s172 = scalar_select %p171, %s14, 1
      %s173 = smul.addr %s172, 32
      %s174 = smul.addr %s173, 8
      %s175 = scalar_lea.vmem %s3, %s174
      %p176 = scmp.lt.s32.totalorder %s14, 1
      %s177 = scalar_select %p176, %s14, 1
      %s178 = smul.addr %s177, 60
      %s179 = smul.addr %s178, 4
      %s180 = scalar_lea.vmem %s0, %s179
      %p181 = scmp.lt.s32.totalorder %s14, 1
      %s182 = scalar_select %p181, %s14, 1
      %s183 = smul.addr %s182, 32
      %s184 = smul.addr %s183, 8
      %s185 = scalar_lea.vmem %s1, %s184
      %p186 = scmp.lt.s32.totalorder %s14, 1
      %s187 = scalar_select %p186, %s14, 1
      %s188 = smul.addr %s187, 32
      %s189 = smul.addr %s188, 8
      %s190 = scalar_lea.vmem %s3, %s189
      %v192 = vld [vmem:[%s180] sm:$0xf]
      %v193 = vld [vmem:[%s180 + $0x4] sm:$0xf]
      %v194 = vld [vmem:[%s180 + $0x8] sm:$0x3]
      %v195 = vld [vmem:[%s180 + $0xc] sm:$0xf]
      %v196 = vld [vmem:[%s180 + $0x10] sm:$0xf]
      %v197 = vld [vmem:[%s180 + $0x14] sm:$0x3]
      %v198 = vld [vmem:[%s180 + $0x18] sm:$0xf]
      %v199 = vld [vmem:[%s180 + $0x1c] sm:$0xf]
      %v200 = vld [vmem:[%s180 + $0x20] sm:$0x3]
      %v201 = vld [vmem:[%s180 + $0x24] sm:$0xf]
      %v202 = vld [vmem:[%s180 + $0x28] sm:$0xf]
      %v203 = vld [vmem:[%s180 + $0x2c] sm:$0x3]
      %v204 = vld [vmem:[%s180 + $0x30] sm:$0xf]
      %v205 = vld [vmem:[%s180 + $0x34] sm:$0xf]
      %v206 = vld [vmem:[%s180 + $0x38] sm:$0x3]
      %v207 = vld [vmem:[%s180 + $0x3c] sm:$0xf]
      %v208 = vld [vmem:[%s180 + $0x40] sm:$0xf]
      %v209 = vld [vmem:[%s180 + $0x44] sm:$0x3]
      %v210 = vld [vmem:[%s180 + $0x48] sm:$0xf]
      %v211 = vld [vmem:[%s180 + $0x4c] sm:$0xf]
      %v212 = vld [vmem:[%s180 + $0x50] sm:$0x3]
      %v213 = vld [vmem:[%s180 + $0x54] sm:$0xf]
      %v214 = vld [vmem:[%s180 + $0x58] sm:$0xf]
      %v215 = vld [vmem:[%s180 + $0x5c] sm:$0x3]
      %v216 = vld [vmem:[%s180 + $0x60] sm:$0xf]
      %v217 = vld [vmem:[%s180 + $0x64] sm:$0xf]
      %v218 = vld [vmem:[%s180 + $0x68] sm:$0x3]
      %v219 = vld [vmem:[%s180 + $0x6c] sm:$0xf]
      %v220 = vld [vmem:[%s180 + $0x70] sm:$0xf]
      %v221 = vld [vmem:[%s180 + $0x74] sm:$0x3]
      %v222 = vld [vmem:[%s180 + $0x78] sm:$0xf]
      %v223 = vld [vmem:[%s180 + $0x7c] sm:$0xf]
      %v224 = vld [vmem:[%s180 + $0x80] sm:$0x3]
      %v225 = vld [vmem:[%s180 + $0x84] sm:$0xf]
      %v226 = vld [vmem:[%s180 + $0x88] sm:$0xf]
      %v227 = vld [vmem:[%s180 + $0x8c] sm:$0x3]
      %v228 = vld [vmem:[%s180 + $0x90] sm:$0xf]
      %v229 = vld [vmem:[%s180 + $0x94] sm:$0xf]
      %v230 = vld [vmem:[%s180 + $0x98] sm:$0x3]
      %v231 = vld [vmem:[%s180 + $0x9c] sm:$0xf]
      %v232 = vld [vmem:[%s180 + $0xa0] sm:$0xf]
      %v233 = vld [vmem:[%s180 + $0xa4] sm:$0x3]
      %v234 = vld [vmem:[%s180 + $0xa8] sm:$0xf]
      %v235 = vld [vmem:[%s180 + $0xac] sm:$0xf]
      %v236 = vld [vmem:[%s180 + $0xb0] sm:$0x3]
      %v237 = vld [vmem:[%s180 + $0xb4] sm:$0xf]
      %v238 = vld [vmem:[%s180 + $0xb8] sm:$0xf]
      %v239 = vld [vmem:[%s180 + $0xbc] sm:$0x3]
      %v240 = vld [vmem:[%s180 + $0xc0] sm:$0xf]
      %v241 = vld [vmem:[%s180 + $0xc4] sm:$0xf]
      %v242 = vld [vmem:[%s180 + $0xc8] sm:$0x3]
      %v243 = vld [vmem:[%s180 + $0xcc] sm:$0xf]
      %v244 = vld [vmem:[%s180 + $0xd0] sm:$0xf]
      %v245 = vld [vmem:[%s180 + $0xd4] sm:$0x3]
      %v246 = vld [vmem:[%s180 + $0xd8] sm:$0xf]
      %v247 = vld [vmem:[%s180 + $0xdc] sm:$0xf]
      %v248 = vld [vmem:[%s180 + $0xe0] sm:$0x3]
      %v249 = vld [vmem:[%s180 + $0xe4] sm:$0xf]
      %v250 = vld [vmem:[%s180 + $0xe8] sm:$0xf]
      %v251 = vld [vmem:[%s180 + $0xec] sm:$0x3]
      %vm252 = vcmask 289792
      %253 = vst.msk [vmem:[#allocation2] sm:$0xf] %vm252, %v192
      %254 = vst.msk [vmem:[#allocation2 + $0x20] sm:$0xf] %vm252, %v193
      %255 = vst.msk [vmem:[#allocation2 + $0x40] sm:$0xf] %vm252, %v195
      %256 = vst.msk [vmem:[#allocation2 + $0x60] sm:$0xf] %vm252, %v196
      %257 = vst.msk [vmem:[#allocation2 + $0x80] sm:$0xf] %vm252, %v198
      %258 = vst.msk [vmem:[#allocation2 + $0xa0] sm:$0xf] %vm252, %v199
      %259 = vst.msk [vmem:[#allocation2 + $0xc0] sm:$0xf] %vm252, %v201
      %260 = vst.msk [vmem:[#allocation2 + $0xe0] sm:$0xf] %vm252, %v202
      %261 = vst.msk [vmem:[#allocation2 + $0x100] sm:$0xf] %vm252, %v204
      %262 = vst.msk [vmem:[#allocation2 + $0x120] sm:$0xf] %vm252, %v205
      %263 = vst.msk [vmem:[#allocation2 + $0x140] sm:$0xf] %vm252, %v207
      %264 = vst.msk [vmem:[#allocation2 + $0x160] sm:$0xf] %vm252, %v208
      %265 = vst.msk [vmem:[#allocation2 + $0x180] sm:$0xf] %vm252, %v210
      %266 = vst.msk [vmem:[#allocation2 + $0x1a0] sm:$0xf] %vm252, %v211
      %267 = vst.msk [vmem:[#allocation2 + $0x1c0] sm:$0xf] %vm252, %v213
      %268 = vst.msk [vmem:[#allocation2 + $0x1e0] sm:$0xf] %vm252, %v214
      %269 = vst.msk [vmem:[#allocation2 + $0x200] sm:$0xf] %vm252, %v216
      %270 = vst.msk [vmem:[#allocation2 + $0x220] sm:$0xf] %vm252, %v217
      %271 = vst.msk [vmem:[#allocation2 + $0x240] sm:$0xf] %vm252, %v219
      %272 = vst.msk [vmem:[#allocation2 + $0x260] sm:$0xf] %vm252, %v220
      %273 = vst.msk [vmem:[#allocation2 + $0x280] sm:$0xf] %vm252, %v222
      %274 = vst.msk [vmem:[#allocation2 + $0x2a0] sm:$0xf] %vm252, %v223
      %275 = vst.msk [vmem:[#allocation2 + $0x2c0] sm:$0xf] %vm252, %v225
      %276 = vst.msk [vmem:[#allocation2 + $0x2e0] sm:$0xf] %vm252, %v226
      %277 = vst.msk [vmem:[#allocation2 + $0x300] sm:$0xf] %vm252, %v228
      %278 = vst.msk [vmem:[#allocation2 + $0x320] sm:$0xf] %vm252, %v229
      %279 = vst.msk [vmem:[#allocation2 + $0x340] sm:$0xf] %vm252, %v231
      %280 = vst.msk [vmem:[#allocation2 + $0x360] sm:$0xf] %vm252, %v232
      %281 = vst.msk [vmem:[#allocation2 + $0x380] sm:$0xf] %vm252, %v234
      %282 = vst.msk [vmem:[#allocation2 + $0x3a0] sm:$0xf] %vm252, %v235
      %283 = vst.msk [vmem:[#allocation2 + $0x3c0] sm:$0xf] %vm252, %v237
      %284 = vst.msk [vmem:[#allocation2 + $0x3e0] sm:$0xf] %vm252, %v238
      %vm285 = vsmask.f32 3328
      %vm286 = vsmask.f32 7440
      %vm287 = vmor %vm285, %vm286
      %v289 = vshrl.u32 %v192, 16
      %v291 = vrot.slane %v289, 4
      %v292 = vshll.u32 %v192, 16
      %v294 = vrot.slane %v292, 5
      %v295 = vor.u32 %v291, %v294
      %v296 = vrot.slane %v295, 4
      %v298 = vshll.u32 %v193, 16
      %v300 = vrot.slane %v298, 5
      %v301 = vsel %vm287, %v296, %v300
      %v302 = vshrl.u32 %v193, 16
      %v304 = vrot.slane %v302, 4
      %v305 = vor.u32 %v304, %v300
      %v306 = vrot.slane %v305, 4
      %v308 = vshll.u32 %v194, 16
      %v310 = vrot.slane %v308, 5
      %v311 = vsel %vm287, %v306, %v310
      %v313 = vshrl.u32 %v195, 16
      %v315 = vrot.slane %v313, 4
      %v316 = vshll.u32 %v195, 16
      %v318 = vrot.slane %v316, 5
      %v319 = vor.u32 %v315, %v318
      %v320 = vrot.slane %v319, 4
      %v322 = vshll.u32 %v196, 16
      %v324 = vrot.slane %v322, 5
      %v325 = vsel %vm287, %v320, %v324
      %v326 = vshrl.u32 %v196, 16
      %v328 = vrot.slane %v326, 4
      %v329 = vor.u32 %v328, %v324
      %v330 = vrot.slane %v329, 4
      %v332 = vshll.u32 %v197, 16
      %v334 = vrot.slane %v332, 5
      %v335 = vsel %vm287, %v330, %v334
      %v337 = vshrl.u32 %v198, 16
      %v339 = vrot.slane %v337, 4
      %v340 = vshll.u32 %v198, 16
      %v342 = vrot.slane %v340, 5
      %v343 = vor.u32 %v339, %v342
      %v344 = vrot.slane %v343, 4
      %v346 = vshll.u32 %v199, 16
      %v348 = vrot.slane %v346, 5
      %v349 = vsel %vm287, %v344, %v348
      %v350 = vshrl.u32 %v199, 16
      %v352 = vrot.slane %v350, 4
      %v353 = vor.u32 %v352, %v348
      %v354 = vrot.slane %v353, 4
      %v356 = vshll.u32 %v200, 16
      %v358 = vrot.slane %v356, 5
      %v359 = vsel %vm287, %v354, %v358
      %v361 = vshrl.u32 %v201, 16
      %v363 = vrot.slane %v361, 4
      %v364 = vshll.u32 %v201, 16
      %v366 = vrot.slane %v364, 5
      %v367 = vor.u32 %v363, %v366
      %v368 = vrot.slane %v367, 4
      %v370 = vshll.u32 %v202, 16
      %v372 = vrot.slane %v370, 5
      %v373 = vsel %vm287, %v368, %v372
      %v374 = vshrl.u32 %v202, 16
      %v376 = vrot.slane %v374, 4
      %v377 = vor.u32 %v376, %v372
      %v378 = vrot.slane %v377, 4
      %v380 = vshll.u32 %v203, 16
      %v382 = vrot.slane %v380, 5
      %v383 = vsel %vm287, %v378, %v382
      %v385 = vshrl.u32 %v204, 16
      %v387 = vrot.slane %v385, 4
      %v388 = vshll.u32 %v204, 16
      %v390 = vrot.slane %v388, 5
      %v391 = vor.u32 %v387, %v390
      %v392 = vrot.slane %v391, 4
      %v394 = vshll.u32 %v205, 16
      %v396 = vrot.slane %v394, 5
      %v397 = vsel %vm287, %v392, %v396
      %v398 = vshrl.u32 %v205, 16
      %v400 = vrot.slane %v398, 4
      %v401 = vor.u32 %v400, %v396
      %v402 = vrot.slane %v401, 4
      %v404 = vshll.u32 %v206, 16
      %v406 = vrot.slane %v404, 5
      %v407 = vsel %vm287, %v402, %v406
      %v409 = vshrl.u32 %v207, 16
      %v411 = vrot.slane %v409, 4
      %v412 = vshll.u32 %v207, 16
      %v414 = vrot.slane %v412, 5
      %v415 = vor.u32 %v411, %v414
      %v416 = vrot.slane %v415, 4
      %v418 = vshll.u32 %v208, 16
      %v420 = vrot.slane %v418, 5
      %v421 = vsel %vm287, %v416, %v420
      %v422 = vshrl.u32 %v208, 16
      %v424 = vrot.slane %v422, 4
      %v425 = vor.u32 %v424, %v420
      %v426 = vrot.slane %v425, 4
      %v428 = vshll.u32 %v209, 16
      %v430 = vrot.slane %v428, 5
      %v431 = vsel %vm287, %v426, %v430
      %v433 = vshrl.u32 %v210, 16
      %v435 = vrot.slane %v433, 4
      %v436 = vshll.u32 %v210, 16
      %v438 = vrot.slane %v436, 5
      %v439 = vor.u32 %v435, %v438
      %v440 = vrot.slane %v439, 4
      %v442 = vshll.u32 %v211, 16
      %v444 = vrot.slane %v442, 5
      %v445 = vsel %vm287, %v440, %v444
      %v446 = vshrl.u32 %v211, 16
      %v448 = vrot.slane %v446, 4
      %v449 = vor.u32 %v448, %v444
      %v450 = vrot.slane %v449, 4
      %v452 = vshll.u32 %v212, 16
      %v454 = vrot.slane %v452, 5
      %v455 = vsel %vm287, %v450, %v454
      %v457 = vshrl.u32 %v213, 16
      %v459 = vrot.slane %v457, 4
      %v460 = vshll.u32 %v213, 16
      %v462 = vrot.slane %v460, 5
      %v463 = vor.u32 %v459, %v462
      %v464 = vrot.slane %v463, 4
      %v466 = vshll.u32 %v214, 16
      %v468 = vrot.slane %v466, 5
      %v469 = vsel %vm287, %v464, %v468
      %v470 = vshrl.u32 %v214, 16
      %v472 = vrot.slane %v470, 4
      %v473 = vor.u32 %v472, %v468
      %v474 = vrot.slane %v473, 4
      %v476 = vshll.u32 %v215, 16
      %v478 = vrot.slane %v476, 5
      %v479 = vsel %vm287, %v474, %v478
      %v481 = vshrl.u32 %v216, 16
      %v483 = vrot.slane %v481, 4
      %v484 = vshll.u32 %v216, 16
      %v486 = vrot.slane %v484, 5
      %v487 = vor.u32 %v483, %v486
      %v488 = vrot.slane %v487, 4
      %v490 = vshll.u32 %v217, 16
      %v492 = vrot.slane %v490, 5
      %v493 = vsel %vm287, %v488, %v492
      %v494 = vshrl.u32 %v217, 16
      %v496 = vrot.slane %v494, 4
      %v497 = vor.u32 %v496, %v492
      %v498 = vrot.slane %v497, 4
      %v500 = vshll.u32 %v218, 16
      %v502 = vrot.slane %v500, 5
      %v503 = vsel %vm287, %v498, %v502
      %v505 = vshrl.u32 %v219, 16
      %v507 = vrot.slane %v505, 4
      %v508 = vshll.u32 %v219, 16
      %v510 = vrot.slane %v508, 5
      %v511 = vor.u32 %v507, %v510
      %v512 = vrot.slane %v511, 4
      %v514 = vshll.u32 %v220, 16
      %v516 = vrot.slane %v514, 5
      %v517 = vsel %vm287, %v512, %v516
      %v518 = vshrl.u32 %v220, 16
      %v520 = vrot.slane %v518, 4
      %v521 = vor.u32 %v520, %v516
      %v522 = vrot.slane %v521, 4
      %v524 = vshll.u32 %v221, 16
      %v526 = vrot.slane %v524, 5
      %v527 = vsel %vm287, %v522, %v526
      %v529 = vshrl.u32 %v222, 16
      %v531 = vrot.slane %v529, 4
      %v532 = vshll.u32 %v222, 16
      %v534 = vrot.slane %v532, 5
      %v535 = vor.u32 %v531, %v534
      %v536 = vrot.slane %v535, 4
      %v538 = vshll.u32 %v223, 16
      %v540 = vrot.slane %v538, 5
      %v541 = vsel %vm287, %v536, %v540
      %v542 = vshrl.u32 %v223, 16
      %v544 = vrot.slane %v542, 4
      %v545 = vor.u32 %v544, %v540
      %v546 = vrot.slane %v545, 4
      %v548 = vshll.u32 %v224, 16
      %v550 = vrot.slane %v548, 5
      %v551 = vsel %vm287, %v546, %v550
      %v553 = vshrl.u32 %v225, 16
      %v555 = vrot.slane %v553, 4
      %v556 = vshll.u32 %v225, 16
      %v558 = vrot.slane %v556, 5
      %v559 = vor.u32 %v555, %v558
      %v560 = vrot.slane %v559, 4
      %v562 = vshll.u32 %v226, 16
      %v564 = vrot.slane %v562, 5
      %v565 = vsel %vm287, %v560, %v564
      %v566 = vshrl.u32 %v226, 16
      %v568 = vrot.slane %v566, 4
      %v569 = vor.u32 %v568, %v564
      %v570 = vrot.slane %v569, 4
      %v572 = vshll.u32 %v227, 16
      %v574 = vrot.slane %v572, 5
      %v575 = vsel %vm287, %v570, %v574
      %v577 = vshrl.u32 %v228, 16
      %v579 = vrot.slane %v577, 4
      %v580 = vshll.u32 %v228, 16
      %v582 = vrot.slane %v580, 5
      %v583 = vor.u32 %v579, %v582
      %v584 = vrot.slane %v583, 4
      %v586 = vshll.u32 %v229, 16
      %v588 = vrot.slane %v586, 5
      %v589 = vsel %vm287, %v584, %v588
      %v590 = vshrl.u32 %v229, 16
      %v592 = vrot.slane %v590, 4
      %v593 = vor.u32 %v592, %v588
      %v594 = vrot.slane %v593, 4
      %v596 = vshll.u32 %v230, 16
      %v598 = vrot.slane %v596, 5
      %v599 = vsel %vm287, %v594, %v598
      %v601 = vshrl.u32 %v231, 16
      %v603 = vrot.slane %v601, 4
      %v604 = vshll.u32 %v231, 16
      %v606 = vrot.slane %v604, 5
      %v607 = vor.u32 %v603, %v606
      %v608 = vrot.slane %v607, 4
      %v610 = vshll.u32 %v232, 16
      %v612 = vrot.slane %v610, 5
      %v613 = vsel %vm287, %v608, %v612
      %v614 = vshrl.u32 %v232, 16
      %v616 = vrot.slane %v614, 4
      %v617 = vor.u32 %v616, %v612
      %v618 = vrot.slane %v617, 4
      %v620 = vshll.u32 %v233, 16
      %v622 = vrot.slane %v620, 5
      %v623 = vsel %vm287, %v618, %v622
      %v625 = vshrl.u32 %v234, 16
      %v627 = vrot.slane %v625, 4
      %v628 = vshll.u32 %v234, 16
      %v630 = vrot.slane %v628, 5
      %v631 = vor.u32 %v627, %v630
      %v632 = vrot.slane %v631, 4
      %v634 = vshll.u32 %v235, 16
      %v636 = vrot.slane %v634, 5
      %v637 = vsel %vm287, %v632, %v636
      %v638 = vshrl.u32 %v235, 16
      %v640 = vrot.slane %v638, 4
      %v641 = vor.u32 %v640, %v636
      %v642 = vrot.slane %v641, 4
      %v644 = vshll.u32 %v236, 16
      %v646 = vrot.slane %v644, 5
      %v647 = vsel %vm287, %v642, %v646
      %v649 = vshrl.u32 %v237, 16
      %v651 = vrot.slane %v649, 4
      %v652 = vshll.u32 %v237, 16
      %v654 = vrot.slane %v652, 5
      %v655 = vor.u32 %v651, %v654
      %v656 = vrot.slane %v655, 4
      %v658 = vshll.u32 %v238, 16
      %v660 = vrot.slane %v658, 5
      %v661 = vsel %vm287, %v656, %v660
      %v662 = vshrl.u32 %v238, 16
      %v664 = vrot.slane %v662, 4
      %v665 = vor.u32 %v664, %v660
      %v666 = vrot.slane %v665, 4
      %v668 = vshll.u32 %v239, 16
      %v670 = vrot.slane %v668, 5
      %v671 = vsel %vm287, %v666, %v670
      %672 = vrot.lane.b32.xlu0 %v301, 36
      %v673 = vpop.permute.xlu0 %672
      %674 = vrot.lane.b32.xlu0 %v311, 36
      %v675 = vpop.permute.xlu0 %674
      %676 = vrot.lane.b32.xlu0 %v325, 36
      %v677 = vpop.permute.xlu0 %676
      %678 = vrot.lane.b32.xlu0 %v335, 36
      %v679 = vpop.permute.xlu0 %678
      %680 = vrot.lane.b32.xlu0 %v349, 36
      %v681 = vpop.permute.xlu0 %680
      %682 = vrot.lane.b32.xlu0 %v359, 36
      %v683 = vpop.permute.xlu0 %682
      %684 = vrot.lane.b32.xlu0 %v373, 36
      %v685 = vpop.permute.xlu0 %684
      %686 = vrot.lane.b32.xlu0 %v383, 36
      %v687 = vpop.permute.xlu0 %686
      %688 = vrot.lane.b32.xlu0 %v397, 36
      %v689 = vpop.permute.xlu0 %688
      %690 = vrot.lane.b32.xlu0 %v407, 36
      %v691 = vpop.permute.xlu0 %690
      %692 = vrot.lane.b32.xlu0 %v421, 36
      %v693 = vpop.permute.xlu0 %692
      %694 = vrot.lane.b32.xlu0 %v431, 36
      %v695 = vpop.permute.xlu0 %694
      %696 = vrot.lane.b32.xlu0 %v445, 36
      %v697 = vpop.permute.xlu0 %696
      %698 = vrot.lane.b32.xlu0 %v455, 36
      %v699 = vpop.permute.xlu0 %698
      %700 = vrot.lane.b32.xlu0 %v469, 36
      %v701 = vpop.permute.xlu0 %700
      %702 = vrot.lane.b32.xlu0 %v479, 36
      %v703 = vpop.permute.xlu0 %702
      %704 = vrot.lane.b32.xlu0 %v493, 36
      %v705 = vpop.permute.xlu0 %704
      %706 = vrot.lane.b32.xlu0 %v503, 36
      %v707 = vpop.permute.xlu0 %706
      %708 = vrot.lane.b32.xlu0 %v517, 36
      %v709 = vpop.permute.xlu0 %708
      %710 = vrot.lane.b32.xlu0 %v527, 36
      %v711 = vpop.permute.xlu0 %710
      %712 = vrot.lane.b32.xlu0 %v541, 36
      %v713 = vpop.permute.xlu0 %712
      %714 = vrot.lane.b32.xlu0 %v551, 36
      %v715 = vpop.permute.xlu0 %714
      %716 = vrot.lane.b32.xlu0 %v565, 36
      %v717 = vpop.permute.xlu0 %716
      %718 = vrot.lane.b32.xlu0 %v575, 36
      %v719 = vpop.permute.xlu0 %718
      %720 = vrot.lane.b32.xlu0 %v589, 36
      %v721 = vpop.permute.xlu0 %720
      %722 = vrot.lane.b32.xlu0 %v599, 36
      %v723 = vpop.permute.xlu0 %722
      %724 = vrot.lane.b32.xlu0 %v613, 36
      %v725 = vpop.permute.xlu0 %724
      %726 = vrot.lane.b32.xlu0 %v623, 36
      %v727 = vpop.permute.xlu0 %726
      %728 = vrot.lane.b32.xlu0 %v637, 36
      %v729 = vpop.permute.xlu0 %728
      %730 = vrot.lane.b32.xlu0 %v647, 36
      %v731 = vpop.permute.xlu0 %730
      %732 = vrot.lane.b32.xlu0 %v661, 36
      %v733 = vpop.permute.xlu0 %732
      %734 = vrot.lane.b32.xlu0 %v671, 36
      %v735 = vpop.permute.xlu0 %734
      %vm768 = vcmask 584992
      %769 = vst.msk [vmem:[#allocation2] sm:$0xf] %vm768, %v673
      %770 = vst.msk [vmem:[#allocation2 + $0x20] sm:$0xf] %vm768, %v675
      %771 = vst.msk [vmem:[#allocation2 + $0x40] sm:$0xf] %vm768, %v677
      %772 = vst.msk [vmem:[#allocation2 + $0x60] sm:$0xf] %vm768, %v679
      %773 = vst.msk [vmem:[#allocation2 + $0x80] sm:$0xf] %vm768, %v681
      %774 = vst.msk [vmem:[#allocation2 + $0xa0] sm:$0xf] %vm768, %v683
      %775 = vst.msk [vmem:[#allocation2 + $0xc0] sm:$0xf] %vm768, %v685
      %776 = vst.msk [vmem:[#allocation2 + $0xe0] sm:$0xf] %vm768, %v687
      %777 = vst.msk [vmem:[#allocation2 + $0x100] sm:$0xf] %vm768, %v689
      %778 = vst.msk [vmem:[#allocation2 + $0x120] sm:$0xf] %vm768, %v691
      %779 = vst.msk [vmem:[#allocation2 + $0x140] sm:$0xf] %vm768, %v693
      %780 = vst.msk [vmem:[#allocation2 + $0x160] sm:$0xf] %vm768, %v695
      %781 = vst.msk [vmem:[#allocation2 + $0x180] sm:$0xf] %vm768, %v697
      %782 = vst.msk [vmem:[#allocation2 + $0x1a0] sm:$0xf] %vm768, %v699
      %783 = vst.msk [vmem:[#allocation2 + $0x1c0] sm:$0xf] %vm768, %v701
      %784 = vst.msk [vmem:[#allocation2 + $0x1e0] sm:$0xf] %vm768, %v703
      %785 = vst.msk [vmem:[#allocation2 + $0x200] sm:$0xf] %vm768, %v705
      %786 = vst.msk [vmem:[#allocation2 + $0x220] sm:$0xf] %vm768, %v707
      %787 = vst.msk [vmem:[#allocation2 + $0x240] sm:$0xf] %vm768, %v709
      %788 = vst.msk [vmem:[#allocation2 + $0x260] sm:$0xf] %vm768, %v711
      %789 = vst.msk [vmem:[#allocation2 + $0x280] sm:$0xf] %vm768, %v713
      %790 = vst.msk [vmem:[#allocation2 + $0x2a0] sm:$0xf] %vm768, %v715
      %791 = vst.msk [vmem:[#allocation2 + $0x2c0] sm:$0xf] %vm768, %v717
      %792 = vst.msk [vmem:[#allocation2 + $0x2e0] sm:$0xf] %vm768, %v719
      %793 = vst.msk [vmem:[#allocation2 + $0x300] sm:$0xf] %vm768, %v721
      %794 = vst.msk [vmem:[#allocation2 + $0x320] sm:$0xf] %vm768, %v723
      %795 = vst.msk [vmem:[#allocation2 + $0x340] sm:$0xf] %vm768, %v725
      %796 = vst.msk [vmem:[#allocation2 + $0x360] sm:$0xf] %vm768, %v727
      %797 = vst.msk [vmem:[#allocation2 + $0x380] sm:$0xf] %vm768, %v729
      %798 = vst.msk [vmem:[#allocation2 + $0x3a0] sm:$0xf] %vm768, %v731
      %799 = vst.msk [vmem:[#allocation2 + $0x3c0] sm:$0xf] %vm768, %v733
      %800 = vst.msk [vmem:[#allocation2 + $0x3e0] sm:$0xf] %vm768, %v735
      %vm849 = vcmask 1042432
      %vm850 = vcmask 1046532
      %vm851 = vmor %vm849, %vm850
      %v852 = vrot.slane %v192, 5
      %v853 = vrot.slane %v852, 4
      %v854 = vrot.slane %v193, 5
      %v855 = vsel %vm851, %v853, %v854
      %v856 = vrot.slane %v854, 4
      %v857 = vrot.slane %v194, 5
      %v858 = vsel %vm851, %v856, %v857
      %v859 = vrot.slane %v195, 5
      %v860 = vrot.slane %v859, 4
      %v861 = vrot.slane %v196, 5
      %v862 = vsel %vm851, %v860, %v861
      %v863 = vrot.slane %v861, 4
      %v864 = vrot.slane %v197, 5
      %v865 = vsel %vm851, %v863, %v864
      %v866 = vrot.slane %v198, 5
      %v867 = vrot.slane %v866, 4
      %v868 = vrot.slane %v199, 5
      %v869 = vsel %vm851, %v867, %v868
      %v870 = vrot.slane %v868, 4
      %v871 = vrot.slane %v200, 5
      %v872 = vsel %vm851, %v870, %v871
      %v873 = vrot.slane %v201, 5
      %v874 = vrot.slane %v873, 4
      %v875 = vrot.slane %v202, 5
      %v876 = vsel %vm851, %v874, %v875
      %v877 = vrot.slane %v875, 4
      %v878 = vrot.slane %v203, 5
      %v879 = vsel %vm851, %v877, %v878
      %v880 = vrot.slane %v204, 5
      %v881 = vrot.slane %v880, 4
      %v882 = vrot.slane %v205, 5
      %v883 = vsel %vm851, %v881, %v882
      %v884 = vrot.slane %v882, 4
      %v885 = vrot.slane %v206, 5
      %v886 = vsel %vm851, %v884, %v885
      %v887 = vrot.slane %v207, 5
      %v888 = vrot.slane %v887, 4
      %v889 = vrot.slane %v208, 5
      %v890 = vsel %vm851, %v888, %v889
      %v891 = vrot.slane %v889, 4
      %v892 = vrot.slane %v209, 5
      %v893 = vsel %vm851, %v891, %v892
      %v894 = vrot.slane %v210, 5
      %v895 = vrot.slane %v894, 4
      %v896 = vrot.slane %v211, 5
      %v897 = vsel %vm851, %v895, %v896
      %v898 = vrot.slane %v896, 4
      %v899 = vrot.slane %v212, 5
      %v900 = vsel %vm851, %v898, %v899
      %v901 = vrot.slane %v213, 5
      %v902 = vrot.slane %v901, 4
      %v903 = vrot.slane %v214, 5
      %v904 = vsel %vm851, %v902, %v903
      %v905 = vrot.slane %v903, 4
      %v906 = vrot.slane %v215, 5
      %v907 = vsel %vm851, %v905, %v906
      %v908 = vrot.slane %v216, 5
      %v909 = vrot.slane %v908, 4
      %v910 = vrot.slane %v217, 5
      %v911 = vsel %vm851, %v909, %v910
      %v912 = vrot.slane %v910, 4
      %v913 = vrot.slane %v218, 5
      %v914 = vsel %vm851, %v912, %v913
      %v915 = vrot.slane %v219, 5
      %v916 = vrot.slane %v915, 4
      %v917 = vrot.slane %v220, 5
      %v918 = vsel %vm851, %v916, %v917
      %v919 = vrot.slane %v917, 4
      %v920 = vrot.slane %v221, 5
      %v921 = vsel %vm851, %v919, %v920
      %v922 = vrot.slane %v222, 5
      %v923 = vrot.slane %v922, 4
      %v924 = vrot.slane %v223, 5
      %v925 = vsel %vm851, %v923, %v924
      %v926 = vrot.slane %v924, 4
      %v927 = vrot.slane %v224, 5
      %v928 = vsel %vm851, %v926, %v927
      %v929 = vrot.slane %v225, 5
      %v930 = vrot.slane %v929, 4
      %v931 = vrot.slane %v226, 5
      %v932 = vsel %vm851, %v930, %v931
      %v933 = vrot.slane %v931, 4
      %v934 = vrot.slane %v227, 5
      %v935 = vsel %vm851, %v933, %v934
      %v936 = vrot.slane %v228, 5
      %v937 = vrot.slane %v936, 4
      %v938 = vrot.slane %v229, 5
      %v939 = vsel %vm851, %v937, %v938
      %v940 = vrot.slane %v938, 4
      %v941 = vrot.slane %v230, 5
      %v942 = vsel %vm851, %v940, %v941
      %v943 = vrot.slane %v231, 5
      %v944 = vrot.slane %v943, 4
      %v945 = vrot.slane %v232, 5
      %v946 = vsel %vm851, %v944, %v945
      %v947 = vrot.slane %v945, 4
      %v948 = vrot.slane %v233, 5
      %v949 = vsel %vm851, %v947, %v948
      %v950 = vrot.slane %v234, 5
      %v951 = vrot.slane %v950, 4
      %v952 = vrot.slane %v235, 5
      %v953 = vsel %vm851, %v951, %v952
      %v954 = vrot.slane %v952, 4
      %v955 = vrot.slane %v236, 5
      %v956 = vsel %vm851, %v954, %v955
      %v957 = vrot.slane %v237, 5
      %v958 = vrot.slane %v957, 4
      %v959 = vrot.slane %v238, 5
      %v960 = vsel %vm851, %v958, %v959
      %v961 = vrot.slane %v959, 4
      %v962 = vrot.slane %v239, 5
      %v963 = vsel %vm851, %v961, %v962
      %964 = vrot.lane.b32.xlu0 %v855, 72
      %v965 = vpop.permute.xlu0 %964
      %966 = vrot.lane.b32.xlu0 %v858, 72
      %v967 = vpop.permute.xlu0 %966
      %968 = vrot.lane.b32.xlu0 %v862, 72
      %v969 = vpop.permute.xlu0 %968
      %970 = vrot.lane.b32.xlu0 %v865, 72
      %v971 = vpop.permute.xlu0 %970
      %972 = vrot.lane.b32.xlu0 %v869, 72
      %v973 = vpop.permute.xlu0 %972
      %974 = vrot.lane.b32.xlu0 %v872, 72
      %v975 = vpop.permute.xlu0 %974
      %976 = vrot.lane.b32.xlu0 %v876, 72
      %v977 = vpop.permute.xlu0 %976
      %978 = vrot.lane.b32.xlu0 %v879, 72
      %v979 = vpop.permute.xlu0 %978
      %980 = vrot.lane.b32.xlu0 %v883, 72
      %v981 = vpop.permute.xlu0 %980
      %982 = vrot.lane.b32.xlu0 %v886, 72
      %v983 = vpop.permute.xlu0 %982
      %984 = vrot.lane.b32.xlu0 %v890, 72
      %v985 = vpop.permute.xlu0 %984
      %986 = vrot.lane.b32.xlu0 %v893, 72
      %v987 = vpop.permute.xlu0 %986
      %988 = vrot.lane.b32.xlu0 %v897, 72
      %v989 = vpop.permute.xlu0 %988
      %990 = vrot.lane.b32.xlu0 %v900, 72
      %v991 = vpop.permute.xlu0 %990
      %992 = vrot.lane.b32.xlu0 %v904, 72
      %v993 = vpop.permute.xlu0 %992
      %994 = vrot.lane.b32.xlu0 %v907, 72
      %v995 = vpop.permute.xlu0 %994
      %996 = vrot.lane.b32.xlu0 %v911, 72
      %v997 = vpop.permute.xlu0 %996
      %998 = vrot.lane.b32.xlu0 %v914, 72
      %v999 = vpop.permute.xlu0 %998
      %1000 = vrot.lane.b32.xlu0 %v918, 72
      %v1001 = vpop.permute.xlu0 %1000
      %1002 = vrot.lane.b32.xlu0 %v921, 72
      %v1003 = vpop.permute.xlu0 %1002
      %1004 = vrot.lane.b32.xlu0 %v925, 72
      %v1005 = vpop.permute.xlu0 %1004
      %1006 = vrot.lane.b32.xlu0 %v928, 72
      %v1007 = vpop.permute.xlu0 %1006
      %1008 = vrot.lane.b32.xlu0 %v932, 72
      %v1009 = vpop.permute.xlu0 %1008
      %1010 = vrot.lane.b32.xlu0 %v935, 72
      %v1011 = vpop.permute.xlu0 %1010
      %1012 = vrot.lane.b32.xlu0 %v939, 72
      %v1013 = vpop.permute.xlu0 %1012
      %1014 = vrot.lane.b32.xlu0 %v942, 72
      %v1015 = vpop.permute.xlu0 %1014
      %1016 = vrot.lane.b32.xlu0 %v946, 72
      %v1017 = vpop.permute.xlu0 %1016
      %1018 = vrot.lane.b32.xlu0 %v949, 72
      %v1019 = vpop.permute.xlu0 %1018
      %1020 = vrot.lane.b32.xlu0 %v953, 72
      %v1021 = vpop.permute.xlu0 %1020
      %1022 = vrot.lane.b32.xlu0 %v956, 72
      %v1023 = vpop.permute.xlu0 %1022
      %1024 = vrot.lane.b32.xlu0 %v960, 72
      %v1025 = vpop.permute.xlu0 %1024
      %1026 = vrot.lane.b32.xlu0 %v963, 72
      %v1027 = vpop.permute.xlu0 %1026
      %vm1060 = vcmask 880192
      %1061 = vst.msk [vmem:[#allocation2] sm:$0xf] %vm1060, %v965
      %1062 = vst.msk [vmem:[#allocation2 + $0x20] sm:$0xf] %vm1060, %v967
      %1063 = vst.msk [vmem:[#allocation2 + $0x40] sm:$0xf] %vm1060, %v969
      %1064 = vst.msk [vmem:[#allocation2 + $0x60] sm:$0xf] %vm1060, %v971
      %1065 = vst.msk [vmem:[#allocation2 + $0x80] sm:$0xf] %vm1060, %v973
      %1066 = vst.msk [vmem:[#allocation2 + $0xa0] sm:$0xf] %vm1060, %v975
      %1067 = vst.msk [vmem:[#allocation2 + $0xc0] sm:$0xf] %vm1060, %v977
      %1068 = vst.msk [vmem:[#allocation2 + $0xe0] sm:$0xf] %vm1060, %v979
      %1069 = vst.msk [vmem:[#allocation2 + $0x100] sm:$0xf] %vm1060, %v981
      %1070 = vst.msk [vmem:[#allocation2 + $0x120] sm:$0xf] %vm1060, %v983
      %1071 = vst.msk [vmem:[#allocation2 + $0x140] sm:$0xf] %vm1060, %v985
      %1072 = vst.msk [vmem:[#allocation2 + $0x160] sm:$0xf] %vm1060, %v987
      %1073 = vst.msk [vmem:[#allocation2 + $0x180] sm:$0xf] %vm1060, %v989
      %1074 = vst.msk [vmem:[#allocation2 + $0x1a0] sm:$0xf] %vm1060, %v991
      %1075 = vst.msk [vmem:[#allocation2 + $0x1c0] sm:$0xf] %vm1060, %v993
      %1076 = vst.msk [vmem:[#allocation2 + $0x1e0] sm:$0xf] %vm1060, %v995
      %1077 = vst.msk [vmem:[#allocation2 + $0x200] sm:$0xf] %vm1060, %v997
      %1078 = vst.msk [vmem:[#allocation2 + $0x220] sm:$0xf] %vm1060, %v999
      %1079 = vst.msk [vmem:[#allocation2 + $0x240] sm:$0xf] %vm1060, %v1001
      %1080 = vst.msk [vmem:[#allocation2 + $0x260] sm:$0xf] %vm1060, %v1003
      %1081 = vst.msk [vmem:[#allocation2 + $0x280] sm:$0xf] %vm1060, %v1005
      %1082 = vst.msk [vmem:[#allocation2 + $0x2a0] sm:$0xf] %vm1060, %v1007
      %1083 = vst.msk [vmem:[#allocation2 + $0x2c0] sm:$0xf] %vm1060, %v1009
      %1084 = vst.msk [vmem:[#allocation2 + $0x2e0] sm:$0xf] %vm1060, %v1011
      %1085 = vst.msk [vmem:[#allocation2 + $0x300] sm:$0xf] %vm1060, %v1013
      %1086 = vst.msk [vmem:[#allocation2 + $0x320] sm:$0xf] %vm1060, %v1015
      %1087 = vst.msk [vmem:[#allocation2 + $0x340] sm:$0xf] %vm1060, %v1017
      %1088 = vst.msk [vmem:[#allocation2 + $0x360] sm:$0xf] %vm1060, %v1019
      %1089 = vst.msk [vmem:[#allocation2 + $0x380] sm:$0xf] %vm1060, %v1021
      %1090 = vst.msk [vmem:[#allocation2 + $0x3a0] sm:$0xf] %vm1060, %v1023
      %1091 = vst.msk [vmem:[#allocation2 + $0x3c0] sm:$0xf] %vm1060, %v1025
      %1092 = vst.msk [vmem:[#allocation2 + $0x3e0] sm:$0xf] %vm1060, %v1027
      %vm1093 = vsmask.f32 2304
      %vm1094 = vsmask.f32 6416
      %vm1095 = vmor %vm1093, %vm1094
      %v1096 = vrot.slane %v289, 5
      %v1097 = vrot.slane %v292, 6
      %v1098 = vor.u32 %v1096, %v1097
      %v1099 = vrot.slane %v1098, 4
      %v1100 = vrot.slane %v302, 5
      %v1101 = vrot.slane %v298, 6
      %v1102 = vor.u32 %v1100, %v1101
      %v1103 = vsel %vm1095, %v1099, %v1102
      %v1104 = vrot.slane %v1102, 4
      %v1105 = vshrl.u32 %v194, 16
      %v1107 = vrot.slane %v1105, 5
      %v1108 = vrot.slane %v308, 6
      %v1109 = vor.u32 %v1107, %v1108
      %v1110 = vsel %vm1095, %v1104, %v1109
      %v1111 = vrot.slane %v313, 5
      %v1112 = vrot.slane %v316, 6
      %v1113 = vor.u32 %v1111, %v1112
      %v1114 = vrot.slane %v1113, 4
      %v1115 = vrot.slane %v326, 5
      %v1116 = vrot.slane %v322, 6
      %v1117 = vor.u32 %v1115, %v1116
      %v1118 = vsel %vm1095, %v1114, %v1117
      %v1119 = vrot.slane %v1117, 4
      %v1120 = vshrl.u32 %v197, 16
      %v1122 = vrot.slane %v1120, 5
      %v1123 = vrot.slane %v332, 6
      %v1124 = vor.u32 %v1122, %v1123
      %v1125 = vsel %vm1095, %v1119, %v1124
      %v1126 = vrot.slane %v337, 5
      %v1127 = vrot.slane %v340, 6
      %v1128 = vor.u32 %v1126, %v1127
      %v1129 = vrot.slane %v1128, 4
      %v1130 = vrot.slane %v350, 5
      %v1131 = vrot.slane %v346, 6
      %v1132 = vor.u32 %v1130, %v1131
      %v1133 = vsel %vm1095, %v1129, %v1132
      %v1134 = vrot.slane %v1132, 4
      %v1135 = vshrl.u32 %v200, 16
      %v1137 = vrot.slane %v1135, 5
      %v1138 = vrot.slane %v356, 6
      %v1139 = vor.u32 %v1137, %v1138
      %v1140 = vsel %vm1095, %v1134, %v1139
      %v1141 = vrot.slane %v361, 5
      %v1142 = vrot.slane %v364, 6
      %v1143 = vor.u32 %v1141, %v1142
      %v1144 = vrot.slane %v1143, 4
      %v1145 = vrot.slane %v374, 5
      %v1146 = vrot.slane %v370, 6
      %v1147 = vor.u32 %v1145, %v1146
      %v1148 = vsel %vm1095, %v1144, %v1147
      %v1149 = vrot.slane %v1147, 4
      %v1150 = vshrl.u32 %v203, 16
      %v1152 = vrot.slane %v1150, 5
      %v1153 = vrot.slane %v380, 6
      %v1154 = vor.u32 %v1152, %v1153
      %v1155 = vsel %vm1095, %v1149, %v1154
      %v1156 = vrot.slane %v385, 5
      %v1157 = vrot.slane %v388, 6
      %v1158 = vor.u32 %v1156, %v1157
      %v1159 = vrot.slane %v1158, 4
      %v1160 = vrot.slane %v398, 5
      %v1161 = vrot.slane %v394, 6
      %v1162 = vor.u32 %v1160, %v1161
      %v1163 = vsel %vm1095, %v1159, %v1162
      %v1164 = vrot.slane %v1162, 4
      %v1165 = vshrl.u32 %v206, 16
      %v1167 = vrot.slane %v1165, 5
      %v1168 = vrot.slane %v404, 6
      %v1169 = vor.u32 %v1167, %v1168
      %v1170 = vsel %vm1095, %v1164, %v1169
      %v1171 = vrot.slane %v409, 5
      %v1172 = vrot.slane %v412, 6
      %v1173 = vor.u32 %v1171, %v1172
      %v1174 = vrot.slane %v1173, 4
      %v1175 = vrot.slane %v422, 5
      %v1176 = vrot.slane %v418, 6
      %v1177 = vor.u32 %v1175, %v1176
      %v1178 = vsel %vm1095, %v1174, %v1177
      %v1179 = vrot.slane %v1177, 4
      %v1180 = vshrl.u32 %v209, 16
      %v1182 = vrot.slane %v1180, 5
      %v1183 = vrot.slane %v428, 6
      %v1184 = vor.u32 %v1182, %v1183
      %v1185 = vsel %vm1095, %v1179, %v1184
      %v1186 = vrot.slane %v433, 5
      %v1187 = vrot.slane %v436, 6
      %v1188 = vor.u32 %v1186, %v1187
      %v1189 = vrot.slane %v1188, 4
      %v1190 = vrot.slane %v446, 5
      %v1191 = vrot.slane %v442, 6
      %v1192 = vor.u32 %v1190, %v1191
      %v1193 = vsel %vm1095, %v1189, %v1192
      %v1194 = vrot.slane %v1192, 4
      %v1195 = vshrl.u32 %v212, 16
      %v1197 = vrot.slane %v1195, 5
      %v1198 = vrot.slane %v452, 6
      %v1199 = vor.u32 %v1197, %v1198
      %v1200 = vsel %vm1095, %v1194, %v1199
      %v1201 = vrot.slane %v457, 5
      %v1202 = vrot.slane %v460, 6
      %v1203 = vor.u32 %v1201, %v1202
      %v1204 = vrot.slane %v1203, 4
      %v1205 = vrot.slane %v470, 5
      %v1206 = vrot.slane %v466, 6
      %v1207 = vor.u32 %v1205, %v1206
      %v1208 = vsel %vm1095, %v1204, %v1207
      %v1209 = vrot.slane %v1207, 4
      %v1210 = vshrl.u32 %v215, 16
      %v1212 = vrot.slane %v1210, 5
      %v1213 = vrot.slane %v476, 6
      %v1214 = vor.u32 %v1212, %v1213
      %v1215 = vsel %vm1095, %v1209, %v1214
      %v1216 = vrot.slane %v481, 5
      %v1217 = vrot.slane %v484, 6
      %v1218 = vor.u32 %v1216, %v1217
      %v1219 = vrot.slane %v1218, 4
      %v1220 = vrot.slane %v494, 5
      %v1221 = vrot.slane %v490, 6
      %v1222 = vor.u32 %v1220, %v1221
      %v1223 = vsel %vm1095, %v1219, %v1222
      %v1224 = vrot.slane %v1222, 4
      %v1225 = vshrl.u32 %v218, 16
      %v1227 = vrot.slane %v1225, 5
      %v1228 = vrot.slane %v500, 6
      %v1229 = vor.u32 %v1227, %v1228
      %v1230 = vsel %vm1095, %v1224, %v1229
      %v1231 = vrot.slane %v505, 5
      %v1232 = vrot.slane %v508, 6
      %v1233 = vor.u32 %v1231, %v1232
      %v1234 = vrot.slane %v1233, 4
      %v1235 = vrot.slane %v518, 5
      %v1236 = vrot.slane %v514, 6
      %v1237 = vor.u32 %v1235, %v1236
      %v1238 = vsel %vm1095, %v1234, %v1237
      %v1239 = vrot.slane %v1237, 4
      %v1240 = vshrl.u32 %v221, 16
      %v1242 = vrot.slane %v1240, 5
      %v1243 = vrot.slane %v524, 6
      %v1244 = vor.u32 %v1242, %v1243
      %v1245 = vsel %vm1095, %v1239, %v1244
      %v1246 = vrot.slane %v529, 5
      %v1247 = vrot.slane %v532, 6
      %v1248 = vor.u32 %v1246, %v1247
      %v1249 = vrot.slane %v1248, 4
      %v1250 = vrot.slane %v542, 5
      %v1251 = vrot.slane %v538, 6
      %v1252 = vor.u32 %v1250, %v1251
      %v1253 = vsel %vm1095, %v1249, %v1252
      %v1254 = vrot.slane %v1252, 4
      %v1255 = vshrl.u32 %v224, 16
      %v1257 = vrot.slane %v1255, 5
      %v1258 = vrot.slane %v548, 6
      %v1259 = vor.u32 %v1257, %v1258
      %v1260 = vsel %vm1095, %v1254, %v1259
      %v1261 = vrot.slane %v553, 5
      %v1262 = vrot.slane %v556, 6
      %v1263 = vor.u32 %v1261, %v1262
      %v1264 = vrot.slane %v1263, 4
      %v1265 = vrot.slane %v566, 5
      %v1266 = vrot.slane %v562, 6
      %v1267 = vor.u32 %v1265, %v1266
      %v1268 = vsel %vm1095, %v1264, %v1267
      %v1269 = vrot.slane %v1267, 4
      %v1270 = vshrl.u32 %v227, 16
      %v1272 = vrot.slane %v1270, 5
      %v1273 = vrot.slane %v572, 6
      %v1274 = vor.u32 %v1272, %v1273
      %v1275 = vsel %vm1095, %v1269, %v1274
      %v1276 = vrot.slane %v577, 5
      %v1277 = vrot.slane %v580, 6
      %v1278 = vor.u32 %v1276, %v1277
      %v1279 = vrot.slane %v1278, 4
      %v1280 = vrot.slane %v590, 5
      %v1281 = vrot.slane %v586, 6
      %v1282 = vor.u32 %v1280, %v1281
      %v1283 = vsel %vm1095, %v1279, %v1282
      %v1284 = vrot.slane %v1282, 4
      %v1285 = vshrl.u32 %v230, 16
      %v1287 = vrot.slane %v1285, 5
      %v1288 = vrot.slane %v596, 6
      %v1289 = vor.u32 %v1287, %v1288
      %v1290 = vsel %vm1095, %v1284, %v1289
      %v1291 = vrot.slane %v601, 5
      %v1292 = vrot.slane %v604, 6
      %v1293 = vor.u32 %v1291, %v1292
      %v1294 = vrot.slane %v1293, 4
      %v1295 = vrot.slane %v614, 5
      %v1296 = vrot.slane %v610, 6
      %v1297 = vor.u32 %v1295, %v1296
      %v1298 = vsel %vm1095, %v1294, %v1297
      %v1299 = vrot.slane %v1297, 4
      %v1300 = vshrl.u32 %v233, 16
      %v1302 = vrot.slane %v1300, 5
      %v1303 = vrot.slane %v620, 6
      %v1304 = vor.u32 %v1302, %v1303
      %v1305 = vsel %vm1095, %v1299, %v1304
      %v1306 = vrot.slane %v625, 5
      %v1307 = vrot.slane %v628, 6
      %v1308 = vor.u32 %v1306, %v1307
      %v1309 = vrot.slane %v1308, 4
      %v1310 = vrot.slane %v638, 5
      %v1311 = vrot.slane %v634, 6
      %v1312 = vor.u32 %v1310, %v1311
      %v1313 = vsel %vm1095, %v1309, %v1312
      %v1314 = vrot.slane %v1312, 4
      %v1315 = vshrl.u32 %v236, 16
      %v1317 = vrot.slane %v1315, 5
      %v1318 = vrot.slane %v644, 6
      %v1319 = vor.u32 %v1317, %v1318
      %v1320 = vsel %vm1095, %v1314, %v1319
      %v1321 = vrot.slane %v649, 5
      %v1322 = vrot.slane %v652, 6
      %v1323 = vor.u32 %v1321, %v1322
      %v1324 = vrot.slane %v1323, 4
      %v1325 = vrot.slane %v662, 5
      %v1326 = vrot.slane %v658, 6
      %v1327 = vor.u32 %v1325, %v1326
      %v1328 = vsel %vm1095, %v1324, %v1327
      %v1329 = vrot.slane %v1327, 4
      %v1330 = vshrl.u32 %v239, 16
      %v1332 = vrot.slane %v1330, 5
      %v1333 = vrot.slane %v668, 6
      %v1334 = vor.u32 %v1332, %v1333
      %v1335 = vsel %vm1095, %v1329, %v1334
      %1336 = vrot.lane.b32.xlu0 %v1103, 108
      %v1337 = vpop.permute.xlu0 %1336
      %1338 = vrot.lane.b32.xlu0 %v1110, 108
      %v1339 = vpop.permute.xlu0 %1338
      %1340 = vrot.lane.b32.xlu0 %v1118, 108
      %v1341 = vpop.permute.xlu0 %1340
      %1342 = vrot.lane.b32.xlu0 %v1125, 108
      %v1343 = vpop.permute.xlu0 %1342
      %1344 = vrot.lane.b32.xlu0 %v1133, 108
      %v1345 = vpop.permute.xlu0 %1344
      %1346 = vrot.lane.b32.xlu0 %v1140, 108
      %v1347 = vpop.permute.xlu0 %1346
      %1348 = vrot.lane.b32.xlu0 %v1148, 108
      %v1349 = vpop.permute.xlu0 %1348
      %1350 = vrot.lane.b32.xlu0 %v1155, 108
      %v1351 = vpop.permute.xlu0 %1350
      %1352 = vrot.lane.b32.xlu0 %v1163, 108
      %v1353 = vpop.permute.xlu0 %1352
      %1354 = vrot.lane.b32.xlu0 %v1170, 108
      %v1355 = vpop.permute.xlu0 %1354
      %1356 = vrot.lane.b32.xlu0 %v1178, 108
      %v1357 = vpop.permute.xlu0 %1356
      %1358 = vrot.lane.b32.xlu0 %v1185, 108
      %v1359 = vpop.permute.xlu0 %1358
      %1360 = vrot.lane.b32.xlu0 %v1193, 108
      %v1361 = vpop.permute.xlu0 %1360
      %1362 = vrot.lane.b32.xlu0 %v1200, 108
      %v1363 = vpop.permute.xlu0 %1362
      %1364 = vrot.lane.b32.xlu0 %v1208, 108
      %v1365 = vpop.permute.xlu0 %1364
      %1366 = vrot.lane.b32.xlu0 %v1215, 108
      %v1367 = vpop.permute.xlu0 %1366
      %1368 = vrot.lane.b32.xlu0 %v1223, 108
      %v1369 = vpop.permute.xlu0 %1368
      %1370 = vrot.lane.b32.xlu0 %v1230, 108
      %v1371 = vpop.permute.xlu0 %1370
      %1372 = vrot.lane.b32.xlu0 %v1238, 108
      %v1373 = vpop.permute.xlu0 %1372
      %1374 = vrot.lane.b32.xlu0 %v1245, 108
      %v1375 = vpop.permute.xlu0 %1374
      %1376 = vrot.lane.b32.xlu0 %v1253, 108
      %v1377 = vpop.permute.xlu0 %1376
      %1378 = vrot.lane.b32.xlu0 %v1260, 108
      %v1379 = vpop.permute.xlu0 %1378
      %1380 = vrot.lane.b32.xlu0 %v1268, 108
      %v1381 = vpop.permute.xlu0 %1380
      %1382 = vrot.lane.b32.xlu0 %v1275, 108
      %v1383 = vpop.permute.xlu0 %1382
      %1384 = vrot.lane.b32.xlu0 %v1283, 108
      %v1385 = vpop.permute.xlu0 %1384
      %1386 = vrot.lane.b32.xlu0 %v1290, 108
      %v1387 = vpop.permute.xlu0 %1386
      %1388 = vrot.lane.b32.xlu0 %v1298, 108
      %v1389 = vpop.permute.xlu0 %1388
      %1390 = vrot.lane.b32.xlu0 %v1305, 108
      %v1391 = vpop.permute.xlu0 %1390
      %1392 = vrot.lane.b32.xlu0 %v1313, 108
      %v1393 = vpop.permute.xlu0 %1392
      %1394 = vrot.lane.b32.xlu0 %v1320, 108
      %v1395 = vpop.permute.xlu0 %1394
      %1396 = vrot.lane.b32.xlu0 %v1328, 108
      %v1397 = vpop.permute.xlu0 %1396
      %1398 = vrot.lane.b32.xlu0 %v1335, 108
      %v1399 = vpop.permute.xlu0 %1398
      %v1400 = vrot.slane %v1337, 4
      %v1401 = vrot.slane %v1339, 4
      %v1402 = vrot.slane %v1341, 4
      %v1403 = vrot.slane %v1343, 4
      %v1404 = vrot.slane %v1345, 4
      %v1405 = vrot.slane %v1347, 4
      %v1406 = vrot.slane %v1349, 4
      %v1407 = vrot.slane %v1351, 4
      %v1408 = vrot.slane %v1353, 4
      %v1409 = vrot.slane %v1355, 4
      %v1410 = vrot.slane %v1357, 4
      %v1411 = vrot.slane %v1359, 4
      %v1412 = vrot.slane %v1361, 4
      %v1413 = vrot.slane %v1363, 4
      %v1414 = vrot.slane %v1365, 4
      %v1415 = vrot.slane %v1367, 4
      %v1416 = vrot.slane %v1369, 4
      %v1417 = vrot.slane %v1371, 4
      %v1418 = vrot.slane %v1373, 4
      %v1419 = vrot.slane %v1375, 4
      %v1420 = vrot.slane %v1377, 4
      %v1421 = vrot.slane %v1379, 4
      %v1422 = vrot.slane %v1381, 4
      %v1423 = vrot.slane %v1383, 4
      %v1424 = vrot.slane %v1385, 4
      %v1425 = vrot.slane %v1387, 4
      %v1426 = vrot.slane %v1389, 4
      %v1427 = vrot.slane %v1391, 4
      %v1428 = vrot.slane %v1393, 4
      %v1429 = vrot.slane %v1395, 4
      %v1430 = vrot.slane %v1397, 4
      %v1431 = vrot.slane %v1399, 4
      %vm1432 = vcmask 883712
      %v1433 = vsel %vm1432, %v1400, %v1337
      %v1434 = vsel %vm1432, %v1401, %v1339
      %v1435 = vsel %vm1432, %v1402, %v1341
      %v1436 = vsel %vm1432, %v1403, %v1343
      %v1437 = vsel %vm1432, %v1404, %v1345
      %v1438 = vsel %vm1432, %v1405, %v1347
      %v1439 = vsel %vm1432, %v1406, %v1349
      %v1440 = vsel %vm1432, %v1407, %v1351
      %v1441 = vsel %vm1432, %v1408, %v1353
      %v1442 = vsel %vm1432, %v1409, %v1355
      %v1443 = vsel %vm1432, %v1410, %v1357
      %v1444 = vsel %vm1432, %v1411, %v1359
      %v1445 = vsel %vm1432, %v1412, %v1361
      %v1446 = vsel %vm1432, %v1413, %v1363
      %v1447 = vsel %vm1432, %v1414, %v1365
      %v1448 = vsel %vm1432, %v1415, %v1367
      %v1449 = vsel %vm1432, %v1416, %v1369
      %v1450 = vsel %vm1432, %v1417, %v1371
      %v1451 = vsel %vm1432, %v1418, %v1373
      %v1452 = vsel %vm1432, %v1419, %v1375
      %v1453 = vsel %vm1432, %v1420, %v1377
      %v1454 = vsel %vm1432, %v1421, %v1379
      %v1455 = vsel %vm1432, %v1422, %v1381
      %v1456 = vsel %vm1432, %v1423, %v1383
      %v1457 = vsel %vm1432, %v1424, %v1385
      %v1458 = vsel %vm1432, %v1425, %v1387
      %v1459 = vsel %vm1432, %v1426, %v1389
      %v1460 = vsel %vm1432, %v1427, %v1391
      %v1461 = vsel %vm1432, %v1428, %v1393
      %v1462 = vsel %vm1432, %v1429, %v1395
      %v1463 = vsel %vm1432, %v1430, %v1397
      %v1464 = vsel %vm1432, %v1431, %v1399
      %vm1497 = vcmask 1044320
      %vm1498 = vcmask 130052
      %vm1499 = vmor %vm1498, %vm1497
      %1500 = vst.msk [vmem:[#allocation2] sm:$0xff] %vm1499, %v1433
      %1501 = vst.msk [vmem:[#allocation2 + $0x20] sm:$0xff] %vm1499, %v1434
      %1502 = vst.msk [vmem:[#allocation2 + $0x40] sm:$0xff] %vm1499, %v1435
      %1503 = vst.msk [vmem:[#allocation2 + $0x60] sm:$0xff] %vm1499, %v1436
      %1504 = vst.msk [vmem:[#allocation2 + $0x80] sm:$0xff] %vm1499, %v1437
      %1505 = vst.msk [vmem:[#allocation2 + $0xa0] sm:$0xff] %vm1499, %v1438
      %1506 = vst.msk [vmem:[#allocation2 + $0xc0] sm:$0xff] %vm1499, %v1439
      %1507 = vst.msk [vmem:[#allocation2 + $0xe0] sm:$0xff] %vm1499, %v1440
      %1508 = vst.msk [vmem:[#allocation2 + $0x100] sm:$0xff] %vm1499, %v1441
      %1509 = vst.msk [vmem:[#allocation2 + $0x120] sm:$0xff] %vm1499, %v1442
      %1510 = vst.msk [vmem:[#allocation2 + $0x140] sm:$0xff] %vm1499, %v1443
      %1511 = vst.msk [vmem:[#allocation2 + $0x160] sm:$0xff] %vm1499, %v1444
      %1512 = vst.msk [vmem:[#allocation2 + $0x180] sm:$0xff] %vm1499, %v1445
      %1513 = vst.msk [vmem:[#allocation2 + $0x1a0] sm:$0xff] %vm1499, %v1446
      %1514 = vst.msk [vmem:[#allocation2 + $0x1c0] sm:$0xff] %vm1499, %v1447
      %1515 = vst.msk [vmem:[#allocation2 + $0x1e0] sm:$0xff] %vm1499, %v1448
      %1516 = vst.msk [vmem:[#allocation2 + $0x200] sm:$0xff] %vm1499, %v1449
      %1517 = vst.msk [vmem:[#allocation2 + $0x220] sm:$0xff] %vm1499, %v1450
      %1518 = vst.msk [vmem:[#allocation2 + $0x240] sm:$0xff] %vm1499, %v1451
      %1519 = vst.msk [vmem:[#allocation2 + $0x260] sm:$0xff] %vm1499, %v1452
      %1520 = vst.msk [vmem:[#allocation2 + $0x280] sm:$0xff] %vm1499, %v1453
      %1521 = vst.msk [vmem:[#allocation2 + $0x2a0] sm:$0xff] %vm1499, %v1454
      %1522 = vst.msk [vmem:[#allocation2 + $0x2c0] sm:$0xff] %vm1499, %v1455
      %1523 = vst.msk [vmem:[#allocation2 + $0x2e0] sm:$0xff] %vm1499, %v1456
      %1524 = vst.msk [vmem:[#allocation2 + $0x300] sm:$0xff] %vm1499, %v1457
      %1525 = vst.msk [vmem:[#allocation2 + $0x320] sm:$0xff] %vm1499, %v1458
      %1526 = vst.msk [vmem:[#allocation2 + $0x340] sm:$0xff] %vm1499, %v1459
      %1527 = vst.msk [vmem:[#allocation2 + $0x360] sm:$0xff] %vm1499, %v1460
      %1528 = vst.msk [vmem:[#allocation2 + $0x380] sm:$0xff] %vm1499, %v1461
      %1529 = vst.msk [vmem:[#allocation2 + $0x3a0] sm:$0xff] %vm1499, %v1462
      %1530 = vst.msk [vmem:[#allocation2 + $0x3c0] sm:$0xff] %vm1499, %v1463
      %1531 = vst.msk [vmem:[#allocation2 + $0x3e0] sm:$0xff] %vm1499, %v1464
      %vm1532 = vcmask 1041408
      %vm1533 = vcmask 1045508
      %vm1534 = vmor %vm1532, %vm1533
      %v1535 = vrot.slane %v192, 6
      %v1536 = vrot.slane %v1535, 4
      %v1537 = vrot.slane %v193, 6
      %v1538 = vsel %vm1534, %v1536, %v1537
      %v1539 = vrot.slane %v1537, 4
      %v1540 = vrot.slane %v194, 6
      %v1541 = vsel %vm1534, %v1539, %v1540
      %v1542 = vrot.slane %v195, 6
      %v1543 = vrot.slane %v1542, 4
      %v1544 = vrot.slane %v196, 6
      %v1545 = vsel %vm1534, %v1543, %v1544
      %v1546 = vrot.slane %v1544, 4
      %v1547 = vrot.slane %v197, 6
      %v1548 = vsel %vm1534, %v1546, %v1547
      %v1549 = vrot.slane %v198, 6
      %v1550 = vrot.slane %v1549, 4
      %v1551 = vrot.slane %v199, 6
      %v1552 = vsel %vm1534, %v1550, %v1551
      %v1553 = vrot.slane %v1551, 4
      %v1554 = vrot.slane %v200, 6
      %v1555 = vsel %vm1534, %v1553, %v1554
      %v1556 = vrot.slane %v201, 6
      %v1557 = vrot.slane %v1556, 4
      %v1558 = vrot.slane %v202, 6
      %v1559 = vsel %vm1534, %v1557, %v1558
      %v1560 = vrot.slane %v1558, 4
      %v1561 = vrot.slane %v203, 6
      %v1562 = vsel %vm1534, %v1560, %v1561
      %v1563 = vrot.slane %v204, 6
      %v1564 = vrot.slane %v1563, 4
      %v1565 = vrot.slane %v205, 6
      %v1566 = vsel %vm1534, %v1564, %v1565
      %v1567 = vrot.slane %v1565, 4
      %v1568 = vrot.slane %v206, 6
      %v1569 = vsel %vm1534, %v1567, %v1568
      %v1570 = vrot.slane %v207, 6
      %v1571 = vrot.slane %v1570, 4
      %v1572 = vrot.slane %v208, 6
      %v1573 = vsel %vm1534, %v1571, %v1572
      %v1574 = vrot.slane %v1572, 4
      %v1575 = vrot.slane %v209, 6
      %v1576 = vsel %vm1534, %v1574, %v1575
      %v1577 = vrot.slane %v210, 6
      %v1578 = vrot.slane %v1577, 4
      %v1579 = vrot.slane %v211, 6
      %v1580 = vsel %vm1534, %v1578, %v1579
      %v1581 = vrot.slane %v1579, 4
      %v1582 = vrot.slane %v212, 6
      %v1583 = vsel %vm1534, %v1581, %v1582
      %v1584 = vrot.slane %v213, 6
      %v1585 = vrot.slane %v1584, 4
      %v1586 = vrot.slane %v214, 6
      %v1587 = vsel %vm1534, %v1585, %v1586
      %v1588 = vrot.slane %v1586, 4
      %v1589 = vrot.slane %v215, 6
      %v1590 = vsel %vm1534, %v1588, %v1589
      %v1591 = vrot.slane %v216, 6
      %v1592 = vrot.slane %v1591, 4
      %v1593 = vrot.slane %v217, 6
      %v1594 = vsel %vm1534, %v1592, %v1593
      %v1595 = vrot.slane %v1593, 4
      %v1596 = vrot.slane %v218, 6
      %v1597 = vsel %vm1534, %v1595, %v1596
      %v1598 = vrot.slane %v219, 6
      %v1599 = vrot.slane %v1598, 4
      %v1600 = vrot.slane %v220, 6
      %v1601 = vsel %vm1534, %v1599, %v1600
      %v1602 = vrot.slane %v1600, 4
      %v1603 = vrot.slane %v221, 6
      %v1604 = vsel %vm1534, %v1602, %v1603
      %v1605 = vrot.slane %v222, 6
      %v1606 = vrot.slane %v1605, 4
      %v1607 = vrot.slane %v223, 6
      %v1608 = vsel %vm1534, %v1606, %v1607
      %v1609 = vrot.slane %v1607, 4
      %v1610 = vrot.slane %v224, 6
      %v1611 = vsel %vm1534, %v1609, %v1610
      %v1612 = vrot.slane %v225, 6
      %v1613 = vrot.slane %v1612, 4
      %v1614 = vrot.slane %v226, 6
      %v1615 = vsel %vm1534, %v1613, %v1614
      %v1616 = vrot.slane %v1614, 4
      %v1617 = vrot.slane %v227, 6
      %v1618 = vsel %vm1534, %v1616, %v1617
      %v1619 = vrot.slane %v228, 6
      %v1620 = vrot.slane %v1619, 4
      %v1621 = vrot.slane %v229, 6
      %v1622 = vsel %vm1534, %v1620, %v1621
      %v1623 = vrot.slane %v1621, 4
      %v1624 = vrot.slane %v230, 6
      %v1625 = vsel %vm1534, %v1623, %v1624
      %v1626 = vrot.slane %v231, 6
      %v1627 = vrot.slane %v1626, 4
      %v1628 = vrot.slane %v232, 6
      %v1629 = vsel %vm1534, %v1627, %v1628
      %v1630 = vrot.slane %v1628, 4
      %v1631 = vrot.slane %v233, 6
      %v1632 = vsel %vm1534, %v1630, %v1631
      %v1633 = vrot.slane %v234, 6
      %v1634 = vrot.slane %v1633, 4
      %v1635 = vrot.slane %v235, 6
      %v1636 = vsel %vm1534, %v1634, %v1635
      %v1637 = vrot.slane %v1635, 4
      %v1638 = vrot.slane %v236, 6
      %v1639 = vsel %vm1534, %v1637, %v1638
      %v1640 = vrot.slane %v237, 6
      %v1641 = vrot.slane %v1640, 4
      %v1642 = vrot.slane %v238, 6
      %v1643 = vsel %vm1534, %v1641, %v1642
      %v1644 = vrot.slane %v1642, 4
      %v1645 = vrot.slane %v239, 6
      %v1646 = vsel %vm1534, %v1644, %v1645
      %1647 = vrot.lane.b32.xlu0 %v1538, 16
      %v1648 = vpop.permute.xlu0 %1647
      %1649 = vrot.lane.b32.xlu0 %v1541, 16
      %v1650 = vpop.permute.xlu0 %1649
      %1651 = vrot.lane.b32.xlu0 %v1545, 16
      %v1652 = vpop.permute.xlu0 %1651
      %1653 = vrot.lane.b32.xlu0 %v1548, 16
      %v1654 = vpop.permute.xlu0 %1653
      %1655 = vrot.lane.b32.xlu0 %v1552, 16
      %v1656 = vpop.permute.xlu0 %1655
      %1657 = vrot.lane.b32.xlu0 %v1555, 16
      %v1658 = vpop.permute.xlu0 %1657
      %1659 = vrot.lane.b32.xlu0 %v1559, 16
      %v1660 = vpop.permute.xlu0 %1659
      %1661 = vrot.lane.b32.xlu0 %v1562, 16
      %v1662 = vpop.permute.xlu0 %1661
      %1663 = vrot.lane.b32.xlu0 %v1566, 16
      %v1664 = vpop.permute.xlu0 %1663
      %1665 = vrot.lane.b32.xlu0 %v1569, 16
      %v1666 = vpop.permute.xlu0 %1665
      %1667 = vrot.lane.b32.xlu0 %v1573, 16
      %v1668 = vpop.permute.xlu0 %1667
      %1669 = vrot.lane.b32.xlu0 %v1576, 16
      %v1670 = vpop.permute.xlu0 %1669
      %1671 = vrot.lane.b32.xlu0 %v1580, 16
      %v1672 = vpop.permute.xlu0 %1671
      %1673 = vrot.lane.b32.xlu0 %v1583, 16
      %v1674 = vpop.permute.xlu0 %1673
      %1675 = vrot.lane.b32.xlu0 %v1587, 16
      %v1676 = vpop.permute.xlu0 %1675
      %1677 = vrot.lane.b32.xlu0 %v1590, 16
      %v1678 = vpop.permute.xlu0 %1677
      %1679 = vrot.lane.b32.xlu0 %v1594, 16
      %v1680 = vpop.permute.xlu0 %1679
      %1681 = vrot.lane.b32.xlu0 %v1597, 16
      %v1682 = vpop.permute.xlu0 %1681
      %1683 = vrot.lane.b32.xlu0 %v1601, 16
      %v1684 = vpop.permute.xlu0 %1683
      %1685 = vrot.lane.b32.xlu0 %v1604, 16
      %v1686 = vpop.permute.xlu0 %1685
      %1687 = vrot.lane.b32.xlu0 %v1608, 16
      %v1688 = vpop.permute.xlu0 %1687
      %1689 = vrot.lane.b32.xlu0 %v1611, 16
      %v1690 = vpop.permute.xlu0 %1689
      %1691 = vrot.lane.b32.xlu0 %v1615, 16
      %v1692 = vpop.permute.xlu0 %1691
      %1693 = vrot.lane.b32.xlu0 %v1618, 16
      %v1694 = vpop.permute.xlu0 %1693
      %1695 = vrot.lane.b32.xlu0 %v1622, 16
      %v1696 = vpop.permute.xlu0 %1695
      %1697 = vrot.lane.b32.xlu0 %v1625, 16
      %v1698 = vpop.permute.xlu0 %1697
      %1699 = vrot.lane.b32.xlu0 %v1629, 16
      %v1700 = vpop.permute.xlu0 %1699
      %1701 = vrot.lane.b32.xlu0 %v1632, 16
      %v1702 = vpop.permute.xlu0 %1701
      %1703 = vrot.lane.b32.xlu0 %v1636, 16
      %v1704 = vpop.permute.xlu0 %1703
      %1705 = vrot.lane.b32.xlu0 %v1639, 16
      %v1706 = vpop.permute.xlu0 %1705
      %1707 = vrot.lane.b32.xlu0 %v1643, 16
      %v1708 = vpop.permute.xlu0 %1707
      %1709 = vrot.lane.b32.xlu0 %v1646, 16
      %v1710 = vpop.permute.xlu0 %1709
      %vm1743 = vcmask 420992
      %1744 = vst.msk [vmem:[#allocation2 + $0x4] sm:$0xf] %vm1743, %v1648
      %1745 = vst.msk [vmem:[#allocation2 + $0x24] sm:$0xf] %vm1743, %v1650
      %1746 = vst.msk [vmem:[#allocation2 + $0x44] sm:$0xf] %vm1743, %v1652
      %1747 = vst.msk [vmem:[#allocation2 + $0x64] sm:$0xf] %vm1743, %v1654
      %1748 = vst.msk [vmem:[#allocation2 + $0x84] sm:$0xf] %vm1743, %v1656
      %1749 = vst.msk [vmem:[#allocation2 + $0xa4] sm:$0xf] %vm1743, %v1658
      %1750 = vst.msk [vmem:[#allocation2 + $0xc4] sm:$0xf] %vm1743, %v1660
      %1751 = vst.msk [vmem:[#allocation2 + $0xe4] sm:$0xf] %vm1743, %v1662
      %1752 = vst.msk [vmem:[#allocation2 + $0x104] sm:$0xf] %vm1743, %v1664
      %1753 = vst.msk [vmem:[#allocation2 + $0x124] sm:$0xf] %vm1743, %v1666
      %1754 = vst.msk [vmem:[#allocation2 + $0x144] sm:$0xf] %vm1743, %v1668
      %1755 = vst.msk [vmem:[#allocation2 + $0x164] sm:$0xf] %vm1743, %v1670
      %1756 = vst.msk [vmem:[#allocation2 + $0x184] sm:$0xf] %vm1743, %v1672
      %1757 = vst.msk [vmem:[#allocation2 + $0x1a4] sm:$0xf] %vm1743, %v1674
      %1758 = vst.msk [vmem:[#allocation2 + $0x1c4] sm:$0xf] %vm1743, %v1676
      %1759 = vst.msk [vmem:[#allocation2 + $0x1e4] sm:$0xf] %vm1743, %v1678
      %1760 = vst.msk [vmem:[#allocation2 + $0x204] sm:$0xf] %vm1743, %v1680
      %1761 = vst.msk [vmem:[#allocation2 + $0x224] sm:$0xf] %vm1743, %v1682
      %1762 = vst.msk [vmem:[#allocation2 + $0x244] sm:$0xf] %vm1743, %v1684
      %1763 = vst.msk [vmem:[#allocation2 + $0x264] sm:$0xf] %vm1743, %v1686
      %1764 = vst.msk [vmem:[#allocation2 + $0x284] sm:$0xf] %vm1743, %v1688
      %1765 = vst.msk [vmem:[#allocation2 + $0x2a4] sm:$0xf] %vm1743, %v1690
      %1766 = vst.msk [vmem:[#allocation2 + $0x2c4] sm:$0xf] %vm1743, %v1692
      %1767 = vst.msk [vmem:[#allocation2 + $0x2e4] sm:$0xf] %vm1743, %v1694
      %1768 = vst.msk [vmem:[#allocation2 + $0x304] sm:$0xf] %vm1743, %v1696
      %1769 = vst.msk [vmem:[#allocation2 + $0x324] sm:$0xf] %vm1743, %v1698
      %1770 = vst.msk [vmem:[#allocation2 + $0x344] sm:$0xf] %vm1743, %v1700
      %1771 = vst.msk [vmem:[#allocation2 + $0x364] sm:$0xf] %vm1743, %v1702
      %1772 = vst.msk [vmem:[#allocation2 + $0x384] sm:$0xf] %vm1743, %v1704
      %1773 = vst.msk [vmem:[#allocation2 + $0x3a4] sm:$0xf] %vm1743, %v1706
      %1774 = vst.msk [vmem:[#allocation2 + $0x3c4] sm:$0xf] %vm1743, %v1708
      %1775 = vst.msk [vmem:[#allocation2 + $0x3e4] sm:$0xf] %vm1743, %v1710
      %1778 = vrot.lane.b32.xlu0 %v195, 52
      %v1779 = vpop.permute.xlu0 %1778
      %1780 = vrot.lane.b32.xlu0 %v196, 52
      %v1781 = vpop.permute.xlu0 %1780
      %1782 = vrot.lane.b32.xlu0 %v198, 52
      %v1783 = vpop.permute.xlu0 %1782
      %1784 = vrot.lane.b32.xlu0 %v199, 52
      %v1785 = vpop.permute.xlu0 %1784
      %1786 = vrot.lane.b32.xlu0 %v201, 52
      %v1787 = vpop.permute.xlu0 %1786
      %1788 = vrot.lane.b32.xlu0 %v202, 52
      %v1789 = vpop.permute.xlu0 %1788
      %1790 = vrot.lane.b32.xlu0 %v204, 52
      %v1791 = vpop.permute.xlu0 %1790
      %1792 = vrot.lane.b32.xlu0 %v205, 52
      %v1793 = vpop.permute.xlu0 %1792
      %1794 = vrot.lane.b32.xlu0 %v207, 52
      %v1795 = vpop.permute.xlu0 %1794
      %1796 = vrot.lane.b32.xlu0 %v208, 52
      %v1797 = vpop.permute.xlu0 %1796
      %1798 = vrot.lane.b32.xlu0 %v210, 52
      %v1799 = vpop.permute.xlu0 %1798
      %1800 = vrot.lane.b32.xlu0 %v211, 52
      %v1801 = vpop.permute.xlu0 %1800
      %1802 = vrot.lane.b32.xlu0 %v213, 52
      %v1803 = vpop.permute.xlu0 %1802
      %1804 = vrot.lane.b32.xlu0 %v214, 52
      %v1805 = vpop.permute.xlu0 %1804
      %1806 = vrot.lane.b32.xlu0 %v216, 52
      %v1807 = vpop.permute.xlu0 %1806
      %1808 = vrot.lane.b32.xlu0 %v217, 52
      %v1809 = vpop.permute.xlu0 %1808
      %1810 = vrot.lane.b32.xlu0 %v219, 52
      %v1811 = vpop.permute.xlu0 %1810
      %1812 = vrot.lane.b32.xlu0 %v220, 52
      %v1813 = vpop.permute.xlu0 %1812
      %1814 = vrot.lane.b32.xlu0 %v222, 52
      %v1815 = vpop.permute.xlu0 %1814
      %1816 = vrot.lane.b32.xlu0 %v223, 52
      %v1817 = vpop.permute.xlu0 %1816
      %1818 = vrot.lane.b32.xlu0 %v225, 52
      %v1819 = vpop.permute.xlu0 %1818
      %1820 = vrot.lane.b32.xlu0 %v226, 52
      %v1821 = vpop.permute.xlu0 %1820
      %1822 = vrot.lane.b32.xlu0 %v228, 52
      %v1823 = vpop.permute.xlu0 %1822
      %1824 = vrot.lane.b32.xlu0 %v229, 52
      %v1825 = vpop.permute.xlu0 %1824
      %1826 = vrot.lane.b32.xlu0 %v231, 52
      %v1827 = vpop.permute.xlu0 %1826
      %1828 = vrot.lane.b32.xlu0 %v232, 52
      %v1829 = vpop.permute.xlu0 %1828
      %1830 = vrot.lane.b32.xlu0 %v234, 52
      %v1831 = vpop.permute.xlu0 %1830
      %1832 = vrot.lane.b32.xlu0 %v235, 52
      %v1833 = vpop.permute.xlu0 %1832
      %1834 = vrot.lane.b32.xlu0 %v237, 52
      %v1835 = vpop.permute.xlu0 %1834
      %1836 = vrot.lane.b32.xlu0 %v238, 52
      %v1837 = vpop.permute.xlu0 %1836
      %1838 = vrot.lane.b32.xlu0 %v240, 52
      %v1839 = vpop.permute.xlu0 %1838
      %1840 = vrot.lane.b32.xlu0 %v241, 52
      %v1841 = vpop.permute.xlu0 %1840
      %vm1874 = vcmask 716192
      %1875 = vst.msk [vmem:[#allocation2 + $0x4] sm:$0xf] %vm1874, %v1779
      %1876 = vst.msk [vmem:[#allocation2 + $0x24] sm:$0xf] %vm1874, %v1781
      %1877 = vst.msk [vmem:[#allocation2 + $0x44] sm:$0xf] %vm1874, %v1783
      %1878 = vst.msk [vmem:[#allocation2 + $0x64] sm:$0xf] %vm1874, %v1785
      %1879 = vst.msk [vmem:[#allocation2 + $0x84] sm:$0xf] %vm1874, %v1787
      %1880 = vst.msk [vmem:[#allocation2 + $0xa4] sm:$0xf] %vm1874, %v1789
      %1881 = vst.msk [vmem:[#allocation2 + $0xc4] sm:$0xf] %vm1874, %v1791
      %1882 = vst.msk [vmem:[#allocation2 + $0xe4] sm:$0xf] %vm1874, %v1793
      %1883 = vst.msk [vmem:[#allocation2 + $0x104] sm:$0xf] %vm1874, %v1795
      %1884 = vst.msk [vmem:[#allocation2 + $0x124] sm:$0xf] %vm1874, %v1797
      %1885 = vst.msk [vmem:[#allocation2 + $0x144] sm:$0xf] %vm1874, %v1799
      %1886 = vst.msk [vmem:[#allocation2 + $0x164] sm:$0xf] %vm1874, %v1801
      %1887 = vst.msk [vmem:[#allocation2 + $0x184] sm:$0xf] %vm1874, %v1803
      %1888 = vst.msk [vmem:[#allocation2 + $0x1a4] sm:$0xf] %vm1874, %v1805
      %1889 = vst.msk [vmem:[#allocation2 + $0x1c4] sm:$0xf] %vm1874, %v1807
      %1890 = vst.msk [vmem:[#allocation2 + $0x1e4] sm:$0xf] %vm1874, %v1809
      %1891 = vst.msk [vmem:[#allocation2 + $0x204] sm:$0xf] %vm1874, %v1811
      %1892 = vst.msk [vmem:[#allocation2 + $0x224] sm:$0xf] %vm1874, %v1813
      %1893 = vst.msk [vmem:[#allocation2 + $0x244] sm:$0xf] %vm1874, %v1815
      %1894 = vst.msk [vmem:[#allocation2 + $0x264] sm:$0xf] %vm1874, %v1817
      %1895 = vst.msk [vmem:[#allocation2 + $0x284] sm:$0xf] %vm1874, %v1819
      %1896 = vst.msk [vmem:[#allocation2 + $0x2a4] sm:$0xf] %vm1874, %v1821
      %1897 = vst.msk [vmem:[#allocation2 + $0x2c4] sm:$0xf] %vm1874, %v1823
      %1898 = vst.msk [vmem:[#allocation2 + $0x2e4] sm:$0xf] %vm1874, %v1825
      %1899 = vst.msk [vmem:[#allocation2 + $0x304] sm:$0xf] %vm1874, %v1827
      %1900 = vst.msk [vmem:[#allocation2 + $0x324] sm:$0xf] %vm1874, %v1829
      %1901 = vst.msk [vmem:[#allocation2 + $0x344] sm:$0xf] %vm1874, %v1831
      %1902 = vst.msk [vmem:[#allocation2 + $0x364] sm:$0xf] %vm1874, %v1833
      %1903 = vst.msk [vmem:[#allocation2 + $0x384] sm:$0xf] %vm1874, %v1835
      %1904 = vst.msk [vmem:[#allocation2 + $0x3a4] sm:$0xf] %vm1874, %v1837
      %1905 = vst.msk [vmem:[#allocation2 + $0x3c4] sm:$0xf] %vm1874, %v1839
      %1906 = vst.msk [vmem:[#allocation2 + $0x3e4] sm:$0xf] %vm1874, %v1841
      %v1908 = vshrl.u32 %v240, 16
      %v1910 = vrot.slane %v1908, 4
      %v1911 = vshll.u32 %v240, 16
      %v1913 = vrot.slane %v1911, 5
      %v1914 = vor.u32 %v1910, %v1913
      %v1915 = vrot.slane %v1914, 4
      %v1917 = vshll.u32 %v241, 16
      %v1919 = vrot.slane %v1917, 5
      %v1920 = vsel %vm287, %v1915, %v1919
      %v1921 = vshrl.u32 %v241, 16
      %v1923 = vrot.slane %v1921, 4
      %v1924 = vor.u32 %v1923, %v1919
      %v1925 = vrot.slane %v1924, 4
      %v1927 = vshll.u32 %v242, 16
      %v1929 = vrot.slane %v1927, 5
      %v1930 = vsel %vm287, %v1925, %v1929
      %1931 = vrot.lane.b32.xlu0 %v325, 88
      %v1932 = vpop.permute.xlu0 %1931
      %1933 = vrot.lane.b32.xlu0 %v335, 88
      %v1934 = vpop.permute.xlu0 %1933
      %1935 = vrot.lane.b32.xlu0 %v349, 88
      %v1936 = vpop.permute.xlu0 %1935
      %1937 = vrot.lane.b32.xlu0 %v359, 88
      %v1938 = vpop.permute.xlu0 %1937
      %1939 = vrot.lane.b32.xlu0 %v373, 88
      %v1940 = vpop.permute.xlu0 %1939
      %1941 = vrot.lane.b32.xlu0 %v383, 88
      %v1942 = vpop.permute.xlu0 %1941
      %1943 = vrot.lane.b32.xlu0 %v397, 88
      %v1944 = vpop.permute.xlu0 %1943
      %1945 = vrot.lane.b32.xlu0 %v407, 88
      %v1946 = vpop.permute.xlu0 %1945
      %1947 = vrot.lane.b32.xlu0 %v421, 88
      %v1948 = vpop.permute.xlu0 %1947
      %1949 = vrot.lane.b32.xlu0 %v431, 88
      %v1950 = vpop.permute.xlu0 %1949
      %1951 = vrot.lane.b32.xlu0 %v445, 88
      %v1952 = vpop.permute.xlu0 %1951
      %1953 = vrot.lane.b32.xlu0 %v455, 88
      %v1954 = vpop.permute.xlu0 %1953
      %1955 = vrot.lane.b32.xlu0 %v469, 88
      %v1956 = vpop.permute.xlu0 %1955
      %1957 = vrot.lane.b32.xlu0 %v479, 88
      %v1958 = vpop.permute.xlu0 %1957
      %1959 = vrot.lane.b32.xlu0 %v493, 88
      %v1960 = vpop.permute.xlu0 %1959
      %1961 = vrot.lane.b32.xlu0 %v503, 88
      %v1962 = vpop.permute.xlu0 %1961
      %1963 = vrot.lane.b32.xlu0 %v517, 88
      %v1964 = vpop.permute.xlu0 %1963
      %1965 = vrot.lane.b32.xlu0 %v527, 88
      %v1966 = vpop.permute.xlu0 %1965
      %1967 = vrot.lane.b32.xlu0 %v541, 88
      %v1968 = vpop.permute.xlu0 %1967
      %1969 = vrot.lane.b32.xlu0 %v551, 88
      %v1970 = vpop.permute.xlu0 %1969
      %1971 = vrot.lane.b32.xlu0 %v565, 88
      %v1972 = vpop.permute.xlu0 %1971
      %1973 = vrot.lane.b32.xlu0 %v575, 88
      %v1974 = vpop.permute.xlu0 %1973
      %1975 = vrot.lane.b32.xlu0 %v589, 88
      %v1976 = vpop.permute.xlu0 %1975
      %1977 = vrot.lane.b32.xlu0 %v599, 88
      %v1978 = vpop.permute.xlu0 %1977
      %1979 = vrot.lane.b32.xlu0 %v613, 88
      %v1980 = vpop.permute.xlu0 %1979
      %1981 = vrot.lane.b32.xlu0 %v623, 88
      %v1982 = vpop.permute.xlu0 %1981
      %1983 = vrot.lane.b32.xlu0 %v637, 88
      %v1984 = vpop.permute.xlu0 %1983
      %1985 = vrot.lane.b32.xlu0 %v647, 88
      %v1986 = vpop.permute.xlu0 %1985
      %1987 = vrot.lane.b32.xlu0 %v661, 88
      %v1988 = vpop.permute.xlu0 %1987
      %1989 = vrot.lane.b32.xlu0 %v671, 88
      %v1990 = vpop.permute.xlu0 %1989
      %1991 = vrot.lane.b32.xlu0 %v1920, 88
      %v1992 = vpop.permute.xlu0 %1991
      %1993 = vrot.lane.b32.xlu0 %v1930, 88
      %v1994 = vpop.permute.xlu0 %1993
      %vm2027 = vcmask 1011392
      %2028 = vst.msk [vmem:[#allocation2 + $0x4] sm:$0xf] %vm2027, %v1932
      %2029 = vst.msk [vmem:[#allocation2 + $0x24] sm:$0xf] %vm2027, %v1934
      %2030 = vst.msk [vmem:[#allocation2 + $0x44] sm:$0xf] %vm2027, %v1936
      %2031 = vst.msk [vmem:[#allocation2 + $0x64] sm:$0xf] %vm2027, %v1938
      %2032 = vst.msk [vmem:[#allocation2 + $0x84] sm:$0xf] %vm2027, %v1940
      %2033 = vst.msk [vmem:[#allocation2 + $0xa4] sm:$0xf] %vm2027, %v1942
      %2034 = vst.msk [vmem:[#allocation2 + $0xc4] sm:$0xf] %vm2027, %v1944
      %2035 = vst.msk [vmem:[#allocation2 + $0xe4] sm:$0xf] %vm2027, %v1946
      %2036 = vst.msk [vmem:[#allocation2 + $0x104] sm:$0xf] %vm2027, %v1948
      %2037 = vst.msk [vmem:[#allocation2 + $0x124] sm:$0xf] %vm2027, %v1950
      %2038 = vst.msk [vmem:[#allocation2 + $0x144] sm:$0xf] %vm2027, %v1952
      %2039 = vst.msk [vmem:[#allocation2 + $0x164] sm:$0xf] %vm2027, %v1954
      %2040 = vst.msk [vmem:[#allocation2 + $0x184] sm:$0xf] %vm2027, %v1956
      %2041 = vst.msk [vmem:[#allocation2 + $0x1a4] sm:$0xf] %vm2027, %v1958
      %2042 = vst.msk [vmem:[#allocation2 + $0x1c4] sm:$0xf] %vm2027, %v1960
      %2043 = vst.msk [vmem:[#allocation2 + $0x1e4] sm:$0xf] %vm2027, %v1962
      %2044 = vst.msk [vmem:[#allocation2 + $0x204] sm:$0xf] %vm2027, %v1964
      %2045 = vst.msk [vmem:[#allocation2 + $0x224] sm:$0xf] %vm2027, %v1966
      %2046 = vst.msk [vmem:[#allocation2 + $0x244] sm:$0xf] %vm2027, %v1968
      %2047 = vst.msk [vmem:[#allocation2 + $0x264] sm:$0xf] %vm2027, %v1970
      %2048 = vst.msk [vmem:[#allocation2 + $0x284] sm:$0xf] %vm2027, %v1972
      %2049 = vst.msk [vmem:[#allocation2 + $0x2a4] sm:$0xf] %vm2027, %v1974
      %2050 = vst.msk [vmem:[#allocation2 + $0x2c4] sm:$0xf] %vm2027, %v1976
      %2051 = vst.msk [vmem:[#allocation2 + $0x2e4] sm:$0xf] %vm2027, %v1978
      %2052 = vst.msk [vmem:[#allocation2 + $0x304] sm:$0xf] %vm2027, %v1980
      %2053 = vst.msk [vmem:[#allocation2 + $0x324] sm:$0xf] %vm2027, %v1982
      %2054 = vst.msk [vmem:[#allocation2 + $0x344] sm:$0xf] %vm2027, %v1984
      %2055 = vst.msk [vmem:[#allocation2 + $0x364] sm:$0xf] %vm2027, %v1986
      %2056 = vst.msk [vmem:[#allocation2 + $0x384] sm:$0xf] %vm2027, %v1988
      %2057 = vst.msk [vmem:[#allocation2 + $0x3a4] sm:$0xf] %vm2027, %v1990
      %2058 = vst.msk [vmem:[#allocation2 + $0x3c4] sm:$0xf] %vm2027, %v1992
      %2059 = vst.msk [vmem:[#allocation2 + $0x3e4] sm:$0xf] %vm2027, %v1994
      %v2061 = vrot.slane %v240, 5
      %v2062 = vrot.slane %v2061, 4
      %v2063 = vrot.slane %v241, 5
      %v2064 = vsel %vm851, %v2062, %v2063
      %v2065 = vrot.slane %v2063, 4
      %v2066 = vrot.slane %v242, 5
      %v2067 = vsel %vm851, %v2065, %v2066
      %2068 = vrot.lane.b32.xlu0 %v862, 124
      %v2069 = vpop.permute.xlu0 %2068
      %2070 = vrot.lane.b32.xlu0 %v865, 124
      %v2071 = vpop.permute.xlu0 %2070
      %2072 = vrot.lane.b32.xlu0 %v869, 124
      %v2073 = vpop.permute.xlu0 %2072
      %2074 = vrot.lane.b32.xlu0 %v872, 124
      %v2075 = vpop.permute.xlu0 %2074
      %2076 = vrot.lane.b32.xlu0 %v876, 124
      %v2077 = vpop.permute.xlu0 %2076
      %2078 = vrot.lane.b32.xlu0 %v879, 124
      %v2079 = vpop.permute.xlu0 %2078
      %2080 = vrot.lane.b32.xlu0 %v883, 124
      %v2081 = vpop.permute.xlu0 %2080
      %2082 = vrot.lane.b32.xlu0 %v886, 124
      %v2083 = vpop.permute.xlu0 %2082
      %2084 = vrot.lane.b32.xlu0 %v890, 124
      %v2085 = vpop.permute.xlu0 %2084
      %2086 = vrot.lane.b32.xlu0 %v893, 124
      %v2087 = vpop.permute.xlu0 %2086
      %2088 = vrot.lane.b32.xlu0 %v897, 124
      %v2089 = vpop.permute.xlu0 %2088
      %2090 = vrot.lane.b32.xlu0 %v900, 124
      %v2091 = vpop.permute.xlu0 %2090
      %2092 = vrot.lane.b32.xlu0 %v904, 124
      %v2093 = vpop.permute.xlu0 %2092
      %2094 = vrot.lane.b32.xlu0 %v907, 124
      %v2095 = vpop.permute.xlu0 %2094
      %2096 = vrot.lane.b32.xlu0 %v911, 124
      %v2097 = vpop.permute.xlu0 %2096
      %2098 = vrot.lane.b32.xlu0 %v914, 124
      %v2099 = vpop.permute.xlu0 %2098
      %2100 = vrot.lane.b32.xlu0 %v918, 124
      %v2101 = vpop.permute.xlu0 %2100
      %2102 = vrot.lane.b32.xlu0 %v921, 124
      %v2103 = vpop.permute.xlu0 %2102
      %2104 = vrot.lane.b32.xlu0 %v925, 124
      %v2105 = vpop.permute.xlu0 %2104
      %2106 = vrot.lane.b32.xlu0 %v928, 124
      %v2107 = vpop.permute.xlu0 %2106
      %2108 = vrot.lane.b32.xlu0 %v932, 124
      %v2109 = vpop.permute.xlu0 %2108
      %2110 = vrot.lane.b32.xlu0 %v935, 124
      %v2111 = vpop.permute.xlu0 %2110
      %2112 = vrot.lane.b32.xlu0 %v939, 124
      %v2113 = vpop.permute.xlu0 %2112
      %2114 = vrot.lane.b32.xlu0 %v942, 124
      %v2115 = vpop.permute.xlu0 %2114
      %2116 = vrot.lane.b32.xlu0 %v946, 124
      %v2117 = vpop.permute.xlu0 %2116
      %2118 = vrot.lane.b32.xlu0 %v949, 124
      %v2119 = vpop.permute.xlu0 %2118
      %2120 = vrot.lane.b32.xlu0 %v953, 124
      %v2121 = vpop.permute.xlu0 %2120
      %2122 = vrot.lane.b32.xlu0 %v956, 124
      %v2123 = vpop.permute.xlu0 %2122
      %2124 = vrot.lane.b32.xlu0 %v960, 124
      %v2125 = vpop.permute.xlu0 %2124
      %2126 = vrot.lane.b32.xlu0 %v963, 124
      %v2127 = vpop.permute.xlu0 %2126
      %2128 = vrot.lane.b32.xlu0 %v2064, 124
      %v2129 = vpop.permute.xlu0 %2128
      %2130 = vrot.lane.b32.xlu0 %v2067, 124
      %v2131 = vpop.permute.xlu0 %2130
      %v2132 = vrot.slane %v2069, 4
      %v2133 = vrot.slane %v2071, 4
      %v2134 = vrot.slane %v2073, 4
      %v2135 = vrot.slane %v2075, 4
      %v2136 = vrot.slane %v2077, 4
      %v2137 = vrot.slane %v2079, 4
      %v2138 = vrot.slane %v2081, 4
      %v2139 = vrot.slane %v2083, 4
      %v2140 = vrot.slane %v2085, 4
      %v2141 = vrot.slane %v2087, 4
      %v2142 = vrot.slane %v2089, 4
      %v2143 = vrot.slane %v2091, 4
      %v2144 = vrot.slane %v2093, 4
      %v2145 = vrot.slane %v2095, 4
      %v2146 = vrot.slane %v2097, 4
      %v2147 = vrot.slane %v2099, 4
      %v2148 = vrot.slane %v2101, 4
      %v2149 = vrot.slane %v2103, 4
      %v2150 = vrot.slane %v2105, 4
      %v2151 = vrot.slane %v2107, 4
      %v2152 = vrot.slane %v2109, 4
      %v2153 = vrot.slane %v2111, 4
      %v2154 = vrot.slane %v2113, 4
      %v2155 = vrot.slane %v2115, 4
      %v2156 = vrot.slane %v2117, 4
      %v2157 = vrot.slane %v2119, 4
      %v2158 = vrot.slane %v2121, 4
      %v2159 = vrot.slane %v2123, 4
      %v2160 = vrot.slane %v2125, 4
      %v2161 = vrot.slane %v2127, 4
      %v2162 = vrot.slane %v2129, 4
      %v2163 = vrot.slane %v2131, 4
      %vm2164 = vcmask 1014784
      %v2165 = vsel %vm2164, %v2132, %v2069
      %v2166 = vsel %vm2164, %v2133, %v2071
      %v2167 = vsel %vm2164, %v2134, %v2073
      %v2168 = vsel %vm2164, %v2135, %v2075
      %v2169 = vsel %vm2164, %v2136, %v2077
      %v2170 = vsel %vm2164, %v2137, %v2079
      %v2171 = vsel %vm2164, %v2138, %v2081
      %v2172 = vsel %vm2164, %v2139, %v2083
      %v2173 = vsel %vm2164, %v2140, %v2085
      %v2174 = vsel %vm2164, %v2141, %v2087
      %v2175 = vsel %vm2164, %v2142, %v2089
      %v2176 = vsel %vm2164, %v2143, %v2091
      %v2177 = vsel %vm2164, %v2144, %v2093
      %v2178 = vsel %vm2164, %v2145, %v2095
      %v2179 = vsel %vm2164, %v2146, %v2097
      %v2180 = vsel %vm2164, %v2147, %v2099
      %v2181 = vsel %vm2164, %v2148, %v2101
      %v2182 = vsel %vm2164, %v2149, %v2103
      %v2183 = vsel %vm2164, %v2150, %v2105
      %v2184 = vsel %vm2164, %v2151, %v2107
      %v2185 = vsel %vm2164, %v2152, %v2109
      %v2186 = vsel %vm2164, %v2153, %v2111
      %v2187 = vsel %vm2164, %v2154, %v2113
      %v2188 = vsel %vm2164, %v2155, %v2115
      %v2189 = vsel %vm2164, %v2156, %v2117
      %v2190 = vsel %vm2164, %v2157, %v2119
      %v2191 = vsel %vm2164, %v2158, %v2121
      %v2192 = vsel %vm2164, %v2159, %v2123
      %v2193 = vsel %vm2164, %v2160, %v2125
      %v2194 = vsel %vm2164, %v2161, %v2127
      %v2195 = vsel %vm2164, %v2162, %v2129
      %v2196 = vsel %vm2164, %v2163, %v2131
      %vm2229 = vcmask 1044448
      %vm2230 = vcmask 261124
      %vm2231 = vmor %vm2230, %vm2229
      %2232 = vst.msk [vmem:[#allocation2 + $0x4] sm:$0xff] %vm2231, %v2165
      %2233 = vst.msk [vmem:[#allocation2 + $0x24] sm:$0xff] %vm2231, %v2166
      %2234 = vst.msk [vmem:[#allocation2 + $0x44] sm:$0xff] %vm2231, %v2167
      %2235 = vst.msk [vmem:[#allocation2 + $0x64] sm:$0xff] %vm2231, %v2168
      %2236 = vst.msk [vmem:[#allocation2 + $0x84] sm:$0xff] %vm2231, %v2169
      %2237 = vst.msk [vmem:[#allocation2 + $0xa4] sm:$0xff] %vm2231, %v2170
      %2238 = vst.msk [vmem:[#allocation2 + $0xc4] sm:$0xff] %vm2231, %v2171
      %2239 = vst.msk [vmem:[#allocation2 + $0xe4] sm:$0xff] %vm2231, %v2172
      %2240 = vst.msk [vmem:[#allocation2 + $0x104] sm:$0xff] %vm2231, %v2173
      %2241 = vst.msk [vmem:[#allocation2 + $0x124] sm:$0xff] %vm2231, %v2174
      %2242 = vst.msk [vmem:[#allocation2 + $0x144] sm:$0xff] %vm2231, %v2175
      %2243 = vst.msk [vmem:[#allocation2 + $0x164] sm:$0xff] %vm2231, %v2176
      %2244 = vst.msk [vmem:[#allocation2 + $0x184] sm:$0xff] %vm2231, %v2177
      %2245 = vst.msk [vmem:[#allocation2 + $0x1a4] sm:$0xff] %vm2231, %v2178
      %2246 = vst.msk [vmem:[#allocation2 + $0x1c4] sm:$0xff] %vm2231, %v2179
      %2247 = vst.msk [vmem:[#allocation2 + $0x1e4] sm:$0xff] %vm2231, %v2180
      %2248 = vst.msk [vmem:[#allocation2 + $0x204] sm:$0xff] %vm2231, %v2181
      %2249 = vst.msk [vmem:[#allocation2 + $0x224] sm:$0xff] %vm2231, %v2182
      %2250 = vst.msk [vmem:[#allocation2 + $0x244] sm:$0xff] %vm2231, %v2183
      %2251 = vst.msk [vmem:[#allocation2 + $0x264] sm:$0xff] %vm2231, %v2184
      %2252 = vst.msk [vmem:[#allocation2 + $0x284] sm:$0xff] %vm2231, %v2185
      %2253 = vst.msk [vmem:[#allocation2 + $0x2a4] sm:$0xff] %vm2231, %v2186
      %2254 = vst.msk [vmem:[#allocation2 + $0x2c4] sm:$0xff] %vm2231, %v2187
      %2255 = vst.msk [vmem:[#allocation2 + $0x2e4] sm:$0xff] %vm2231, %v2188
      %2256 = vst.msk [vmem:[#allocation2 + $0x304] sm:$0xff] %vm2231, %v2189
      %2257 = vst.msk [vmem:[#allocation2 + $0x324] sm:$0xff] %vm2231, %v2190
      %2258 = vst.msk [vmem:[#allocation2 + $0x344] sm:$0xff] %vm2231, %v2191
      %2259 = vst.msk [vmem:[#allocation2 + $0x364] sm:$0xff] %vm2231, %v2192
      %2260 = vst.msk [vmem:[#allocation2 + $0x384] sm:$0xff] %vm2231, %v2193
      %2261 = vst.msk [vmem:[#allocation2 + $0x3a4] sm:$0xff] %vm2231, %v2194
      %2262 = vst.msk [vmem:[#allocation2 + $0x3c4] sm:$0xff] %vm2231, %v2195
      %2263 = vst.msk [vmem:[#allocation2 + $0x3e4] sm:$0xff] %vm2231, %v2196
      %v2264 = vrot.slane %v1908, 5
      %v2265 = vrot.slane %v1911, 6
      %v2266 = vor.u32 %v2264, %v2265
      %v2267 = vrot.slane %v2266, 4
      %v2268 = vrot.slane %v1921, 5
      %v2269 = vrot.slane %v1917, 6
      %v2270 = vor.u32 %v2268, %v2269
      %v2271 = vsel %vm1095, %v2267, %v2270
      %v2272 = vrot.slane %v2270, 4
      %v2273 = vshrl.u32 %v242, 16
      %v2275 = vrot.slane %v2273, 5
      %v2276 = vrot.slane %v1927, 6
      %v2277 = vor.u32 %v2275, %v2276
      %v2278 = vsel %vm1095, %v2272, %v2277
      %2279 = vrot.lane.b32.xlu0 %v1118, 32
      %v2280 = vpop.permute.xlu0 %2279
      %2281 = vrot.lane.b32.xlu0 %v1125, 32
      %v2282 = vpop.permute.xlu0 %2281
      %2283 = vrot.lane.b32.xlu0 %v1133, 32
      %v2284 = vpop.permute.xlu0 %2283
      %2285 = vrot.lane.b32.xlu0 %v1140, 32
      %v2286 = vpop.permute.xlu0 %2285
      %2287 = vrot.lane.b32.xlu0 %v1148, 32
      %v2288 = vpop.permute.xlu0 %2287
      %2289 = vrot.lane.b32.xlu0 %v1155, 32
      %v2290 = vpop.permute.xlu0 %2289
      %2291 = vrot.lane.b32.xlu0 %v1163, 32
      %v2292 = vpop.permute.xlu0 %2291
      %2293 = vrot.lane.b32.xlu0 %v1170, 32
      %v2294 = vpop.permute.xlu0 %2293
      %2295 = vrot.lane.b32.xlu0 %v1178, 32
      %v2296 = vpop.permute.xlu0 %2295
      %2297 = vrot.lane.b32.xlu0 %v1185, 32
      %v2298 = vpop.permute.xlu0 %2297
      %2299 = vrot.lane.b32.xlu0 %v1193, 32
      %v2300 = vpop.permute.xlu0 %2299
      %2301 = vrot.lane.b32.xlu0 %v1200, 32
      %v2302 = vpop.permute.xlu0 %2301
      %2303 = vrot.lane.b32.xlu0 %v1208, 32
      %v2304 = vpop.permute.xlu0 %2303
      %2305 = vrot.lane.b32.xlu0 %v1215, 32
      %v2306 = vpop.permute.xlu0 %2305
      %2307 = vrot.lane.b32.xlu0 %v1223, 32
      %v2308 = vpop.permute.xlu0 %2307
      %2309 = vrot.lane.b32.xlu0 %v1230, 32
      %v2310 = vpop.permute.xlu0 %2309
      %2311 = vrot.lane.b32.xlu0 %v1238, 32
      %v2312 = vpop.permute.xlu0 %2311
      %2313 = vrot.lane.b32.xlu0 %v1245, 32
      %v2314 = vpop.permute.xlu0 %2313
      %2315 = vrot.lane.b32.xlu0 %v1253, 32
      %v2316 = vpop.permute.xlu0 %2315
      %2317 = vrot.lane.b32.xlu0 %v1260, 32
      %v2318 = vpop.permute.xlu0 %2317
      %2319 = vrot.lane.b32.xlu0 %v1268, 32
      %v2320 = vpop.permute.xlu0 %2319
      %2321 = vrot.lane.b32.xlu0 %v1275, 32
      %v2322 = vpop.permute.xlu0 %2321
      %2323 = vrot.lane.b32.xlu0 %v1283, 32
      %v2324 = vpop.permute.xlu0 %2323
      %2325 = vrot.lane.b32.xlu0 %v1290, 32
      %v2326 = vpop.permute.xlu0 %2325
      %2327 = vrot.lane.b32.xlu0 %v1298, 32
      %v2328 = vpop.permute.xlu0 %2327
      %2329 = vrot.lane.b32.xlu0 %v1305, 32
      %v2330 = vpop.permute.xlu0 %2329
      %2331 = vrot.lane.b32.xlu0 %v1313, 32
      %v2332 = vpop.permute.xlu0 %2331
      %2333 = vrot.lane.b32.xlu0 %v1320, 32
      %v2334 = vpop.permute.xlu0 %2333
      %2335 = vrot.lane.b32.xlu0 %v1328, 32
      %v2336 = vpop.permute.xlu0 %2335
      %2337 = vrot.lane.b32.xlu0 %v1335, 32
      %v2338 = vpop.permute.xlu0 %2337
      %2339 = vrot.lane.b32.xlu0 %v2271, 32
      %v2340 = vpop.permute.xlu0 %2339
      %2341 = vrot.lane.b32.xlu0 %v2278, 32
      %v2342 = vpop.permute.xlu0 %2341
      %vm2375 = vcmask 552192
      %2376 = vst.msk [vmem:[#allocation2 + $0x8] sm:$0xf] %vm2375, %v2280
      %2377 = vst.msk [vmem:[#allocation2 + $0x28] sm:$0xf] %vm2375, %v2282
      %2378 = vst.msk [vmem:[#allocation2 + $0x48] sm:$0xf] %vm2375, %v2284
      %2379 = vst.msk [vmem:[#allocation2 + $0x68] sm:$0xf] %vm2375, %v2286
      %2380 = vst.msk [vmem:[#allocation2 + $0x88] sm:$0xf] %vm2375, %v2288
      %2381 = vst.msk [vmem:[#allocation2 + $0xa8] sm:$0xf] %vm2375, %v2290
      %2382 = vst.msk [vmem:[#allocation2 + $0xc8] sm:$0xf] %vm2375, %v2292
      %2383 = vst.msk [vmem:[#allocation2 + $0xe8] sm:$0xf] %vm2375, %v2294
      %2384 = vst.msk [vmem:[#allocation2 + $0x108] sm:$0xf] %vm2375, %v2296
      %2385 = vst.msk [vmem:[#allocation2 + $0x128] sm:$0xf] %vm2375, %v2298
      %2386 = vst.msk [vmem:[#allocation2 + $0x148] sm:$0xf] %vm2375, %v2300
      %2387 = vst.msk [vmem:[#allocation2 + $0x168] sm:$0xf] %vm2375, %v2302
      %2388 = vst.msk [vmem:[#allocation2 + $0x188] sm:$0xf] %vm2375, %v2304
      %2389 = vst.msk [vmem:[#allocation2 + $0x1a8] sm:$0xf] %vm2375, %v2306
      %2390 = vst.msk [vmem:[#allocation2 + $0x1c8] sm:$0xf] %vm2375, %v2308
      %2391 = vst.msk [vmem:[#allocation2 + $0x1e8] sm:$0xf] %vm2375, %v2310
      %2392 = vst.msk [vmem:[#allocation2 + $0x208] sm:$0xf] %vm2375, %v2312
      %2393 = vst.msk [vmem:[#allocation2 + $0x228] sm:$0xf] %vm2375, %v2314
      %2394 = vst.msk [vmem:[#allocation2 + $0x248] sm:$0xf] %vm2375, %v2316
      %2395 = vst.msk [vmem:[#allocation2 + $0x268] sm:$0xf] %vm2375, %v2318
      %2396 = vst.msk [vmem:[#allocation2 + $0x288] sm:$0xf] %vm2375, %v2320
      %2397 = vst.msk [vmem:[#allocation2 + $0x2a8] sm:$0xf] %vm2375, %v2322
      %2398 = vst.msk [vmem:[#allocation2 + $0x2c8] sm:$0xf] %vm2375, %v2324
      %2399 = vst.msk [vmem:[#allocation2 + $0x2e8] sm:$0xf] %vm2375, %v2326
      %2400 = vst.msk [vmem:[#allocation2 + $0x308] sm:$0xf] %vm2375, %v2328
      %2401 = vst.msk [vmem:[#allocation2 + $0x328] sm:$0xf] %vm2375, %v2330
      %2402 = vst.msk [vmem:[#allocation2 + $0x348] sm:$0xf] %vm2375, %v2332
      %2403 = vst.msk [vmem:[#allocation2 + $0x368] sm:$0xf] %vm2375, %v2334
      %2404 = vst.msk [vmem:[#allocation2 + $0x388] sm:$0xf] %vm2375, %v2336
      %2405 = vst.msk [vmem:[#allocation2 + $0x3a8] sm:$0xf] %vm2375, %v2338
      %2406 = vst.msk [vmem:[#allocation2 + $0x3c8] sm:$0xf] %vm2375, %v2340
      %2407 = vst.msk [vmem:[#allocation2 + $0x3e8] sm:$0xf] %vm2375, %v2342
      %v2408 = vrot.slane %v240, 6
      %v2409 = vrot.slane %v2408, 4
      %v2410 = vrot.slane %v241, 6
      %v2411 = vsel %vm1534, %v2409, %v2410
      %v2412 = vrot.slane %v2410, 4
      %v2413 = vrot.slane %v242, 6
      %v2414 = vsel %vm1534, %v2412, %v2413
      %2415 = vrot.lane.b32.xlu0 %v1545, 68
      %v2416 = vpop.permute.xlu0 %2415
      %2417 = vrot.lane.b32.xlu0 %v1548, 68
      %v2418 = vpop.permute.xlu0 %2417
      %2419 = vrot.lane.b32.xlu0 %v1552, 68
      %v2420 = vpop.permute.xlu0 %2419
      %2421 = vrot.lane.b32.xlu0 %v1555, 68
      %v2422 = vpop.permute.xlu0 %2421
      %2423 = vrot.lane.b32.xlu0 %v1559, 68
      %v2424 = vpop.permute.xlu0 %2423
      %2425 = vrot.lane.b32.xlu0 %v1562, 68
      %v2426 = vpop.permute.xlu0 %2425
      %2427 = vrot.lane.b32.xlu0 %v1566, 68
      %v2428 = vpop.permute.xlu0 %2427
      %2429 = vrot.lane.b32.xlu0 %v1569, 68
      %v2430 = vpop.permute.xlu0 %2429
      %2431 = vrot.lane.b32.xlu0 %v1573, 68
      %v2432 = vpop.permute.xlu0 %2431
      %2433 = vrot.lane.b32.xlu0 %v1576, 68
      %v2434 = vpop.permute.xlu0 %2433
      %2435 = vrot.lane.b32.xlu0 %v1580, 68
      %v2436 = vpop.permute.xlu0 %2435
      %2437 = vrot.lane.b32.xlu0 %v1583, 68
      %v2438 = vpop.permute.xlu0 %2437
      %2439 = vrot.lane.b32.xlu0 %v1587, 68
      %v2440 = vpop.permute.xlu0 %2439
      %2441 = vrot.lane.b32.xlu0 %v1590, 68
      %v2442 = vpop.permute.xlu0 %2441
      %2443 = vrot.lane.b32.xlu0 %v1594, 68
      %v2444 = vpop.permute.xlu0 %2443
      %2445 = vrot.lane.b32.xlu0 %v1597, 68
      %v2446 = vpop.permute.xlu0 %2445
      %2447 = vrot.lane.b32.xlu0 %v1601, 68
      %v2448 = vpop.permute.xlu0 %2447
      %2449 = vrot.lane.b32.xlu0 %v1604, 68
      %v2450 = vpop.permute.xlu0 %2449
      %2451 = vrot.lane.b32.xlu0 %v1608, 68
      %v2452 = vpop.permute.xlu0 %2451
      %2453 = vrot.lane.b32.xlu0 %v1611, 68
      %v2454 = vpop.permute.xlu0 %2453
      %2455 = vrot.lane.b32.xlu0 %v1615, 68
      %v2456 = vpop.permute.xlu0 %2455
      %2457 = vrot.lane.b32.xlu0 %v1618, 68
      %v2458 = vpop.permute.xlu0 %2457
      %2459 = vrot.lane.b32.xlu0 %v1622, 68
      %v2460 = vpop.permute.xlu0 %2459
      %2461 = vrot.lane.b32.xlu0 %v1625, 68
      %v2462 = vpop.permute.xlu0 %2461
      %2463 = vrot.lane.b32.xlu0 %v1629, 68
      %v2464 = vpop.permute.xlu0 %2463
      %2465 = vrot.lane.b32.xlu0 %v1632, 68
      %v2466 = vpop.permute.xlu0 %2465
      %2467 = vrot.lane.b32.xlu0 %v1636, 68
      %v2468 = vpop.permute.xlu0 %2467
      %2469 = vrot.lane.b32.xlu0 %v1639, 68
      %v2470 = vpop.permute.xlu0 %2469
      %2471 = vrot.lane.b32.xlu0 %v1643, 68
      %v2472 = vpop.permute.xlu0 %2471
      %2473 = vrot.lane.b32.xlu0 %v1646, 68
      %v2474 = vpop.permute.xlu0 %2473
      %2475 = vrot.lane.b32.xlu0 %v2411, 68
      %v2476 = vpop.permute.xlu0 %2475
      %2477 = vrot.lane.b32.xlu0 %v2414, 68
      %v2478 = vpop.permute.xlu0 %2477
      %vm2511 = vcmask 847392
      %2512 = vst.msk [vmem:[#allocation2 + $0x8] sm:$0xf] %vm2511, %v2416
      %2513 = vst.msk [vmem:[#allocation2 + $0x28] sm:$0xf] %vm2511, %v2418
      %2514 = vst.msk [vmem:[#allocation2 + $0x48] sm:$0xf] %vm2511, %v2420
      %2515 = vst.msk [vmem:[#allocation2 + $0x68] sm:$0xf] %vm2511, %v2422
      %2516 = vst.msk [vmem:[#allocation2 + $0x88] sm:$0xf] %vm2511, %v2424
      %2517 = vst.msk [vmem:[#allocation2 + $0xa8] sm:$0xf] %vm2511, %v2426
      %2518 = vst.msk [vmem:[#allocation2 + $0xc8] sm:$0xf] %vm2511, %v2428
      %2519 = vst.msk [vmem:[#allocation2 + $0xe8] sm:$0xf] %vm2511, %v2430
      %2520 = vst.msk [vmem:[#allocation2 + $0x108] sm:$0xf] %vm2511, %v2432
      %2521 = vst.msk [vmem:[#allocation2 + $0x128] sm:$0xf] %vm2511, %v2434
      %2522 = vst.msk [vmem:[#allocation2 + $0x148] sm:$0xf] %vm2511, %v2436
      %2523 = vst.msk [vmem:[#allocation2 + $0x168] sm:$0xf] %vm2511, %v2438
      %2524 = vst.msk [vmem:[#allocation2 + $0x188] sm:$0xf] %vm2511, %v2440
      %2525 = vst.msk [vmem:[#allocation2 + $0x1a8] sm:$0xf] %vm2511, %v2442
      %2526 = vst.msk [vmem:[#allocation2 + $0x1c8] sm:$0xf] %vm2511, %v2444
      %2527 = vst.msk [vmem:[#allocation2 + $0x1e8] sm:$0xf] %vm2511, %v2446
      %2528 = vst.msk [vmem:[#allocation2 + $0x208] sm:$0xf] %vm2511, %v2448
      %2529 = vst.msk [vmem:[#allocation2 + $0x228] sm:$0xf] %vm2511, %v2450
      %2530 = vst.msk [vmem:[#allocation2 + $0x248] sm:$0xf] %vm2511, %v2452
      %2531 = vst.msk [vmem:[#allocation2 + $0x268] sm:$0xf] %vm2511, %v2454
      %2532 = vst.msk [vmem:[#allocation2 + $0x288] sm:$0xf] %vm2511, %v2456
      %2533 = vst.msk [vmem:[#allocation2 + $0x2a8] sm:$0xf] %vm2511, %v2458
      %2534 = vst.msk [vmem:[#allocation2 + $0x2c8] sm:$0xf] %vm2511, %v2460
      %2535 = vst.msk [vmem:[#allocation2 + $0x2e8] sm:$0xf] %vm2511, %v2462
      %2536 = vst.msk [vmem:[#allocation2 + $0x308] sm:$0xf] %vm2511, %v2464
      %2537 = vst.msk [vmem:[#allocation2 + $0x328] sm:$0xf] %vm2511, %v2466
      %2538 = vst.msk [vmem:[#allocation2 + $0x348] sm:$0xf] %vm2511, %v2468
      %2539 = vst.msk [vmem:[#allocation2 + $0x368] sm:$0xf] %vm2511, %v2470
      %2540 = vst.msk [vmem:[#allocation2 + $0x388] sm:$0xf] %vm2511, %v2472
      %2541 = vst.msk [vmem:[#allocation2 + $0x3a8] sm:$0xf] %vm2511, %v2474
      %2542 = vst.msk [vmem:[#allocation2 + $0x3c8] sm:$0xf] %vm2511, %v2476
      %2543 = vst.msk [vmem:[#allocation2 + $0x3e8] sm:$0xf] %vm2511, %v2478
      %2546 = vrot.lane.b32.xlu0 %v198, 104
      %v2547 = vpop.permute.xlu0 %2546
      %2548 = vrot.lane.b32.xlu0 %v199, 104
      %v2549 = vpop.permute.xlu0 %2548
      %2550 = vrot.lane.b32.xlu0 %v201, 104
      %v2551 = vpop.permute.xlu0 %2550
      %2552 = vrot.lane.b32.xlu0 %v202, 104
      %v2553 = vpop.permute.xlu0 %2552
      %2554 = vrot.lane.b32.xlu0 %v204, 104
      %v2555 = vpop.permute.xlu0 %2554
      %2556 = vrot.lane.b32.xlu0 %v205, 104
      %v2557 = vpop.permute.xlu0 %2556
      %2558 = vrot.lane.b32.xlu0 %v207, 104
      %v2559 = vpop.permute.xlu0 %2558
      %2560 = vrot.lane.b32.xlu0 %v208, 104
      %v2561 = vpop.permute.xlu0 %2560
      %2562 = vrot.lane.b32.xlu0 %v210, 104
      %v2563 = vpop.permute.xlu0 %2562
      %2564 = vrot.lane.b32.xlu0 %v211, 104
      %v2565 = vpop.permute.xlu0 %2564
      %2566 = vrot.lane.b32.xlu0 %v213, 104
      %v2567 = vpop.permute.xlu0 %2566
      %2568 = vrot.lane.b32.xlu0 %v214, 104
      %v2569 = vpop.permute.xlu0 %2568
      %2570 = vrot.lane.b32.xlu0 %v216, 104
      %v2571 = vpop.permute.xlu0 %2570
      %2572 = vrot.lane.b32.xlu0 %v217, 104
      %v2573 = vpop.permute.xlu0 %2572
      %2574 = vrot.lane.b32.xlu0 %v219, 104
      %v2575 = vpop.permute.xlu0 %2574
      %2576 = vrot.lane.b32.xlu0 %v220, 104
      %v2577 = vpop.permute.xlu0 %2576
      %2578 = vrot.lane.b32.xlu0 %v222, 104
      %v2579 = vpop.permute.xlu0 %2578
      %2580 = vrot.lane.b32.xlu0 %v223, 104
      %v2581 = vpop.permute.xlu0 %2580
      %2582 = vrot.lane.b32.xlu0 %v225, 104
      %v2583 = vpop.permute.xlu0 %2582
      %2584 = vrot.lane.b32.xlu0 %v226, 104
      %v2585 = vpop.permute.xlu0 %2584
      %2586 = vrot.lane.b32.xlu0 %v228, 104
      %v2587 = vpop.permute.xlu0 %2586
      %2588 = vrot.lane.b32.xlu0 %v229, 104
      %v2589 = vpop.permute.xlu0 %2588
      %2590 = vrot.lane.b32.xlu0 %v231, 104
      %v2591 = vpop.permute.xlu0 %2590
      %2592 = vrot.lane.b32.xlu0 %v232, 104
      %v2593 = vpop.permute.xlu0 %2592
      %2594 = vrot.lane.b32.xlu0 %v234, 104
      %v2595 = vpop.permute.xlu0 %2594
      %2596 = vrot.lane.b32.xlu0 %v235, 104
      %v2597 = vpop.permute.xlu0 %2596
      %2598 = vrot.lane.b32.xlu0 %v237, 104
      %v2599 = vpop.permute.xlu0 %2598
      %2600 = vrot.lane.b32.xlu0 %v238, 104
      %v2601 = vpop.permute.xlu0 %2600
      %2602 = vrot.lane.b32.xlu0 %v240, 104
      %v2603 = vpop.permute.xlu0 %2602
      %2604 = vrot.lane.b32.xlu0 %v241, 104
      %v2605 = vpop.permute.xlu0 %2604
      %2606 = vrot.lane.b32.xlu0 %v243, 104
      %v2607 = vpop.permute.xlu0 %2606
      %2608 = vrot.lane.b32.xlu0 %v244, 104
      %v2609 = vpop.permute.xlu0 %2608
      %v2610 = vrot.slane %v2547, 4
      %v2611 = vrot.slane %v2549, 4
      %v2612 = vrot.slane %v2551, 4
      %v2613 = vrot.slane %v2553, 4
      %v2614 = vrot.slane %v2555, 4
      %v2615 = vrot.slane %v2557, 4
      %v2616 = vrot.slane %v2559, 4
      %v2617 = vrot.slane %v2561, 4
      %v2618 = vrot.slane %v2563, 4
      %v2619 = vrot.slane %v2565, 4
      %v2620 = vrot.slane %v2567, 4
      %v2621 = vrot.slane %v2569, 4
      %v2622 = vrot.slane %v2571, 4
      %v2623 = vrot.slane %v2573, 4
      %v2624 = vrot.slane %v2575, 4
      %v2625 = vrot.slane %v2577, 4
      %v2626 = vrot.slane %v2579, 4
      %v2627 = vrot.slane %v2581, 4
      %v2628 = vrot.slane %v2583, 4
      %v2629 = vrot.slane %v2585, 4
      %v2630 = vrot.slane %v2587, 4
      %v2631 = vrot.slane %v2589, 4
      %v2632 = vrot.slane %v2591, 4
      %v2633 = vrot.slane %v2593, 4
      %v2634 = vrot.slane %v2595, 4
      %v2635 = vrot.slane %v2597, 4
      %v2636 = vrot.slane %v2599, 4
      %v2637 = vrot.slane %v2601, 4
      %v2638 = vrot.slane %v2603, 4
      %v2639 = vrot.slane %v2605, 4
      %v2640 = vrot.slane %v2607, 4
      %v2641 = vrot.slane %v2609, 4
      %vm2642 = vcmask 850944
      %v2643 = vsel %vm2642, %v2610, %v2547
      %v2644 = vsel %vm2642, %v2611, %v2549
      %v2645 = vsel %vm2642, %v2612, %v2551
      %v2646 = vsel %vm2642, %v2613, %v2553
      %v2647 = vsel %vm2642, %v2614, %v2555
      %v2648 = vsel %vm2642, %v2615, %v2557
      %v2649 = vsel %vm2642, %v2616, %v2559
      %v2650 = vsel %vm2642, %v2617, %v2561
      %v2651 = vsel %vm2642, %v2618, %v2563
      %v2652 = vsel %vm2642, %v2619, %v2565
      %v2653 = vsel %vm2642, %v2620, %v2567
      %v2654 = vsel %vm2642, %v2621, %v2569
      %v2655 = vsel %vm2642, %v2622, %v2571
      %v2656 = vsel %vm2642, %v2623, %v2573
      %v2657 = vsel %vm2642, %v2624, %v2575
      %v2658 = vsel %vm2642, %v2625, %v2577
      %v2659 = vsel %vm2642, %v2626, %v2579
      %v2660 = vsel %vm2642, %v2627, %v2581
      %v2661 = vsel %vm2642, %v2628, %v2583
      %v2662 = vsel %vm2642, %v2629, %v2585
      %v2663 = vsel %vm2642, %v2630, %v2587
      %v2664 = vsel %vm2642, %v2631, %v2589
      %v2665 = vsel %vm2642, %v2632, %v2591
      %v2666 = vsel %vm2642, %v2633, %v2593
      %v2667 = vsel %vm2642, %v2634, %v2595
      %v2668 = vsel %vm2642, %v2635, %v2597
      %v2669 = vsel %vm2642, %v2636, %v2599
      %v2670 = vsel %vm2642, %v2637, %v2601
      %v2671 = vsel %vm2642, %v2638, %v2603
      %v2672 = vsel %vm2642, %v2639, %v2605
      %v2673 = vsel %vm2642, %v2640, %v2607
      %v2674 = vsel %vm2642, %v2641, %v2609
      %vm2707 = vcmask 1044288
      %vm2708 = vcmask 97284
      %vm2709 = vmor %vm2708, %vm2707
      %2710 = vst.msk [vmem:[#allocation2 + $0x8] sm:$0xff] %vm2709, %v2643
      %2711 = vst.msk [vmem:[#allocation2 + $0x28] sm:$0xff] %vm2709, %v2644
      %2712 = vst.msk [vmem:[#allocation2 + $0x48] sm:$0xff] %vm2709, %v2645
      %2713 = vst.msk [vmem:[#allocation2 + $0x68] sm:$0xff] %vm2709, %v2646
      %2714 = vst.msk [vmem:[#allocation2 + $0x88] sm:$0xff] %vm2709, %v2647
      %2715 = vst.msk [vmem:[#allocation2 + $0xa8] sm:$0xff] %vm2709, %v2648
      %2716 = vst.msk [vmem:[#allocation2 + $0xc8] sm:$0xff] %vm2709, %v2649
      %2717 = vst.msk [vmem:[#allocation2 + $0xe8] sm:$0xff] %vm2709, %v2650
      %2718 = vst.msk [vmem:[#allocation2 + $0x108] sm:$0xff] %vm2709, %v2651
      %2719 = vst.msk [vmem:[#allocation2 + $0x128] sm:$0xff] %vm2709, %v2652
      %2720 = vst.msk [vmem:[#allocation2 + $0x148] sm:$0xff] %vm2709, %v2653
      %2721 = vst.msk [vmem:[#allocation2 + $0x168] sm:$0xff] %vm2709, %v2654
      %2722 = vst.msk [vmem:[#allocation2 + $0x188] sm:$0xff] %vm2709, %v2655
      %2723 = vst.msk [vmem:[#allocation2 + $0x1a8] sm:$0xff] %vm2709, %v2656
      %2724 = vst.msk [vmem:[#allocation2 + $0x1c8] sm:$0xff] %vm2709, %v2657
      %2725 = vst.msk [vmem:[#allocation2 + $0x1e8] sm:$0xff] %vm2709, %v2658
      %2726 = vst.msk [vmem:[#allocation2 + $0x208] sm:$0xff] %vm2709, %v2659
      %2727 = vst.msk [vmem:[#allocation2 + $0x228] sm:$0xff] %vm2709, %v2660
      %2728 = vst.msk [vmem:[#allocation2 + $0x248] sm:$0xff] %vm2709, %v2661
      %2729 = vst.msk [vmem:[#allocation2 + $0x268] sm:$0xff] %vm2709, %v2662
      %2730 = vst.msk [vmem:[#allocation2 + $0x288] sm:$0xff] %vm2709, %v2663
      %2731 = vst.msk [vmem:[#allocation2 + $0x2a8] sm:$0xff] %vm2709, %v2664
      %2732 = vst.msk [vmem:[#allocation2 + $0x2c8] sm:$0xff] %vm2709, %v2665
      %2733 = vst.msk [vmem:[#allocation2 + $0x2e8] sm:$0xff] %vm2709, %v2666
      %2734 = vst.msk [vmem:[#allocation2 + $0x308] sm:$0xff] %vm2709, %v2667
      %2735 = vst.msk [vmem:[#allocation2 + $0x328] sm:$0xff] %vm2709, %v2668
      %2736 = vst.msk [vmem:[#allocation2 + $0x348] sm:$0xff] %vm2709, %v2669
      %2737 = vst.msk [vmem:[#allocation2 + $0x368] sm:$0xff] %vm2709, %v2670
      %2738 = vst.msk [vmem:[#allocation2 + $0x388] sm:$0xff] %vm2709, %v2671
      %2739 = vst.msk [vmem:[#allocation2 + $0x3a8] sm:$0xff] %vm2709, %v2672
      %2740 = vst.msk [vmem:[#allocation2 + $0x3c8] sm:$0xff] %vm2709, %v2673
      %2741 = vst.msk [vmem:[#allocation2 + $0x3e8] sm:$0xff] %vm2709, %v2674
      %v2743 = vshrl.u32 %v243, 16
      %v2745 = vrot.slane %v2743, 4
      %v2746 = vshll.u32 %v243, 16
      %v2748 = vrot.slane %v2746, 5
      %v2749 = vor.u32 %v2745, %v2748
      %v2750 = vrot.slane %v2749, 4
      %v2752 = vshll.u32 %v244, 16
      %v2754 = vrot.slane %v2752, 5
      %v2755 = vsel %vm287, %v2750, %v2754
      %v2756 = vshrl.u32 %v244, 16
      %v2758 = vrot.slane %v2756, 4
      %v2759 = vor.u32 %v2758, %v2754
      %v2760 = vrot.slane %v2759, 4
      %v2762 = vshll.u32 %v245, 16
      %v2764 = vrot.slane %v2762, 5
      %v2765 = vsel %vm287, %v2760, %v2764
      %2766 = vrot.lane.b32.xlu0 %v349, 12
      %v2767 = vpop.permute.xlu0 %2766
      %2768 = vrot.lane.b32.xlu0 %v359, 12
      %v2769 = vpop.permute.xlu0 %2768
      %2770 = vrot.lane.b32.xlu0 %v373, 12
      %v2771 = vpop.permute.xlu0 %2770
      %2772 = vrot.lane.b32.xlu0 %v383, 12
      %v2773 = vpop.permute.xlu0 %2772
      %2774 = vrot.lane.b32.xlu0 %v397, 12
      %v2775 = vpop.permute.xlu0 %2774
      %2776 = vrot.lane.b32.xlu0 %v407, 12
      %v2777 = vpop.permute.xlu0 %2776
      %2778 = vrot.lane.b32.xlu0 %v421, 12
      %v2779 = vpop.permute.xlu0 %2778
      %2780 = vrot.lane.b32.xlu0 %v431, 12
      %v2781 = vpop.permute.xlu0 %2780
      %2782 = vrot.lane.b32.xlu0 %v445, 12
      %v2783 = vpop.permute.xlu0 %2782
      %2784 = vrot.lane.b32.xlu0 %v455, 12
      %v2785 = vpop.permute.xlu0 %2784
      %2786 = vrot.lane.b32.xlu0 %v469, 12
      %v2787 = vpop.permute.xlu0 %2786
      %2788 = vrot.lane.b32.xlu0 %v479, 12
      %v2789 = vpop.permute.xlu0 %2788
      %2790 = vrot.lane.b32.xlu0 %v493, 12
      %v2791 = vpop.permute.xlu0 %2790
      %2792 = vrot.lane.b32.xlu0 %v503, 12
      %v2793 = vpop.permute.xlu0 %2792
      %2794 = vrot.lane.b32.xlu0 %v517, 12
      %v2795 = vpop.permute.xlu0 %2794
      %2796 = vrot.lane.b32.xlu0 %v527, 12
      %v2797 = vpop.permute.xlu0 %2796
      %2798 = vrot.lane.b32.xlu0 %v541, 12
      %v2799 = vpop.permute.xlu0 %2798
      %2800 = vrot.lane.b32.xlu0 %v551, 12
      %v2801 = vpop.permute.xlu0 %2800
      %2802 = vrot.lane.b32.xlu0 %v565, 12
      %v2803 = vpop.permute.xlu0 %2802
      %2804 = vrot.lane.b32.xlu0 %v575, 12
      %v2805 = vpop.permute.xlu0 %2804
      %2806 = vrot.lane.b32.xlu0 %v589, 12
      %v2807 = vpop.permute.xlu0 %2806
      %2808 = vrot.lane.b32.xlu0 %v599, 12
      %v2809 = vpop.permute.xlu0 %2808
      %2810 = vrot.lane.b32.xlu0 %v613, 12
      %v2811 = vpop.permute.xlu0 %2810
      %2812 = vrot.lane.b32.xlu0 %v623, 12
      %v2813 = vpop.permute.xlu0 %2812
      %2814 = vrot.lane.b32.xlu0 %v637, 12
      %v2815 = vpop.permute.xlu0 %2814
      %2816 = vrot.lane.b32.xlu0 %v647, 12
      %v2817 = vpop.permute.xlu0 %2816
      %2818 = vrot.lane.b32.xlu0 %v661, 12
      %v2819 = vpop.permute.xlu0 %2818
      %2820 = vrot.lane.b32.xlu0 %v671, 12
      %v2821 = vpop.permute.xlu0 %2820
      %2822 = vrot.lane.b32.xlu0 %v1920, 12
      %v2823 = vpop.permute.xlu0 %2822
      %2824 = vrot.lane.b32.xlu0 %v1930, 12
      %v2825 = vpop.permute.xlu0 %2824
      %2826 = vrot.lane.b32.xlu0 %v2755, 12
      %v2827 = vpop.permute.xlu0 %2826
      %2828 = vrot.lane.b32.xlu0 %v2765, 12
      %v2829 = vpop.permute.xlu0 %2828
      %vm2862 = vcmask 388192
      %2863 = vst.msk [vmem:[#allocation2 + $0xc] sm:$0xf] %vm2862, %v2767
      %2864 = vst.msk [vmem:[#allocation2 + $0x2c] sm:$0xf] %vm2862, %v2769
      %2865 = vst.msk [vmem:[#allocation2 + $0x4c] sm:$0xf] %vm2862, %v2771
      %2866 = vst.msk [vmem:[#allocation2 + $0x6c] sm:$0xf] %vm2862, %v2773
      %2867 = vst.msk [vmem:[#allocation2 + $0x8c] sm:$0xf] %vm2862, %v2775
      %2868 = vst.msk [vmem:[#allocation2 + $0xac] sm:$0xf] %vm2862, %v2777
      %2869 = vst.msk [vmem:[#allocation2 + $0xcc] sm:$0xf] %vm2862, %v2779
      %2870 = vst.msk [vmem:[#allocation2 + $0xec] sm:$0xf] %vm2862, %v2781
      %2871 = vst.msk [vmem:[#allocation2 + $0x10c] sm:$0xf] %vm2862, %v2783
      %2872 = vst.msk [vmem:[#allocation2 + $0x12c] sm:$0xf] %vm2862, %v2785
      %2873 = vst.msk [vmem:[#allocation2 + $0x14c] sm:$0xf] %vm2862, %v2787
      %2874 = vst.msk [vmem:[#allocation2 + $0x16c] sm:$0xf] %vm2862, %v2789
      %2875 = vst.msk [vmem:[#allocation2 + $0x18c] sm:$0xf] %vm2862, %v2791
      %2876 = vst.msk [vmem:[#allocation2 + $0x1ac] sm:$0xf] %vm2862, %v2793
      %2877 = vst.msk [vmem:[#allocation2 + $0x1cc] sm:$0xf] %vm2862, %v2795
      %2878 = vst.msk [vmem:[#allocation2 + $0x1ec] sm:$0xf] %vm2862, %v2797
      %2879 = vst.msk [vmem:[#allocation2 + $0x20c] sm:$0xf] %vm2862, %v2799
      %2880 = vst.msk [vmem:[#allocation2 + $0x22c] sm:$0xf] %vm2862, %v2801
      %2881 = vst.msk [vmem:[#allocation2 + $0x24c] sm:$0xf] %vm2862, %v2803
      %2882 = vst.msk [vmem:[#allocation2 + $0x26c] sm:$0xf] %vm2862, %v2805
      %2883 = vst.msk [vmem:[#allocation2 + $0x28c] sm:$0xf] %vm2862, %v2807
      %2884 = vst.msk [vmem:[#allocation2 + $0x2ac] sm:$0xf] %vm2862, %v2809
      %2885 = vst.msk [vmem:[#allocation2 + $0x2cc] sm:$0xf] %vm2862, %v2811
      %2886 = vst.msk [vmem:[#allocation2 + $0x2ec] sm:$0xf] %vm2862, %v2813
      %2887 = vst.msk [vmem:[#allocation2 + $0x30c] sm:$0xf] %vm2862, %v2815
      %2888 = vst.msk [vmem:[#allocation2 + $0x32c] sm:$0xf] %vm2862, %v2817
      %2889 = vst.msk [vmem:[#allocation2 + $0x34c] sm:$0xf] %vm2862, %v2819
      %2890 = vst.msk [vmem:[#allocation2 + $0x36c] sm:$0xf] %vm2862, %v2821
      %2891 = vst.msk [vmem:[#allocation2 + $0x38c] sm:$0xf] %vm2862, %v2823
      %2892 = vst.msk [vmem:[#allocation2 + $0x3ac] sm:$0xf] %vm2862, %v2825
      %2893 = vst.msk [vmem:[#allocation2 + $0x3cc] sm:$0xf] %vm2862, %v2827
      %2894 = vst.msk [vmem:[#allocation2 + $0x3ec] sm:$0xf] %vm2862, %v2829
      %v2896 = vrot.slane %v243, 5
      %v2897 = vrot.slane %v2896, 4
      %v2898 = vrot.slane %v244, 5
      %v2899 = vsel %vm851, %v2897, %v2898
      %v2900 = vrot.slane %v2898, 4
      %v2901 = vrot.slane %v245, 5
      %v2902 = vsel %vm851, %v2900, %v2901
      %2903 = vrot.lane.b32.xlu0 %v869, 48
      %v2904 = vpop.permute.xlu0 %2903
      %2905 = vrot.lane.b32.xlu0 %v872, 48
      %v2906 = vpop.permute.xlu0 %2905
      %2907 = vrot.lane.b32.xlu0 %v876, 48
      %v2908 = vpop.permute.xlu0 %2907
      %2909 = vrot.lane.b32.xlu0 %v879, 48
      %v2910 = vpop.permute.xlu0 %2909
      %2911 = vrot.lane.b32.xlu0 %v883, 48
      %v2912 = vpop.permute.xlu0 %2911
      %2913 = vrot.lane.b32.xlu0 %v886, 48
      %v2914 = vpop.permute.xlu0 %2913
      %2915 = vrot.lane.b32.xlu0 %v890, 48
      %v2916 = vpop.permute.xlu0 %2915
      %2917 = vrot.lane.b32.xlu0 %v893, 48
      %v2918 = vpop.permute.xlu0 %2917
      %2919 = vrot.lane.b32.xlu0 %v897, 48
      %v2920 = vpop.permute.xlu0 %2919
      %2921 = vrot.lane.b32.xlu0 %v900, 48
      %v2922 = vpop.permute.xlu0 %2921
      %2923 = vrot.lane.b32.xlu0 %v904, 48
      %v2924 = vpop.permute.xlu0 %2923
      %2925 = vrot.lane.b32.xlu0 %v907, 48
      %v2926 = vpop.permute.xlu0 %2925
      %2927 = vrot.lane.b32.xlu0 %v911, 48
      %v2928 = vpop.permute.xlu0 %2927
      %2929 = vrot.lane.b32.xlu0 %v914, 48
      %v2930 = vpop.permute.xlu0 %2929
      %2931 = vrot.lane.b32.xlu0 %v918, 48
      %v2932 = vpop.permute.xlu0 %2931
      %2933 = vrot.lane.b32.xlu0 %v921, 48
      %v2934 = vpop.permute.xlu0 %2933
      %2935 = vrot.lane.b32.xlu0 %v925, 48
      %v2936 = vpop.permute.xlu0 %2935
      %2937 = vrot.lane.b32.xlu0 %v928, 48
      %v2938 = vpop.permute.xlu0 %2937
      %2939 = vrot.lane.b32.xlu0 %v932, 48
      %v2940 = vpop.permute.xlu0 %2939
      %2941 = vrot.lane.b32.xlu0 %v935, 48
      %v2942 = vpop.permute.xlu0 %2941
      %2943 = vrot.lane.b32.xlu0 %v939, 48
      %v2944 = vpop.permute.xlu0 %2943
      %2945 = vrot.lane.b32.xlu0 %v942, 48
      %v2946 = vpop.permute.xlu0 %2945
      %2947 = vrot.lane.b32.xlu0 %v946, 48
      %v2948 = vpop.permute.xlu0 %2947
      %2949 = vrot.lane.b32.xlu0 %v949, 48
      %v2950 = vpop.permute.xlu0 %2949
      %2951 = vrot.lane.b32.xlu0 %v953, 48
      %v2952 = vpop.permute.xlu0 %2951
      %2953 = vrot.lane.b32.xlu0 %v956, 48
      %v2954 = vpop.permute.xlu0 %2953
      %2955 = vrot.lane.b32.xlu0 %v960, 48
      %v2956 = vpop.permute.xlu0 %2955
      %2957 = vrot.lane.b32.xlu0 %v963, 48
      %v2958 = vpop.permute.xlu0 %2957
      %2959 = vrot.lane.b32.xlu0 %v2064, 48
      %v2960 = vpop.permute.xlu0 %2959
      %2961 = vrot.lane.b32.xlu0 %v2067, 48
      %v2962 = vpop.permute.xlu0 %2961
      %2963 = vrot.lane.b32.xlu0 %v2899, 48
      %v2964 = vpop.permute.xlu0 %2963
      %2965 = vrot.lane.b32.xlu0 %v2902, 48
      %v2966 = vpop.permute.xlu0 %2965
      %vm2999 = vcmask 683392
      %3000 = vst.msk [vmem:[#allocation2 + $0xc] sm:$0xf] %vm2999, %v2904
      %3001 = vst.msk [vmem:[#allocation2 + $0x2c] sm:$0xf] %vm2999, %v2906
      %3002 = vst.msk [vmem:[#allocation2 + $0x4c] sm:$0xf] %vm2999, %v2908
      %3003 = vst.msk [vmem:[#allocation2 + $0x6c] sm:$0xf] %vm2999, %v2910
      %3004 = vst.msk [vmem:[#allocation2 + $0x8c] sm:$0xf] %vm2999, %v2912
      %3005 = vst.msk [vmem:[#allocation2 + $0xac] sm:$0xf] %vm2999, %v2914
      %3006 = vst.msk [vmem:[#allocation2 + $0xcc] sm:$0xf] %vm2999, %v2916
      %3007 = vst.msk [vmem:[#allocation2 + $0xec] sm:$0xf] %vm2999, %v2918
      %3008 = vst.msk [vmem:[#allocation2 + $0x10c] sm:$0xf] %vm2999, %v2920
      %3009 = vst.msk [vmem:[#allocation2 + $0x12c] sm:$0xf] %vm2999, %v2922
      %3010 = vst.msk [vmem:[#allocation2 + $0x14c] sm:$0xf] %vm2999, %v2924
      %3011 = vst.msk [vmem:[#allocation2 + $0x16c] sm:$0xf] %vm2999, %v2926
      %3012 = vst.msk [vmem:[#allocation2 + $0x18c] sm:$0xf] %vm2999, %v2928
      %3013 = vst.msk [vmem:[#allocation2 + $0x1ac] sm:$0xf] %vm2999, %v2930
      %3014 = vst.msk [vmem:[#allocation2 + $0x1cc] sm:$0xf] %vm2999, %v2932
      %3015 = vst.msk [vmem:[#allocation2 + $0x1ec] sm:$0xf] %vm2999, %v2934
      %3016 = vst.msk [vmem:[#allocation2 + $0x20c] sm:$0xf] %vm2999, %v2936
      %3017 = vst.msk [vmem:[#allocation2 + $0x22c] sm:$0xf] %vm2999, %v2938
      %3018 = vst.msk [vmem:[#allocation2 + $0x24c] sm:$0xf] %vm2999, %v2940
      %3019 = vst.msk [vmem:[#allocation2 + $0x26c] sm:$0xf] %vm2999, %v2942
      %3020 = vst.msk [vmem:[#allocation2 + $0x28c] sm:$0xf] %vm2999, %v2944
      %3021 = vst.msk [vmem:[#allocation2 + $0x2ac] sm:$0xf] %vm2999, %v2946
      %3022 = vst.msk [vmem:[#allocation2 + $0x2cc] sm:$0xf] %vm2999, %v2948
      %3023 = vst.msk [vmem:[#allocation2 + $0x2ec] sm:$0xf] %vm2999, %v2950
      %3024 = vst.msk [vmem:[#allocation2 + $0x30c] sm:$0xf] %vm2999, %v2952
      %3025 = vst.msk [vmem:[#allocation2 + $0x32c] sm:$0xf] %vm2999, %v2954
      %3026 = vst.msk [vmem:[#allocation2 + $0x34c] sm:$0xf] %vm2999, %v2956
      %3027 = vst.msk [vmem:[#allocation2 + $0x36c] sm:$0xf] %vm2999, %v2958
      %3028 = vst.msk [vmem:[#allocation2 + $0x38c] sm:$0xf] %vm2999, %v2960
      %3029 = vst.msk [vmem:[#allocation2 + $0x3ac] sm:$0xf] %vm2999, %v2962
      %3030 = vst.msk [vmem:[#allocation2 + $0x3cc] sm:$0xf] %vm2999, %v2964
      %3031 = vst.msk [vmem:[#allocation2 + $0x3ec] sm:$0xf] %vm2999, %v2966
      %v3032 = vrot.slane %v2743, 5
      %v3033 = vrot.slane %v2746, 6
      %v3034 = vor.u32 %v3032, %v3033
      %v3035 = vrot.slane %v3034, 4
      %v3036 = vrot.slane %v2756, 5
      %v3037 = vrot.slane %v2752, 6
      %v3038 = vor.u32 %v3036, %v3037
      %v3039 = vsel %vm1095, %v3035, %v3038
      %v3040 = vrot.slane %v3038, 4
      %v3041 = vshrl.u32 %v245, 16
      %v3043 = vrot.slane %v3041, 5
      %v3044 = vrot.slane %v2762, 6
      %v3045 = vor.u32 %v3043, %v3044
      %v3046 = vsel %vm1095, %v3040, %v3045
      %3047 = vrot.lane.b32.xlu0 %v1133, 84
      %v3048 = vpop.permute.xlu0 %3047
      %3049 = vrot.lane.b32.xlu0 %v1140, 84
      %v3050 = vpop.permute.xlu0 %3049
      %3051 = vrot.lane.b32.xlu0 %v1148, 84
      %v3052 = vpop.permute.xlu0 %3051
      %3053 = vrot.lane.b32.xlu0 %v1155, 84
      %v3054 = vpop.permute.xlu0 %3053
      %3055 = vrot.lane.b32.xlu0 %v1163, 84
      %v3056 = vpop.permute.xlu0 %3055
      %3057 = vrot.lane.b32.xlu0 %v1170, 84
      %v3058 = vpop.permute.xlu0 %3057
      %3059 = vrot.lane.b32.xlu0 %v1178, 84
      %v3060 = vpop.permute.xlu0 %3059
      %3061 = vrot.lane.b32.xlu0 %v1185, 84
      %v3062 = vpop.permute.xlu0 %3061
      %3063 = vrot.lane.b32.xlu0 %v1193, 84
      %v3064 = vpop.permute.xlu0 %3063
      %3065 = vrot.lane.b32.xlu0 %v1200, 84
      %v3066 = vpop.permute.xlu0 %3065
      %3067 = vrot.lane.b32.xlu0 %v1208, 84
      %v3068 = vpop.permute.xlu0 %3067
      %3069 = vrot.lane.b32.xlu0 %v1215, 84
      %v3070 = vpop.permute.xlu0 %3069
      %3071 = vrot.lane.b32.xlu0 %v1223, 84
      %v3072 = vpop.permute.xlu0 %3071
      %3073 = vrot.lane.b32.xlu0 %v1230, 84
      %v3074 = vpop.permute.xlu0 %3073
      %3075 = vrot.lane.b32.xlu0 %v1238, 84
      %v3076 = vpop.permute.xlu0 %3075
      %3077 = vrot.lane.b32.xlu0 %v1245, 84
      %v3078 = vpop.permute.xlu0 %3077
      %3079 = vrot.lane.b32.xlu0 %v1253, 84
      %v3080 = vpop.permute.xlu0 %3079
      %3081 = vrot.lane.b32.xlu0 %v1260, 84
      %v3082 = vpop.permute.xlu0 %3081
      %3083 = vrot.lane.b32.xlu0 %v1268, 84
      %v3084 = vpop.permute.xlu0 %3083
      %3085 = vrot.lane.b32.xlu0 %v1275, 84
      %v3086 = vpop.permute.xlu0 %3085
      %3087 = vrot.lane.b32.xlu0 %v1283, 84
      %v3088 = vpop.permute.xlu0 %3087
      %3089 = vrot.lane.b32.xlu0 %v1290, 84
      %v3090 = vpop.permute.xlu0 %3089
      %3091 = vrot.lane.b32.xlu0 %v1298, 84
      %v3092 = vpop.permute.xlu0 %3091
      %3093 = vrot.lane.b32.xlu0 %v1305, 84
      %v3094 = vpop.permute.xlu0 %3093
      %3095 = vrot.lane.b32.xlu0 %v1313, 84
      %v3096 = vpop.permute.xlu0 %3095
      %3097 = vrot.lane.b32.xlu0 %v1320, 84
      %v3098 = vpop.permute.xlu0 %3097
      %3099 = vrot.lane.b32.xlu0 %v1328, 84
      %v3100 = vpop.permute.xlu0 %3099
      %3101 = vrot.lane.b32.xlu0 %v1335, 84
      %v3102 = vpop.permute.xlu0 %3101
      %3103 = vrot.lane.b32.xlu0 %v2271, 84
      %v3104 = vpop.permute.xlu0 %3103
      %3105 = vrot.lane.b32.xlu0 %v2278, 84
      %v3106 = vpop.permute.xlu0 %3105
      %3107 = vrot.lane.b32.xlu0 %v3039, 84
      %v3108 = vpop.permute.xlu0 %3107
      %3109 = vrot.lane.b32.xlu0 %v3046, 84
      %v3110 = vpop.permute.xlu0 %3109
      %vm3143 = vcmask 978592
      %3144 = vst.msk [vmem:[#allocation2 + $0xc] sm:$0xf] %vm3143, %v3048
      %3145 = vst.msk [vmem:[#allocation2 + $0x2c] sm:$0xf] %vm3143, %v3050
      %3146 = vst.msk [vmem:[#allocation2 + $0x4c] sm:$0xf] %vm3143, %v3052
      %3147 = vst.msk [vmem:[#allocation2 + $0x6c] sm:$0xf] %vm3143, %v3054
      %3148 = vst.msk [vmem:[#allocation2 + $0x8c] sm:$0xf] %vm3143, %v3056
      %3149 = vst.msk [vmem:[#allocation2 + $0xac] sm:$0xf] %vm3143, %v3058
      %3150 = vst.msk [vmem:[#allocation2 + $0xcc] sm:$0xf] %vm3143, %v3060
      %3151 = vst.msk [vmem:[#allocation2 + $0xec] sm:$0xf] %vm3143, %v3062
      %3152 = vst.msk [vmem:[#allocation2 + $0x10c] sm:$0xf] %vm3143, %v3064
      %3153 = vst.msk [vmem:[#allocation2 + $0x12c] sm:$0xf] %vm3143, %v3066
      %3154 = vst.msk [vmem:[#allocation2 + $0x14c] sm:$0xf] %vm3143, %v3068
      %3155 = vst.msk [vmem:[#allocation2 + $0x16c] sm:$0xf] %vm3143, %v3070
      %3156 = vst.msk [vmem:[#allocation2 + $0x18c] sm:$0xf] %vm3143, %v3072
      %3157 = vst.msk [vmem:[#allocation2 + $0x1ac] sm:$0xf] %vm3143, %v3074
      %3158 = vst.msk [vmem:[#allocation2 + $0x1cc] sm:$0xf] %vm3143, %v3076
      %3159 = vst.msk [vmem:[#allocation2 + $0x1ec] sm:$0xf] %vm3143, %v3078
      %3160 = vst.msk [vmem:[#allocation2 + $0x20c] sm:$0xf] %vm3143, %v3080
      %3161 = vst.msk [vmem:[#allocation2 + $0x22c] sm:$0xf] %vm3143, %v3082
      %3162 = vst.msk [vmem:[#allocation2 + $0x24c] sm:$0xf] %vm3143, %v3084
      %3163 = vst.msk [vmem:[#allocation2 + $0x26c] sm:$0xf] %vm3143, %v3086
      %3164 = vst.msk [vmem:[#allocation2 + $0x28c] sm:$0xf] %vm3143, %v3088
      %3165 = vst.msk [vmem:[#allocation2 + $0x2ac] sm:$0xf] %vm3143, %v3090
      %3166 = vst.msk [vmem:[#allocation2 + $0x2cc] sm:$0xf] %vm3143, %v3092
      %3167 = vst.msk [vmem:[#allocation2 + $0x2ec] sm:$0xf] %vm3143, %v3094
      %3168 = vst.msk [vmem:[#allocation2 + $0x30c] sm:$0xf] %vm3143, %v3096
      %3169 = vst.msk [vmem:[#allocation2 + $0x32c] sm:$0xf] %vm3143, %v3098
      %3170 = vst.msk [vmem:[#allocation2 + $0x34c] sm:$0xf] %vm3143, %v3100
      %3171 = vst.msk [vmem:[#allocation2 + $0x36c] sm:$0xf] %vm3143, %v3102
      %3172 = vst.msk [vmem:[#allocation2 + $0x38c] sm:$0xf] %vm3143, %v3104
      %3173 = vst.msk [vmem:[#allocation2 + $0x3ac] sm:$0xf] %vm3143, %v3106
      %3174 = vst.msk [vmem:[#allocation2 + $0x3cc] sm:$0xf] %vm3143, %v3108
      %3175 = vst.msk [vmem:[#allocation2 + $0x3ec] sm:$0xf] %vm3143, %v3110
      %v3176 = vrot.slane %v243, 6
      %v3177 = vrot.slane %v3176, 4
      %v3178 = vrot.slane %v244, 6
      %v3179 = vsel %vm1534, %v3177, %v3178
      %v3180 = vrot.slane %v3178, 4
      %v3181 = vrot.slane %v245, 6
      %v3182 = vsel %vm1534, %v3180, %v3181
      %3183 = vrot.lane.b32.xlu0 %v1552, 120
      %v3184 = vpop.permute.xlu0 %3183
      %3185 = vrot.lane.b32.xlu0 %v1555, 120
      %v3186 = vpop.permute.xlu0 %3185
      %3187 = vrot.lane.b32.xlu0 %v1559, 120
      %v3188 = vpop.permute.xlu0 %3187
      %3189 = vrot.lane.b32.xlu0 %v1562, 120
      %v3190 = vpop.permute.xlu0 %3189
      %3191 = vrot.lane.b32.xlu0 %v1566, 120
      %v3192 = vpop.permute.xlu0 %3191
      %3193 = vrot.lane.b32.xlu0 %v1569, 120
      %v3194 = vpop.permute.xlu0 %3193
      %3195 = vrot.lane.b32.xlu0 %v1573, 120
      %v3196 = vpop.permute.xlu0 %3195
      %3197 = vrot.lane.b32.xlu0 %v1576, 120
      %v3198 = vpop.permute.xlu0 %3197
      %3199 = vrot.lane.b32.xlu0 %v1580, 120
      %v3200 = vpop.permute.xlu0 %3199
      %3201 = vrot.lane.b32.xlu0 %v1583, 120
      %v3202 = vpop.permute.xlu0 %3201
      %3203 = vrot.lane.b32.xlu0 %v1587, 120
      %v3204 = vpop.permute.xlu0 %3203
      %3205 = vrot.lane.b32.xlu0 %v1590, 120
      %v3206 = vpop.permute.xlu0 %3205
      %3207 = vrot.lane.b32.xlu0 %v1594, 120
      %v3208 = vpop.permute.xlu0 %3207
      %3209 = vrot.lane.b32.xlu0 %v1597, 120
      %v3210 = vpop.permute.xlu0 %3209
      %3211 = vrot.lane.b32.xlu0 %v1601, 120
      %v3212 = vpop.permute.xlu0 %3211
      %3213 = vrot.lane.b32.xlu0 %v1604, 120
      %v3214 = vpop.permute.xlu0 %3213
      %3215 = vrot.lane.b32.xlu0 %v1608, 120
      %v3216 = vpop.permute.xlu0 %3215
      %3217 = vrot.lane.b32.xlu0 %v1611, 120
      %v3218 = vpop.permute.xlu0 %3217
      %3219 = vrot.lane.b32.xlu0 %v1615, 120
      %v3220 = vpop.permute.xlu0 %3219
      %3221 = vrot.lane.b32.xlu0 %v1618, 120
      %v3222 = vpop.permute.xlu0 %3221
      %3223 = vrot.lane.b32.xlu0 %v1622, 120
      %v3224 = vpop.permute.xlu0 %3223
      %3225 = vrot.lane.b32.xlu0 %v1625, 120
      %v3226 = vpop.permute.xlu0 %3225
      %3227 = vrot.lane.b32.xlu0 %v1629, 120
      %v3228 = vpop.permute.xlu0 %3227
      %3229 = vrot.lane.b32.xlu0 %v1632, 120
      %v3230 = vpop.permute.xlu0 %3229
      %3231 = vrot.lane.b32.xlu0 %v1636, 120
      %v3232 = vpop.permute.xlu0 %3231
      %3233 = vrot.lane.b32.xlu0 %v1639, 120
      %v3234 = vpop.permute.xlu0 %3233
      %3235 = vrot.lane.b32.xlu0 %v1643, 120
      %v3236 = vpop.permute.xlu0 %3235
      %3237 = vrot.lane.b32.xlu0 %v1646, 120
      %v3238 = vpop.permute.xlu0 %3237
      %3239 = vrot.lane.b32.xlu0 %v2411, 120
      %v3240 = vpop.permute.xlu0 %3239
      %3241 = vrot.lane.b32.xlu0 %v2414, 120
      %v3242 = vpop.permute.xlu0 %3241
      %3243 = vrot.lane.b32.xlu0 %v3179, 120
      %v3244 = vpop.permute.xlu0 %3243
      %3245 = vrot.lane.b32.xlu0 %v3182, 120
      %v3246 = vpop.permute.xlu0 %3245
      %v3247 = vrot.slane %v3184, 4
      %v3248 = vrot.slane %v3186, 4
      %v3249 = vrot.slane %v3188, 4
      %v3250 = vrot.slane %v3190, 4
      %v3251 = vrot.slane %v3192, 4
      %v3252 = vrot.slane %v3194, 4
      %v3253 = vrot.slane %v3196, 4
      %v3254 = vrot.slane %v3198, 4
      %v3255 = vrot.slane %v3200, 4
      %v3256 = vrot.slane %v3202, 4
      %v3257 = vrot.slane %v3204, 4
      %v3258 = vrot.slane %v3206, 4
      %v3259 = vrot.slane %v3208, 4
      %v3260 = vrot.slane %v3210, 4
      %v3261 = vrot.slane %v3212, 4
      %v3262 = vrot.slane %v3214, 4
      %v3263 = vrot.slane %v3216, 4
      %v3264 = vrot.slane %v3218, 4
      %v3265 = vrot.slane %v3220, 4
      %v3266 = vrot.slane %v3222, 4
      %v3267 = vrot.slane %v3224, 4
      %v3268 = vrot.slane %v3226, 4
      %v3269 = vrot.slane %v3228, 4
      %v3270 = vrot.slane %v3230, 4
      %v3271 = vrot.slane %v3232, 4
      %v3272 = vrot.slane %v3234, 4
      %v3273 = vrot.slane %v3236, 4
      %v3274 = vrot.slane %v3238, 4
      %v3275 = vrot.slane %v3240, 4
      %v3276 = vrot.slane %v3242, 4
      %v3277 = vrot.slane %v3244, 4
      %v3278 = vrot.slane %v3246, 4
      %vm3279 = vcmask 982016
      %v3280 = vsel %vm3279, %v3247, %v3184
      %v3281 = vsel %vm3279, %v3248, %v3186
      %v3282 = vsel %vm3279, %v3249, %v3188
      %v3283 = vsel %vm3279, %v3250, %v3190
      %v3284 = vsel %vm3279, %v3251, %v3192
      %v3285 = vsel %vm3279, %v3252, %v3194
      %v3286 = vsel %vm3279, %v3253, %v3196
      %v3287 = vsel %vm3279, %v3254, %v3198
      %v3288 = vsel %vm3279, %v3255, %v3200
      %v3289 = vsel %vm3279, %v3256, %v3202
      %v3290 = vsel %vm3279, %v3257, %v3204
      %v3291 = vsel %vm3279, %v3258, %v3206
      %v3292 = vsel %vm3279, %v3259, %v3208
      %v3293 = vsel %vm3279, %v3260, %v3210
      %v3294 = vsel %vm3279, %v3261, %v3212
      %v3295 = vsel %vm3279, %v3262, %v3214
      %v3296 = vsel %vm3279, %v3263, %v3216
      %v3297 = vsel %vm3279, %v3264, %v3218
      %v3298 = vsel %vm3279, %v3265, %v3220
      %v3299 = vsel %vm3279, %v3266, %v3222
      %v3300 = vsel %vm3279, %v3267, %v3224
      %v3301 = vsel %vm3279, %v3268, %v3226
      %v3302 = vsel %vm3279, %v3269, %v3228
      %v3303 = vsel %vm3279, %v3270, %v3230
      %v3304 = vsel %vm3279, %v3271, %v3232
      %v3305 = vsel %vm3279, %v3272, %v3234
      %v3306 = vsel %vm3279, %v3273, %v3236
      %v3307 = vsel %vm3279, %v3274, %v3238
      %v3308 = vsel %vm3279, %v3275, %v3240
      %v3309 = vsel %vm3279, %v3276, %v3242
      %v3310 = vsel %vm3279, %v3277, %v3244
      %v3311 = vsel %vm3279, %v3278, %v3246
      %vm3344 = vcmask 1044416
      %vm3345 = vcmask 228356
      %vm3346 = vmor %vm3345, %vm3344
      %3347 = vst.msk [vmem:[#allocation2 + $0xc] sm:$0xff] %vm3346, %v3280
      %3348 = vst.msk [vmem:[#allocation2 + $0x2c] sm:$0xff] %vm3346, %v3281
      %3349 = vst.msk [vmem:[#allocation2 + $0x4c] sm:$0xff] %vm3346, %v3282
      %3350 = vst.msk [vmem:[#allocation2 + $0x6c] sm:$0xff] %vm3346, %v3283
      %3351 = vst.msk [vmem:[#allocation2 + $0x8c] sm:$0xff] %vm3346, %v3284
      %3352 = vst.msk [vmem:[#allocation2 + $0xac] sm:$0xff] %vm3346, %v3285
      %3353 = vst.msk [vmem:[#allocation2 + $0xcc] sm:$0xff] %vm3346, %v3286
      %3354 = vst.msk [vmem:[#allocation2 + $0xec] sm:$0xff] %vm3346, %v3287
      %3355 = vst.msk [vmem:[#allocation2 + $0x10c] sm:$0xff] %vm3346, %v3288
      %3356 = vst.msk [vmem:[#allocation2 + $0x12c] sm:$0xff] %vm3346, %v3289
      %3357 = vst.msk [vmem:[#allocation2 + $0x14c] sm:$0xff] %vm3346, %v3290
      %3358 = vst.msk [vmem:[#allocation2 + $0x16c] sm:$0xff] %vm3346, %v3291
      %3359 = vst.msk [vmem:[#allocation2 + $0x18c] sm:$0xff] %vm3346, %v3292
      %3360 = vst.msk [vmem:[#allocation2 + $0x1ac] sm:$0xff] %vm3346, %v3293
      %3361 = vst.msk [vmem:[#allocation2 + $0x1cc] sm:$0xff] %vm3346, %v3294
      %3362 = vst.msk [vmem:[#allocation2 + $0x1ec] sm:$0xff] %vm3346, %v3295
      %3363 = vst.msk [vmem:[#allocation2 + $0x20c] sm:$0xff] %vm3346, %v3296
      %3364 = vst.msk [vmem:[#allocation2 + $0x22c] sm:$0xff] %vm3346, %v3297
      %3365 = vst.msk [vmem:[#allocation2 + $0x24c] sm:$0xff] %vm3346, %v3298
      %3366 = vst.msk [vmem:[#allocation2 + $0x26c] sm:$0xff] %vm3346, %v3299
      %3367 = vst.msk [vmem:[#allocation2 + $0x28c] sm:$0xff] %vm3346, %v3300
      %3368 = vst.msk [vmem:[#allocation2 + $0x2ac] sm:$0xff] %vm3346, %v3301
      %3369 = vst.msk [vmem:[#allocation2 + $0x2cc] sm:$0xff] %vm3346, %v3302
      %3370 = vst.msk [vmem:[#allocation2 + $0x2ec] sm:$0xff] %vm3346, %v3303
      %3371 = vst.msk [vmem:[#allocation2 + $0x30c] sm:$0xff] %vm3346, %v3304
      %3372 = vst.msk [vmem:[#allocation2 + $0x32c] sm:$0xff] %vm3346, %v3305
      %3373 = vst.msk [vmem:[#allocation2 + $0x34c] sm:$0xff] %vm3346, %v3306
      %3374 = vst.msk [vmem:[#allocation2 + $0x36c] sm:$0xff] %vm3346, %v3307
      %3375 = vst.msk [vmem:[#allocation2 + $0x38c] sm:$0xff] %vm3346, %v3308
      %3376 = vst.msk [vmem:[#allocation2 + $0x3ac] sm:$0xff] %vm3346, %v3309
      %3377 = vst.msk [vmem:[#allocation2 + $0x3cc] sm:$0xff] %vm3346, %v3310
      %3378 = vst.msk [vmem:[#allocation2 + $0x3ec] sm:$0xff] %vm3346, %v3311
      %3381 = vrot.lane.b32.xlu0 %v201, 28
      %v3382 = vpop.permute.xlu0 %3381
      %3383 = vrot.lane.b32.xlu0 %v202, 28
      %v3384 = vpop.permute.xlu0 %3383
      %3385 = vrot.lane.b32.xlu0 %v204, 28
      %v3386 = vpop.permute.xlu0 %3385
      %3387 = vrot.lane.b32.xlu0 %v205, 28
      %v3388 = vpop.permute.xlu0 %3387
      %3389 = vrot.lane.b32.xlu0 %v207, 28
      %v3390 = vpop.permute.xlu0 %3389
      %3391 = vrot.lane.b32.xlu0 %v208, 28
      %v3392 = vpop.permute.xlu0 %3391
      %3393 = vrot.lane.b32.xlu0 %v210, 28
      %v3394 = vpop.permute.xlu0 %3393
      %3395 = vrot.lane.b32.xlu0 %v211, 28
      %v3396 = vpop.permute.xlu0 %3395
      %3397 = vrot.lane.b32.xlu0 %v213, 28
      %v3398 = vpop.permute.xlu0 %3397
      %3399 = vrot.lane.b32.xlu0 %v214, 28
      %v3400 = vpop.permute.xlu0 %3399
      %3401 = vrot.lane.b32.xlu0 %v216, 28
      %v3402 = vpop.permute.xlu0 %3401
      %3403 = vrot.lane.b32.xlu0 %v217, 28
      %v3404 = vpop.permute.xlu0 %3403
      %3405 = vrot.lane.b32.xlu0 %v219, 28
      %v3406 = vpop.permute.xlu0 %3405
      %3407 = vrot.lane.b32.xlu0 %v220, 28
      %v3408 = vpop.permute.xlu0 %3407
      %3409 = vrot.lane.b32.xlu0 %v222, 28
      %v3410 = vpop.permute.xlu0 %3409
      %3411 = vrot.lane.b32.xlu0 %v223, 28
      %v3412 = vpop.permute.xlu0 %3411
      %3413 = vrot.lane.b32.xlu0 %v225, 28
      %v3414 = vpop.permute.xlu0 %3413
      %3415 = vrot.lane.b32.xlu0 %v226, 28
      %v3416 = vpop.permute.xlu0 %3415
      %3417 = vrot.lane.b32.xlu0 %v228, 28
      %v3418 = vpop.permute.xlu0 %3417
      %3419 = vrot.lane.b32.xlu0 %v229, 28
      %v3420 = vpop.permute.xlu0 %3419
      %3421 = vrot.lane.b32.xlu0 %v231, 28
      %v3422 = vpop.permute.xlu0 %3421
      %3423 = vrot.lane.b32.xlu0 %v232, 28
      %v3424 = vpop.permute.xlu0 %3423
      %3425 = vrot.lane.b32.xlu0 %v234, 28
      %v3426 = vpop.permute.xlu0 %3425
      %3427 = vrot.lane.b32.xlu0 %v235, 28
      %v3428 = vpop.permute.xlu0 %3427
      %3429 = vrot.lane.b32.xlu0 %v237, 28
      %v3430 = vpop.permute.xlu0 %3429
      %3431 = vrot.lane.b32.xlu0 %v238, 28
      %v3432 = vpop.permute.xlu0 %3431
      %3433 = vrot.lane.b32.xlu0 %v240, 28
      %v3434 = vpop.permute.xlu0 %3433
      %3435 = vrot.lane.b32.xlu0 %v241, 28
      %v3436 = vpop.permute.xlu0 %3435
      %3437 = vrot.lane.b32.xlu0 %v243, 28
      %v3438 = vpop.permute.xlu0 %3437
      %3439 = vrot.lane.b32.xlu0 %v244, 28
      %v3440 = vpop.permute.xlu0 %3439
      %3441 = vrot.lane.b32.xlu0 %v246, 28
      %v3442 = vpop.permute.xlu0 %3441
      %3443 = vrot.lane.b32.xlu0 %v247, 28
      %v3444 = vpop.permute.xlu0 %3443
      %vm3477 = vcmask 519392
      %3478 = vst.msk [vmem:[#allocation2 + $0x10] sm:$0xf] %vm3477, %v3382
      %3479 = vst.msk [vmem:[#allocation2 + $0x30] sm:$0xf] %vm3477, %v3384
      %3480 = vst.msk [vmem:[#allocation2 + $0x50] sm:$0xf] %vm3477, %v3386
      %3481 = vst.msk [vmem:[#allocation2 + $0x70] sm:$0xf] %vm3477, %v3388
      %3482 = vst.msk [vmem:[#allocation2 + $0x90] sm:$0xf] %vm3477, %v3390
      %3483 = vst.msk [vmem:[#allocation2 + $0xb0] sm:$0xf] %vm3477, %v3392
      %3484 = vst.msk [vmem:[#allocation2 + $0xd0] sm:$0xf] %vm3477, %v3394
      %3485 = vst.msk [vmem:[#allocation2 + $0xf0] sm:$0xf] %vm3477, %v3396
      %3486 = vst.msk [vmem:[#allocation2 + $0x110] sm:$0xf] %vm3477, %v3398
      %3487 = vst.msk [vmem:[#allocation2 + $0x130] sm:$0xf] %vm3477, %v3400
      %3488 = vst.msk [vmem:[#allocation2 + $0x150] sm:$0xf] %vm3477, %v3402
      %3489 = vst.msk [vmem:[#allocation2 + $0x170] sm:$0xf] %vm3477, %v3404
      %3490 = vst.msk [vmem:[#allocation2 + $0x190] sm:$0xf] %vm3477, %v3406
      %3491 = vst.msk [vmem:[#allocation2 + $0x1b0] sm:$0xf] %vm3477, %v3408
      %3492 = vst.msk [vmem:[#allocation2 + $0x1d0] sm:$0xf] %vm3477, %v3410
      %3493 = vst.msk [vmem:[#allocation2 + $0x1f0] sm:$0xf] %vm3477, %v3412
      %3494 = vst.msk [vmem:[#allocation2 + $0x210] sm:$0xf] %vm3477, %v3414
      %3495 = vst.msk [vmem:[#allocation2 + $0x230] sm:$0xf] %vm3477, %v3416
      %3496 = vst.msk [vmem:[#allocation2 + $0x250] sm:$0xf] %vm3477, %v3418
      %3497 = vst.msk [vmem:[#allocation2 + $0x270] sm:$0xf] %vm3477, %v3420
      %3498 = vst.msk [vmem:[#allocation2 + $0x290] sm:$0xf] %vm3477, %v3422
      %3499 = vst.msk [vmem:[#allocation2 + $0x2b0] sm:$0xf] %vm3477, %v3424
      %3500 = vst.msk [vmem:[#allocation2 + $0x2d0] sm:$0xf] %vm3477, %v3426
      %3501 = vst.msk [vmem:[#allocation2 + $0x2f0] sm:$0xf] %vm3477, %v3428
      %3502 = vst.msk [vmem:[#allocation2 + $0x310] sm:$0xf] %vm3477, %v3430
      %3503 = vst.msk [vmem:[#allocation2 + $0x330] sm:$0xf] %vm3477, %v3432
      %3504 = vst.msk [vmem:[#allocation2 + $0x350] sm:$0xf] %vm3477, %v3434
      %3505 = vst.msk [vmem:[#allocation2 + $0x370] sm:$0xf] %vm3477, %v3436
      %3506 = vst.msk [vmem:[#allocation2 + $0x390] sm:$0xf] %vm3477, %v3438
      %3507 = vst.msk [vmem:[#allocation2 + $0x3b0] sm:$0xf] %vm3477, %v3440
      %3508 = vst.msk [vmem:[#allocation2 + $0x3d0] sm:$0xf] %vm3477, %v3442
      %3509 = vst.msk [vmem:[#allocation2 + $0x3f0] sm:$0xf] %vm3477, %v3444
      %v3511 = vshrl.u32 %v246, 16
      %v3513 = vrot.slane %v3511, 4
      %v3514 = vshll.u32 %v246, 16
      %v3516 = vrot.slane %v3514, 5
      %v3517 = vor.u32 %v3513, %v3516
      %v3518 = vrot.slane %v3517, 4
      %v3520 = vshll.u32 %v247, 16
      %v3522 = vrot.slane %v3520, 5
      %v3523 = vsel %vm287, %v3518, %v3522
      %v3524 = vshrl.u32 %v247, 16
      %v3526 = vrot.slane %v3524, 4
      %v3527 = vor.u32 %v3526, %v3522
      %v3528 = vrot.slane %v3527, 4
      %v3530 = vshll.u32 %v248, 16
      %v3532 = vrot.slane %v3530, 5
      %v3533 = vsel %vm287, %v3528, %v3532
      %3534 = vrot.lane.b32.xlu0 %v373, 64
      %v3535 = vpop.permute.xlu0 %3534
      %3536 = vrot.lane.b32.xlu0 %v383, 64
      %v3537 = vpop.permute.xlu0 %3536
      %3538 = vrot.lane.b32.xlu0 %v397, 64
      %v3539 = vpop.permute.xlu0 %3538
      %3540 = vrot.lane.b32.xlu0 %v407, 64
      %v3541 = vpop.permute.xlu0 %3540
      %3542 = vrot.lane.b32.xlu0 %v421, 64
      %v3543 = vpop.permute.xlu0 %3542
      %3544 = vrot.lane.b32.xlu0 %v431, 64
      %v3545 = vpop.permute.xlu0 %3544
      %3546 = vrot.lane.b32.xlu0 %v445, 64
      %v3547 = vpop.permute.xlu0 %3546
      %3548 = vrot.lane.b32.xlu0 %v455, 64
      %v3549 = vpop.permute.xlu0 %3548
      %3550 = vrot.lane.b32.xlu0 %v469, 64
      %v3551 = vpop.permute.xlu0 %3550
      %3552 = vrot.lane.b32.xlu0 %v479, 64
      %v3553 = vpop.permute.xlu0 %3552
      %3554 = vrot.lane.b32.xlu0 %v493, 64
      %v3555 = vpop.permute.xlu0 %3554
      %3556 = vrot.lane.b32.xlu0 %v503, 64
      %v3557 = vpop.permute.xlu0 %3556
      %3558 = vrot.lane.b32.xlu0 %v517, 64
      %v3559 = vpop.permute.xlu0 %3558
      %3560 = vrot.lane.b32.xlu0 %v527, 64
      %v3561 = vpop.permute.xlu0 %3560
      %3562 = vrot.lane.b32.xlu0 %v541, 64
      %v3563 = vpop.permute.xlu0 %3562
      %3564 = vrot.lane.b32.xlu0 %v551, 64
      %v3565 = vpop.permute.xlu0 %3564
      %3566 = vrot.lane.b32.xlu0 %v565, 64
      %v3567 = vpop.permute.xlu0 %3566
      %3568 = vrot.lane.b32.xlu0 %v575, 64
      %v3569 = vpop.permute.xlu0 %3568
      %3570 = vrot.lane.b32.xlu0 %v589, 64
      %v3571 = vpop.permute.xlu0 %3570
      %3572 = vrot.lane.b32.xlu0 %v599, 64
      %v3573 = vpop.permute.xlu0 %3572
      %3574 = vrot.lane.b32.xlu0 %v613, 64
      %v3575 = vpop.permute.xlu0 %3574
      %3576 = vrot.lane.b32.xlu0 %v623, 64
      %v3577 = vpop.permute.xlu0 %3576
      %3578 = vrot.lane.b32.xlu0 %v637, 64
      %v3579 = vpop.permute.xlu0 %3578
      %3580 = vrot.lane.b32.xlu0 %v647, 64
      %v3581 = vpop.permute.xlu0 %3580
      %3582 = vrot.lane.b32.xlu0 %v661, 64
      %v3583 = vpop.permute.xlu0 %3582
      %3584 = vrot.lane.b32.xlu0 %v671, 64
      %v3585 = vpop.permute.xlu0 %3584
      %3586 = vrot.lane.b32.xlu0 %v1920, 64
      %v3587 = vpop.permute.xlu0 %3586
      %3588 = vrot.lane.b32.xlu0 %v1930, 64
      %v3589 = vpop.permute.xlu0 %3588
      %3590 = vrot.lane.b32.xlu0 %v2755, 64
      %v3591 = vpop.permute.xlu0 %3590
      %3592 = vrot.lane.b32.xlu0 %v2765, 64
      %v3593 = vpop.permute.xlu0 %3592
      %3594 = vrot.lane.b32.xlu0 %v3523, 64
      %v3595 = vpop.permute.xlu0 %3594
      %3596 = vrot.lane.b32.xlu0 %v3533, 64
      %v3597 = vpop.permute.xlu0 %3596
      %vm3630 = vcmask 814592
      %3631 = vst.msk [vmem:[#allocation2 + $0x10] sm:$0xf] %vm3630, %v3535
      %3632 = vst.msk [vmem:[#allocation2 + $0x30] sm:$0xf] %vm3630, %v3537
      %3633 = vst.msk [vmem:[#allocation2 + $0x50] sm:$0xf] %vm3630, %v3539
      %3634 = vst.msk [vmem:[#allocation2 + $0x70] sm:$0xf] %vm3630, %v3541
      %3635 = vst.msk [vmem:[#allocation2 + $0x90] sm:$0xf] %vm3630, %v3543
      %3636 = vst.msk [vmem:[#allocation2 + $0xb0] sm:$0xf] %vm3630, %v3545
      %3637 = vst.msk [vmem:[#allocation2 + $0xd0] sm:$0xf] %vm3630, %v3547
      %3638 = vst.msk [vmem:[#allocation2 + $0xf0] sm:$0xf] %vm3630, %v3549
      %3639 = vst.msk [vmem:[#allocation2 + $0x110] sm:$0xf] %vm3630, %v3551
      %3640 = vst.msk [vmem:[#allocation2 + $0x130] sm:$0xf] %vm3630, %v3553
      %3641 = vst.msk [vmem:[#allocation2 + $0x150] sm:$0xf] %vm3630, %v3555
      %3642 = vst.msk [vmem:[#allocation2 + $0x170] sm:$0xf] %vm3630, %v3557
      %3643 = vst.msk [vmem:[#allocation2 + $0x190] sm:$0xf] %vm3630, %v3559
      %3644 = vst.msk [vmem:[#allocation2 + $0x1b0] sm:$0xf] %vm3630, %v3561
      %3645 = vst.msk [vmem:[#allocation2 + $0x1d0] sm:$0xf] %vm3630, %v3563
      %3646 = vst.msk [vmem:[#allocation2 + $0x1f0] sm:$0xf] %vm3630, %v3565
      %3647 = vst.msk [vmem:[#allocation2 + $0x210] sm:$0xf] %vm3630, %v3567
      %3648 = vst.msk [vmem:[#allocation2 + $0x230] sm:$0xf] %vm3630, %v3569
      %3649 = vst.msk [vmem:[#allocation2 + $0x250] sm:$0xf] %vm3630, %v3571
      %3650 = vst.msk [vmem:[#allocation2 + $0x270] sm:$0xf] %vm3630, %v3573
      %3651 = vst.msk [vmem:[#allocation2 + $0x290] sm:$0xf] %vm3630, %v3575
      %3652 = vst.msk [vmem:[#allocation2 + $0x2b0] sm:$0xf] %vm3630, %v3577
      %3653 = vst.msk [vmem:[#allocation2 + $0x2d0] sm:$0xf] %vm3630, %v3579
      %3654 = vst.msk [vmem:[#allocation2 + $0x2f0] sm:$0xf] %vm3630, %v3581
      %3655 = vst.msk [vmem:[#allocation2 + $0x310] sm:$0xf] %vm3630, %v3583
      %3656 = vst.msk [vmem:[#allocation2 + $0x330] sm:$0xf] %vm3630, %v3585
      %3657 = vst.msk [vmem:[#allocation2 + $0x350] sm:$0xf] %vm3630, %v3587
      %3658 = vst.msk [vmem:[#allocation2 + $0x370] sm:$0xf] %vm3630, %v3589
      %3659 = vst.msk [vmem:[#allocation2 + $0x390] sm:$0xf] %vm3630, %v3591
      %3660 = vst.msk [vmem:[#allocation2 + $0x3b0] sm:$0xf] %vm3630, %v3593
      %3661 = vst.msk [vmem:[#allocation2 + $0x3d0] sm:$0xf] %vm3630, %v3595
      %3662 = vst.msk [vmem:[#allocation2 + $0x3f0] sm:$0xf] %vm3630, %v3597
      %v3664 = vrot.slane %v246, 5
      %v3665 = vrot.slane %v3664, 4
      %v3666 = vrot.slane %v247, 5
      %v3667 = vsel %vm851, %v3665, %v3666
      %v3668 = vrot.slane %v3666, 4
      %v3669 = vrot.slane %v248, 5
      %v3670 = vsel %vm851, %v3668, %v3669
      %3671 = vrot.lane.b32.xlu0 %v876, 100
      %v3672 = vpop.permute.xlu0 %3671
      %3673 = vrot.lane.b32.xlu0 %v879, 100
      %v3674 = vpop.permute.xlu0 %3673
      %3675 = vrot.lane.b32.xlu0 %v883, 100
      %v3676 = vpop.permute.xlu0 %3675
      %3677 = vrot.lane.b32.xlu0 %v886, 100
      %v3678 = vpop.permute.xlu0 %3677
      %3679 = vrot.lane.b32.xlu0 %v890, 100
      %v3680 = vpop.permute.xlu0 %3679
      %3681 = vrot.lane.b32.xlu0 %v893, 100
      %v3682 = vpop.permute.xlu0 %3681
      %3683 = vrot.lane.b32.xlu0 %v897, 100
      %v3684 = vpop.permute.xlu0 %3683
      %3685 = vrot.lane.b32.xlu0 %v900, 100
      %v3686 = vpop.permute.xlu0 %3685
      %3687 = vrot.lane.b32.xlu0 %v904, 100
      %v3688 = vpop.permute.xlu0 %3687
      %3689 = vrot.lane.b32.xlu0 %v907, 100
      %v3690 = vpop.permute.xlu0 %3689
      %3691 = vrot.lane.b32.xlu0 %v911, 100
      %v3692 = vpop.permute.xlu0 %3691
      %3693 = vrot.lane.b32.xlu0 %v914, 100
      %v3694 = vpop.permute.xlu0 %3693
      %3695 = vrot.lane.b32.xlu0 %v918, 100
      %v3696 = vpop.permute.xlu0 %3695
      %3697 = vrot.lane.b32.xlu0 %v921, 100
      %v3698 = vpop.permute.xlu0 %3697
      %3699 = vrot.lane.b32.xlu0 %v925, 100
      %v3700 = vpop.permute.xlu0 %3699
      %3701 = vrot.lane.b32.xlu0 %v928, 100
      %v3702 = vpop.permute.xlu0 %3701
      %3703 = vrot.lane.b32.xlu0 %v932, 100
      %v3704 = vpop.permute.xlu0 %3703
      %3705 = vrot.lane.b32.xlu0 %v935, 100
      %v3706 = vpop.permute.xlu0 %3705
      %3707 = vrot.lane.b32.xlu0 %v939, 100
      %v3708 = vpop.permute.xlu0 %3707
      %3709 = vrot.lane.b32.xlu0 %v942, 100
      %v3710 = vpop.permute.xlu0 %3709
      %3711 = vrot.lane.b32.xlu0 %v946, 100
      %v3712 = vpop.permute.xlu0 %3711
      %3713 = vrot.lane.b32.xlu0 %v949, 100
      %v3714 = vpop.permute.xlu0 %3713
      %3715 = vrot.lane.b32.xlu0 %v953, 100
      %v3716 = vpop.permute.xlu0 %3715
      %3717 = vrot.lane.b32.xlu0 %v956, 100
      %v3718 = vpop.permute.xlu0 %3717
      %3719 = vrot.lane.b32.xlu0 %v960, 100
      %v3720 = vpop.permute.xlu0 %3719
      %3721 = vrot.lane.b32.xlu0 %v963, 100
      %v3722 = vpop.permute.xlu0 %3721
      %3723 = vrot.lane.b32.xlu0 %v2064, 100
      %v3724 = vpop.permute.xlu0 %3723
      %3725 = vrot.lane.b32.xlu0 %v2067, 100
      %v3726 = vpop.permute.xlu0 %3725
      %3727 = vrot.lane.b32.xlu0 %v2899, 100
      %v3728 = vpop.permute.xlu0 %3727
      %3729 = vrot.lane.b32.xlu0 %v2902, 100
      %v3730 = vpop.permute.xlu0 %3729
      %3731 = vrot.lane.b32.xlu0 %v3667, 100
      %v3732 = vpop.permute.xlu0 %3731
      %3733 = vrot.lane.b32.xlu0 %v3670, 100
      %v3734 = vpop.permute.xlu0 %3733
      %v3735 = vrot.slane %v3672, 4
      %v3736 = vrot.slane %v3674, 4
      %v3737 = vrot.slane %v3676, 4
      %v3738 = vrot.slane %v3678, 4
      %v3739 = vrot.slane %v3680, 4
      %v3740 = vrot.slane %v3682, 4
      %v3741 = vrot.slane %v3684, 4
      %v3742 = vrot.slane %v3686, 4
      %v3743 = vrot.slane %v3688, 4
      %v3744 = vrot.slane %v3690, 4
      %v3745 = vrot.slane %v3692, 4
      %v3746 = vrot.slane %v3694, 4
      %v3747 = vrot.slane %v3696, 4
      %v3748 = vrot.slane %v3698, 4
      %v3749 = vrot.slane %v3700, 4
      %v3750 = vrot.slane %v3702, 4
      %v3751 = vrot.slane %v3704, 4
      %v3752 = vrot.slane %v3706, 4
      %v3753 = vrot.slane %v3708, 4
      %v3754 = vrot.slane %v3710, 4
      %v3755 = vrot.slane %v3712, 4
      %v3756 = vrot.slane %v3714, 4
      %v3757 = vrot.slane %v3716, 4
      %v3758 = vrot.slane %v3718, 4
      %v3759 = vrot.slane %v3720, 4
      %v3760 = vrot.slane %v3722, 4
      %v3761 = vrot.slane %v3724, 4
      %v3762 = vrot.slane %v3726, 4
      %v3763 = vrot.slane %v3728, 4
      %v3764 = vrot.slane %v3730, 4
      %v3765 = vrot.slane %v3732, 4
      %v3766 = vrot.slane %v3734, 4
      %vm3767 = vcmask 818176
      %v3768 = vsel %vm3767, %v3735, %v3672
      %v3769 = vsel %vm3767, %v3736, %v3674
      %v3770 = vsel %vm3767, %v3737, %v3676
      %v3771 = vsel %vm3767, %v3738, %v3678
      %v3772 = vsel %vm3767, %v3739, %v3680
      %v3773 = vsel %vm3767, %v3740, %v3682
      %v3774 = vsel %vm3767, %v3741, %v3684
      %v3775 = vsel %vm3767, %v3742, %v3686
      %v3776 = vsel %vm3767, %v3743, %v3688
      %v3777 = vsel %vm3767, %v3744, %v3690
      %v3778 = vsel %vm3767, %v3745, %v3692
      %v3779 = vsel %vm3767, %v3746, %v3694
      %v3780 = vsel %vm3767, %v3747, %v3696
      %v3781 = vsel %vm3767, %v3748, %v3698
      %v3782 = vsel %vm3767, %v3749, %v3700
      %v3783 = vsel %vm3767, %v3750, %v3702
      %v3784 = vsel %vm3767, %v3751, %v3704
      %v3785 = vsel %vm3767, %v3752, %v3706
      %v3786 = vsel %vm3767, %v3753, %v3708
      %v3787 = vsel %vm3767, %v3754, %v3710
      %v3788 = vsel %vm3767, %v3755, %v3712
      %v3789 = vsel %vm3767, %v3756, %v3714
      %v3790 = vsel %vm3767, %v3757, %v3716
      %v3791 = vsel %vm3767, %v3758, %v3718
      %v3792 = vsel %vm3767, %v3759, %v3720
      %v3793 = vsel %vm3767, %v3760, %v3722
      %v3794 = vsel %vm3767, %v3761, %v3724
      %v3795 = vsel %vm3767, %v3762, %v3726
      %v3796 = vsel %vm3767, %v3763, %v3728
      %v3797 = vsel %vm3767, %v3764, %v3730
      %v3798 = vsel %vm3767, %v3765, %v3732
      %v3799 = vsel %vm3767, %v3766, %v3734
      %vm3832 = vcmask 1044256
      %vm3833 = vcmask 64516
      %vm3834 = vmor %vm3833, %vm3832
      %3835 = vst.msk [vmem:[#allocation2 + $0x10] sm:$0xff] %vm3834, %v3768
      %3836 = vst.msk [vmem:[#allocation2 + $0x30] sm:$0xff] %vm3834, %v3769
      %3837 = vst.msk [vmem:[#allocation2 + $0x50] sm:$0xff] %vm3834, %v3770
      %3838 = vst.msk [vmem:[#allocation2 + $0x70] sm:$0xff] %vm3834, %v3771
      %3839 = vst.msk [vmem:[#allocation2 + $0x90] sm:$0xff] %vm3834, %v3772
      %3840 = vst.msk [vmem:[#allocation2 + $0xb0] sm:$0xff] %vm3834, %v3773
      %3841 = vst.msk [vmem:[#allocation2 + $0xd0] sm:$0xff] %vm3834, %v3774
      %3842 = vst.msk [vmem:[#allocation2 + $0xf0] sm:$0xff] %vm3834, %v3775
      %3843 = vst.msk [vmem:[#allocation2 + $0x110] sm:$0xff] %vm3834, %v3776
      %3844 = vst.msk [vmem:[#allocation2 + $0x130] sm:$0xff] %vm3834, %v3777
      %3845 = vst.msk [vmem:[#allocation2 + $0x150] sm:$0xff] %vm3834, %v3778
      %3846 = vst.msk [vmem:[#allocation2 + $0x170] sm:$0xff] %vm3834, %v3779
      %3847 = vst.msk [vmem:[#allocation2 + $0x190] sm:$0xff] %vm3834, %v3780
      %3848 = vst.msk [vmem:[#allocation2 + $0x1b0] sm:$0xff] %vm3834, %v3781
      %3849 = vst.msk [vmem:[#allocation2 + $0x1d0] sm:$0xff] %vm3834, %v3782
      %3850 = vst.msk [vmem:[#allocation2 + $0x1f0] sm:$0xff] %vm3834, %v3783
      %3851 = vst.msk [vmem:[#allocation2 + $0x210] sm:$0xff] %vm3834, %v3784
      %3852 = vst.msk [vmem:[#allocation2 + $0x230] sm:$0xff] %vm3834, %v3785
      %3853 = vst.msk [vmem:[#allocation2 + $0x250] sm:$0xff] %vm3834, %v3786
      %3854 = vst.msk [vmem:[#allocation2 + $0x270] sm:$0xff] %vm3834, %v3787
      %3855 = vst.msk [vmem:[#allocation2 + $0x290] sm:$0xff] %vm3834, %v3788
      %3856 = vst.msk [vmem:[#allocation2 + $0x2b0] sm:$0xff] %vm3834, %v3789
      %3857 = vst.msk [vmem:[#allocation2 + $0x2d0] sm:$0xff] %vm3834, %v3790
      %3858 = vst.msk [vmem:[#allocation2 + $0x2f0] sm:$0xff] %vm3834, %v3791
      %3859 = vst.msk [vmem:[#allocation2 + $0x310] sm:$0xff] %vm3834, %v3792
      %3860 = vst.msk [vmem:[#allocation2 + $0x330] sm:$0xff] %vm3834, %v3793
      %3861 = vst.msk [vmem:[#allocation2 + $0x350] sm:$0xff] %vm3834, %v3794
      %3862 = vst.msk [vmem:[#allocation2 + $0x370] sm:$0xff] %vm3834, %v3795
      %3863 = vst.msk [vmem:[#allocation2 + $0x390] sm:$0xff] %vm3834, %v3796
      %3864 = vst.msk [vmem:[#allocation2 + $0x3b0] sm:$0xff] %vm3834, %v3797
      %3865 = vst.msk [vmem:[#allocation2 + $0x3d0] sm:$0xff] %vm3834, %v3798
      %3866 = vst.msk [vmem:[#allocation2 + $0x3f0] sm:$0xff] %vm3834, %v3799
      %v3867 = vrot.slane %v3511, 5
      %v3868 = vrot.slane %v3514, 6
      %v3869 = vor.u32 %v3867, %v3868
      %v3870 = vrot.slane %v3869, 4
      %v3871 = vrot.slane %v3524, 5
      %v3872 = vrot.slane %v3520, 6
      %v3873 = vor.u32 %v3871, %v3872
      %v3874 = vsel %vm1095, %v3870, %v3873
      %v3875 = vrot.slane %v3873, 4
      %v3876 = vshrl.u32 %v248, 16
      %v3878 = vrot.slane %v3876, 5
      %v3879 = vrot.slane %v3530, 6
      %v3880 = vor.u32 %v3878, %v3879
      %v3881 = vsel %vm1095, %v3875, %v3880
      %3882 = vrot.lane.b32.xlu0 %v1148, 8
      %v3883 = vpop.permute.xlu0 %3882
      %3884 = vrot.lane.b32.xlu0 %v1155, 8
      %v3885 = vpop.permute.xlu0 %3884
      %3886 = vrot.lane.b32.xlu0 %v1163, 8
      %v3887 = vpop.permute.xlu0 %3886
      %3888 = vrot.lane.b32.xlu0 %v1170, 8
      %v3889 = vpop.permute.xlu0 %3888
      %3890 = vrot.lane.b32.xlu0 %v1178, 8
      %v3891 = vpop.permute.xlu0 %3890
      %3892 = vrot.lane.b32.xlu0 %v1185, 8
      %v3893 = vpop.permute.xlu0 %3892
      %3894 = vrot.lane.b32.xlu0 %v1193, 8
      %v3895 = vpop.permute.xlu0 %3894
      %3896 = vrot.lane.b32.xlu0 %v1200, 8
      %v3897 = vpop.permute.xlu0 %3896
      %3898 = vrot.lane.b32.xlu0 %v1208, 8
      %v3899 = vpop.permute.xlu0 %3898
      %3900 = vrot.lane.b32.xlu0 %v1215, 8
      %v3901 = vpop.permute.xlu0 %3900
      %3902 = vrot.lane.b32.xlu0 %v1223, 8
      %v3903 = vpop.permute.xlu0 %3902
      %3904 = vrot.lane.b32.xlu0 %v1230, 8
      %v3905 = vpop.permute.xlu0 %3904
      %3906 = vrot.lane.b32.xlu0 %v1238, 8
      %v3907 = vpop.permute.xlu0 %3906
      %3908 = vrot.lane.b32.xlu0 %v1245, 8
      %v3909 = vpop.permute.xlu0 %3908
      %3910 = vrot.lane.b32.xlu0 %v1253, 8
      %v3911 = vpop.permute.xlu0 %3910
      %3912 = vrot.lane.b32.xlu0 %v1260, 8
      %v3913 = vpop.permute.xlu0 %3912
      %3914 = vrot.lane.b32.xlu0 %v1268, 8
      %v3915 = vpop.permute.xlu0 %3914
      %3916 = vrot.lane.b32.xlu0 %v1275, 8
      %v3917 = vpop.permute.xlu0 %3916
      %3918 = vrot.lane.b32.xlu0 %v1283, 8
      %v3919 = vpop.permute.xlu0 %3918
      %3920 = vrot.lane.b32.xlu0 %v1290, 8
      %v3921 = vpop.permute.xlu0 %3920
      %3922 = vrot.lane.b32.xlu0 %v1298, 8
      %v3923 = vpop.permute.xlu0 %3922
      %3924 = vrot.lane.b32.xlu0 %v1305, 8
      %v3925 = vpop.permute.xlu0 %3924
      %3926 = vrot.lane.b32.xlu0 %v1313, 8
      %v3927 = vpop.permute.xlu0 %3926
      %3928 = vrot.lane.b32.xlu0 %v1320, 8
      %v3929 = vpop.permute.xlu0 %3928
      %3930 = vrot.lane.b32.xlu0 %v1328, 8
      %v3931 = vpop.permute.xlu0 %3930
      %3932 = vrot.lane.b32.xlu0 %v1335, 8
      %v3933 = vpop.permute.xlu0 %3932
      %3934 = vrot.lane.b32.xlu0 %v2271, 8
      %v3935 = vpop.permute.xlu0 %3934
      %3936 = vrot.lane.b32.xlu0 %v2278, 8
      %v3937 = vpop.permute.xlu0 %3936
      %3938 = vrot.lane.b32.xlu0 %v3039, 8
      %v3939 = vpop.permute.xlu0 %3938
      %3940 = vrot.lane.b32.xlu0 %v3046, 8
      %v3941 = vpop.permute.xlu0 %3940
      %3942 = vrot.lane.b32.xlu0 %v3874, 8
      %v3943 = vpop.permute.xlu0 %3942
      %3944 = vrot.lane.b32.xlu0 %v3881, 8
      %v3945 = vpop.permute.xlu0 %3944
      %vm3978 = vcmask 355392
      %3979 = vst.msk [vmem:[#allocation2 + $0x14] sm:$0xf] %vm3978, %v3883
      %3980 = vst.msk [vmem:[#allocation2 + $0x34] sm:$0xf] %vm3978, %v3885
      %3981 = vst.msk [vmem:[#allocation2 + $0x54] sm:$0xf] %vm3978, %v3887
      %3982 = vst.msk [vmem:[#allocation2 + $0x74] sm:$0xf] %vm3978, %v3889
      %3983 = vst.msk [vmem:[#allocation2 + $0x94] sm:$0xf] %vm3978, %v3891
      %3984 = vst.msk [vmem:[#allocation2 + $0xb4] sm:$0xf] %vm3978, %v3893
      %3985 = vst.msk [vmem:[#allocation2 + $0xd4] sm:$0xf] %vm3978, %v3895
      %3986 = vst.msk [vmem:[#allocation2 + $0xf4] sm:$0xf] %vm3978, %v3897
      %3987 = vst.msk [vmem:[#allocation2 + $0x114] sm:$0xf] %vm3978, %v3899
      %3988 = vst.msk [vmem:[#allocation2 + $0x134] sm:$0xf] %vm3978, %v3901
      %3989 = vst.msk [vmem:[#allocation2 + $0x154] sm:$0xf] %vm3978, %v3903
      %3990 = vst.msk [vmem:[#allocation2 + $0x174] sm:$0xf] %vm3978, %v3905
      %3991 = vst.msk [vmem:[#allocation2 + $0x194] sm:$0xf] %vm3978, %v3907
      %3992 = vst.msk [vmem:[#allocation2 + $0x1b4] sm:$0xf] %vm3978, %v3909
      %3993 = vst.msk [vmem:[#allocation2 + $0x1d4] sm:$0xf] %vm3978, %v3911
      %3994 = vst.msk [vmem:[#allocation2 + $0x1f4] sm:$0xf] %vm3978, %v3913
      %3995 = vst.msk [vmem:[#allocation2 + $0x214] sm:$0xf] %vm3978, %v3915
      %3996 = vst.msk [vmem:[#allocation2 + $0x234] sm:$0xf] %vm3978, %v3917
      %3997 = vst.msk [vmem:[#allocation2 + $0x254] sm:$0xf] %vm3978, %v3919
      %3998 = vst.msk [vmem:[#allocation2 + $0x274] sm:$0xf] %vm3978, %v3921
      %3999 = vst.msk [vmem:[#allocation2 + $0x294] sm:$0xf] %vm3978, %v3923
      %4000 = vst.msk [vmem:[#allocation2 + $0x2b4] sm:$0xf] %vm3978, %v3925
      %4001 = vst.msk [vmem:[#allocation2 + $0x2d4] sm:$0xf] %vm3978, %v3927
      %4002 = vst.msk [vmem:[#allocation2 + $0x2f4] sm:$0xf] %vm3978, %v3929
      %4003 = vst.msk [vmem:[#allocation2 + $0x314] sm:$0xf] %vm3978, %v3931
      %4004 = vst.msk [vmem:[#allocation2 + $0x334] sm:$0xf] %vm3978, %v3933
      %4005 = vst.msk [vmem:[#allocation2 + $0x354] sm:$0xf] %vm3978, %v3935
      %4006 = vst.msk [vmem:[#allocation2 + $0x374] sm:$0xf] %vm3978, %v3937
      %4007 = vst.msk [vmem:[#allocation2 + $0x394] sm:$0xf] %vm3978, %v3939
      %4008 = vst.msk [vmem:[#allocation2 + $0x3b4] sm:$0xf] %vm3978, %v3941
      %4009 = vst.msk [vmem:[#allocation2 + $0x3d4] sm:$0xf] %vm3978, %v3943
      %4010 = vst.msk [vmem:[#allocation2 + $0x3f4] sm:$0xf] %vm3978, %v3945
      %v4011 = vrot.slane %v246, 6
      %v4012 = vrot.slane %v4011, 4
      %v4013 = vrot.slane %v247, 6
      %v4014 = vsel %vm1534, %v4012, %v4013
      %v4015 = vrot.slane %v4013, 4
      %v4016 = vrot.slane %v248, 6
      %v4017 = vsel %vm1534, %v4015, %v4016
      %4018 = vrot.lane.b32.xlu0 %v1559, 44
      %v4019 = vpop.permute.xlu0 %4018
      %4020 = vrot.lane.b32.xlu0 %v1562, 44
      %v4021 = vpop.permute.xlu0 %4020
      %4022 = vrot.lane.b32.xlu0 %v1566, 44
      %v4023 = vpop.permute.xlu0 %4022
      %4024 = vrot.lane.b32.xlu0 %v1569, 44
      %v4025 = vpop.permute.xlu0 %4024
      %4026 = vrot.lane.b32.xlu0 %v1573, 44
      %v4027 = vpop.permute.xlu0 %4026
      %4028 = vrot.lane.b32.xlu0 %v1576, 44
      %v4029 = vpop.permute.xlu0 %4028
      %4030 = vrot.lane.b32.xlu0 %v1580, 44
      %v4031 = vpop.permute.xlu0 %4030
      %4032 = vrot.lane.b32.xlu0 %v1583, 44
      %v4033 = vpop.permute.xlu0 %4032
      %4034 = vrot.lane.b32.xlu0 %v1587, 44
      %v4035 = vpop.permute.xlu0 %4034
      %4036 = vrot.lane.b32.xlu0 %v1590, 44
      %v4037 = vpop.permute.xlu0 %4036
      %4038 = vrot.lane.b32.xlu0 %v1594, 44
      %v4039 = vpop.permute.xlu0 %4038
      %4040 = vrot.lane.b32.xlu0 %v1597, 44
      %v4041 = vpop.permute.xlu0 %4040
      %4042 = vrot.lane.b32.xlu0 %v1601, 44
      %v4043 = vpop.permute.xlu0 %4042
      %4044 = vrot.lane.b32.xlu0 %v1604, 44
      %v4045 = vpop.permute.xlu0 %4044
      %4046 = vrot.lane.b32.xlu0 %v1608, 44
      %v4047 = vpop.permute.xlu0 %4046
      %4048 = vrot.lane.b32.xlu0 %v1611, 44
      %v4049 = vpop.permute.xlu0 %4048
      %4050 = vrot.lane.b32.xlu0 %v1615, 44
      %v4051 = vpop.permute.xlu0 %4050
      %4052 = vrot.lane.b32.xlu0 %v1618, 44
      %v4053 = vpop.permute.xlu0 %4052
      %4054 = vrot.lane.b32.xlu0 %v1622, 44
      %v4055 = vpop.permute.xlu0 %4054
      %4056 = vrot.lane.b32.xlu0 %v1625, 44
      %v4057 = vpop.permute.xlu0 %4056
      %4058 = vrot.lane.b32.xlu0 %v1629, 44
      %v4059 = vpop.permute.xlu0 %4058
      %4060 = vrot.lane.b32.xlu0 %v1632, 44
      %v4061 = vpop.permute.xlu0 %4060
      %4062 = vrot.lane.b32.xlu0 %v1636, 44
      %v4063 = vpop.permute.xlu0 %4062
      %4064 = vrot.lane.b32.xlu0 %v1639, 44
      %v4065 = vpop.permute.xlu0 %4064
      %4066 = vrot.lane.b32.xlu0 %v1643, 44
      %v4067 = vpop.permute.xlu0 %4066
      %4068 = vrot.lane.b32.xlu0 %v1646, 44
      %v4069 = vpop.permute.xlu0 %4068
      %4070 = vrot.lane.b32.xlu0 %v2411, 44
      %v4071 = vpop.permute.xlu0 %4070
      %4072 = vrot.lane.b32.xlu0 %v2414, 44
      %v4073 = vpop.permute.xlu0 %4072
      %4074 = vrot.lane.b32.xlu0 %v3179, 44
      %v4075 = vpop.permute.xlu0 %4074
      %4076 = vrot.lane.b32.xlu0 %v3182, 44
      %v4077 = vpop.permute.xlu0 %4076
      %4078 = vrot.lane.b32.xlu0 %v4014, 44
      %v4079 = vpop.permute.xlu0 %4078
      %4080 = vrot.lane.b32.xlu0 %v4017, 44
      %v4081 = vpop.permute.xlu0 %4080
      %vm4114 = vcmask 650592
      %4115 = vst.msk [vmem:[#allocation2 + $0x14] sm:$0xf] %vm4114, %v4019
      %4116 = vst.msk [vmem:[#allocation2 + $0x34] sm:$0xf] %vm4114, %v4021
      %4117 = vst.msk [vmem:[#allocation2 + $0x54] sm:$0xf] %vm4114, %v4023
      %4118 = vst.msk [vmem:[#allocation2 + $0x74] sm:$0xf] %vm4114, %v4025
      %4119 = vst.msk [vmem:[#allocation2 + $0x94] sm:$0xf] %vm4114, %v4027
      %4120 = vst.msk [vmem:[#allocation2 + $0xb4] sm:$0xf] %vm4114, %v4029
      %4121 = vst.msk [vmem:[#allocation2 + $0xd4] sm:$0xf] %vm4114, %v4031
      %4122 = vst.msk [vmem:[#allocation2 + $0xf4] sm:$0xf] %vm4114, %v4033
      %4123 = vst.msk [vmem:[#allocation2 + $0x114] sm:$0xf] %vm4114, %v4035
      %4124 = vst.msk [vmem:[#allocation2 + $0x134] sm:$0xf] %vm4114, %v4037
      %4125 = vst.msk [vmem:[#allocation2 + $0x154] sm:$0xf] %vm4114, %v4039
      %4126 = vst.msk [vmem:[#allocation2 + $0x174] sm:$0xf] %vm4114, %v4041
      %4127 = vst.msk [vmem:[#allocation2 + $0x194] sm:$0xf] %vm4114, %v4043
      %4128 = vst.msk [vmem:[#allocation2 + $0x1b4] sm:$0xf] %vm4114, %v4045
      %4129 = vst.msk [vmem:[#allocation2 + $0x1d4] sm:$0xf] %vm4114, %v4047
      %4130 = vst.msk [vmem:[#allocation2 + $0x1f4] sm:$0xf] %vm4114, %v4049
      %4131 = vst.msk [vmem:[#allocation2 + $0x214] sm:$0xf] %vm4114, %v4051
      %4132 = vst.msk [vmem:[#allocation2 + $0x234] sm:$0xf] %vm4114, %v4053
      %4133 = vst.msk [vmem:[#allocation2 + $0x254] sm:$0xf] %vm4114, %v4055
      %4134 = vst.msk [vmem:[#allocation2 + $0x274] sm:$0xf] %vm4114, %v4057
      %4135 = vst.msk [vmem:[#allocation2 + $0x294] sm:$0xf] %vm4114, %v4059
      %4136 = vst.msk [vmem:[#allocation2 + $0x2b4] sm:$0xf] %vm4114, %v4061
      %4137 = vst.msk [vmem:[#allocation2 + $0x2d4] sm:$0xf] %vm4114, %v4063
      %4138 = vst.msk [vmem:[#allocation2 + $0x2f4] sm:$0xf] %vm4114, %v4065
      %4139 = vst.msk [vmem:[#allocation2 + $0x314] sm:$0xf] %vm4114, %v4067
      %4140 = vst.msk [vmem:[#allocation2 + $0x334] sm:$0xf] %vm4114, %v4069
      %4141 = vst.msk [vmem:[#allocation2 + $0x354] sm:$0xf] %vm4114, %v4071
      %4142 = vst.msk [vmem:[#allocation2 + $0x374] sm:$0xf] %vm4114, %v4073
      %4143 = vst.msk [vmem:[#allocation2 + $0x394] sm:$0xf] %vm4114, %v4075
      %4144 = vst.msk [vmem:[#allocation2 + $0x3b4] sm:$0xf] %vm4114, %v4077
      %4145 = vst.msk [vmem:[#allocation2 + $0x3d4] sm:$0xf] %vm4114, %v4079
      %4146 = vst.msk [vmem:[#allocation2 + $0x3f4] sm:$0xf] %vm4114, %v4081
      %4149 = vrot.lane.b32.xlu0 %v204, 80
      %v4150 = vpop.permute.xlu0 %4149
      %4151 = vrot.lane.b32.xlu0 %v205, 80
      %v4152 = vpop.permute.xlu0 %4151
      %4153 = vrot.lane.b32.xlu0 %v207, 80
      %v4154 = vpop.permute.xlu0 %4153
      %4155 = vrot.lane.b32.xlu0 %v208, 80
      %v4156 = vpop.permute.xlu0 %4155
      %4157 = vrot.lane.b32.xlu0 %v210, 80
      %v4158 = vpop.permute.xlu0 %4157
      %4159 = vrot.lane.b32.xlu0 %v211, 80
      %v4160 = vpop.permute.xlu0 %4159
      %4161 = vrot.lane.b32.xlu0 %v213, 80
      %v4162 = vpop.permute.xlu0 %4161
      %4163 = vrot.lane.b32.xlu0 %v214, 80
      %v4164 = vpop.permute.xlu0 %4163
      %4165 = vrot.lane.b32.xlu0 %v216, 80
      %v4166 = vpop.permute.xlu0 %4165
      %4167 = vrot.lane.b32.xlu0 %v217, 80
      %v4168 = vpop.permute.xlu0 %4167
      %4169 = vrot.lane.b32.xlu0 %v219, 80
      %v4170 = vpop.permute.xlu0 %4169
      %4171 = vrot.lane.b32.xlu0 %v220, 80
      %v4172 = vpop.permute.xlu0 %4171
      %4173 = vrot.lane.b32.xlu0 %v222, 80
      %v4174 = vpop.permute.xlu0 %4173
      %4175 = vrot.lane.b32.xlu0 %v223, 80
      %v4176 = vpop.permute.xlu0 %4175
      %4177 = vrot.lane.b32.xlu0 %v225, 80
      %v4178 = vpop.permute.xlu0 %4177
      %4179 = vrot.lane.b32.xlu0 %v226, 80
      %v4180 = vpop.permute.xlu0 %4179
      %4181 = vrot.lane.b32.xlu0 %v228, 80
      %v4182 = vpop.permute.xlu0 %4181
      %4183 = vrot.lane.b32.xlu0 %v229, 80
      %v4184 = vpop.permute.xlu0 %4183
      %4185 = vrot.lane.b32.xlu0 %v231, 80
      %v4186 = vpop.permute.xlu0 %4185
      %4187 = vrot.lane.b32.xlu0 %v232, 80
      %v4188 = vpop.permute.xlu0 %4187
      %4189 = vrot.lane.b32.xlu0 %v234, 80
      %v4190 = vpop.permute.xlu0 %4189
      %4191 = vrot.lane.b32.xlu0 %v235, 80
      %v4192 = vpop.permute.xlu0 %4191
      %4193 = vrot.lane.b32.xlu0 %v237, 80
      %v4194 = vpop.permute.xlu0 %4193
      %4195 = vrot.lane.b32.xlu0 %v238, 80
      %v4196 = vpop.permute.xlu0 %4195
      %4197 = vrot.lane.b32.xlu0 %v240, 80
      %v4198 = vpop.permute.xlu0 %4197
      %4199 = vrot.lane.b32.xlu0 %v241, 80
      %v4200 = vpop.permute.xlu0 %4199
      %4201 = vrot.lane.b32.xlu0 %v243, 80
      %v4202 = vpop.permute.xlu0 %4201
      %4203 = vrot.lane.b32.xlu0 %v244, 80
      %v4204 = vpop.permute.xlu0 %4203
      %4205 = vrot.lane.b32.xlu0 %v246, 80
      %v4206 = vpop.permute.xlu0 %4205
      %4207 = vrot.lane.b32.xlu0 %v247, 80
      %v4208 = vpop.permute.xlu0 %4207
      %4209 = vrot.lane.b32.xlu0 %v249, 80
      %v4210 = vpop.permute.xlu0 %4209
      %4211 = vrot.lane.b32.xlu0 %v250, 80
      %v4212 = vpop.permute.xlu0 %4211
      %vm4245 = vcmask 945792
      %4246 = vst.msk [vmem:[#allocation2 + $0x14] sm:$0xf] %vm4245, %v4150
      %4247 = vst.msk [vmem:[#allocation2 + $0x34] sm:$0xf] %vm4245, %v4152
      %4248 = vst.msk [vmem:[#allocation2 + $0x54] sm:$0xf] %vm4245, %v4154
      %4249 = vst.msk [vmem:[#allocation2 + $0x74] sm:$0xf] %vm4245, %v4156
      %4250 = vst.msk [vmem:[#allocation2 + $0x94] sm:$0xf] %vm4245, %v4158
      %4251 = vst.msk [vmem:[#allocation2 + $0xb4] sm:$0xf] %vm4245, %v4160
      %4252 = vst.msk [vmem:[#allocation2 + $0xd4] sm:$0xf] %vm4245, %v4162
      %4253 = vst.msk [vmem:[#allocation2 + $0xf4] sm:$0xf] %vm4245, %v4164
      %4254 = vst.msk [vmem:[#allocation2 + $0x114] sm:$0xf] %vm4245, %v4166
      %4255 = vst.msk [vmem:[#allocation2 + $0x134] sm:$0xf] %vm4245, %v4168
      %4256 = vst.msk [vmem:[#allocation2 + $0x154] sm:$0xf] %vm4245, %v4170
      %4257 = vst.msk [vmem:[#allocation2 + $0x174] sm:$0xf] %vm4245, %v4172
      %4258 = vst.msk [vmem:[#allocation2 + $0x194] sm:$0xf] %vm4245, %v4174
      %4259 = vst.msk [vmem:[#allocation2 + $0x1b4] sm:$0xf] %vm4245, %v4176
      %4260 = vst.msk [vmem:[#allocation2 + $0x1d4] sm:$0xf] %vm4245, %v4178
      %4261 = vst.msk [vmem:[#allocation2 + $0x1f4] sm:$0xf] %vm4245, %v4180
      %4262 = vst.msk [vmem:[#allocation2 + $0x214] sm:$0xf] %vm4245, %v4182
      %4263 = vst.msk [vmem:[#allocation2 + $0x234] sm:$0xf] %vm4245, %v4184
      %4264 = vst.msk [vmem:[#allocation2 + $0x254] sm:$0xf] %vm4245, %v4186
      %4265 = vst.msk [vmem:[#allocation2 + $0x274] sm:$0xf] %vm4245, %v4188
      %4266 = vst.msk [vmem:[#allocation2 + $0x294] sm:$0xf] %vm4245, %v4190
      %4267 = vst.msk [vmem:[#allocation2 + $0x2b4] sm:$0xf] %vm4245, %v4192
      %4268 = vst.msk [vmem:[#allocation2 + $0x2d4] sm:$0xf] %vm4245, %v4194
      %4269 = vst.msk [vmem:[#allocation2 + $0x2f4] sm:$0xf] %vm4245, %v4196
      %4270 = vst.msk [vmem:[#allocation2 + $0x314] sm:$0xf] %vm4245, %v4198
      %4271 = vst.msk [vmem:[#allocation2 + $0x334] sm:$0xf] %vm4245, %v4200
      %4272 = vst.msk [vmem:[#allocation2 + $0x354] sm:$0xf] %vm4245, %v4202
      %4273 = vst.msk [vmem:[#allocation2 + $0x374] sm:$0xf] %vm4245, %v4204
      %4274 = vst.msk [vmem:[#allocation2 + $0x394] sm:$0xf] %vm4245, %v4206
      %4275 = vst.msk [vmem:[#allocation2 + $0x3b4] sm:$0xf] %vm4245, %v4208
      %4276 = vst.msk [vmem:[#allocation2 + $0x3d4] sm:$0xf] %vm4245, %v4210
      %4277 = vst.msk [vmem:[#allocation2 + $0x3f4] sm:$0xf] %vm4245, %v4212
      %v4279 = vshrl.u32 %v249, 16
      %v4281 = vrot.slane %v4279, 4
      %v4282 = vshll.u32 %v249, 16
      %v4284 = vrot.slane %v4282, 5
      %v4285 = vor.u32 %v4281, %v4284
      %v4286 = vrot.slane %v4285, 4
      %v4288 = vshll.u32 %v250, 16
      %v4290 = vrot.slane %v4288, 5
      %v4291 = vsel %vm287, %v4286, %v4290
      %v4292 = vshrl.u32 %v250, 16
      %v4294 = vrot.slane %v4292, 4
      %v4295 = vor.u32 %v4294, %v4290
      %v4296 = vrot.slane %v4295, 4
      %v4298 = vshll.u32 %v251, 16
      %v4300 = vrot.slane %v4298, 5
      %v4301 = vsel %vm287, %v4296, %v4300
      %4302 = vrot.lane.b32.xlu0 %v397, 116
      %v4303 = vpop.permute.xlu0 %4302
      %4304 = vrot.lane.b32.xlu0 %v407, 116
      %v4305 = vpop.permute.xlu0 %4304
      %4306 = vrot.lane.b32.xlu0 %v421, 116
      %v4307 = vpop.permute.xlu0 %4306
      %4308 = vrot.lane.b32.xlu0 %v431, 116
      %v4309 = vpop.permute.xlu0 %4308
      %4310 = vrot.lane.b32.xlu0 %v445, 116
      %v4311 = vpop.permute.xlu0 %4310
      %4312 = vrot.lane.b32.xlu0 %v455, 116
      %v4313 = vpop.permute.xlu0 %4312
      %4314 = vrot.lane.b32.xlu0 %v469, 116
      %v4315 = vpop.permute.xlu0 %4314
      %4316 = vrot.lane.b32.xlu0 %v479, 116
      %v4317 = vpop.permute.xlu0 %4316
      %4318 = vrot.lane.b32.xlu0 %v493, 116
      %v4319 = vpop.permute.xlu0 %4318
      %4320 = vrot.lane.b32.xlu0 %v503, 116
      %v4321 = vpop.permute.xlu0 %4320
      %4322 = vrot.lane.b32.xlu0 %v517, 116
      %v4323 = vpop.permute.xlu0 %4322
      %4324 = vrot.lane.b32.xlu0 %v527, 116
      %v4325 = vpop.permute.xlu0 %4324
      %4326 = vrot.lane.b32.xlu0 %v541, 116
      %v4327 = vpop.permute.xlu0 %4326
      %4328 = vrot.lane.b32.xlu0 %v551, 116
      %v4329 = vpop.permute.xlu0 %4328
      %4330 = vrot.lane.b32.xlu0 %v565, 116
      %v4331 = vpop.permute.xlu0 %4330
      %4332 = vrot.lane.b32.xlu0 %v575, 116
      %v4333 = vpop.permute.xlu0 %4332
      %4334 = vrot.lane.b32.xlu0 %v589, 116
      %v4335 = vpop.permute.xlu0 %4334
      %4336 = vrot.lane.b32.xlu0 %v599, 116
      %v4337 = vpop.permute.xlu0 %4336
      %4338 = vrot.lane.b32.xlu0 %v613, 116
      %v4339 = vpop.permute.xlu0 %4338
      %4340 = vrot.lane.b32.xlu0 %v623, 116
      %v4341 = vpop.permute.xlu0 %4340
      %4342 = vrot.lane.b32.xlu0 %v637, 116
      %v4343 = vpop.permute.xlu0 %4342
      %4344 = vrot.lane.b32.xlu0 %v647, 116
      %v4345 = vpop.permute.xlu0 %4344
      %4346 = vrot.lane.b32.xlu0 %v661, 116
      %v4347 = vpop.permute.xlu0 %4346
      %4348 = vrot.lane.b32.xlu0 %v671, 116
      %v4349 = vpop.permute.xlu0 %4348
      %4350 = vrot.lane.b32.xlu0 %v1920, 116
      %v4351 = vpop.permute.xlu0 %4350
      %4352 = vrot.lane.b32.xlu0 %v1930, 116
      %v4353 = vpop.permute.xlu0 %4352
      %4354 = vrot.lane.b32.xlu0 %v2755, 116
      %v4355 = vpop.permute.xlu0 %4354
      %4356 = vrot.lane.b32.xlu0 %v2765, 116
      %v4357 = vpop.permute.xlu0 %4356
      %4358 = vrot.lane.b32.xlu0 %v3523, 116
      %v4359 = vpop.permute.xlu0 %4358
      %4360 = vrot.lane.b32.xlu0 %v3533, 116
      %v4361 = vpop.permute.xlu0 %4360
      %4362 = vrot.lane.b32.xlu0 %v4291, 116
      %v4363 = vpop.permute.xlu0 %4362
      %4364 = vrot.lane.b32.xlu0 %v4301, 116
      %v4365 = vpop.permute.xlu0 %4364
      %v4366 = vrot.slane %v4303, 4
      %v4367 = vrot.slane %v4305, 4
      %v4368 = vrot.slane %v4307, 4
      %v4369 = vrot.slane %v4309, 4
      %v4370 = vrot.slane %v4311, 4
      %v4371 = vrot.slane %v4313, 4
      %v4372 = vrot.slane %v4315, 4
      %v4373 = vrot.slane %v4317, 4
      %v4374 = vrot.slane %v4319, 4
      %v4375 = vrot.slane %v4321, 4
      %v4376 = vrot.slane %v4323, 4
      %v4377 = vrot.slane %v4325, 4
      %v4378 = vrot.slane %v4327, 4
      %v4379 = vrot.slane %v4329, 4
      %v4380 = vrot.slane %v4331, 4
      %v4381 = vrot.slane %v4333, 4
      %v4382 = vrot.slane %v4335, 4
      %v4383 = vrot.slane %v4337, 4
      %v4384 = vrot.slane %v4339, 4
      %v4385 = vrot.slane %v4341, 4
      %v4386 = vrot.slane %v4343, 4
      %v4387 = vrot.slane %v4345, 4
      %v4388 = vrot.slane %v4347, 4
      %v4389 = vrot.slane %v4349, 4
      %v4390 = vrot.slane %v4351, 4
      %v4391 = vrot.slane %v4353, 4
      %v4392 = vrot.slane %v4355, 4
      %v4393 = vrot.slane %v4357, 4
      %v4394 = vrot.slane %v4359, 4
      %v4395 = vrot.slane %v4361, 4
      %v4396 = vrot.slane %v4363, 4
      %v4397 = vrot.slane %v4365, 4
      %vm4398 = vcmask 949248
      %v4399 = vsel %vm4398, %v4366, %v4303
      %v4400 = vsel %vm4398, %v4367, %v4305
      %v4401 = vsel %vm4398, %v4368, %v4307
      %v4402 = vsel %vm4398, %v4369, %v4309
      %v4403 = vsel %vm4398, %v4370, %v4311
      %v4404 = vsel %vm4398, %v4371, %v4313
      %v4405 = vsel %vm4398, %v4372, %v4315
      %v4406 = vsel %vm4398, %v4373, %v4317
      %v4407 = vsel %vm4398, %v4374, %v4319
      %v4408 = vsel %vm4398, %v4375, %v4321
      %v4409 = vsel %vm4398, %v4376, %v4323
      %v4410 = vsel %vm4398, %v4377, %v4325
      %v4411 = vsel %vm4398, %v4378, %v4327
      %v4412 = vsel %vm4398, %v4379, %v4329
      %v4413 = vsel %vm4398, %v4380, %v4331
      %v4414 = vsel %vm4398, %v4381, %v4333
      %v4415 = vsel %vm4398, %v4382, %v4335
      %v4416 = vsel %vm4398, %v4383, %v4337
      %v4417 = vsel %vm4398, %v4384, %v4339
      %v4418 = vsel %vm4398, %v4385, %v4341
      %v4419 = vsel %vm4398, %v4386, %v4343
      %v4420 = vsel %vm4398, %v4387, %v4345
      %v4421 = vsel %vm4398, %v4388, %v4347
      %v4422 = vsel %vm4398, %v4389, %v4349
      %v4423 = vsel %vm4398, %v4390, %v4351
      %v4424 = vsel %vm4398, %v4391, %v4353
      %v4425 = vsel %vm4398, %v4392, %v4355
      %v4426 = vsel %vm4398, %v4393, %v4357
      %v4427 = vsel %vm4398, %v4394, %v4359
      %v4428 = vsel %vm4398, %v4395, %v4361
      %v4429 = vsel %vm4398, %v4396, %v4363
      %v4430 = vsel %vm4398, %v4397, %v4365
      %vm4463 = vcmask 1044384
      %vm4464 = vcmask 195588
      %vm4465 = vmor %vm4464, %vm4463
      %4466 = vst.msk [vmem:[#allocation2 + $0x14] sm:$0xff] %vm4465, %v4399
      %4467 = vst.msk [vmem:[#allocation2 + $0x34] sm:$0xff] %vm4465, %v4400
      %4468 = vst.msk [vmem:[#allocation2 + $0x54] sm:$0xff] %vm4465, %v4401
      %4469 = vst.msk [vmem:[#allocation2 + $0x74] sm:$0xff] %vm4465, %v4402
      %4470 = vst.msk [vmem:[#allocation2 + $0x94] sm:$0xff] %vm4465, %v4403
      %4471 = vst.msk [vmem:[#allocation2 + $0xb4] sm:$0xff] %vm4465, %v4404
      %4472 = vst.msk [vmem:[#allocation2 + $0xd4] sm:$0xff] %vm4465, %v4405
      %4473 = vst.msk [vmem:[#allocation2 + $0xf4] sm:$0xff] %vm4465, %v4406
      %4474 = vst.msk [vmem:[#allocation2 + $0x114] sm:$0xff] %vm4465, %v4407
      %4475 = vst.msk [vmem:[#allocation2 + $0x134] sm:$0xff] %vm4465, %v4408
      %4476 = vst.msk [vmem:[#allocation2 + $0x154] sm:$0xff] %vm4465, %v4409
      %4477 = vst.msk [vmem:[#allocation2 + $0x174] sm:$0xff] %vm4465, %v4410
      %4478 = vst.msk [vmem:[#allocation2 + $0x194] sm:$0xff] %vm4465, %v4411
      %4479 = vst.msk [vmem:[#allocation2 + $0x1b4] sm:$0xff] %vm4465, %v4412
      %4480 = vst.msk [vmem:[#allocation2 + $0x1d4] sm:$0xff] %vm4465, %v4413
      %4481 = vst.msk [vmem:[#allocation2 + $0x1f4] sm:$0xff] %vm4465, %v4414
      %4482 = vst.msk [vmem:[#allocation2 + $0x214] sm:$0xff] %vm4465, %v4415
      %4483 = vst.msk [vmem:[#allocation2 + $0x234] sm:$0xff] %vm4465, %v4416
      %4484 = vst.msk [vmem:[#allocation2 + $0x254] sm:$0xff] %vm4465, %v4417
      %4485 = vst.msk [vmem:[#allocation2 + $0x274] sm:$0xff] %vm4465, %v4418
      %4486 = vst.msk [vmem:[#allocation2 + $0x294] sm:$0xff] %vm4465, %v4419
      %4487 = vst.msk [vmem:[#allocation2 + $0x2b4] sm:$0xff] %vm4465, %v4420
      %4488 = vst.msk [vmem:[#allocation2 + $0x2d4] sm:$0xff] %vm4465, %v4421
      %4489 = vst.msk [vmem:[#allocation2 + $0x2f4] sm:$0xff] %vm4465, %v4422
      %4490 = vst.msk [vmem:[#allocation2 + $0x314] sm:$0xff] %vm4465, %v4423
      %4491 = vst.msk [vmem:[#allocation2 + $0x334] sm:$0xff] %vm4465, %v4424
      %4492 = vst.msk [vmem:[#allocation2 + $0x354] sm:$0xff] %vm4465, %v4425
      %4493 = vst.msk [vmem:[#allocation2 + $0x374] sm:$0xff] %vm4465, %v4426
      %4494 = vst.msk [vmem:[#allocation2 + $0x394] sm:$0xff] %vm4465, %v4427
      %4495 = vst.msk [vmem:[#allocation2 + $0x3b4] sm:$0xff] %vm4465, %v4428
      %4496 = vst.msk [vmem:[#allocation2 + $0x3d4] sm:$0xff] %vm4465, %v4429
      %4497 = vst.msk [vmem:[#allocation2 + $0x3f4] sm:$0xff] %vm4465, %v4430
      %v4499 = vrot.slane %v249, 5
      %v4500 = vrot.slane %v4499, 4
      %v4501 = vrot.slane %v250, 5
      %v4502 = vsel %vm851, %v4500, %v4501
      %v4503 = vrot.slane %v4501, 4
      %v4504 = vrot.slane %v251, 5
      %v4505 = vsel %vm851, %v4503, %v4504
      %4506 = vrot.lane.b32.xlu0 %v883, 24
      %v4507 = vpop.permute.xlu0 %4506
      %4508 = vrot.lane.b32.xlu0 %v886, 24
      %v4509 = vpop.permute.xlu0 %4508
      %4510 = vrot.lane.b32.xlu0 %v890, 24
      %v4511 = vpop.permute.xlu0 %4510
      %4512 = vrot.lane.b32.xlu0 %v893, 24
      %v4513 = vpop.permute.xlu0 %4512
      %4514 = vrot.lane.b32.xlu0 %v897, 24
      %v4515 = vpop.permute.xlu0 %4514
      %4516 = vrot.lane.b32.xlu0 %v900, 24
      %v4517 = vpop.permute.xlu0 %4516
      %4518 = vrot.lane.b32.xlu0 %v904, 24
      %v4519 = vpop.permute.xlu0 %4518
      %4520 = vrot.lane.b32.xlu0 %v907, 24
      %v4521 = vpop.permute.xlu0 %4520
      %4522 = vrot.lane.b32.xlu0 %v911, 24
      %v4523 = vpop.permute.xlu0 %4522
      %4524 = vrot.lane.b32.xlu0 %v914, 24
      %v4525 = vpop.permute.xlu0 %4524
      %4526 = vrot.lane.b32.xlu0 %v918, 24
      %v4527 = vpop.permute.xlu0 %4526
      %4528 = vrot.lane.b32.xlu0 %v921, 24
      %v4529 = vpop.permute.xlu0 %4528
      %4530 = vrot.lane.b32.xlu0 %v925, 24
      %v4531 = vpop.permute.xlu0 %4530
      %4532 = vrot.lane.b32.xlu0 %v928, 24
      %v4533 = vpop.permute.xlu0 %4532
      %4534 = vrot.lane.b32.xlu0 %v932, 24
      %v4535 = vpop.permute.xlu0 %4534
      %4536 = vrot.lane.b32.xlu0 %v935, 24
      %v4537 = vpop.permute.xlu0 %4536
      %4538 = vrot.lane.b32.xlu0 %v939, 24
      %v4539 = vpop.permute.xlu0 %4538
      %4540 = vrot.lane.b32.xlu0 %v942, 24
      %v4541 = vpop.permute.xlu0 %4540
      %4542 = vrot.lane.b32.xlu0 %v946, 24
      %v4543 = vpop.permute.xlu0 %4542
      %4544 = vrot.lane.b32.xlu0 %v949, 24
      %v4545 = vpop.permute.xlu0 %4544
      %4546 = vrot.lane.b32.xlu0 %v953, 24
      %v4547 = vpop.permute.xlu0 %4546
      %4548 = vrot.lane.b32.xlu0 %v956, 24
      %v4549 = vpop.permute.xlu0 %4548
      %4550 = vrot.lane.b32.xlu0 %v960, 24
      %v4551 = vpop.permute.xlu0 %4550
      %4552 = vrot.lane.b32.xlu0 %v963, 24
      %v4553 = vpop.permute.xlu0 %4552
      %4554 = vrot.lane.b32.xlu0 %v2064, 24
      %v4555 = vpop.permute.xlu0 %4554
      %4556 = vrot.lane.b32.xlu0 %v2067, 24
      %v4557 = vpop.permute.xlu0 %4556
      %4558 = vrot.lane.b32.xlu0 %v2899, 24
      %v4559 = vpop.permute.xlu0 %4558
      %4560 = vrot.lane.b32.xlu0 %v2902, 24
      %v4561 = vpop.permute.xlu0 %4560
      %4562 = vrot.lane.b32.xlu0 %v3667, 24
      %v4563 = vpop.permute.xlu0 %4562
      %4564 = vrot.lane.b32.xlu0 %v3670, 24
      %v4565 = vpop.permute.xlu0 %4564
      %4566 = vrot.lane.b32.xlu0 %v4502, 24
      %v4567 = vpop.permute.xlu0 %4566
      %4568 = vrot.lane.b32.xlu0 %v4505, 24
      %v4569 = vpop.permute.xlu0 %4568
      %vm4602 = vcmask 486592
      %4603 = vst.msk [vmem:[#allocation2 + $0x18] sm:$0xf] %vm4602, %v4507
      %4604 = vst.msk [vmem:[#allocation2 + $0x38] sm:$0xf] %vm4602, %v4509
      %4605 = vst.msk [vmem:[#allocation2 + $0x58] sm:$0xf] %vm4602, %v4511
      %4606 = vst.msk [vmem:[#allocation2 + $0x78] sm:$0xf] %vm4602, %v4513
      %4607 = vst.msk [vmem:[#allocation2 + $0x98] sm:$0xf] %vm4602, %v4515
      %4608 = vst.msk [vmem:[#allocation2 + $0xb8] sm:$0xf] %vm4602, %v4517
      %4609 = vst.msk [vmem:[#allocation2 + $0xd8] sm:$0xf] %vm4602, %v4519
      %4610 = vst.msk [vmem:[#allocation2 + $0xf8] sm:$0xf] %vm4602, %v4521
      %4611 = vst.msk [vmem:[#allocation2 + $0x118] sm:$0xf] %vm4602, %v4523
      %4612 = vst.msk [vmem:[#allocation2 + $0x138] sm:$0xf] %vm4602, %v4525
      %4613 = vst.msk [vmem:[#allocation2 + $0x158] sm:$0xf] %vm4602, %v4527
      %4614 = vst.msk [vmem:[#allocation2 + $0x178] sm:$0xf] %vm4602, %v4529
      %4615 = vst.msk [vmem:[#allocation2 + $0x198] sm:$0xf] %vm4602, %v4531
      %4616 = vst.msk [vmem:[#allocation2 + $0x1b8] sm:$0xf] %vm4602, %v4533
      %4617 = vst.msk [vmem:[#allocation2 + $0x1d8] sm:$0xf] %vm4602, %v4535
      %4618 = vst.msk [vmem:[#allocation2 + $0x1f8] sm:$0xf] %vm4602, %v4537
      %4619 = vst.msk [vmem:[#allocation2 + $0x218] sm:$0xf] %vm4602, %v4539
      %4620 = vst.msk [vmem:[#allocation2 + $0x238] sm:$0xf] %vm4602, %v4541
      %4621 = vst.msk [vmem:[#allocation2 + $0x258] sm:$0xf] %vm4602, %v4543
      %4622 = vst.msk [vmem:[#allocation2 + $0x278] sm:$0xf] %vm4602, %v4545
      %4623 = vst.msk [vmem:[#allocation2 + $0x298] sm:$0xf] %vm4602, %v4547
      %4624 = vst.msk [vmem:[#allocation2 + $0x2b8] sm:$0xf] %vm4602, %v4549
      %4625 = vst.msk [vmem:[#allocation2 + $0x2d8] sm:$0xf] %vm4602, %v4551
      %4626 = vst.msk [vmem:[#allocation2 + $0x2f8] sm:$0xf] %vm4602, %v4553
      %4627 = vst.msk [vmem:[#allocation2 + $0x318] sm:$0xf] %vm4602, %v4555
      %4628 = vst.msk [vmem:[#allocation2 + $0x338] sm:$0xf] %vm4602, %v4557
      %4629 = vst.msk [vmem:[#allocation2 + $0x358] sm:$0xf] %vm4602, %v4559
      %4630 = vst.msk [vmem:[#allocation2 + $0x378] sm:$0xf] %vm4602, %v4561
      %4631 = vst.msk [vmem:[#allocation2 + $0x398] sm:$0xf] %vm4602, %v4563
      %4632 = vst.msk [vmem:[#allocation2 + $0x3b8] sm:$0xf] %vm4602, %v4565
      %4633 = vst.msk [vmem:[#allocation2 + $0x3d8] sm:$0xf] %vm4602, %v4567
      %4634 = vst.msk [vmem:[#allocation2 + $0x3f8] sm:$0xf] %vm4602, %v4569
      %v4635 = vrot.slane %v4279, 5
      %v4636 = vrot.slane %v4282, 6
      %v4637 = vor.u32 %v4635, %v4636
      %v4638 = vrot.slane %v4637, 4
      %v4639 = vrot.slane %v4292, 5
      %v4640 = vrot.slane %v4288, 6
      %v4641 = vor.u32 %v4639, %v4640
      %v4642 = vsel %vm1095, %v4638, %v4641
      %v4643 = vrot.slane %v4641, 4
      %v4644 = vshrl.u32 %v251, 16
      %v4646 = vrot.slane %v4644, 5
      %v4647 = vrot.slane %v4298, 6
      %v4648 = vor.u32 %v4646, %v4647
      %v4649 = vsel %vm1095, %v4643, %v4648
      %4650 = vrot.lane.b32.xlu0 %v1163, 60
      %v4651 = vpop.permute.xlu0 %4650
      %4652 = vrot.lane.b32.xlu0 %v1170, 60
      %v4653 = vpop.permute.xlu0 %4652
      %4654 = vrot.lane.b32.xlu0 %v1178, 60
      %v4655 = vpop.permute.xlu0 %4654
      %4656 = vrot.lane.b32.xlu0 %v1185, 60
      %v4657 = vpop.permute.xlu0 %4656
      %4658 = vrot.lane.b32.xlu0 %v1193, 60
      %v4659 = vpop.permute.xlu0 %4658
      %4660 = vrot.lane.b32.xlu0 %v1200, 60
      %v4661 = vpop.permute.xlu0 %4660
      %4662 = vrot.lane.b32.xlu0 %v1208, 60
      %v4663 = vpop.permute.xlu0 %4662
      %4664 = vrot.lane.b32.xlu0 %v1215, 60
      %v4665 = vpop.permute.xlu0 %4664
      %4666 = vrot.lane.b32.xlu0 %v1223, 60
      %v4667 = vpop.permute.xlu0 %4666
      %4668 = vrot.lane.b32.xlu0 %v1230, 60
      %v4669 = vpop.permute.xlu0 %4668
      %4670 = vrot.lane.b32.xlu0 %v1238, 60
      %v4671 = vpop.permute.xlu0 %4670
      %4672 = vrot.lane.b32.xlu0 %v1245, 60
      %v4673 = vpop.permute.xlu0 %4672
      %4674 = vrot.lane.b32.xlu0 %v1253, 60
      %v4675 = vpop.permute.xlu0 %4674
      %4676 = vrot.lane.b32.xlu0 %v1260, 60
      %v4677 = vpop.permute.xlu0 %4676
      %4678 = vrot.lane.b32.xlu0 %v1268, 60
      %v4679 = vpop.permute.xlu0 %4678
      %4680 = vrot.lane.b32.xlu0 %v1275, 60
      %v4681 = vpop.permute.xlu0 %4680
      %4682 = vrot.lane.b32.xlu0 %v1283, 60
      %v4683 = vpop.permute.xlu0 %4682
      %4684 = vrot.lane.b32.xlu0 %v1290, 60
      %v4685 = vpop.permute.xlu0 %4684
      %4686 = vrot.lane.b32.xlu0 %v1298, 60
      %v4687 = vpop.permute.xlu0 %4686
      %4688 = vrot.lane.b32.xlu0 %v1305, 60
      %v4689 = vpop.permute.xlu0 %4688
      %4690 = vrot.lane.b32.xlu0 %v1313, 60
      %v4691 = vpop.permute.xlu0 %4690
      %4692 = vrot.lane.b32.xlu0 %v1320, 60
      %v4693 = vpop.permute.xlu0 %4692
      %4694 = vrot.lane.b32.xlu0 %v1328, 60
      %v4695 = vpop.permute.xlu0 %4694
      %4696 = vrot.lane.b32.xlu0 %v1335, 60
      %v4697 = vpop.permute.xlu0 %4696
      %4698 = vrot.lane.b32.xlu0 %v2271, 60
      %v4699 = vpop.permute.xlu0 %4698
      %4700 = vrot.lane.b32.xlu0 %v2278, 60
      %v4701 = vpop.permute.xlu0 %4700
      %4702 = vrot.lane.b32.xlu0 %v3039, 60
      %v4703 = vpop.permute.xlu0 %4702
      %4704 = vrot.lane.b32.xlu0 %v3046, 60
      %v4705 = vpop.permute.xlu0 %4704
      %4706 = vrot.lane.b32.xlu0 %v3874, 60
      %v4707 = vpop.permute.xlu0 %4706
      %4708 = vrot.lane.b32.xlu0 %v3881, 60
      %v4709 = vpop.permute.xlu0 %4708
      %4710 = vrot.lane.b32.xlu0 %v4642, 60
      %v4711 = vpop.permute.xlu0 %4710
      %4712 = vrot.lane.b32.xlu0 %v4649, 60
      %v4713 = vpop.permute.xlu0 %4712
      %vm4746 = vcmask 781792
      %4747 = vst.msk [vmem:[#allocation2 + $0x18] sm:$0xf] %vm4746, %v4651
      %4748 = vst.msk [vmem:[#allocation2 + $0x38] sm:$0xf] %vm4746, %v4653
      %4749 = vst.msk [vmem:[#allocation2 + $0x58] sm:$0xf] %vm4746, %v4655
      %4750 = vst.msk [vmem:[#allocation2 + $0x78] sm:$0xf] %vm4746, %v4657
      %4751 = vst.msk [vmem:[#allocation2 + $0x98] sm:$0xf] %vm4746, %v4659
      %4752 = vst.msk [vmem:[#allocation2 + $0xb8] sm:$0xf] %vm4746, %v4661
      %4753 = vst.msk [vmem:[#allocation2 + $0xd8] sm:$0xf] %vm4746, %v4663
      %4754 = vst.msk [vmem:[#allocation2 + $0xf8] sm:$0xf] %vm4746, %v4665
      %4755 = vst.msk [vmem:[#allocation2 + $0x118] sm:$0xf] %vm4746, %v4667
      %4756 = vst.msk [vmem:[#allocation2 + $0x138] sm:$0xf] %vm4746, %v4669
      %4757 = vst.msk [vmem:[#allocation2 + $0x158] sm:$0xf] %vm4746, %v4671
      %4758 = vst.msk [vmem:[#allocation2 + $0x178] sm:$0xf] %vm4746, %v4673
      %4759 = vst.msk [vmem:[#allocation2 + $0x198] sm:$0xf] %vm4746, %v4675
      %4760 = vst.msk [vmem:[#allocation2 + $0x1b8] sm:$0xf] %vm4746, %v4677
      %4761 = vst.msk [vmem:[#allocation2 + $0x1d8] sm:$0xf] %vm4746, %v4679
      %4762 = vst.msk [vmem:[#allocation2 + $0x1f8] sm:$0xf] %vm4746, %v4681
      %4763 = vst.msk [vmem:[#allocation2 + $0x218] sm:$0xf] %vm4746, %v4683
      %4764 = vst.msk [vmem:[#allocation2 + $0x238] sm:$0xf] %vm4746, %v4685
      %4765 = vst.msk [vmem:[#allocation2 + $0x258] sm:$0xf] %vm4746, %v4687
      %4766 = vst.msk [vmem:[#allocation2 + $0x278] sm:$0xf] %vm4746, %v4689
      %4767 = vst.msk [vmem:[#allocation2 + $0x298] sm:$0xf] %vm4746, %v4691
      %4768 = vst.msk [vmem:[#allocation2 + $0x2b8] sm:$0xf] %vm4746, %v4693
      %4769 = vst.msk [vmem:[#allocation2 + $0x2d8] sm:$0xf] %vm4746, %v4695
      %4770 = vst.msk [vmem:[#allocation2 + $0x2f8] sm:$0xf] %vm4746, %v4697
      %4771 = vst.msk [vmem:[#allocation2 + $0x318] sm:$0xf] %vm4746, %v4699
      %4772 = vst.msk [vmem:[#allocation2 + $0x338] sm:$0xf] %vm4746, %v4701
      %4773 = vst.msk [vmem:[#allocation2 + $0x358] sm:$0xf] %vm4746, %v4703
      %4774 = vst.msk [vmem:[#allocation2 + $0x378] sm:$0xf] %vm4746, %v4705
      %4775 = vst.msk [vmem:[#allocation2 + $0x398] sm:$0xf] %vm4746, %v4707
      %4776 = vst.msk [vmem:[#allocation2 + $0x3b8] sm:$0xf] %vm4746, %v4709
      %4777 = vst.msk [vmem:[#allocation2 + $0x3d8] sm:$0xf] %vm4746, %v4711
      %4778 = vst.msk [vmem:[#allocation2 + $0x3f8] sm:$0xf] %vm4746, %v4713
      %v4779 = vrot.slane %v249, 6
      %v4780 = vrot.slane %v4779, 4
      %v4781 = vrot.slane %v250, 6
      %v4782 = vsel %vm1534, %v4780, %v4781
      %v4783 = vrot.slane %v4781, 4
      %v4784 = vrot.slane %v251, 6
      %v4785 = vsel %vm1534, %v4783, %v4784
      %4786 = vrot.lane.b32.xlu0 %v1566, 96
      %v4787 = vpop.permute.xlu0 %4786
      %4788 = vrot.lane.b32.xlu0 %v1569, 96
      %v4789 = vpop.permute.xlu0 %4788
      %4790 = vrot.lane.b32.xlu0 %v1573, 96
      %v4791 = vpop.permute.xlu0 %4790
      %4792 = vrot.lane.b32.xlu0 %v1576, 96
      %v4793 = vpop.permute.xlu0 %4792
      %4794 = vrot.lane.b32.xlu0 %v1580, 96
      %v4795 = vpop.permute.xlu0 %4794
      %4796 = vrot.lane.b32.xlu0 %v1583, 96
      %v4797 = vpop.permute.xlu0 %4796
      %4798 = vrot.lane.b32.xlu0 %v1587, 96
      %v4799 = vpop.permute.xlu0 %4798
      %4800 = vrot.lane.b32.xlu0 %v1590, 96
      %v4801 = vpop.permute.xlu0 %4800
      %4802 = vrot.lane.b32.xlu0 %v1594, 96
      %v4803 = vpop.permute.xlu0 %4802
      %4804 = vrot.lane.b32.xlu0 %v1597, 96
      %v4805 = vpop.permute.xlu0 %4804
      %4806 = vrot.lane.b32.xlu0 %v1601, 96
      %v4807 = vpop.permute.xlu0 %4806
      %4808 = vrot.lane.b32.xlu0 %v1604, 96
      %v4809 = vpop.permute.xlu0 %4808
      %4810 = vrot.lane.b32.xlu0 %v1608, 96
      %v4811 = vpop.permute.xlu0 %4810
      %4812 = vrot.lane.b32.xlu0 %v1611, 96
      %v4813 = vpop.permute.xlu0 %4812
      %4814 = vrot.lane.b32.xlu0 %v1615, 96
      %v4815 = vpop.permute.xlu0 %4814
      %4816 = vrot.lane.b32.xlu0 %v1618, 96
      %v4817 = vpop.permute.xlu0 %4816
      %4818 = vrot.lane.b32.xlu0 %v1622, 96
      %v4819 = vpop.permute.xlu0 %4818
      %4820 = vrot.lane.b32.xlu0 %v1625, 96
      %v4821 = vpop.permute.xlu0 %4820
      %4822 = vrot.lane.b32.xlu0 %v1629, 96
      %v4823 = vpop.permute.xlu0 %4822
      %4824 = vrot.lane.b32.xlu0 %v1632, 96
      %v4825 = vpop.permute.xlu0 %4824
      %4826 = vrot.lane.b32.xlu0 %v1636, 96
      %v4827 = vpop.permute.xlu0 %4826
      %4828 = vrot.lane.b32.xlu0 %v1639, 96
      %v4829 = vpop.permute.xlu0 %4828
      %4830 = vrot.lane.b32.xlu0 %v1643, 96
      %v4831 = vpop.permute.xlu0 %4830
      %4832 = vrot.lane.b32.xlu0 %v1646, 96
      %v4833 = vpop.permute.xlu0 %4832
      %4834 = vrot.lane.b32.xlu0 %v2411, 96
      %v4835 = vpop.permute.xlu0 %4834
      %4836 = vrot.lane.b32.xlu0 %v2414, 96
      %v4837 = vpop.permute.xlu0 %4836
      %4838 = vrot.lane.b32.xlu0 %v3179, 96
      %v4839 = vpop.permute.xlu0 %4838
      %4840 = vrot.lane.b32.xlu0 %v3182, 96
      %v4841 = vpop.permute.xlu0 %4840
      %4842 = vrot.lane.b32.xlu0 %v4014, 96
      %v4843 = vpop.permute.xlu0 %4842
      %4844 = vrot.lane.b32.xlu0 %v4017, 96
      %v4845 = vpop.permute.xlu0 %4844
      %4846 = vrot.lane.b32.xlu0 %v4782, 96
      %v4847 = vpop.permute.xlu0 %4846
      %4848 = vrot.lane.b32.xlu0 %v4785, 96
      %v4849 = vpop.permute.xlu0 %4848
      %v4850 = vrot.slane %v4787, 4
      %v4851 = vrot.slane %v4789, 4
      %v4852 = vrot.slane %v4791, 4
      %v4853 = vrot.slane %v4793, 4
      %v4854 = vrot.slane %v4795, 4
      %v4855 = vrot.slane %v4797, 4
      %v4856 = vrot.slane %v4799, 4
      %v4857 = vrot.slane %v4801, 4
      %v4858 = vrot.slane %v4803, 4
      %v4859 = vrot.slane %v4805, 4
      %v4860 = vrot.slane %v4807, 4
      %v4861 = vrot.slane %v4809, 4
      %v4862 = vrot.slane %v4811, 4
      %v4863 = vrot.slane %v4813, 4
      %v4864 = vrot.slane %v4815, 4
      %v4865 = vrot.slane %v4817, 4
      %v4866 = vrot.slane %v4819, 4
      %v4867 = vrot.slane %v4821, 4
      %v4868 = vrot.slane %v4823, 4
      %v4869 = vrot.slane %v4825, 4
      %v4870 = vrot.slane %v4827, 4
      %v4871 = vrot.slane %v4829, 4
      %v4872 = vrot.slane %v4831, 4
      %v4873 = vrot.slane %v4833, 4
      %v4874 = vrot.slane %v4835, 4
      %v4875 = vrot.slane %v4837, 4
      %v4876 = vrot.slane %v4839, 4
      %v4877 = vrot.slane %v4841, 4
      %v4878 = vrot.slane %v4843, 4
      %v4879 = vrot.slane %v4845, 4
      %v4880 = vrot.slane %v4847, 4
      %v4881 = vrot.slane %v4849, 4
      %vm4882 = vcmask 785408
      %v4883 = vsel %vm4882, %v4850, %v4787
      %v4884 = vsel %vm4882, %v4851, %v4789
      %v4885 = vsel %vm4882, %v4852, %v4791
      %v4886 = vsel %vm4882, %v4853, %v4793
      %v4887 = vsel %vm4882, %v4854, %v4795
      %v4888 = vsel %vm4882, %v4855, %v4797
      %v4889 = vsel %vm4882, %v4856, %v4799
      %v4890 = vsel %vm4882, %v4857, %v4801
      %v4891 = vsel %vm4882, %v4858, %v4803
      %v4892 = vsel %vm4882, %v4859, %v4805
      %v4893 = vsel %vm4882, %v4860, %v4807
      %v4894 = vsel %vm4882, %v4861, %v4809
      %v4895 = vsel %vm4882, %v4862, %v4811
      %v4896 = vsel %vm4882, %v4863, %v4813
      %v4897 = vsel %vm4882, %v4864, %v4815
      %v4898 = vsel %vm4882, %v4865, %v4817
      %v4899 = vsel %vm4882, %v4866, %v4819
      %v4900 = vsel %vm4882, %v4867, %v4821
      %v4901 = vsel %vm4882, %v4868, %v4823
      %v4902 = vsel %vm4882, %v4869, %v4825
      %v4903 = vsel %vm4882, %v4870, %v4827
      %v4904 = vsel %vm4882, %v4871, %v4829
      %v4905 = vsel %vm4882, %v4872, %v4831
      %v4906 = vsel %vm4882, %v4873, %v4833
      %v4907 = vsel %vm4882, %v4874, %v4835
      %v4908 = vsel %vm4882, %v4875, %v4837
      %v4909 = vsel %vm4882, %v4876, %v4839
      %v4910 = vsel %vm4882, %v4877, %v4841
      %v4911 = vsel %vm4882, %v4878, %v4843
      %v4912 = vsel %vm4882, %v4879, %v4845
      %v4913 = vsel %vm4882, %v4880, %v4847
      %v4914 = vsel %vm4882, %v4881, %v4849
      %vm4947 = vcmask 1044224
      %vm4948 = vcmask 31748
      %vm4949 = vmor %vm4948, %vm4947
      %4950 = vst.msk [vmem:[#allocation2 + $0x18] sm:$0xff] %vm4949, %v4883
      %4951 = vst.msk [vmem:[#allocation2 + $0x38] sm:$0xff] %vm4949, %v4884
      %4952 = vst.msk [vmem:[#allocation2 + $0x58] sm:$0xff] %vm4949, %v4885
      %4953 = vst.msk [vmem:[#allocation2 + $0x78] sm:$0xff] %vm4949, %v4886
      %4954 = vst.msk [vmem:[#allocation2 + $0x98] sm:$0xff] %vm4949, %v4887
      %4955 = vst.msk [vmem:[#allocation2 + $0xb8] sm:$0xff] %vm4949, %v4888
      %4956 = vst.msk [vmem:[#allocation2 + $0xd8] sm:$0xff] %vm4949, %v4889
      %4957 = vst.msk [vmem:[#allocation2 + $0xf8] sm:$0xff] %vm4949, %v4890
      %4958 = vst.msk [vmem:[#allocation2 + $0x118] sm:$0xff] %vm4949, %v4891
      %4959 = vst.msk [vmem:[#allocation2 + $0x138] sm:$0xff] %vm4949, %v4892
      %4960 = vst.msk [vmem:[#allocation2 + $0x158] sm:$0xff] %vm4949, %v4893
      %4961 = vst.msk [vmem:[#allocation2 + $0x178] sm:$0xff] %vm4949, %v4894
      %4962 = vst.msk [vmem:[#allocation2 + $0x198] sm:$0xff] %vm4949, %v4895
      %4963 = vst.msk [vmem:[#allocation2 + $0x1b8] sm:$0xff] %vm4949, %v4896
      %4964 = vst.msk [vmem:[#allocation2 + $0x1d8] sm:$0xff] %vm4949, %v4897
      %4965 = vst.msk [vmem:[#allocation2 + $0x1f8] sm:$0xff] %vm4949, %v4898
      %4966 = vst.msk [vmem:[#allocation2 + $0x218] sm:$0xff] %vm4949, %v4899
      %4967 = vst.msk [vmem:[#allocation2 + $0x238] sm:$0xff] %vm4949, %v4900
      %4968 = vst.msk [vmem:[#allocation2 + $0x258] sm:$0xff] %vm4949, %v4901
      %4969 = vst.msk [vmem:[#allocation2 + $0x278] sm:$0xff] %vm4949, %v4902
      %4970 = vst.msk [vmem:[#allocation2 + $0x298] sm:$0xff] %vm4949, %v4903
      %4971 = vst.msk [vmem:[#allocation2 + $0x2b8] sm:$0xff] %vm4949, %v4904
      %4972 = vst.msk [vmem:[#allocation2 + $0x2d8] sm:$0xff] %vm4949, %v4905
      %4973 = vst.msk [vmem:[#allocation2 + $0x2f8] sm:$0xff] %vm4949, %v4906
      %4974 = vst.msk [vmem:[#allocation2 + $0x318] sm:$0xff] %vm4949, %v4907
      %4975 = vst.msk [vmem:[#allocation2 + $0x338] sm:$0xff] %vm4949, %v4908
      %4976 = vst.msk [vmem:[#allocation2 + $0x358] sm:$0xff] %vm4949, %v4909
      %4977 = vst.msk [vmem:[#allocation2 + $0x378] sm:$0xff] %vm4949, %v4910
      %4978 = vst.msk [vmem:[#allocation2 + $0x398] sm:$0xff] %vm4949, %v4911
      %4979 = vst.msk [vmem:[#allocation2 + $0x3b8] sm:$0xff] %vm4949, %v4912
      %4980 = vst.msk [vmem:[#allocation2 + $0x3d8] sm:$0xff] %vm4949, %v4913
      %4981 = vst.msk [vmem:[#allocation2 + $0x3f8] sm:$0xff] %vm4949, %v4914
      %v4982 = vld [vmem:[#allocation2] sm:$0xff]
      %v4983 = vld [vmem:[#allocation2 + $0x8] sm:$0xff]
      %v4984 = vld [vmem:[#allocation2 + $0x10] sm:$0xff]
      %v4985 = vld [vmem:[#allocation2 + $0x18] sm:$0xff]
      %v4986 = vld [vmem:[#allocation2 + $0x20] sm:$0xff]
      %v4987 = vld [vmem:[#allocation2 + $0x28] sm:$0xff]
      %v4988 = vld [vmem:[#allocation2 + $0x30] sm:$0xff]
      %v4989 = vld [vmem:[#allocation2 + $0x38] sm:$0xff]
      %v4990 = vld [vmem:[#allocation2 + $0x40] sm:$0xff]
      %v4991 = vld [vmem:[#allocation2 + $0x48] sm:$0xff]
      %v4992 = vld [vmem:[#allocation2 + $0x50] sm:$0xff]
      %v4993 = vld [vmem:[#allocation2 + $0x58] sm:$0xff]
      %v4994 = vld [vmem:[#allocation2 + $0x60] sm:$0xff]
      %v4995 = vld [vmem:[#allocation2 + $0x68] sm:$0xff]
      %v4996 = vld [vmem:[#allocation2 + $0x70] sm:$0xff]
      %v4997 = vld [vmem:[#allocation2 + $0x78] sm:$0xff]
      %v4998 = vld [vmem:[#allocation2 + $0x80] sm:$0xff]
      %v4999 = vld [vmem:[#allocation2 + $0x88] sm:$0xff]
      %v5000 = vld [vmem:[#allocation2 + $0x90] sm:$0xff]
      %v5001 = vld [vmem:[#allocation2 + $0x98] sm:$0xff]
      %v5002 = vld [vmem:[#allocation2 + $0xa0] sm:$0xff]
      %v5003 = vld [vmem:[#allocation2 + $0xa8] sm:$0xff]
      %v5004 = vld [vmem:[#allocation2 + $0xb0] sm:$0xff]
      %v5005 = vld [vmem:[#allocation2 + $0xb8] sm:$0xff]
      %v5006 = vld [vmem:[#allocation2 + $0xc0] sm:$0xff]
      %v5007 = vld [vmem:[#allocation2 + $0xc8] sm:$0xff]
      %v5008 = vld [vmem:[#allocation2 + $0xd0] sm:$0xff]
      %v5009 = vld [vmem:[#allocation2 + $0xd8] sm:$0xff]
      %v5010 = vld [vmem:[#allocation2 + $0xe0] sm:$0xff]
      %v5011 = vld [vmem:[#allocation2 + $0xe8] sm:$0xff]
      %v5012 = vld [vmem:[#allocation2 + $0xf0] sm:$0xff]
      %v5013 = vld [vmem:[#allocation2 + $0xf8] sm:$0xff]
      %v5014 = vld [vmem:[#allocation2 + $0x100] sm:$0xff]
      %v5015 = vld [vmem:[#allocation2 + $0x108] sm:$0xff]
      %v5016 = vld [vmem:[#allocation2 + $0x110] sm:$0xff]
      %v5017 = vld [vmem:[#allocation2 + $0x118] sm:$0xff]
      %v5018 = vld [vmem:[#allocation2 + $0x120] sm:$0xff]
      %v5019 = vld [vmem:[#allocation2 + $0x128] sm:$0xff]
      %v5020 = vld [vmem:[#allocation2 + $0x130] sm:$0xff]
      %v5021 = vld [vmem:[#allocation2 + $0x138] sm:$0xff]
      %v5022 = vld [vmem:[#allocation2 + $0x140] sm:$0xff]
      %v5023 = vld [vmem:[#allocation2 + $0x148] sm:$0xff]
      %v5024 = vld [vmem:[#allocation2 + $0x150] sm:$0xff]
      %v5025 = vld [vmem:[#allocation2 + $0x158] sm:$0xff]
      %v5026 = vld [vmem:[#allocation2 + $0x160] sm:$0xff]
      %v5027 = vld [vmem:[#allocation2 + $0x168] sm:$0xff]
      %v5028 = vld [vmem:[#allocation2 + $0x170] sm:$0xff]
      %v5029 = vld [vmem:[#allocation2 + $0x178] sm:$0xff]
      %v5030 = vld [vmem:[#allocation2 + $0x180] sm:$0xff]
      %v5031 = vld [vmem:[#allocation2 + $0x188] sm:$0xff]
      %v5032 = vld [vmem:[#allocation2 + $0x190] sm:$0xff]
      %v5033 = vld [vmem:[#allocation2 + $0x198] sm:$0xff]
      %v5034 = vld [vmem:[#allocation2 + $0x1a0] sm:$0xff]
      %v5035 = vld [vmem:[#allocation2 + $0x1a8] sm:$0xff]
      %v5036 = vld [vmem:[#allocation2 + $0x1b0] sm:$0xff]
      %v5037 = vld [vmem:[#allocation2 + $0x1b8] sm:$0xff]
      %v5038 = vld [vmem:[#allocation2 + $0x1c0] sm:$0xff]
      %v5039 = vld [vmem:[#allocation2 + $0x1c8] sm:$0xff]
      %v5040 = vld [vmem:[#allocation2 + $0x1d0] sm:$0xff]
      %v5041 = vld [vmem:[#allocation2 + $0x1d8] sm:$0xff]
      %v5042 = vld [vmem:[#allocation2 + $0x1e0] sm:$0xff]
      %v5043 = vld [vmem:[#allocation2 + $0x1e8] sm:$0xff]
      %v5044 = vld [vmem:[#allocation2 + $0x1f0] sm:$0xff]
      %v5045 = vld [vmem:[#allocation2 + $0x1f8] sm:$0xff]
      %v5046 = vld [vmem:[#allocation2 + $0x200] sm:$0xff]
      %v5047 = vld [vmem:[#allocation2 + $0x208] sm:$0xff]
      %v5048 = vld [vmem:[#allocation2 + $0x210] sm:$0xff]
      %v5049 = vld [vmem:[#allocation2 + $0x218] sm:$0xff]
      %v5050 = vld [vmem:[#allocation2 + $0x220] sm:$0xff]
      %v5051 = vld [vmem:[#allocation2 + $0x228] sm:$0xff]
      %v5052 = vld [vmem:[#allocation2 + $0x230] sm:$0xff]
      %v5053 = vld [vmem:[#allocation2 + $0x238] sm:$0xff]
      %v5054 = vld [vmem:[#allocation2 + $0x240] sm:$0xff]
      %v5055 = vld [vmem:[#allocation2 + $0x248] sm:$0xff]
      %v5056 = vld [vmem:[#allocation2 + $0x250] sm:$0xff]
      %v5057 = vld [vmem:[#allocation2 + $0x258] sm:$0xff]
      %v5058 = vld [vmem:[#allocation2 + $0x260] sm:$0xff]
      %v5059 = vld [vmem:[#allocation2 + $0x268] sm:$0xff]
      %v5060 = vld [vmem:[#allocation2 + $0x270] sm:$0xff]
      %v5061 = vld [vmem:[#allocation2 + $0x278] sm:$0xff]
      %v5062 = vld [vmem:[#allocation2 + $0x280] sm:$0xff]
      %v5063 = vld [vmem:[#allocation2 + $0x288] sm:$0xff]
      %v5064 = vld [vmem:[#allocation2 + $0x290] sm:$0xff]
      %v5065 = vld [vmem:[#allocation2 + $0x298] sm:$0xff]
      %v5066 = vld [vmem:[#allocation2 + $0x2a0] sm:$0xff]
      %v5067 = vld [vmem:[#allocation2 + $0x2a8] sm:$0xff]
      %v5068 = vld [vmem:[#allocation2 + $0x2b0] sm:$0xff]
      %v5069 = vld [vmem:[#allocation2 + $0x2b8] sm:$0xff]
      %v5070 = vld [vmem:[#allocation2 + $0x2c0] sm:$0xff]
      %v5071 = vld [vmem:[#allocation2 + $0x2c8] sm:$0xff]
      %v5072 = vld [vmem:[#allocation2 + $0x2d0] sm:$0xff]
      %v5073 = vld [vmem:[#allocation2 + $0x2d8] sm:$0xff]
      %v5074 = vld [vmem:[#allocation2 + $0x2e0] sm:$0xff]
      %v5075 = vld [vmem:[#allocation2 + $0x2e8] sm:$0xff]
      %v5076 = vld [vmem:[#allocation2 + $0x2f0] sm:$0xff]
      %v5077 = vld [vmem:[#allocation2 + $0x2f8] sm:$0xff]
      %v5078 = vld [vmem:[#allocation2 + $0x300] sm:$0xff]
      %v5079 = vld [vmem:[#allocation2 + $0x308] sm:$0xff]
      %v5080 = vld [vmem:[#allocation2 + $0x310] sm:$0xff]
      %v5081 = vld [vmem:[#allocation2 + $0x318] sm:$0xff]
      %v5082 = vld [vmem:[#allocation2 + $0x320] sm:$0xff]
      %v5083 = vld [vmem:[#allocation2 + $0x328] sm:$0xff]
      %v5084 = vld [vmem:[#allocation2 + $0x330] sm:$0xff]
      %v5085 = vld [vmem:[#allocation2 + $0x338] sm:$0xff]
      %v5086 = vld [vmem:[#allocation2 + $0x340] sm:$0xff]
      %v5087 = vld [vmem:[#allocation2 + $0x348] sm:$0xff]
      %v5088 = vld [vmem:[#allocation2 + $0x350] sm:$0xff]
      %v5089 = vld [vmem:[#allocation2 + $0x358] sm:$0xff]
      %v5090 = vld [vmem:[#allocation2 + $0x360] sm:$0xff]
      %v5091 = vld [vmem:[#allocation2 + $0x368] sm:$0xff]
      %v5092 = vld [vmem:[#allocation2 + $0x370] sm:$0xff]
      %v5093 = vld [vmem:[#allocation2 + $0x378] sm:$0xff]
      %v5094 = vld [vmem:[#allocation2 + $0x380] sm:$0xff]
      %v5095 = vld [vmem:[#allocation2 + $0x388] sm:$0xff]
      %v5096 = vld [vmem:[#allocation2 + $0x390] sm:$0xff]
      %v5097 = vld [vmem:[#allocation2 + $0x398] sm:$0xff]
      %v5098 = vld [vmem:[#allocation2 + $0x3a0] sm:$0xff]
      %v5099 = vld [vmem:[#allocation2 + $0x3a8] sm:$0xff]
      %v5100 = vld [vmem:[#allocation2 + $0x3b0] sm:$0xff]
      %v5101 = vld [vmem:[#allocation2 + $0x3b8] sm:$0xff]
      %v5102 = vld [vmem:[#allocation2 + $0x3c0] sm:$0xff]
      %v5103 = vld [vmem:[#allocation2 + $0x3c8] sm:$0xff]
      %v5104 = vld [vmem:[#allocation2 + $0x3d0] sm:$0xff]
      %v5105 = vld [vmem:[#allocation2 + $0x3d8] sm:$0xff]
      %v5106 = vld [vmem:[#allocation2 + $0x3e0] sm:$0xff]
      %v5107 = vld [vmem:[#allocation2 + $0x3e8] sm:$0xff]
      %v5108 = vld [vmem:[#allocation2 + $0x3f0] sm:$0xff]
      %v5109 = vld [vmem:[#allocation2 + $0x3f8] sm:$0xff]
      %v5110 = vld [vmem:[%s2] sm:$0xf]
      %v5111 = vld [vmem:[%s2 + $0x4] sm:$0xf]
      %v5112 = vld [vmem:[%s2 + $0x8] sm:$0xf]
      %v5113 = vld [vmem:[%s2 + $0xc] sm:$0xf]
      %v5114 = vld [vmem:[%s2 + $0x10] sm:$0xf]
      %v5115 = vld [vmem:[%s2 + $0x14] sm:$0xf]
      %v5116 = vld [vmem:[%s2 + $0x18] sm:$0xf]
      %v5117 = vld [vmem:[%s2 + $0x1c] sm:$0xf]
      %v5118 = vld [vmem:[%s2 + $0x20] sm:$0xf]
      %v5119 = vld [vmem:[%s2 + $0x24] sm:$0xf]
      %v5120 = vld [vmem:[%s2 + $0x28] sm:$0xf]
      %v5121 = vld [vmem:[%s2 + $0x2c] sm:$0xf]
      %v5122 = vld [vmem:[%s2 + $0x30] sm:$0xf]
      %v5123 = vld [vmem:[%s2 + $0x34] sm:$0xf]
      %v5124 = vld [vmem:[%s2 + $0x38] sm:$0xf]
      %v5125 = vld [vmem:[%s2 + $0x3c] sm:$0xf]
      %v5126 = vld [vmem:[%s2 + $0x40] sm:$0xf]
      %v5127 = vld [vmem:[%s2 + $0x44] sm:$0xf]
      %v5128 = vld [vmem:[%s2 + $0x48] sm:$0xf]
      %v5129 = vld [vmem:[%s2 + $0x4c] sm:$0xf]
      %v5130 = vld [vmem:[%s2 + $0x50] sm:$0xf]
      %v5131 = vld [vmem:[%s2 + $0x54] sm:$0xf]
      %v5132 = vld [vmem:[%s2 + $0x58] sm:$0xf]
      %v5133 = vld [vmem:[%s2 + $0x5c] sm:$0xf]
      %v5134 = vld [vmem:[%s2 + $0x60] sm:$0xf]
      %v5135 = vld [vmem:[%s2 + $0x64] sm:$0xf]
      %v5136 = vld [vmem:[%s2 + $0x68] sm:$0xf]
      %v5137 = vld [vmem:[%s2 + $0x6c] sm:$0xf]
      %v5138 = vld [vmem:[%s2 + $0x70] sm:$0xf]
      %v5139 = vld [vmem:[%s2 + $0x74] sm:$0xf]
      %v5140 = vld [vmem:[%s2 + $0x78] sm:$0xf]
      %v5141 = vld [vmem:[%s2 + $0x7c] sm:$0xf]
      %v5142 = vld [vmem:[%s2 + $0x80] sm:$0xf]
      %v5143 = vld [vmem:[%s2 + $0x84] sm:$0xf]
      %v5144 = vld [vmem:[%s2 + $0x88] sm:$0xf]
      %v5145 = vld [vmem:[%s2 + $0x8c] sm:$0xf]
      %v5146 = vld [vmem:[%s2 + $0x90] sm:$0xf]
      %v5147 = vld [vmem:[%s2 + $0x94] sm:$0xf]
      %v5148 = vld [vmem:[%s2 + $0x98] sm:$0xf]
      %v5149 = vld [vmem:[%s2 + $0x9c] sm:$0xf]
      %v5150 = vld [vmem:[%s2 + $0xa0] sm:$0xf]
      %v5151 = vld [vmem:[%s2 + $0xa4] sm:$0xf]
      %v5152 = vld [vmem:[%s2 + $0xa8] sm:$0xf]
      %v5153 = vld [vmem:[%s2 + $0xac] sm:$0xf]
      %v5154 = vld [vmem:[%s2 + $0xb0] sm:$0xf]
      %v5155 = vld [vmem:[%s2 + $0xb4] sm:$0xf]
      %v5156 = vld [vmem:[%s2 + $0xb8] sm:$0xf]
      %v5157 = vld [vmem:[%s2 + $0xbc] sm:$0xf]
      %v5158 = vld [vmem:[%s2 + $0xc0] sm:$0xf]
      %v5159 = vld [vmem:[%s2 + $0xc4] sm:$0xf]
      %v5160 = vld [vmem:[%s2 + $0xc8] sm:$0xf]
      %v5161 = vld [vmem:[%s2 + $0xcc] sm:$0xf]
      %v5162 = vld [vmem:[%s2 + $0xd0] sm:$0xf]
      %v5163 = vld [vmem:[%s2 + $0xd4] sm:$0xf]
      %v5164 = vld [vmem:[%s2 + $0xd8] sm:$0xf]
      %v5165 = vld [vmem:[%s2 + $0xdc] sm:$0xf]
      %v5166 = vld [vmem:[%s2 + $0xe0] sm:$0xf]
      %v5167 = vld [vmem:[%s2 + $0xe4] sm:$0xf]
      %v5168 = vld [vmem:[%s2 + $0xe8] sm:$0xf]
      %v5169 = vld [vmem:[%s2 + $0xec] sm:$0xf]
      %v5170 = vld [vmem:[%s2 + $0xf0] sm:$0xf]
      %v5171 = vld [vmem:[%s2 + $0xf4] sm:$0xf]
      %v5172 = vld [vmem:[%s2 + $0xf8] sm:$0xf]
      %v5173 = vld [vmem:[%s2 + $0xfc] sm:$0xf]
      %v5174 = vld [vmem:[%s2 + $0x100] sm:$0xf]
      %v5175 = vld [vmem:[%s2 + $0x104] sm:$0xf]
      %v5176 = vld [vmem:[%s2 + $0x108] sm:$0xf]
      %v5177 = vld [vmem:[%s2 + $0x10c] sm:$0xf]
      %v5178 = vld [vmem:[%s2 + $0x110] sm:$0xf]
      %v5179 = vld [vmem:[%s2 + $0x114] sm:$0xf]
      %v5180 = vld [vmem:[%s2 + $0x118] sm:$0xf]
      %v5181 = vld [vmem:[%s2 + $0x11c] sm:$0xf]
      %v5182 = vld [vmem:[%s2 + $0x120] sm:$0xf]
      %v5183 = vld [vmem:[%s2 + $0x124] sm:$0xf]
      %v5184 = vld [vmem:[%s2 + $0x128] sm:$0xf]
      %v5185 = vld [vmem:[%s2 + $0x12c] sm:$0xf]
      %v5186 = vld [vmem:[%s2 + $0x130] sm:$0xf]
      %v5187 = vld [vmem:[%s2 + $0x134] sm:$0xf]
      %v5188 = vld [vmem:[%s2 + $0x138] sm:$0xf]
      %v5189 = vld [vmem:[%s2 + $0x13c] sm:$0xf]
      %v5190 = vld [vmem:[%s2 + $0x140] sm:$0xf]
      %v5191 = vld [vmem:[%s2 + $0x144] sm:$0xf]
      %v5192 = vld [vmem:[%s2 + $0x148] sm:$0xf]
      %v5193 = vld [vmem:[%s2 + $0x14c] sm:$0xf]
      %v5194 = vld [vmem:[%s2 + $0x150] sm:$0xf]
      %v5195 = vld [vmem:[%s2 + $0x154] sm:$0xf]
      %v5196 = vld [vmem:[%s2 + $0x158] sm:$0xf]
      %v5197 = vld [vmem:[%s2 + $0x15c] sm:$0xf]
      %v5198 = vld [vmem:[%s2 + $0x160] sm:$0xf]
      %v5199 = vld [vmem:[%s2 + $0x164] sm:$0xf]
      %v5200 = vld [vmem:[%s2 + $0x168] sm:$0xf]
      %v5201 = vld [vmem:[%s2 + $0x16c] sm:$0xf]
      %v5202 = vld [vmem:[%s2 + $0x170] sm:$0xf]
      %v5203 = vld [vmem:[%s2 + $0x174] sm:$0xf]
      %v5204 = vld [vmem:[%s2 + $0x178] sm:$0xf]
      %v5205 = vld [vmem:[%s2 + $0x17c] sm:$0xf]
      %v5206 = vld [vmem:[%s2 + $0x180] sm:$0xf]
      %v5207 = vld [vmem:[%s2 + $0x184] sm:$0xf]
      %v5208 = vld [vmem:[%s2 + $0x188] sm:$0xf]
      %v5209 = vld [vmem:[%s2 + $0x18c] sm:$0xf]
      %v5210 = vld [vmem:[%s2 + $0x190] sm:$0xf]
      %v5211 = vld [vmem:[%s2 + $0x194] sm:$0xf]
      %v5212 = vld [vmem:[%s2 + $0x198] sm:$0xf]
      %v5213 = vld [vmem:[%s2 + $0x19c] sm:$0xf]
      %v5214 = vld [vmem:[%s2 + $0x1a0] sm:$0xf]
      %v5215 = vld [vmem:[%s2 + $0x1a4] sm:$0xf]
      %v5216 = vld [vmem:[%s2 + $0x1a8] sm:$0xf]
      %v5217 = vld [vmem:[%s2 + $0x1ac] sm:$0xf]
      %v5218 = vld [vmem:[%s2 + $0x1b0] sm:$0xf]
      %v5219 = vld [vmem:[%s2 + $0x1b4] sm:$0xf]
      %v5220 = vld [vmem:[%s2 + $0x1b8] sm:$0xf]
      %v5221 = vld [vmem:[%s2 + $0x1bc] sm:$0xf]
      %v5222 = vld [vmem:[%s2 + $0x1c0] sm:$0x3]
      %v5351 = vunpack.c.l.b16 %v4982
      %v5352 = vunpack.c.h.b16 %v4982
      %v5353 = vunpack.c.l.b16 %v4983
      %v5354 = vunpack.c.h.b16 %v4983
      %v5355 = vunpack.c.l.b16 %v4984
      %v5356 = vunpack.c.h.b16 %v4984
      %v5357 = vunpack.c.l.b16 %v4985
      %v5358 = vunpack.c.h.b16 %v4985
      %v5359 = vunpack.c.l.b16 %v4986
      %v5360 = vunpack.c.h.b16 %v4986
      %v5361 = vunpack.c.l.b16 %v4987
      %v5362 = vunpack.c.h.b16 %v4987
      %v5363 = vunpack.c.l.b16 %v4988
      %v5364 = vunpack.c.h.b16 %v4988
      %v5365 = vunpack.c.l.b16 %v4989
      %v5366 = vunpack.c.h.b16 %v4989
      %v5367 = vunpack.c.l.b16 %v4990
      %v5368 = vunpack.c.h.b16 %v4990
      %v5369 = vunpack.c.l.b16 %v4991
      %v5370 = vunpack.c.h.b16 %v4991
      %v5371 = vunpack.c.l.b16 %v4992
      %v5372 = vunpack.c.h.b16 %v4992
      %v5373 = vunpack.c.l.b16 %v4993
      %v5374 = vunpack.c.h.b16 %v4993
      %v5375 = vunpack.c.l.b16 %v4994
      %v5376 = vunpack.c.h.b16 %v4994
      %v5377 = vunpack.c.l.b16 %v4995
      %v5378 = vunpack.c.h.b16 %v4995
      %v5379 = vunpack.c.l.b16 %v4996
      %v5380 = vunpack.c.h.b16 %v4996
      %v5381 = vunpack.c.l.b16 %v4997
      %v5382 = vunpack.c.h.b16 %v4997
      %v5383 = vunpack.c.l.b16 %v4998
      %v5384 = vunpack.c.h.b16 %v4998
      %v5385 = vunpack.c.l.b16 %v4999
      %v5386 = vunpack.c.h.b16 %v4999
      %v5387 = vunpack.c.l.b16 %v5000
      %v5388 = vunpack.c.h.b16 %v5000
      %v5389 = vunpack.c.l.b16 %v5001
      %v5390 = vunpack.c.h.b16 %v5001
      %v5391 = vunpack.c.l.b16 %v5002
      %v5392 = vunpack.c.h.b16 %v5002
      %v5393 = vunpack.c.l.b16 %v5003
      %v5394 = vunpack.c.h.b16 %v5003
      %v5395 = vunpack.c.l.b16 %v5004
      %v5396 = vunpack.c.h.b16 %v5004
      %v5397 = vunpack.c.l.b16 %v5005
      %v5398 = vunpack.c.h.b16 %v5005
      %v5399 = vunpack.c.l.b16 %v5006
      %v5400 = vunpack.c.h.b16 %v5006
      %v5401 = vunpack.c.l.b16 %v5007
      %v5402 = vunpack.c.h.b16 %v5007
      %v5403 = vunpack.c.l.b16 %v5008
      %v5404 = vunpack.c.h.b16 %v5008
      %v5405 = vunpack.c.l.b16 %v5009
      %v5406 = vunpack.c.h.b16 %v5009
      %v5407 = vunpack.c.l.b16 %v5010
      %v5408 = vunpack.c.h.b16 %v5010
      %v5409 = vunpack.c.l.b16 %v5011
      %v5410 = vunpack.c.h.b16 %v5011
      %v5411 = vunpack.c.l.b16 %v5012
      %v5412 = vunpack.c.h.b16 %v5012
      %v5413 = vunpack.c.l.b16 %v5013
      %v5414 = vunpack.c.h.b16 %v5013
      %v5415 = vunpack.c.l.b16 %v5014
      %v5416 = vunpack.c.h.b16 %v5014
      %v5417 = vunpack.c.l.b16 %v5015
      %v5418 = vunpack.c.h.b16 %v5015
      %v5419 = vunpack.c.l.b16 %v5016
      %v5420 = vunpack.c.h.b16 %v5016
      %v5421 = vunpack.c.l.b16 %v5017
      %v5422 = vunpack.c.h.b16 %v5017
      %v5423 = vunpack.c.l.b16 %v5018
      %v5424 = vunpack.c.h.b16 %v5018
      %v5425 = vunpack.c.l.b16 %v5019
      %v5426 = vunpack.c.h.b16 %v5019
      %v5427 = vunpack.c.l.b16 %v5020
      %v5428 = vunpack.c.h.b16 %v5020
      %v5429 = vunpack.c.l.b16 %v5021
      %v5430 = vunpack.c.h.b16 %v5021
      %v5431 = vunpack.c.l.b16 %v5022
      %v5432 = vunpack.c.h.b16 %v5022
      %v5433 = vunpack.c.l.b16 %v5023
      %v5434 = vunpack.c.h.b16 %v5023
      %v5435 = vunpack.c.l.b16 %v5024
      %v5436 = vunpack.c.h.b16 %v5024
      %v5437 = vunpack.c.l.b16 %v5025
      %v5438 = vunpack.c.h.b16 %v5025
      %v5439 = vunpack.c.l.b16 %v5026
      %v5440 = vunpack.c.h.b16 %v5026
      %v5441 = vunpack.c.l.b16 %v5027
      %v5442 = vunpack.c.h.b16 %v5027
      %v5443 = vunpack.c.l.b16 %v5028
      %v5444 = vunpack.c.h.b16 %v5028
      %v5445 = vunpack.c.l.b16 %v5029
      %v5446 = vunpack.c.h.b16 %v5029
      %v5447 = vunpack.c.l.b16 %v5030
      %v5448 = vunpack.c.h.b16 %v5030
      %v5449 = vunpack.c.l.b16 %v5031
      %v5450 = vunpack.c.h.b16 %v5031
      %v5451 = vunpack.c.l.b16 %v5032
      %v5452 = vunpack.c.h.b16 %v5032
      %v5453 = vunpack.c.l.b16 %v5033
      %v5454 = vunpack.c.h.b16 %v5033
      %v5455 = vunpack.c.l.b16 %v5034
      %v5456 = vunpack.c.h.b16 %v5034
      %v5457 = vunpack.c.l.b16 %v5035
      %v5458 = vunpack.c.h.b16 %v5035
      %v5459 = vunpack.c.l.b16 %v5036
      %v5460 = vunpack.c.h.b16 %v5036
      %v5461 = vunpack.c.l.b16 %v5037
      %v5462 = vunpack.c.h.b16 %v5037
      %v5463 = vunpack.c.l.b16 %v5038
      %v5464 = vunpack.c.h.b16 %v5038
      %v5465 = vunpack.c.l.b16 %v5039
      %v5466 = vunpack.c.h.b16 %v5039
      %v5467 = vunpack.c.l.b16 %v5040
      %v5468 = vunpack.c.h.b16 %v5040
      %v5469 = vunpack.c.l.b16 %v5041
      %v5470 = vunpack.c.h.b16 %v5041
      %v5471 = vunpack.c.l.b16 %v5042
      %v5472 = vunpack.c.h.b16 %v5042
      %v5473 = vunpack.c.l.b16 %v5043
      %v5474 = vunpack.c.h.b16 %v5043
      %v5475 = vunpack.c.l.b16 %v5044
      %v5476 = vunpack.c.h.b16 %v5044
      %v5477 = vunpack.c.l.b16 %v5045
      %v5478 = vunpack.c.h.b16 %v5045
      %v5479 = vunpack.c.l.b16 %v5046
      %v5480 = vunpack.c.h.b16 %v5046
      %v5481 = vunpack.c.l.b16 %v5047
      %v5482 = vunpack.c.h.b16 %v5047
      %v5483 = vunpack.c.l.b16 %v5048
      %v5484 = vunpack.c.h.b16 %v5048
      %v5485 = vunpack.c.l.b16 %v5049
      %v5486 = vunpack.c.h.b16 %v5049
      %v5487 = vunpack.c.l.b16 %v5050
      %v5488 = vunpack.c.h.b16 %v5050
      %v5489 = vunpack.c.l.b16 %v5051
      %v5490 = vunpack.c.h.b16 %v5051
      %v5491 = vunpack.c.l.b16 %v5052
      %v5492 = vunpack.c.h.b16 %v5052
      %v5493 = vunpack.c.l.b16 %v5053
      %v5494 = vunpack.c.h.b16 %v5053
      %v5495 = vunpack.c.l.b16 %v5054
      %v5496 = vunpack.c.h.b16 %v5054
      %v5497 = vunpack.c.l.b16 %v5055
      %v5498 = vunpack.c.h.b16 %v5055
      %v5499 = vunpack.c.l.b16 %v5056
      %v5500 = vunpack.c.h.b16 %v5056
      %v5501 = vunpack.c.l.b16 %v5057
      %v5502 = vunpack.c.h.b16 %v5057
      %v5503 = vunpack.c.l.b16 %v5058
      %v5504 = vunpack.c.h.b16 %v5058
      %v5505 = vunpack.c.l.b16 %v5059
      %v5506 = vunpack.c.h.b16 %v5059
      %v5507 = vunpack.c.l.b16 %v5060
      %v5508 = vunpack.c.h.b16 %v5060
      %v5509 = vunpack.c.l.b16 %v5061
      %v5510 = vunpack.c.h.b16 %v5061
      %v5511 = vunpack.c.l.b16 %v5062
      %v5512 = vunpack.c.h.b16 %v5062
      %v5513 = vunpack.c.l.b16 %v5063
      %v5514 = vunpack.c.h.b16 %v5063
      %v5515 = vunpack.c.l.b16 %v5064
      %v5516 = vunpack.c.h.b16 %v5064
      %v5517 = vunpack.c.l.b16 %v5065
      %v5518 = vunpack.c.h.b16 %v5065
      %v5519 = vunpack.c.l.b16 %v5066
      %v5520 = vunpack.c.h.b16 %v5066
      %v5521 = vunpack.c.l.b16 %v5067
      %v5522 = vunpack.c.h.b16 %v5067
      %v5523 = vunpack.c.l.b16 %v5068
      %v5524 = vunpack.c.h.b16 %v5068
      %v5525 = vunpack.c.l.b16 %v5069
      %v5526 = vunpack.c.h.b16 %v5069
      %v5527 = vunpack.c.l.b16 %v5070
      %v5528 = vunpack.c.h.b16 %v5070
      %v5529 = vunpack.c.l.b16 %v5071
      %v5530 = vunpack.c.h.b16 %v5071
      %v5531 = vunpack.c.l.b16 %v5072
      %v5532 = vunpack.c.h.b16 %v5072
      %v5533 = vunpack.c.l.b16 %v5073
      %v5534 = vunpack.c.h.b16 %v5073
      %v5535 = vunpack.c.l.b16 %v5074
      %v5536 = vunpack.c.h.b16 %v5074
      %v5537 = vunpack.c.l.b16 %v5075
      %v5538 = vunpack.c.h.b16 %v5075
      %v5539 = vunpack.c.l.b16 %v5076
      %v5540 = vunpack.c.h.b16 %v5076
      %v5541 = vunpack.c.l.b16 %v5077
      %v5542 = vunpack.c.h.b16 %v5077
      %v5543 = vunpack.c.l.b16 %v5078
      %v5544 = vunpack.c.h.b16 %v5078
      %v5545 = vunpack.c.l.b16 %v5079
      %v5546 = vunpack.c.h.b16 %v5079
      %v5547 = vunpack.c.l.b16 %v5080
      %v5548 = vunpack.c.h.b16 %v5080
      %v5549 = vunpack.c.l.b16 %v5081
      %v5550 = vunpack.c.h.b16 %v5081
      %v5551 = vunpack.c.l.b16 %v5082
      %v5552 = vunpack.c.h.b16 %v5082
      %v5553 = vunpack.c.l.b16 %v5083
      %v5554 = vunpack.c.h.b16 %v5083
      %v5555 = vunpack.c.l.b16 %v5084
      %v5556 = vunpack.c.h.b16 %v5084
      %v5557 = vunpack.c.l.b16 %v5085
      %v5558 = vunpack.c.h.b16 %v5085
      %v5559 = vunpack.c.l.b16 %v5086
      %v5560 = vunpack.c.h.b16 %v5086
      %v5561 = vunpack.c.l.b16 %v5087
      %v5562 = vunpack.c.h.b16 %v5087
      %v5563 = vunpack.c.l.b16 %v5088
      %v5564 = vunpack.c.h.b16 %v5088
      %v5565 = vunpack.c.l.b16 %v5089
      %v5566 = vunpack.c.h.b16 %v5089
      %v5567 = vunpack.c.l.b16 %v5090
      %v5568 = vunpack.c.h.b16 %v5090
      %v5569 = vunpack.c.l.b16 %v5091
      %v5570 = vunpack.c.h.b16 %v5091
      %v5571 = vunpack.c.l.b16 %v5092
      %v5572 = vunpack.c.h.b16 %v5092
      %v5573 = vunpack.c.l.b16 %v5093
      %v5574 = vunpack.c.h.b16 %v5093
      %v5575 = vunpack.c.l.b16 %v5094
      %v5576 = vunpack.c.h.b16 %v5094
      %v5577 = vunpack.c.l.b16 %v5095
      %v5578 = vunpack.c.h.b16 %v5095
      %v5579 = vunpack.c.l.b16 %v5096
      %v5580 = vunpack.c.h.b16 %v5096
      %v5581 = vunpack.c.l.b16 %v5097
      %v5582 = vunpack.c.h.b16 %v5097
      %v5583 = vunpack.c.l.b16 %v5098
      %v5584 = vunpack.c.h.b16 %v5098
      %v5585 = vunpack.c.l.b16 %v5099
      %v5586 = vunpack.c.h.b16 %v5099
      %v5587 = vunpack.c.l.b16 %v5100
      %v5588 = vunpack.c.h.b16 %v5100
      %v5589 = vunpack.c.l.b16 %v5101
      %v5590 = vunpack.c.h.b16 %v5101
      %v5591 = vunpack.c.l.b16 %v5102
      %v5592 = vunpack.c.h.b16 %v5102
      %v5593 = vunpack.c.l.b16 %v5103
      %v5594 = vunpack.c.h.b16 %v5103
      %v5595 = vunpack.c.l.b16 %v5104
      %v5596 = vunpack.c.h.b16 %v5104
      %v5597 = vunpack.c.l.b16 %v5105
      %v5598 = vunpack.c.h.b16 %v5105
      %v5599 = vunpack.c.l.b16 %v5106
      %v5600 = vunpack.c.h.b16 %v5106
      %v5601 = vunpack.c.l.b16 %v5107
      %v5602 = vunpack.c.h.b16 %v5107
      %v5603 = vunpack.c.l.b16 %v5108
      %v5604 = vunpack.c.h.b16 %v5108
      %v5605 = vunpack.c.l.b16 %v5109
      %v5606 = vunpack.c.h.b16 %v5109
      %v5607 = vpack.c.b16 %v5359, %v5351
      %v5608 = vpack.c.b16 %v5360, %v5352
      %v5609 = vpack.c.b16 %v5361, %v5353
      %v5610 = vpack.c.b16 %v5362, %v5354
      %v5611 = vpack.c.b16 %v5363, %v5355
      %v5612 = vpack.c.b16 %v5364, %v5356
      %v5613 = vpack.c.b16 %v5365, %v5357
      %v5614 = vpack.c.b16 %v5366, %v5358
      %v5615 = vpack.c.b16 %v5375, %v5367
      %v5616 = vpack.c.b16 %v5376, %v5368
      %v5617 = vpack.c.b16 %v5377, %v5369
      %v5618 = vpack.c.b16 %v5378, %v5370
      %v5619 = vpack.c.b16 %v5379, %v5371
      %v5620 = vpack.c.b16 %v5380, %v5372
      %v5621 = vpack.c.b16 %v5381, %v5373
      %v5622 = vpack.c.b16 %v5382, %v5374
      %v5623 = vpack.c.b16 %v5391, %v5383
      %v5624 = vpack.c.b16 %v5392, %v5384
      %v5625 = vpack.c.b16 %v5393, %v5385
      %v5626 = vpack.c.b16 %v5394, %v5386
      %v5627 = vpack.c.b16 %v5395, %v5387
      %v5628 = vpack.c.b16 %v5396, %v5388
      %v5629 = vpack.c.b16 %v5397, %v5389
      %v5630 = vpack.c.b16 %v5398, %v5390
      %v5631 = vpack.c.b16 %v5407, %v5399
      %v5632 = vpack.c.b16 %v5408, %v5400
      %v5633 = vpack.c.b16 %v5409, %v5401
      %v5634 = vpack.c.b16 %v5410, %v5402
      %v5635 = vpack.c.b16 %v5411, %v5403
      %v5636 = vpack.c.b16 %v5412, %v5404
      %v5637 = vpack.c.b16 %v5413, %v5405
      %v5638 = vpack.c.b16 %v5414, %v5406
      %v5639 = vpack.c.b16 %v5423, %v5415
      %v5640 = vpack.c.b16 %v5424, %v5416
      %v5641 = vpack.c.b16 %v5425, %v5417
      %v5642 = vpack.c.b16 %v5426, %v5418
      %v5643 = vpack.c.b16 %v5427, %v5419
      %v5644 = vpack.c.b16 %v5428, %v5420
      %v5645 = vpack.c.b16 %v5429, %v5421
      %v5646 = vpack.c.b16 %v5430, %v5422
      %v5647 = vpack.c.b16 %v5439, %v5431
      %v5648 = vpack.c.b16 %v5440, %v5432
      %v5649 = vpack.c.b16 %v5441, %v5433
      %v5650 = vpack.c.b16 %v5442, %v5434
      %v5651 = vpack.c.b16 %v5443, %v5435
      %v5652 = vpack.c.b16 %v5444, %v5436
      %v5653 = vpack.c.b16 %v5445, %v5437
      %v5654 = vpack.c.b16 %v5446, %v5438
      %v5655 = vpack.c.b16 %v5455, %v5447
      %v5656 = vpack.c.b16 %v5456, %v5448
      %v5657 = vpack.c.b16 %v5457, %v5449
      %v5658 = vpack.c.b16 %v5458, %v5450
      %v5659 = vpack.c.b16 %v5459, %v5451
      %v5660 = vpack.c.b16 %v5460, %v5452
      %v5661 = vpack.c.b16 %v5461, %v5453
      %v5662 = vpack.c.b16 %v5462, %v5454
      %v5663 = vpack.c.b16 %v5471, %v5463
      %v5664 = vpack.c.b16 %v5472, %v5464
      %v5665 = vpack.c.b16 %v5473, %v5465
      %v5666 = vpack.c.b16 %v5474, %v5466
      %v5667 = vpack.c.b16 %v5475, %v5467
      %v5668 = vpack.c.b16 %v5476, %v5468
      %v5669 = vpack.c.b16 %v5477, %v5469
      %v5670 = vpack.c.b16 %v5478, %v5470
      %v5671 = vpack.c.b16 %v5487, %v5479
      %v5672 = vpack.c.b16 %v5488, %v5480
      %v5673 = vpack.c.b16 %v5489, %v5481
      %v5674 = vpack.c.b16 %v5490, %v5482
      %v5675 = vpack.c.b16 %v5491, %v5483
      %v5676 = vpack.c.b16 %v5492, %v5484
      %v5677 = vpack.c.b16 %v5493, %v5485
      %v5678 = vpack.c.b16 %v5494, %v5486
      %v5679 = vpack.c.b16 %v5503, %v5495
      %v5680 = vpack.c.b16 %v5504, %v5496
      %v5681 = vpack.c.b16 %v5505, %v5497
      %v5682 = vpack.c.b16 %v5506, %v5498
      %v5683 = vpack.c.b16 %v5507, %v5499
      %v5684 = vpack.c.b16 %v5508, %v5500
      %v5685 = vpack.c.b16 %v5509, %v5501
      %v5686 = vpack.c.b16 %v5510, %v5502
      %v5687 = vpack.c.b16 %v5519, %v5511
      %v5688 = vpack.c.b16 %v5520, %v5512
      %v5689 = vpack.c.b16 %v5521, %v5513
      %v5690 = vpack.c.b16 %v5522, %v5514
      %v5691 = vpack.c.b16 %v5523, %v5515
      %v5692 = vpack.c.b16 %v5524, %v5516
      %v5693 = vpack.c.b16 %v5525, %v5517
      %v5694 = vpack.c.b16 %v5526, %v5518
      %v5695 = vpack.c.b16 %v5535, %v5527
      %v5696 = vpack.c.b16 %v5536, %v5528
      %v5697 = vpack.c.b16 %v5537, %v5529
      %v5698 = vpack.c.b16 %v5538, %v5530
      %v5699 = vpack.c.b16 %v5539, %v5531
      %v5700 = vpack.c.b16 %v5540, %v5532
      %v5701 = vpack.c.b16 %v5541, %v5533
      %v5702 = vpack.c.b16 %v5542, %v5534
      %v5703 = vpack.c.b16 %v5551, %v5543
      %v5704 = vpack.c.b16 %v5552, %v5544
      %v5705 = vpack.c.b16 %v5553, %v5545
      %v5706 = vpack.c.b16 %v5554, %v5546
      %v5707 = vpack.c.b16 %v5555, %v5547
      %v5708 = vpack.c.b16 %v5556, %v5548
      %v5709 = vpack.c.b16 %v5557, %v5549
      %v5710 = vpack.c.b16 %v5558, %v5550
      %v5711 = vpack.c.b16 %v5567, %v5559
      %v5712 = vpack.c.b16 %v5568, %v5560
      %v5713 = vpack.c.b16 %v5569, %v5561
      %v5714 = vpack.c.b16 %v5570, %v5562
      %v5715 = vpack.c.b16 %v5571, %v5563
      %v5716 = vpack.c.b16 %v5572, %v5564
      %v5717 = vpack.c.b16 %v5573, %v5565
      %v5718 = vpack.c.b16 %v5574, %v5566
      %v5719 = vpack.c.b16 %v5583, %v5575
      %v5720 = vpack.c.b16 %v5584, %v5576
      %v5721 = vpack.c.b16 %v5585, %v5577
      %v5722 = vpack.c.b16 %v5586, %v5578
      %v5723 = vpack.c.b16 %v5587, %v5579
      %v5724 = vpack.c.b16 %v5588, %v5580
      %v5725 = vpack.c.b16 %v5589, %v5581
      %v5726 = vpack.c.b16 %v5590, %v5582
      %v5727 = vpack.c.b16 %v5599, %v5591
      %v5728 = vpack.c.b16 %v5600, %v5592
      %v5729 = vpack.c.b16 %v5601, %v5593
      %v5730 = vpack.c.b16 %v5602, %v5594
      %v5731 = vpack.c.b16 %v5603, %v5595
      %v5732 = vpack.c.b16 %v5604, %v5596
      %v5733 = vpack.c.b16 %v5605, %v5597
      %v5734 = vpack.c.b16 %v5606, %v5598
      %v5960 = vunpack.c.l.b16 %v5110
      %v5961 = vunpack.c.l.b16 %v5111
      %v5962 = vunpack.c.l.b16 %v5112
      %v5963 = vunpack.c.l.b16 %v5113
      %v5964 = vunpack.c.l.b16 %v5114
      %v5965 = vunpack.c.l.b16 %v5115
      %v5966 = vunpack.c.l.b16 %v5116
      %v5967 = vunpack.c.l.b16 %v5117
      %v5968 = vunpack.c.l.b16 %v5118
      %v5969 = vunpack.c.l.b16 %v5119
      %v5970 = vunpack.c.l.b16 %v5120
      %v5971 = vunpack.c.l.b16 %v5121
      %v5972 = vunpack.c.l.b16 %v5122
      %v5973 = vunpack.c.l.b16 %v5123
      %v5974 = vunpack.c.l.b16 %v5124
      %v5975 = vunpack.c.l.b16 %v5125
      %v5976 = vunpack.c.l.b16 %v5126
      %v5977 = vunpack.c.l.b16 %v5127
      %v5978 = vunpack.c.l.b16 %v5128
      %v5979 = vunpack.c.l.b16 %v5129
      %v5980 = vunpack.c.l.b16 %v5130
      %v5981 = vunpack.c.l.b16 %v5131
      %v5982 = vunpack.c.l.b16 %v5132
      %v5983 = vunpack.c.l.b16 %v5133
      %v5984 = vunpack.c.l.b16 %v5134
      %v5985 = vunpack.c.l.b16 %v5135
      %v5986 = vunpack.c.l.b16 %v5136
      %v5987 = vunpack.c.l.b16 %v5137
      %v5988 = vunpack.c.l.b16 %v5138
      %v5989 = vunpack.c.l.b16 %v5139
      %v5990 = vunpack.c.l.b16 %v5140
      %v5991 = vunpack.c.l.b16 %v5141
      %v5992 = vunpack.c.l.b16 %v5142
      %v5993 = vunpack.c.l.b16 %v5143
      %v5994 = vunpack.c.l.b16 %v5144
      %v5995 = vunpack.c.l.b16 %v5145
      %v5996 = vunpack.c.l.b16 %v5146
      %v5997 = vunpack.c.l.b16 %v5147
      %v5998 = vunpack.c.l.b16 %v5148
      %v5999 = vunpack.c.l.b16 %v5149
      %v6000 = vunpack.c.l.b16 %v5150
      %v6001 = vunpack.c.l.b16 %v5151
      %v6002 = vunpack.c.l.b16 %v5152
      %v6003 = vunpack.c.l.b16 %v5153
      %v6004 = vunpack.c.l.b16 %v5154
      %v6005 = vunpack.c.l.b16 %v5155
      %v6006 = vunpack.c.l.b16 %v5156
      %v6007 = vunpack.c.l.b16 %v5157
      %v6008 = vunpack.c.l.b16 %v5158
      %v6009 = vunpack.c.l.b16 %v5159
      %v6010 = vunpack.c.l.b16 %v5160
      %v6011 = vunpack.c.l.b16 %v5161
      %v6012 = vunpack.c.l.b16 %v5162
      %v6013 = vunpack.c.l.b16 %v5163
      %v6014 = vunpack.c.l.b16 %v5164
      %v6015 = vunpack.c.l.b16 %v5165
      %v6016 = vunpack.c.l.b16 %v5166
      %v6017 = vunpack.c.l.b16 %v5167
      %v6018 = vunpack.c.l.b16 %v5168
      %v6019 = vunpack.c.l.b16 %v5169
      %v6020 = vunpack.c.l.b16 %v5170
      %v6021 = vunpack.c.l.b16 %v5171
      %v6022 = vunpack.c.l.b16 %v5172
      %v6023 = vunpack.c.l.b16 %v5173
      %v6024 = vunpack.c.l.b16 %v5174
      %v6025 = vunpack.c.l.b16 %v5175
      %v6026 = vunpack.c.l.b16 %v5176
      %v6027 = vunpack.c.l.b16 %v5177
      %v6028 = vunpack.c.l.b16 %v5178
      %v6029 = vunpack.c.l.b16 %v5179
      %v6030 = vunpack.c.l.b16 %v5180
      %v6031 = vunpack.c.l.b16 %v5181
      %v6032 = vunpack.c.l.b16 %v5182
      %v6033 = vunpack.c.l.b16 %v5183
      %v6034 = vunpack.c.l.b16 %v5184
      %v6035 = vunpack.c.l.b16 %v5185
      %v6036 = vunpack.c.l.b16 %v5186
      %v6037 = vunpack.c.l.b16 %v5187
      %v6038 = vunpack.c.l.b16 %v5188
      %v6039 = vunpack.c.l.b16 %v5189
      %v6040 = vunpack.c.l.b16 %v5190
      %v6041 = vunpack.c.l.b16 %v5191
      %v6042 = vunpack.c.l.b16 %v5192
      %v6043 = vunpack.c.l.b16 %v5193
      %v6044 = vunpack.c.l.b16 %v5194
      %v6045 = vunpack.c.l.b16 %v5195
      %v6046 = vunpack.c.l.b16 %v5196
      %v6047 = vunpack.c.l.b16 %v5197
      %v6048 = vunpack.c.l.b16 %v5198
      %v6049 = vunpack.c.l.b16 %v5199
      %v6050 = vunpack.c.l.b16 %v5200
      %v6051 = vunpack.c.l.b16 %v5201
      %v6052 = vunpack.c.l.b16 %v5202
      %v6053 = vunpack.c.l.b16 %v5203
      %v6054 = vunpack.c.l.b16 %v5204
      %v6055 = vunpack.c.l.b16 %v5205
      %v6056 = vunpack.c.l.b16 %v5206
      %v6057 = vunpack.c.l.b16 %v5207
      %v6058 = vunpack.c.l.b16 %v5208
      %v6059 = vunpack.c.l.b16 %v5209
      %v6060 = vunpack.c.l.b16 %v5210
      %v6061 = vunpack.c.l.b16 %v5211
      %v6062 = vunpack.c.l.b16 %v5212
      %v6063 = vunpack.c.l.b16 %v5213
      %v6064 = vunpack.c.l.b16 %v5214
      %v6065 = vunpack.c.l.b16 %v5215
      %v6066 = vunpack.c.l.b16 %v5216
      %v6067 = vunpack.c.l.b16 %v5217
      %v6068 = vunpack.c.l.b16 %v5218
      %v6069 = vunpack.c.l.b16 %v5219
      %v6070 = vunpack.c.l.b16 %v5220
      %v6071 = vunpack.c.l.b16 %v5221
      %v6072 = vunpack.c.l.b16 %v5222
      %v6073 = vpack.c.b16 %v5961, %v5960
      %v6074 = vpack.c.b16 %v5963, %v5962
      %v6075 = vpack.c.b16 %v5965, %v5964
      %v6076 = vpack.c.b16 %v5967, %v5966
      %v6077 = vpack.c.b16 %v5969, %v5968
      %v6078 = vpack.c.b16 %v5971, %v5970
      %v6079 = vpack.c.b16 %v5973, %v5972
      %v6080 = vpack.c.b16 %v5975, %v5974
      %v6081 = vpack.c.b16 %v5977, %v5976
      %v6082 = vpack.c.b16 %v5979, %v5978
      %v6083 = vpack.c.b16 %v5981, %v5980
      %v6084 = vpack.c.b16 %v5983, %v5982
      %v6085 = vpack.c.b16 %v5985, %v5984
      %v6086 = vpack.c.b16 %v5987, %v5986
      %v6087 = vpack.c.b16 %v5989, %v5988
      %v6088 = vpack.c.b16 %v5991, %v5990
      %v6089 = vpack.c.b16 %v5993, %v5992
      %v6090 = vpack.c.b16 %v5995, %v5994
      %v6091 = vpack.c.b16 %v5997, %v5996
      %v6092 = vpack.c.b16 %v5999, %v5998
      %v6093 = vpack.c.b16 %v6001, %v6000
      %v6094 = vpack.c.b16 %v6003, %v6002
      %v6095 = vpack.c.b16 %v6005, %v6004
      %v6096 = vpack.c.b16 %v6007, %v6006
      %v6097 = vpack.c.b16 %v6009, %v6008
      %v6098 = vpack.c.b16 %v6011, %v6010
      %v6099 = vpack.c.b16 %v6013, %v6012
      %v6100 = vpack.c.b16 %v6015, %v6014
      %v6101 = vpack.c.b16 %v6017, %v6016
      %v6102 = vpack.c.b16 %v6019, %v6018
      %v6103 = vpack.c.b16 %v6021, %v6020
      %v6104 = vpack.c.b16 %v6023, %v6022
      %v6105 = vpack.c.b16 %v6025, %v6024
      %v6106 = vpack.c.b16 %v6027, %v6026
      %v6107 = vpack.c.b16 %v6029, %v6028
      %v6108 = vpack.c.b16 %v6031, %v6030
      %v6109 = vpack.c.b16 %v6033, %v6032
      %v6110 = vpack.c.b16 %v6035, %v6034
      %v6111 = vpack.c.b16 %v6037, %v6036
      %v6112 = vpack.c.b16 %v6039, %v6038
      %v6113 = vpack.c.b16 %v6041, %v6040
      %v6114 = vpack.c.b16 %v6043, %v6042
      %v6115 = vpack.c.b16 %v6045, %v6044
      %v6116 = vpack.c.b16 %v6047, %v6046
      %v6117 = vpack.c.b16 %v6049, %v6048
      %v6118 = vpack.c.b16 %v6051, %v6050
      %v6119 = vpack.c.b16 %v6053, %v6052
      %v6120 = vpack.c.b16 %v6055, %v6054
      %v6121 = vpack.c.b16 %v6057, %v6056
      %v6122 = vpack.c.b16 %v6059, %v6058
      %v6123 = vpack.c.b16 %v6061, %v6060
      %v6124 = vpack.c.b16 %v6063, %v6062
      %v6125 = vpack.c.b16 %v6065, %v6064
      %v6126 = vpack.c.b16 %v6067, %v6066
      %v6127 = vpack.c.b16 %v6069, %v6068
      %v6128 = vpack.c.b16 %v6071, %v6070
      %v6129 = vpack.c.b16 %v6072, %v6072
      %vm6186 = vcmask 31744
      %v6188 = vsel %vm6186, %v5614, 0
      %v6191 = vsel %vm6186, %v5622, 0
      %v6194 = vsel %vm6186, %v5630, 0
      %v6197 = vsel %vm6186, %v5638, 0
      %v6200 = vsel %vm6186, %v5646, 0
      %v6203 = vsel %vm6186, %v5654, 0
      %v6206 = vsel %vm6186, %v5662, 0
      %v6209 = vsel %vm6186, %v5670, 0
      %v6212 = vsel %vm6186, %v5678, 0
      %v6215 = vsel %vm6186, %v5686, 0
      %v6218 = vsel %vm6186, %v5694, 0
      %v6221 = vsel %vm6186, %v5702, 0
      %v6224 = vsel %vm6186, %v5710, 0
      %v6227 = vsel %vm6186, %v5718, 0
      %v6230 = vsel %vm6186, %v5726, 0
      %v6233 = vsel %vm6186, %v5734, 0
      %vm6235 = vcmask 1041408
      %v6237 = vsel %vm6235, %v6129, 0
      %6239 = vmatpush.bf16.msra.mxu0 %v6080
      %6240 = vmatpush.bf16.msra.mxu0 %v6079
      %6241 = vmatpush.bf16.msra.mxu0 %v6078
      %6242 = vmatpush.bf16.msra.mxu0 %v6077
      %6243 = vmatpush.bf16.msra.mxu0 %v6076
      %6244 = vmatpush.bf16.msra.mxu0 %v6075
      %6245 = vmatpush.bf16.msra.mxu0 %v6074
      %6246 = vmatpush.bf16.msra.mxu0 %v6073
      %6247 = vmatmul.bf16.gmra.mxu0 %v5607
      %v6248 = vpop.f32.mrf.mxu0
      %v6249 = vadd.f32 0.0, %v6248
      %v6250 = vpop.f32.mrf.mxu0
      %v6251 = vadd.f32 0.0, %v6250
      %6252 = vmatmul.bf16.gmra.mxu0 %v5615
      %v6253 = vpop.f32.mrf.mxu0
      %v6254 = vadd.f32 0.0, %v6253
      %v6255 = vpop.f32.mrf.mxu0
      %v6256 = vadd.f32 0.0, %v6255
      %6257 = vmatmul.bf16.gmra.mxu0 %v5623
      %v6258 = vpop.f32.mrf.mxu0
      %v6259 = vadd.f32 0.0, %v6258
      %v6260 = vpop.f32.mrf.mxu0
      %v6261 = vadd.f32 0.0, %v6260
      %6262 = vmatmul.bf16.gmra.mxu0 %v5631
      %v6263 = vpop.f32.mrf.mxu0
      %v6264 = vadd.f32 0.0, %v6263
      %v6265 = vpop.f32.mrf.mxu0
      %v6266 = vadd.f32 0.0, %v6265
      %6267 = vmatmul.bf16.gmra.mxu0 %v5639
      %v6268 = vpop.f32.mrf.mxu0
      %v6269 = vadd.f32 0.0, %v6268
      %v6270 = vpop.f32.mrf.mxu0
      %v6271 = vadd.f32 0.0, %v6270
      %6272 = vmatmul.bf16.gmra.mxu0 %v5647
      %v6273 = vpop.f32.mrf.mxu0
      %v6274 = vadd.f32 0.0, %v6273
      %v6275 = vpop.f32.mrf.mxu0
      %v6276 = vadd.f32 0.0, %v6275
      %6277 = vmatmul.bf16.gmra.mxu0 %v5655
      %v6278 = vpop.f32.mrf.mxu0
      %v6279 = vadd.f32 0.0, %v6278
      %v6280 = vpop.f32.mrf.mxu0
      %v6281 = vadd.f32 0.0, %v6280
      %6282 = vmatmul.bf16.gmra.mxu0 %v5663
      %v6283 = vpop.f32.mrf.mxu0
      %v6284 = vadd.f32 0.0, %v6283
      %v6285 = vpop.f32.mrf.mxu0
      %v6286 = vadd.f32 0.0, %v6285
      %6287 = vmatmul.bf16.gmra.mxu0 %v5671
      %v6288 = vpop.f32.mrf.mxu0
      %v6289 = vadd.f32 0.0, %v6288
      %v6290 = vpop.f32.mrf.mxu0
      %v6291 = vadd.f32 0.0, %v6290
      %6292 = vmatmul.bf16.gmra.mxu0 %v5679
      %v6293 = vpop.f32.mrf.mxu0
      %v6294 = vadd.f32 0.0, %v6293
      %v6295 = vpop.f32.mrf.mxu0
      %v6296 = vadd.f32 0.0, %v6295
      %6297 = vmatmul.bf16.gmra.mxu0 %v5687
      %v6298 = vpop.f32.mrf.mxu0
      %v6299 = vadd.f32 0.0, %v6298
      %v6300 = vpop.f32.mrf.mxu0
      %v6301 = vadd.f32 0.0, %v6300
      %6302 = vmatmul.bf16.gmra.mxu0 %v5695
      %v6303 = vpop.f32.mrf.mxu0
      %v6304 = vadd.f32 0.0, %v6303
      %v6305 = vpop.f32.mrf.mxu0
      %v6306 = vadd.f32 0.0, %v6305
      %6307 = vmatmul.bf16.gmra.mxu0 %v5703
      %v6308 = vpop.f32.mrf.mxu0
      %v6309 = vadd.f32 0.0, %v6308
      %v6310 = vpop.f32.mrf.mxu0
      %v6311 = vadd.f32 0.0, %v6310
      %6312 = vmatmul.bf16.gmra.mxu0 %v5711
      %v6313 = vpop.f32.mrf.mxu0
      %v6314 = vadd.f32 0.0, %v6313
      %v6315 = vpop.f32.mrf.mxu0
      %v6316 = vadd.f32 0.0, %v6315
      %6317 = vmatmul.bf16.gmra.mxu0 %v5719
      %v6318 = vpop.f32.mrf.mxu0
      %v6319 = vadd.f32 0.0, %v6318
      %v6320 = vpop.f32.mrf.mxu0
      %v6321 = vadd.f32 0.0, %v6320
      %6322 = vmatmul.bf16.gmra.mxu0 %v5727
      %v6323 = vpop.f32.mrf.mxu0
      %v6324 = vadd.f32 0.0, %v6323
      %v6325 = vpop.f32.mrf.mxu0
      %v6326 = vadd.f32 0.0, %v6325
      %6327 = vdwg.mxu0
      %6328 = vmatpush.bf16.msra.mxu0 %v6088
      %6329 = vmatpush.bf16.msra.mxu0 %v6087
      %6330 = vmatpush.bf16.msra.mxu0 %v6086
      %6331 = vmatpush.bf16.msra.mxu0 %v6085
      %6332 = vmatpush.bf16.msra.mxu0 %v6084
      %6333 = vmatpush.bf16.msra.mxu0 %v6083
      %6334 = vmatpush.bf16.msra.mxu0 %v6082
      %6335 = vmatpush.bf16.msra.mxu0 %v6081
      %6336 = vmatmul.bf16.gmra.mxu0 %v5608
      %v6337 = vpop.f32.mrf.mxu0
      %v6338 = vadd.f32 %v6249, %v6337
      %v6339 = vpop.f32.mrf.mxu0
      %v6340 = vadd.f32 %v6251, %v6339
      %6341 = vmatmul.bf16.gmra.mxu0 %v5616
      %v6342 = vpop.f32.mrf.mxu0
      %v6343 = vadd.f32 %v6254, %v6342
      %v6344 = vpop.f32.mrf.mxu0
      %v6345 = vadd.f32 %v6256, %v6344
      %6346 = vmatmul.bf16.gmra.mxu0 %v5624
      %v6347 = vpop.f32.mrf.mxu0
      %v6348 = vadd.f32 %v6259, %v6347
      %v6349 = vpop.f32.mrf.mxu0
      %v6350 = vadd.f32 %v6261, %v6349
      %6351 = vmatmul.bf16.gmra.mxu0 %v5632
      %v6352 = vpop.f32.mrf.mxu0
      %v6353 = vadd.f32 %v6264, %v6352
      %v6354 = vpop.f32.mrf.mxu0
      %v6355 = vadd.f32 %v6266, %v6354
      %6356 = vmatmul.bf16.gmra.mxu0 %v5640
      %v6357 = vpop.f32.mrf.mxu0
      %v6358 = vadd.f32 %v6269, %v6357
      %v6359 = vpop.f32.mrf.mxu0
      %v6360 = vadd.f32 %v6271, %v6359
      %6361 = vmatmul.bf16.gmra.mxu0 %v5648
      %v6362 = vpop.f32.mrf.mxu0
      %v6363 = vadd.f32 %v6274, %v6362
      %v6364 = vpop.f32.mrf.mxu0
      %v6365 = vadd.f32 %v6276, %v6364
      %6366 = vmatmul.bf16.gmra.mxu0 %v5656
      %v6367 = vpop.f32.mrf.mxu0
      %v6368 = vadd.f32 %v6279, %v6367
      %v6369 = vpop.f32.mrf.mxu0
      %v6370 = vadd.f32 %v6281, %v6369
      %6371 = vmatmul.bf16.gmra.mxu0 %v5664
      %v6372 = vpop.f32.mrf.mxu0
      %v6373 = vadd.f32 %v6284, %v6372
      %v6374 = vpop.f32.mrf.mxu0
      %v6375 = vadd.f32 %v6286, %v6374
      %6376 = vmatmul.bf16.gmra.mxu0 %v5672
      %v6377 = vpop.f32.mrf.mxu0
      %v6378 = vadd.f32 %v6289, %v6377
      %v6379 = vpop.f32.mrf.mxu0
      %v6380 = vadd.f32 %v6291, %v6379
      %6381 = vmatmul.bf16.gmra.mxu0 %v5680
      %v6382 = vpop.f32.mrf.mxu0
      %v6383 = vadd.f32 %v6294, %v6382
      %v6384 = vpop.f32.mrf.mxu0
      %v6385 = vadd.f32 %v6296, %v6384
      %6386 = vmatmul.bf16.gmra.mxu0 %v5688
      %v6387 = vpop.f32.mrf.mxu0
      %v6388 = vadd.f32 %v6299, %v6387
      %v6389 = vpop.f32.mrf.mxu0
      %v6390 = vadd.f32 %v6301, %v6389
      %6391 = vmatmul.bf16.gmra.mxu0 %v5696
      %v6392 = vpop.f32.mrf.mxu0
      %v6393 = vadd.f32 %v6304, %v6392
      %v6394 = vpop.f32.mrf.mxu0
      %v6395 = vadd.f32 %v6306, %v6394
      %6396 = vmatmul.bf16.gmra.mxu0 %v5704
      %v6397 = vpop.f32.mrf.mxu0
      %v6398 = vadd.f32 %v6309, %v6397
      %v6399 = vpop.f32.mrf.mxu0
      %v6400 = vadd.f32 %v6311, %v6399
      %6401 = vmatmul.bf16.gmra.mxu0 %v5712
      %v6402 = vpop.f32.mrf.mxu0
      %v6403 = vadd.f32 %v6314, %v6402
      %v6404 = vpop.f32.mrf.mxu0
      %v6405 = vadd.f32 %v6316, %v6404
      %6406 = vmatmul.bf16.gmra.mxu0 %v5720
      %v6407 = vpop.f32.mrf.mxu0
      %v6408 = vadd.f32 %v6319, %v6407
      %v6409 = vpop.f32.mrf.mxu0
      %v6410 = vadd.f32 %v6321, %v6409
      %6411 = vmatmul.bf16.gmra.mxu0 %v5728
      %v6412 = vpop.f32.mrf.mxu0
      %v6413 = vadd.f32 %v6324, %v6412
      %v6414 = vpop.f32.mrf.mxu0
      %v6415 = vadd.f32 %v6326, %v6414
      %6416 = vdwg.mxu0
      %6417 = vmatpush.bf16.msra.mxu0 %v6096
      %6418 = vmatpush.bf16.msra.mxu0 %v6095
      %6419 = vmatpush.bf16.msra.mxu0 %v6094
      %6420 = vmatpush.bf16.msra.mxu0 %v6093
      %6421 = vmatpush.bf16.msra.mxu0 %v6092
      %6422 = vmatpush.bf16.msra.mxu0 %v6091
      %6423 = vmatpush.bf16.msra.mxu0 %v6090
      %6424 = vmatpush.bf16.msra.mxu0 %v6089
      %6425 = vmatmul.bf16.gmra.mxu0 %v5609
      %v6426 = vpop.f32.mrf.mxu0
      %v6427 = vadd.f32 %v6338, %v6426
      %v6428 = vpop.f32.mrf.mxu0
      %v6429 = vadd.f32 %v6340, %v6428
      %6430 = vmatmul.bf16.gmra.mxu0 %v5617
      %v6431 = vpop.f32.mrf.mxu0
      %v6432 = vadd.f32 %v6343, %v6431
      %v6433 = vpop.f32.mrf.mxu0
      %v6434 = vadd.f32 %v6345, %v6433
      %6435 = vmatmul.bf16.gmra.mxu0 %v5625
      %v6436 = vpop.f32.mrf.mxu0
      %v6437 = vadd.f32 %v6348, %v6436
      %v6438 = vpop.f32.mrf.mxu0
      %v6439 = vadd.f32 %v6350, %v6438
      %6440 = vmatmul.bf16.gmra.mxu0 %v5633
      %v6441 = vpop.f32.mrf.mxu0
      %v6442 = vadd.f32 %v6353, %v6441
      %v6443 = vpop.f32.mrf.mxu0
      %v6444 = vadd.f32 %v6355, %v6443
      %6445 = vmatmul.bf16.gmra.mxu0 %v5641
      %v6446 = vpop.f32.mrf.mxu0
      %v6447 = vadd.f32 %v6358, %v6446
      %v6448 = vpop.f32.mrf.mxu0
      %v6449 = vadd.f32 %v6360, %v6448
      %6450 = vmatmul.bf16.gmra.mxu0 %v5649
      %v6451 = vpop.f32.mrf.mxu0
      %v6452 = vadd.f32 %v6363, %v6451
      %v6453 = vpop.f32.mrf.mxu0
      %v6454 = vadd.f32 %v6365, %v6453
      %6455 = vmatmul.bf16.gmra.mxu0 %v5657
      %v6456 = vpop.f32.mrf.mxu0
      %v6457 = vadd.f32 %v6368, %v6456
      %v6458 = vpop.f32.mrf.mxu0
      %v6459 = vadd.f32 %v6370, %v6458
      %6460 = vmatmul.bf16.gmra.mxu0 %v5665
      %v6461 = vpop.f32.mrf.mxu0
      %v6462 = vadd.f32 %v6373, %v6461
      %v6463 = vpop.f32.mrf.mxu0
      %v6464 = vadd.f32 %v6375, %v6463
      %6465 = vmatmul.bf16.gmra.mxu0 %v5673
      %v6466 = vpop.f32.mrf.mxu0
      %v6467 = vadd.f32 %v6378, %v6466
      %v6468 = vpop.f32.mrf.mxu0
      %v6469 = vadd.f32 %v6380, %v6468
      %6470 = vmatmul.bf16.gmra.mxu0 %v5681
      %v6471 = vpop.f32.mrf.mxu0
      %v6472 = vadd.f32 %v6383, %v6471
      %v6473 = vpop.f32.mrf.mxu0
      %v6474 = vadd.f32 %v6385, %v6473
      %6475 = vmatmul.bf16.gmra.mxu0 %v5689
      %v6476 = vpop.f32.mrf.mxu0
      %v6477 = vadd.f32 %v6388, %v6476
      %v6478 = vpop.f32.mrf.mxu0
      %v6479 = vadd.f32 %v6390, %v6478
      %6480 = vmatmul.bf16.gmra.mxu0 %v5697
      %v6481 = vpop.f32.mrf.mxu0
      %v6482 = vadd.f32 %v6393, %v6481
      %v6483 = vpop.f32.mrf.mxu0
      %v6484 = vadd.f32 %v6395, %v6483
      %6485 = vmatmul.bf16.gmra.mxu0 %v5705
      %v6486 = vpop.f32.mrf.mxu0
      %v6487 = vadd.f32 %v6398, %v6486
      %v6488 = vpop.f32.mrf.mxu0
      %v6489 = vadd.f32 %v6400, %v6488
      %6490 = vmatmul.bf16.gmra.mxu0 %v5713
      %v6491 = vpop.f32.mrf.mxu0
      %v6492 = vadd.f32 %v6403, %v6491
      %v6493 = vpop.f32.mrf.mxu0
      %v6494 = vadd.f32 %v6405, %v6493
      %6495 = vmatmul.bf16.gmra.mxu0 %v5721
      %v6496 = vpop.f32.mrf.mxu0
      %v6497 = vadd.f32 %v6408, %v6496
      %v6498 = vpop.f32.mrf.mxu0
      %v6499 = vadd.f32 %v6410, %v6498
      %6500 = vmatmul.bf16.gmra.mxu0 %v5729
      %v6501 = vpop.f32.mrf.mxu0
      %v6502 = vadd.f32 %v6413, %v6501
      %v6503 = vpop.f32.mrf.mxu0
      %v6504 = vadd.f32 %v6415, %v6503
      %6505 = vdwg.mxu0
      %6506 = vmatpush.bf16.msra.mxu0 %v6104
      %6507 = vmatpush.bf16.msra.mxu0 %v6103
      %6508 = vmatpush.bf16.msra.mxu0 %v6102
      %6509 = vmatpush.bf16.msra.mxu0 %v6101
      %6510 = vmatpush.bf16.msra.mxu0 %v6100
      %6511 = vmatpush.bf16.msra.mxu0 %v6099
      %6512 = vmatpush.bf16.msra.mxu0 %v6098
      %6513 = vmatpush.bf16.msra.mxu0 %v6097
      %6514 = vmatmul.bf16.gmra.mxu0 %v5610
      %v6515 = vpop.f32.mrf.mxu0
      %v6516 = vadd.f32 %v6427, %v6515
      %v6517 = vpop.f32.mrf.mxu0
      %v6518 = vadd.f32 %v6429, %v6517
      %6519 = vmatmul.bf16.gmra.mxu0 %v5618
      %v6520 = vpop.f32.mrf.mxu0
      %v6521 = vadd.f32 %v6432, %v6520
      %v6522 = vpop.f32.mrf.mxu0
      %v6523 = vadd.f32 %v6434, %v6522
      %6524 = vmatmul.bf16.gmra.mxu0 %v5626
      %v6525 = vpop.f32.mrf.mxu0
      %v6526 = vadd.f32 %v6437, %v6525
      %v6527 = vpop.f32.mrf.mxu0
      %v6528 = vadd.f32 %v6439, %v6527
      %6529 = vmatmul.bf16.gmra.mxu0 %v5634
      %v6530 = vpop.f32.mrf.mxu0
      %v6531 = vadd.f32 %v6442, %v6530
      %v6532 = vpop.f32.mrf.mxu0
      %v6533 = vadd.f32 %v6444, %v6532
      %6534 = vmatmul.bf16.gmra.mxu0 %v5642
      %v6535 = vpop.f32.mrf.mxu0
      %v6536 = vadd.f32 %v6447, %v6535
      %v6537 = vpop.f32.mrf.mxu0
      %v6538 = vadd.f32 %v6449, %v6537
      %6539 = vmatmul.bf16.gmra.mxu0 %v5650
      %v6540 = vpop.f32.mrf.mxu0
      %v6541 = vadd.f32 %v6452, %v6540
      %v6542 = vpop.f32.mrf.mxu0
      %v6543 = vadd.f32 %v6454, %v6542
      %6544 = vmatmul.bf16.gmra.mxu0 %v5658
      %v6545 = vpop.f32.mrf.mxu0
      %v6546 = vadd.f32 %v6457, %v6545
      %v6547 = vpop.f32.mrf.mxu0
      %v6548 = vadd.f32 %v6459, %v6547
      %6549 = vmatmul.bf16.gmra.mxu0 %v5666
      %v6550 = vpop.f32.mrf.mxu0
      %v6551 = vadd.f32 %v6462, %v6550
      %v6552 = vpop.f32.mrf.mxu0
      %v6553 = vadd.f32 %v6464, %v6552
      %6554 = vmatmul.bf16.gmra.mxu0 %v5674
      %v6555 = vpop.f32.mrf.mxu0
      %v6556 = vadd.f32 %v6467, %v6555
      %v6557 = vpop.f32.mrf.mxu0
      %v6558 = vadd.f32 %v6469, %v6557
      %6559 = vmatmul.bf16.gmra.mxu0 %v5682
      %v6560 = vpop.f32.mrf.mxu0
      %v6561 = vadd.f32 %v6472, %v6560
      %v6562 = vpop.f32.mrf.mxu0
      %v6563 = vadd.f32 %v6474, %v6562
      %6564 = vmatmul.bf16.gmra.mxu0 %v5690
      %v6565 = vpop.f32.mrf.mxu0
      %v6566 = vadd.f32 %v6477, %v6565
      %v6567 = vpop.f32.mrf.mxu0
      %v6568 = vadd.f32 %v6479, %v6567
      %6569 = vmatmul.bf16.gmra.mxu0 %v5698
      %v6570 = vpop.f32.mrf.mxu0
      %v6571 = vadd.f32 %v6482, %v6570
      %v6572 = vpop.f32.mrf.mxu0
      %v6573 = vadd.f32 %v6484, %v6572
      %6574 = vmatmul.bf16.gmra.mxu0 %v5706
      %v6575 = vpop.f32.mrf.mxu0
      %v6576 = vadd.f32 %v6487, %v6575
      %v6577 = vpop.f32.mrf.mxu0
      %v6578 = vadd.f32 %v6489, %v6577
      %6579 = vmatmul.bf16.gmra.mxu0 %v5714
      %v6580 = vpop.f32.mrf.mxu0
      %v6581 = vadd.f32 %v6492, %v6580
      %v6582 = vpop.f32.mrf.mxu0
      %v6583 = vadd.f32 %v6494, %v6582
      %6584 = vmatmul.bf16.gmra.mxu0 %v5722
      %v6585 = vpop.f32.mrf.mxu0
      %v6586 = vadd.f32 %v6497, %v6585
      %v6587 = vpop.f32.mrf.mxu0
      %v6588 = vadd.f32 %v6499, %v6587
      %6589 = vmatmul.bf16.gmra.mxu0 %v5730
      %v6590 = vpop.f32.mrf.mxu0
      %v6591 = vadd.f32 %v6502, %v6590
      %v6592 = vpop.f32.mrf.mxu0
      %v6593 = vadd.f32 %v6504, %v6592
      %6594 = vdwg.mxu0
      %6595 = vmatpush.bf16.msra.mxu0 %v6112
      %6596 = vmatpush.bf16.msra.mxu0 %v6111
      %6597 = vmatpush.bf16.msra.mxu0 %v6110
      %6598 = vmatpush.bf16.msra.mxu0 %v6109
      %6599 = vmatpush.bf16.msra.mxu0 %v6108
      %6600 = vmatpush.bf16.msra.mxu0 %v6107
      %6601 = vmatpush.bf16.msra.mxu0 %v6106
      %6602 = vmatpush.bf16.msra.mxu0 %v6105
      %6603 = vmatmul.bf16.gmra.mxu0 %v5611
      %v6604 = vpop.f32.mrf.mxu0
      %v6605 = vadd.f32 %v6516, %v6604
      %v6606 = vpop.f32.mrf.mxu0
      %v6607 = vadd.f32 %v6518, %v6606
      %6608 = vmatmul.bf16.gmra.mxu0 %v5619
      %v6609 = vpop.f32.mrf.mxu0
      %v6610 = vadd.f32 %v6521, %v6609
      %v6611 = vpop.f32.mrf.mxu0
      %v6612 = vadd.f32 %v6523, %v6611
      %6613 = vmatmul.bf16.gmra.mxu0 %v5627
      %v6614 = vpop.f32.mrf.mxu0
      %v6615 = vadd.f32 %v6526, %v6614
      %v6616 = vpop.f32.mrf.mxu0
      %v6617 = vadd.f32 %v6528, %v6616
      %6618 = vmatmul.bf16.gmra.mxu0 %v5635
      %v6619 = vpop.f32.mrf.mxu0
      %v6620 = vadd.f32 %v6531, %v6619
      %v6621 = vpop.f32.mrf.mxu0
      %v6622 = vadd.f32 %v6533, %v6621
      %6623 = vmatmul.bf16.gmra.mxu0 %v5643
      %v6624 = vpop.f32.mrf.mxu0
      %v6625 = vadd.f32 %v6536, %v6624
      %v6626 = vpop.f32.mrf.mxu0
      %v6627 = vadd.f32 %v6538, %v6626
      %6628 = vmatmul.bf16.gmra.mxu0 %v5651
      %v6629 = vpop.f32.mrf.mxu0
      %v6630 = vadd.f32 %v6541, %v6629
      %v6631 = vpop.f32.mrf.mxu0
      %v6632 = vadd.f32 %v6543, %v6631
      %6633 = vmatmul.bf16.gmra.mxu0 %v5659
      %v6634 = vpop.f32.mrf.mxu0
      %v6635 = vadd.f32 %v6546, %v6634
      %v6636 = vpop.f32.mrf.mxu0
      %v6637 = vadd.f32 %v6548, %v6636
      %6638 = vmatmul.bf16.gmra.mxu0 %v5667
      %v6639 = vpop.f32.mrf.mxu0
      %v6640 = vadd.f32 %v6551, %v6639
      %v6641 = vpop.f32.mrf.mxu0
      %v6642 = vadd.f32 %v6553, %v6641
      %6643 = vmatmul.bf16.gmra.mxu0 %v5675
      %v6644 = vpop.f32.mrf.mxu0
      %v6645 = vadd.f32 %v6556, %v6644
      %v6646 = vpop.f32.mrf.mxu0
      %v6647 = vadd.f32 %v6558, %v6646
      %6648 = vmatmul.bf16.gmra.mxu0 %v5683
      %v6649 = vpop.f32.mrf.mxu0
      %v6650 = vadd.f32 %v6561, %v6649
      %v6651 = vpop.f32.mrf.mxu0
      %v6652 = vadd.f32 %v6563, %v6651
      %6653 = vmatmul.bf16.gmra.mxu0 %v5691
      %v6654 = vpop.f32.mrf.mxu0
      %v6655 = vadd.f32 %v6566, %v6654
      %v6656 = vpop.f32.mrf.mxu0
      %v6657 = vadd.f32 %v6568, %v6656
      %6658 = vmatmul.bf16.gmra.mxu0 %v5699
      %v6659 = vpop.f32.mrf.mxu0
      %v6660 = vadd.f32 %v6571, %v6659
      %v6661 = vpop.f32.mrf.mxu0
      %v6662 = vadd.f32 %v6573, %v6661
      %6663 = vmatmul.bf16.gmra.mxu0 %v5707
      %v6664 = vpop.f32.mrf.mxu0
      %v6665 = vadd.f32 %v6576, %v6664
      %v6666 = vpop.f32.mrf.mxu0
      %v6667 = vadd.f32 %v6578, %v6666
      %6668 = vmatmul.bf16.gmra.mxu0 %v5715
      %v6669 = vpop.f32.mrf.mxu0
      %v6670 = vadd.f32 %v6581, %v6669
      %v6671 = vpop.f32.mrf.mxu0
      %v6672 = vadd.f32 %v6583, %v6671
      %6673 = vmatmul.bf16.gmra.mxu0 %v5723
      %v6674 = vpop.f32.mrf.mxu0
      %v6675 = vadd.f32 %v6586, %v6674
      %v6676 = vpop.f32.mrf.mxu0
      %v6677 = vadd.f32 %v6588, %v6676
      %6678 = vmatmul.bf16.gmra.mxu0 %v5731
      %v6679 = vpop.f32.mrf.mxu0
      %v6680 = vadd.f32 %v6591, %v6679
      %v6681 = vpop.f32.mrf.mxu0
      %v6682 = vadd.f32 %v6593, %v6681
      %6683 = vdwg.mxu0
      %6684 = vmatpush.bf16.msra.mxu0 %v6120
      %6685 = vmatpush.bf16.msra.mxu0 %v6119
      %6686 = vmatpush.bf16.msra.mxu0 %v6118
      %6687 = vmatpush.bf16.msra.mxu0 %v6117
      %6688 = vmatpush.bf16.msra.mxu0 %v6116
      %6689 = vmatpush.bf16.msra.mxu0 %v6115
      %6690 = vmatpush.bf16.msra.mxu0 %v6114
      %6691 = vmatpush.bf16.msra.mxu0 %v6113
      %6692 = vmatmul.bf16.gmra.mxu0 %v5612
      %v6693 = vpop.f32.mrf.mxu0
      %v6694 = vadd.f32 %v6605, %v6693
      %v6695 = vpop.f32.mrf.mxu0
      %v6696 = vadd.f32 %v6607, %v6695
      %6697 = vmatmul.bf16.gmra.mxu0 %v5620
      %v6698 = vpop.f32.mrf.mxu0
      %v6699 = vadd.f32 %v6610, %v6698
      %v6700 = vpop.f32.mrf.mxu0
      %v6701 = vadd.f32 %v6612, %v6700
      %6702 = vmatmul.bf16.gmra.mxu0 %v5628
      %v6703 = vpop.f32.mrf.mxu0
      %v6704 = vadd.f32 %v6615, %v6703
      %v6705 = vpop.f32.mrf.mxu0
      %v6706 = vadd.f32 %v6617, %v6705
      %6707 = vmatmul.bf16.gmra.mxu0 %v5636
      %v6708 = vpop.f32.mrf.mxu0
      %v6709 = vadd.f32 %v6620, %v6708
      %v6710 = vpop.f32.mrf.mxu0
      %v6711 = vadd.f32 %v6622, %v6710
      %6712 = vmatmul.bf16.gmra.mxu0 %v5644
      %v6713 = vpop.f32.mrf.mxu0
      %v6714 = vadd.f32 %v6625, %v6713
      %v6715 = vpop.f32.mrf.mxu0
      %v6716 = vadd.f32 %v6627, %v6715
      %6717 = vmatmul.bf16.gmra.mxu0 %v5652
      %v6718 = vpop.f32.mrf.mxu0
      %v6719 = vadd.f32 %v6630, %v6718
      %v6720 = vpop.f32.mrf.mxu0
      %v6721 = vadd.f32 %v6632, %v6720
      %6722 = vmatmul.bf16.gmra.mxu0 %v5660
      %v6723 = vpop.f32.mrf.mxu0
      %v6724 = vadd.f32 %v6635, %v6723
      %v6725 = vpop.f32.mrf.mxu0
      %v6726 = vadd.f32 %v6637, %v6725
      %6727 = vmatmul.bf16.gmra.mxu0 %v5668
      %v6728 = vpop.f32.mrf.mxu0
      %v6729 = vadd.f32 %v6640, %v6728
      %v6730 = vpop.f32.mrf.mxu0
      %v6731 = vadd.f32 %v6642, %v6730
      %6732 = vmatmul.bf16.gmra.mxu0 %v5676
      %v6733 = vpop.f32.mrf.mxu0
      %v6734 = vadd.f32 %v6645, %v6733
      %v6735 = vpop.f32.mrf.mxu0
      %v6736 = vadd.f32 %v6647, %v6735
      %6737 = vmatmul.bf16.gmra.mxu0 %v5684
      %v6738 = vpop.f32.mrf.mxu0
      %v6739 = vadd.f32 %v6650, %v6738
      %v6740 = vpop.f32.mrf.mxu0
      %v6741 = vadd.f32 %v6652, %v6740
      %6742 = vmatmul.bf16.gmra.mxu0 %v5692
      %v6743 = vpop.f32.mrf.mxu0
      %v6744 = vadd.f32 %v6655, %v6743
      %v6745 = vpop.f32.mrf.mxu0
      %v6746 = vadd.f32 %v6657, %v6745
      %6747 = vmatmul.bf16.gmra.mxu0 %v5700
      %v6748 = vpop.f32.mrf.mxu0
      %v6749 = vadd.f32 %v6660, %v6748
      %v6750 = vpop.f32.mrf.mxu0
      %v6751 = vadd.f32 %v6662, %v6750
      %6752 = vmatmul.bf16.gmra.mxu0 %v5708
      %v6753 = vpop.f32.mrf.mxu0
      %v6754 = vadd.f32 %v6665, %v6753
      %v6755 = vpop.f32.mrf.mxu0
      %v6756 = vadd.f32 %v6667, %v6755
      %6757 = vmatmul.bf16.gmra.mxu0 %v5716
      %v6758 = vpop.f32.mrf.mxu0
      %v6759 = vadd.f32 %v6670, %v6758
      %v6760 = vpop.f32.mrf.mxu0
      %v6761 = vadd.f32 %v6672, %v6760
      %6762 = vmatmul.bf16.gmra.mxu0 %v5724
      %v6763 = vpop.f32.mrf.mxu0
      %v6764 = vadd.f32 %v6675, %v6763
      %v6765 = vpop.f32.mrf.mxu0
      %v6766 = vadd.f32 %v6677, %v6765
      %6767 = vmatmul.bf16.gmra.mxu0 %v5732
      %v6768 = vpop.f32.mrf.mxu0
      %v6769 = vadd.f32 %v6680, %v6768
      %v6770 = vpop.f32.mrf.mxu0
      %v6771 = vadd.f32 %v6682, %v6770
      %6772 = vdwg.mxu0
      %6773 = vmatpush.bf16.msra.mxu0 %v6128
      %6774 = vmatpush.bf16.msra.mxu0 %v6127
      %6775 = vmatpush.bf16.msra.mxu0 %v6126
      %6776 = vmatpush.bf16.msra.mxu0 %v6125
      %6777 = vmatpush.bf16.msra.mxu0 %v6124
      %6778 = vmatpush.bf16.msra.mxu0 %v6123
      %6779 = vmatpush.bf16.msra.mxu0 %v6122
      %6780 = vmatpush.bf16.msra.mxu0 %v6121
      %6781 = vmatmul.bf16.gmra.mxu0 %v5613
      %v6782 = vpop.f32.mrf.mxu0
      %v6783 = vadd.f32 %v6694, %v6782
      %v6784 = vpop.f32.mrf.mxu0
      %v6785 = vadd.f32 %v6696, %v6784
      %6786 = vmatmul.bf16.gmra.mxu0 %v5621
      %v6787 = vpop.f32.mrf.mxu0
      %v6788 = vadd.f32 %v6699, %v6787
      %v6789 = vpop.f32.mrf.mxu0
      %v6790 = vadd.f32 %v6701, %v6789
      %6791 = vmatmul.bf16.gmra.mxu0 %v5629
      %v6792 = vpop.f32.mrf.mxu0
      %v6793 = vadd.f32 %v6704, %v6792
      %v6794 = vpop.f32.mrf.mxu0
      %v6795 = vadd.f32 %v6706, %v6794
      %6796 = vmatmul.bf16.gmra.mxu0 %v5637
      %v6797 = vpop.f32.mrf.mxu0
      %v6798 = vadd.f32 %v6709, %v6797
      %v6799 = vpop.f32.mrf.mxu0
      %v6800 = vadd.f32 %v6711, %v6799
      %6801 = vmatmul.bf16.gmra.mxu0 %v5645
      %v6802 = vpop.f32.mrf.mxu0
      %v6803 = vadd.f32 %v6714, %v6802
      %v6804 = vpop.f32.mrf.mxu0
      %v6805 = vadd.f32 %v6716, %v6804
      %6806 = vmatmul.bf16.gmra.mxu0 %v5653
      %v6807 = vpop.f32.mrf.mxu0
      %v6808 = vadd.f32 %v6719, %v6807
      %v6809 = vpop.f32.mrf.mxu0
      %v6810 = vadd.f32 %v6721, %v6809
      %6811 = vmatmul.bf16.gmra.mxu0 %v5661
      %v6812 = vpop.f32.mrf.mxu0
      %v6813 = vadd.f32 %v6724, %v6812
      %v6814 = vpop.f32.mrf.mxu0
      %v6815 = vadd.f32 %v6726, %v6814
      %6816 = vmatmul.bf16.gmra.mxu0 %v5669
      %v6817 = vpop.f32.mrf.mxu0
      %v6818 = vadd.f32 %v6729, %v6817
      %v6819 = vpop.f32.mrf.mxu0
      %v6820 = vadd.f32 %v6731, %v6819
      %6821 = vmatmul.bf16.gmra.mxu0 %v5677
      %v6822 = vpop.f32.mrf.mxu0
      %v6823 = vadd.f32 %v6734, %v6822
      %v6824 = vpop.f32.mrf.mxu0
      %v6825 = vadd.f32 %v6736, %v6824
      %6826 = vmatmul.bf16.gmra.mxu0 %v5685
      %v6827 = vpop.f32.mrf.mxu0
      %v6828 = vadd.f32 %v6739, %v6827
      %v6829 = vpop.f32.mrf.mxu0
      %v6830 = vadd.f32 %v6741, %v6829
      %6831 = vmatmul.bf16.gmra.mxu0 %v5693
      %v6832 = vpop.f32.mrf.mxu0
      %v6833 = vadd.f32 %v6744, %v6832
      %v6834 = vpop.f32.mrf.mxu0
      %v6835 = vadd.f32 %v6746, %v6834
      %6836 = vmatmul.bf16.gmra.mxu0 %v5701
      %v6837 = vpop.f32.mrf.mxu0
      %v6838 = vadd.f32 %v6749, %v6837
      %v6839 = vpop.f32.mrf.mxu0
      %v6840 = vadd.f32 %v6751, %v6839
      %6841 = vmatmul.bf16.gmra.mxu0 %v5709
      %v6842 = vpop.f32.mrf.mxu0
      %v6843 = vadd.f32 %v6754, %v6842
      %v6844 = vpop.f32.mrf.mxu0
      %v6845 = vadd.f32 %v6756, %v6844
      %6846 = vmatmul.bf16.gmra.mxu0 %v5717
      %v6847 = vpop.f32.mrf.mxu0
      %v6848 = vadd.f32 %v6759, %v6847
      %v6849 = vpop.f32.mrf.mxu0
      %v6850 = vadd.f32 %v6761, %v6849
      %6851 = vmatmul.bf16.gmra.mxu0 %v5725
      %v6852 = vpop.f32.mrf.mxu0
      %v6853 = vadd.f32 %v6764, %v6852
      %v6854 = vpop.f32.mrf.mxu0
      %v6855 = vadd.f32 %v6766, %v6854
      %6856 = vmatmul.bf16.gmra.mxu0 %v5733
      %v6857 = vpop.f32.mrf.mxu0
      %v6858 = vadd.f32 %v6769, %v6857
      %v6859 = vpop.f32.mrf.mxu0
      %v6860 = vadd.f32 %v6771, %v6859
      %6861 = vdwg.mxu0
      %6862 = vmatpush.bf16.msra.mxu0 0
      %6863 = vmatpush.bf16.msra.mxu0 0
      %6864 = vmatpush.bf16.msra.mxu0 0
      %6865 = vmatpush.bf16.msra.mxu0 0
      %6866 = vmatpush.bf16.msra.mxu0 0
      %6867 = vmatpush.bf16.msra.mxu0 0
      %6868 = vmatpush.bf16.msra.mxu0 0
      %6869 = vmatpush.bf16.msra.mxu0 %v6237
      %6870 = vmatmul.bf16.gmra.mxu0 %v6188
      %v6871 = vpop.f32.mrf.mxu0
      %v6872 = vadd.f32 %v6783, %v6871
      %v6873 = vpop.f32.mrf.mxu0
      %v6874 = vadd.f32 %v6785, %v6873
      %6875 = vmatmul.bf16.gmra.mxu0 %v6191
      %v6876 = vpop.f32.mrf.mxu0
      %v6877 = vadd.f32 %v6788, %v6876
      %v6878 = vpop.f32.mrf.mxu0
      %v6879 = vadd.f32 %v6790, %v6878
      %6880 = vmatmul.bf16.gmra.mxu0 %v6194
      %v6881 = vpop.f32.mrf.mxu0
      %v6882 = vadd.f32 %v6793, %v6881
      %v6883 = vpop.f32.mrf.mxu0
      %v6884 = vadd.f32 %v6795, %v6883
      %6885 = vmatmul.bf16.gmra.mxu0 %v6197
      %v6886 = vpop.f32.mrf.mxu0
      %v6887 = vadd.f32 %v6798, %v6886
      %v6888 = vpop.f32.mrf.mxu0
      %v6889 = vadd.f32 %v6800, %v6888
      %6890 = vmatmul.bf16.gmra.mxu0 %v6200
      %v6891 = vpop.f32.mrf.mxu0
      %v6892 = vadd.f32 %v6803, %v6891
      %v6893 = vpop.f32.mrf.mxu0
      %v6894 = vadd.f32 %v6805, %v6893
      %6895 = vmatmul.bf16.gmra.mxu0 %v6203
      %v6896 = vpop.f32.mrf.mxu0
      %v6897 = vadd.f32 %v6808, %v6896
      %v6898 = vpop.f32.mrf.mxu0
      %v6899 = vadd.f32 %v6810, %v6898
      %6900 = vmatmul.bf16.gmra.mxu0 %v6206
      %v6901 = vpop.f32.mrf.mxu0
      %v6902 = vadd.f32 %v6813, %v6901
      %v6903 = vpop.f32.mrf.mxu0
      %v6904 = vadd.f32 %v6815, %v6903
      %6905 = vmatmul.bf16.gmra.mxu0 %v6209
      %v6906 = vpop.f32.mrf.mxu0
      %v6907 = vadd.f32 %v6818, %v6906
      %v6908 = vpop.f32.mrf.mxu0
      %v6909 = vadd.f32 %v6820, %v6908
      %6910 = vmatmul.bf16.gmra.mxu0 %v6212
      %v6911 = vpop.f32.mrf.mxu0
      %v6912 = vadd.f32 %v6823, %v6911
      %v6913 = vpop.f32.mrf.mxu0
      %v6914 = vadd.f32 %v6825, %v6913
      %6915 = vmatmul.bf16.gmra.mxu0 %v6215
      %v6916 = vpop.f32.mrf.mxu0
      %v6917 = vadd.f32 %v6828, %v6916
      %v6918 = vpop.f32.mrf.mxu0
      %v6919 = vadd.f32 %v6830, %v6918
      %6920 = vmatmul.bf16.gmra.mxu0 %v6218
      %v6921 = vpop.f32.mrf.mxu0
      %v6922 = vadd.f32 %v6833, %v6921
      %v6923 = vpop.f32.mrf.mxu0
      %v6924 = vadd.f32 %v6835, %v6923
      %6925 = vmatmul.bf16.gmra.mxu0 %v6221
      %v6926 = vpop.f32.mrf.mxu0
      %v6927 = vadd.f32 %v6838, %v6926
      %v6928 = vpop.f32.mrf.mxu0
      %v6929 = vadd.f32 %v6840, %v6928
      %6930 = vmatmul.bf16.gmra.mxu0 %v6224
      %v6931 = vpop.f32.mrf.mxu0
      %v6932 = vadd.f32 %v6843, %v6931
      %v6933 = vpop.f32.mrf.mxu0
      %v6934 = vadd.f32 %v6845, %v6933
      %6935 = vmatmul.bf16.gmra.mxu0 %v6227
      %v6936 = vpop.f32.mrf.mxu0
      %v6937 = vadd.f32 %v6848, %v6936
      %v6938 = vpop.f32.mrf.mxu0
      %v6939 = vadd.f32 %v6850, %v6938
      %6940 = vmatmul.bf16.gmra.mxu0 %v6230
      %v6941 = vpop.f32.mrf.mxu0
      %v6942 = vadd.f32 %v6853, %v6941
      %v6943 = vpop.f32.mrf.mxu0
      %v6944 = vadd.f32 %v6855, %v6943
      %6945 = vmatmul.bf16.gmra.mxu0 %v6233
      %v6946 = vpop.f32.mrf.mxu0
      %v6947 = vadd.f32 %v6858, %v6946
      %v6948 = vpop.f32.mrf.mxu0
      %v6949 = vadd.f32 %v6860, %v6948
      %6950 = vdwg.mxu0
      %v6951 = vxor.u32 %v6872, 2147483648
      %v6952 = vxor.u32 %v6874, 2147483648
      %v6953 = vxor.u32 %v6877, 2147483648
      %v6954 = vxor.u32 %v6879, 2147483648
      %v6955 = vxor.u32 %v6882, 2147483648
      %v6956 = vxor.u32 %v6884, 2147483648
      %v6957 = vxor.u32 %v6887, 2147483648
      %v6958 = vxor.u32 %v6889, 2147483648
      %v6959 = vxor.u32 %v6892, 2147483648
      %v6960 = vxor.u32 %v6894, 2147483648
      %v6961 = vxor.u32 %v6897, 2147483648
      %v6962 = vxor.u32 %v6899, 2147483648
      %v6963 = vxor.u32 %v6902, 2147483648
      %v6964 = vxor.u32 %v6904, 2147483648
      %v6965 = vxor.u32 %v6907, 2147483648
      %v6966 = vxor.u32 %v6909, 2147483648
      %v6967 = vxor.u32 %v6912, 2147483648
      %v6968 = vxor.u32 %v6914, 2147483648
      %v6969 = vxor.u32 %v6917, 2147483648
      %v6970 = vxor.u32 %v6919, 2147483648
      %v6971 = vxor.u32 %v6922, 2147483648
      %v6972 = vxor.u32 %v6924, 2147483648
      %v6973 = vxor.u32 %v6927, 2147483648
      %v6974 = vxor.u32 %v6929, 2147483648
      %v6975 = vxor.u32 %v6932, 2147483648
      %v6976 = vxor.u32 %v6934, 2147483648
      %v6977 = vxor.u32 %v6937, 2147483648
      %v6978 = vxor.u32 %v6939, 2147483648
      %v6979 = vxor.u32 %v6942, 2147483648
      %v6980 = vxor.u32 %v6944, 2147483648
      %v6981 = vxor.u32 %v6947, 2147483648
      %v6982 = vxor.u32 %v6949, 2147483648
      %v6983 = vmul.f32 %v6951, 1.442695
      %v6984 = vpow.pop %v6983
      %v6985 = vmul.f32 %v6952, 1.442695
      %v6986 = vpow.pop %v6985
      %v6987 = vmul.f32 %v6953, 1.442695
      %v6988 = vpow.pop %v6987
      %v6989 = vmul.f32 %v6954, 1.442695
      %v6990 = vpow.pop %v6989
      %v6991 = vmul.f32 %v6955, 1.442695
      %v6992 = vpow.pop %v6991
      %v6993 = vmul.f32 %v6956, 1.442695
      %v6994 = vpow.pop %v6993
      %v6995 = vmul.f32 %v6957, 1.442695
      %v6996 = vpow.pop %v6995
      %v6997 = vmul.f32 %v6958, 1.442695
      %v6998 = vpow.pop %v6997
      %v6999 = vmul.f32 %v6959, 1.442695
      %v7000 = vpow.pop %v6999
      %v7001 = vmul.f32 %v6960, 1.442695
      %v7002 = vpow.pop %v7001
      %v7003 = vmul.f32 %v6961, 1.442695
      %v7004 = vpow.pop %v7003
      %v7005 = vmul.f32 %v6962, 1.442695
      %v7006 = vpow.pop %v7005
      %v7007 = vmul.f32 %v6963, 1.442695
      %v7008 = vpow.pop %v7007
      %v7009 = vmul.f32 %v6964, 1.442695
      %v7010 = vpow.pop %v7009
      %v7011 = vmul.f32 %v6965, 1.442695
      %v7012 = vpow.pop %v7011
      %v7013 = vmul.f32 %v6966, 1.442695
      %v7014 = vpow.pop %v7013
      %v7015 = vmul.f32 %v6967, 1.442695
      %v7016 = vpow.pop %v7015
      %v7017 = vmul.f32 %v6968, 1.442695
      %v7018 = vpow.pop %v7017
      %v7019 = vmul.f32 %v6969, 1.442695
      %v7020 = vpow.pop %v7019
      %v7021 = vmul.f32 %v6970, 1.442695
      %v7022 = vpow.pop %v7021
      %v7023 = vmul.f32 %v6971, 1.442695
      %v7024 = vpow.pop %v7023
      %v7025 = vmul.f32 %v6972, 1.442695
      %v7026 = vpow.pop %v7025
      %v7027 = vmul.f32 %v6973, 1.442695
      %v7028 = vpow.pop %v7027
      %v7029 = vmul.f32 %v6974, 1.442695
      %v7030 = vpow.pop %v7029
      %v7031 = vmul.f32 %v6975, 1.442695
      %v7032 = vpow.pop %v7031
      %v7033 = vmul.f32 %v6976, 1.442695
      %v7034 = vpow.pop %v7033
      %v7035 = vmul.f32 %v6977, 1.442695
      %v7036 = vpow.pop %v7035
      %v7037 = vmul.f32 %v6978, 1.442695
      %v7038 = vpow.pop %v7037
      %v7039 = vmul.f32 %v6979, 1.442695
      %v7040 = vpow.pop %v7039
      %v7041 = vmul.f32 %v6980, 1.442695
      %v7042 = vpow.pop %v7041
      %v7043 = vmul.f32 %v6981, 1.442695
      %v7044 = vpow.pop %v7043
      %v7045 = vmul.f32 %v6982, 1.442695
      %v7046 = vpow.pop %v7045
      %v7047 = vadd.f32 %v6984, 1.0
      %v7048 = vadd.f32 %v6986, 1.0
      %v7049 = vadd.f32 %v6988, 1.0
      %v7050 = vadd.f32 %v6990, 1.0
      %v7051 = vadd.f32 %v6992, 1.0
      %v7052 = vadd.f32 %v6994, 1.0
      %v7053 = vadd.f32 %v6996, 1.0
      %v7054 = vadd.f32 %v6998, 1.0
      %v7055 = vadd.f32 %v7000, 1.0
      %v7056 = vadd.f32 %v7002, 1.0
      %v7057 = vadd.f32 %v7004, 1.0
      %v7058 = vadd.f32 %v7006, 1.0
      %v7059 = vadd.f32 %v7008, 1.0
      %v7060 = vadd.f32 %v7010, 1.0
      %v7061 = vadd.f32 %v7012, 1.0
      %v7062 = vadd.f32 %v7014, 1.0
      %v7063 = vadd.f32 %v7016, 1.0
      %v7064 = vadd.f32 %v7018, 1.0
      %v7065 = vadd.f32 %v7020, 1.0
      %v7066 = vadd.f32 %v7022, 1.0
      %v7067 = vadd.f32 %v7024, 1.0
      %v7068 = vadd.f32 %v7026, 1.0
      %v7069 = vadd.f32 %v7028, 1.0
      %v7070 = vadd.f32 %v7030, 1.0
      %v7071 = vadd.f32 %v7032, 1.0
      %v7072 = vadd.f32 %v7034, 1.0
      %v7073 = vadd.f32 %v7036, 1.0
      %v7074 = vadd.f32 %v7038, 1.0
      %v7075 = vadd.f32 %v7040, 1.0
      %v7076 = vadd.f32 %v7042, 1.0
      %v7077 = vadd.f32 %v7044, 1.0
      %v7078 = vadd.f32 %v7046, 1.0
      %v7079 = vrcp.pop %v7047
      %v7080 = vmul.f32 %v7047, %v7079
      %v7081 = vsub.f32 1.0, %v7080
      %v7082 = vmul.f32 %v7079, %v7081
      %v7083 = vadd.f32 %v7079, %v7082
      %vm7084 = vweird.f32 %v7047
      %vm7085 = vweird.f32 %v7079
      %vm7086 = vmor %vm7084, %vm7085
      %v7087 = vsel %vm7086, %v7079, %v7083
      %v7088 = vand.u32 2147483647, %v7047
      %vm7089 = vcmp.eq.f32.partialorder %v7088, 8.507059e+37
      %v7090 = vand.u32 %v7047, 2147483648
      %v7091 = vor.u32 1.1754944e-38, %v7090
      %v7092 = vsel %vm7089, %v7091, %v7087
      %v7093 = vmul.f32 1.0, %v7092
      %v7094 = vrcp.pop %v7048
      %v7095 = vmul.f32 %v7048, %v7094
      %v7096 = vsub.f32 1.0, %v7095
      %v7097 = vmul.f32 %v7094, %v7096
      %v7098 = vadd.f32 %v7094, %v7097
      %vm7099 = vweird.f32 %v7048
      %vm7100 = vweird.f32 %v7094
      %vm7101 = vmor %vm7099, %vm7100
      %v7102 = vsel %vm7101, %v7094, %v7098
      %v7103 = vand.u32 2147483647, %v7048
      %vm7104 = vcmp.eq.f32.partialorder %v7103, 8.507059e+37
      %v7105 = vand.u32 %v7048, 2147483648
      %v7106 = vor.u32 1.1754944e-38, %v7105
      %v7107 = vsel %vm7104, %v7106, %v7102
      %v7108 = vmul.f32 1.0, %v7107
      %v7109 = vrcp.pop %v7049
      %v7110 = vmul.f32 %v7049, %v7109
      %v7111 = vsub.f32 1.0, %v7110
      %v7112 = vmul.f32 %v7109, %v7111
      %v7113 = vadd.f32 %v7109, %v7112
      %vm7114 = vweird.f32 %v7049
      %vm7115 = vweird.f32 %v7109
      %vm7116 = vmor %vm7114, %vm7115
      %v7117 = vsel %vm7116, %v7109, %v7113
      %v7118 = vand.u32 2147483647, %v7049
      %vm7119 = vcmp.eq.f32.partialorder %v7118, 8.507059e+37
      %v7120 = vand.u32 %v7049, 2147483648
      %v7121 = vor.u32 1.1754944e-38, %v7120
      %v7122 = vsel %vm7119, %v7121, %v7117
      %v7123 = vmul.f32 1.0, %v7122
      %v7124 = vrcp.pop %v7050
      %v7125 = vmul.f32 %v7050, %v7124
      %v7126 = vsub.f32 1.0, %v7125
      %v7127 = vmul.f32 %v7124, %v7126
      %v7128 = vadd.f32 %v7124, %v7127
      %vm7129 = vweird.f32 %v7050
      %vm7130 = vweird.f32 %v7124
      %vm7131 = vmor %vm7129, %vm7130
      %v7132 = vsel %vm7131, %v7124, %v7128
      %v7133 = vand.u32 2147483647, %v7050
      %vm7134 = vcmp.eq.f32.partialorder %v7133, 8.507059e+37
      %v7135 = vand.u32 %v7050, 2147483648
      %v7136 = vor.u32 1.1754944e-38, %v7135
      %v7137 = vsel %vm7134, %v7136, %v7132
      %v7138 = vmul.f32 1.0, %v7137
      %v7139 = vrcp.pop %v7051
      %v7140 = vmul.f32 %v7051, %v7139
      %v7141 = vsub.f32 1.0, %v7140
      %v7142 = vmul.f32 %v7139, %v7141
      %v7143 = vadd.f32 %v7139, %v7142
      %vm7144 = vweird.f32 %v7051
      %vm7145 = vweird.f32 %v7139
      %vm7146 = vmor %vm7144, %vm7145
      %v7147 = vsel %vm7146, %v7139, %v7143
      %v7148 = vand.u32 2147483647, %v7051
      %vm7149 = vcmp.eq.f32.partialorder %v7148, 8.507059e+37
      %v7150 = vand.u32 %v7051, 2147483648
      %v7151 = vor.u32 1.1754944e-38, %v7150
      %v7152 = vsel %vm7149, %v7151, %v7147
      %v7153 = vmul.f32 1.0, %v7152
      %v7154 = vrcp.pop %v7052
      %v7155 = vmul.f32 %v7052, %v7154
      %v7156 = vsub.f32 1.0, %v7155
      %v7157 = vmul.f32 %v7154, %v7156
      %v7158 = vadd.f32 %v7154, %v7157
      %vm7159 = vweird.f32 %v7052
      %vm7160 = vweird.f32 %v7154
      %vm7161 = vmor %vm7159, %vm7160
      %v7162 = vsel %vm7161, %v7154, %v7158
      %v7163 = vand.u32 2147483647, %v7052
      %vm7164 = vcmp.eq.f32.partialorder %v7163, 8.507059e+37
      %v7165 = vand.u32 %v7052, 2147483648
      %v7166 = vor.u32 1.1754944e-38, %v7165
      %v7167 = vsel %vm7164, %v7166, %v7162
      %v7168 = vmul.f32 1.0, %v7167
      %v7169 = vrcp.pop %v7053
      %v7170 = vmul.f32 %v7053, %v7169
      %v7171 = vsub.f32 1.0, %v7170
      %v7172 = vmul.f32 %v7169, %v7171
      %v7173 = vadd.f32 %v7169, %v7172
      %vm7174 = vweird.f32 %v7053
      %vm7175 = vweird.f32 %v7169
      %vm7176 = vmor %vm7174, %vm7175
      %v7177 = vsel %vm7176, %v7169, %v7173
      %v7178 = vand.u32 2147483647, %v7053
      %vm7179 = vcmp.eq.f32.partialorder %v7178, 8.507059e+37
      %v7180 = vand.u32 %v7053, 2147483648
      %v7181 = vor.u32 1.1754944e-38, %v7180
      %v7182 = vsel %vm7179, %v7181, %v7177
      %v7183 = vmul.f32 1.0, %v7182
      %v7184 = vrcp.pop %v7054
      %v7185 = vmul.f32 %v7054, %v7184
      %v7186 = vsub.f32 1.0, %v7185
      %v7187 = vmul.f32 %v7184, %v7186
      %v7188 = vadd.f32 %v7184, %v7187
      %vm7189 = vweird.f32 %v7054
      %vm7190 = vweird.f32 %v7184
      %vm7191 = vmor %vm7189, %vm7190
      %v7192 = vsel %vm7191, %v7184, %v7188
      %v7193 = vand.u32 2147483647, %v7054
      %vm7194 = vcmp.eq.f32.partialorder %v7193, 8.507059e+37
      %v7195 = vand.u32 %v7054, 2147483648
      %v7196 = vor.u32 1.1754944e-38, %v7195
      %v7197 = vsel %vm7194, %v7196, %v7192
      %v7198 = vmul.f32 1.0, %v7197
      %v7199 = vrcp.pop %v7055
      %v7200 = vmul.f32 %v7055, %v7199
      %v7201 = vsub.f32 1.0, %v7200
      %v7202 = vmul.f32 %v7199, %v7201
      %v7203 = vadd.f32 %v7199, %v7202
      %vm7204 = vweird.f32 %v7055
      %vm7205 = vweird.f32 %v7199
      %vm7206 = vmor %vm7204, %vm7205
      %v7207 = vsel %vm7206, %v7199, %v7203
      %v7208 = vand.u32 2147483647, %v7055
      %vm7209 = vcmp.eq.f32.partialorder %v7208, 8.507059e+37
      %v7210 = vand.u32 %v7055, 2147483648
      %v7211 = vor.u32 1.1754944e-38, %v7210
      %v7212 = vsel %vm7209, %v7211, %v7207
      %v7213 = vmul.f32 1.0, %v7212
      %v7214 = vrcp.pop %v7056
      %v7215 = vmul.f32 %v7056, %v7214
      %v7216 = vsub.f32 1.0, %v7215
      %v7217 = vmul.f32 %v7214, %v7216
      %v7218 = vadd.f32 %v7214, %v7217
      %vm7219 = vweird.f32 %v7056
      %vm7220 = vweird.f32 %v7214
      %vm7221 = vmor %vm7219, %vm7220
      %v7222 = vsel %vm7221, %v7214, %v7218
      %v7223 = vand.u32 2147483647, %v7056
      %vm7224 = vcmp.eq.f32.partialorder %v7223, 8.507059e+37
      %v7225 = vand.u32 %v7056, 2147483648
      %v7226 = vor.u32 1.1754944e-38, %v7225
      %v7227 = vsel %vm7224, %v7226, %v7222
      %v7228 = vmul.f32 1.0, %v7227
      %v7229 = vrcp.pop %v7057
      %v7230 = vmul.f32 %v7057, %v7229
      %v7231 = vsub.f32 1.0, %v7230
      %v7232 = vmul.f32 %v7229, %v7231
      %v7233 = vadd.f32 %v7229, %v7232
      %vm7234 = vweird.f32 %v7057
      %vm7235 = vweird.f32 %v7229
      %vm7236 = vmor %vm7234, %vm7235
      %v7237 = vsel %vm7236, %v7229, %v7233
      %v7238 = vand.u32 2147483647, %v7057
      %vm7239 = vcmp.eq.f32.partialorder %v7238, 8.507059e+37
      %v7240 = vand.u32 %v7057, 2147483648
      %v7241 = vor.u32 1.1754944e-38, %v7240
      %v7242 = vsel %vm7239, %v7241, %v7237
      %v7243 = vmul.f32 1.0, %v7242
      %v7244 = vrcp.pop %v7058
      %v7245 = vmul.f32 %v7058, %v7244
      %v7246 = vsub.f32 1.0, %v7245
      %v7247 = vmul.f32 %v7244, %v7246
      %v7248 = vadd.f32 %v7244, %v7247
      %vm7249 = vweird.f32 %v7058
      %vm7250 = vweird.f32 %v7244
      %vm7251 = vmor %vm7249, %vm7250
      %v7252 = vsel %vm7251, %v7244, %v7248
      %v7253 = vand.u32 2147483647, %v7058
      %vm7254 = vcmp.eq.f32.partialorder %v7253, 8.507059e+37
      %v7255 = vand.u32 %v7058, 2147483648
      %v7256 = vor.u32 1.1754944e-38, %v7255
      %v7257 = vsel %vm7254, %v7256, %v7252
      %v7258 = vmul.f32 1.0, %v7257
      %v7259 = vrcp.pop %v7059
      %v7260 = vmul.f32 %v7059, %v7259
      %v7261 = vsub.f32 1.0, %v7260
      %v7262 = vmul.f32 %v7259, %v7261
      %v7263 = vadd.f32 %v7259, %v7262
      %vm7264 = vweird.f32 %v7059
      %vm7265 = vweird.f32 %v7259
      %vm7266 = vmor %vm7264, %vm7265
      %v7267 = vsel %vm7266, %v7259, %v7263
      %v7268 = vand.u32 2147483647, %v7059
      %vm7269 = vcmp.eq.f32.partialorder %v7268, 8.507059e+37
      %v7270 = vand.u32 %v7059, 2147483648
      %v7271 = vor.u32 1.1754944e-38, %v7270
      %v7272 = vsel %vm7269, %v7271, %v7267
      %v7273 = vmul.f32 1.0, %v7272
      %v7274 = vrcp.pop %v7060
      %v7275 = vmul.f32 %v7060, %v7274
      %v7276 = vsub.f32 1.0, %v7275
      %v7277 = vmul.f32 %v7274, %v7276
      %v7278 = vadd.f32 %v7274, %v7277
      %vm7279 = vweird.f32 %v7060
      %vm7280 = vweird.f32 %v7274
      %vm7281 = vmor %vm7279, %vm7280
      %v7282 = vsel %vm7281, %v7274, %v7278
      %v7283 = vand.u32 2147483647, %v7060
      %vm7284 = vcmp.eq.f32.partialorder %v7283, 8.507059e+37
      %v7285 = vand.u32 %v7060, 2147483648
      %v7286 = vor.u32 1.1754944e-38, %v7285
      %v7287 = vsel %vm7284, %v7286, %v7282
      %v7288 = vmul.f32 1.0, %v7287
      %v7289 = vrcp.pop %v7061
      %v7290 = vmul.f32 %v7061, %v7289
      %v7291 = vsub.f32 1.0, %v7290
      %v7292 = vmul.f32 %v7289, %v7291
      %v7293 = vadd.f32 %v7289, %v7292
      %vm7294 = vweird.f32 %v7061
      %vm7295 = vweird.f32 %v7289
      %vm7296 = vmor %vm7294, %vm7295
      %v7297 = vsel %vm7296, %v7289, %v7293
      %v7298 = vand.u32 2147483647, %v7061
      %vm7299 = vcmp.eq.f32.partialorder %v7298, 8.507059e+37
      %v7300 = vand.u32 %v7061, 2147483648
      %v7301 = vor.u32 1.1754944e-38, %v7300
      %v7302 = vsel %vm7299, %v7301, %v7297
      %v7303 = vmul.f32 1.0, %v7302
      %v7304 = vrcp.pop %v7062
      %v7305 = vmul.f32 %v7062, %v7304
      %v7306 = vsub.f32 1.0, %v7305
      %v7307 = vmul.f32 %v7304, %v7306
      %v7308 = vadd.f32 %v7304, %v7307
      %vm7309 = vweird.f32 %v7062
      %vm7310 = vweird.f32 %v7304
      %vm7311 = vmor %vm7309, %vm7310
      %v7312 = vsel %vm7311, %v7304, %v7308
      %v7313 = vand.u32 2147483647, %v7062
      %vm7314 = vcmp.eq.f32.partialorder %v7313, 8.507059e+37
      %v7315 = vand.u32 %v7062, 2147483648
      %v7316 = vor.u32 1.1754944e-38, %v7315
      %v7317 = vsel %vm7314, %v7316, %v7312
      %v7318 = vmul.f32 1.0, %v7317
      %v7319 = vrcp.pop %v7063
      %v7320 = vmul.f32 %v7063, %v7319
      %v7321 = vsub.f32 1.0, %v7320
      %v7322 = vmul.f32 %v7319, %v7321
      %v7323 = vadd.f32 %v7319, %v7322
      %vm7324 = vweird.f32 %v7063
      %vm7325 = vweird.f32 %v7319
      %vm7326 = vmor %vm7324, %vm7325
      %v7327 = vsel %vm7326, %v7319, %v7323
      %v7328 = vand.u32 2147483647, %v7063
      %vm7329 = vcmp.eq.f32.partialorder %v7328, 8.507059e+37
      %v7330 = vand.u32 %v7063, 2147483648
      %v7331 = vor.u32 1.1754944e-38, %v7330
      %v7332 = vsel %vm7329, %v7331, %v7327
      %v7333 = vmul.f32 1.0, %v7332
      %v7334 = vrcp.pop %v7064
      %v7335 = vmul.f32 %v7064, %v7334
      %v7336 = vsub.f32 1.0, %v7335
      %v7337 = vmul.f32 %v7334, %v7336
      %v7338 = vadd.f32 %v7334, %v7337
      %vm7339 = vweird.f32 %v7064
      %vm7340 = vweird.f32 %v7334
      %vm7341 = vmor %vm7339, %vm7340
      %v7342 = vsel %vm7341, %v7334, %v7338
      %v7343 = vand.u32 2147483647, %v7064
      %vm7344 = vcmp.eq.f32.partialorder %v7343, 8.507059e+37
      %v7345 = vand.u32 %v7064, 2147483648
      %v7346 = vor.u32 1.1754944e-38, %v7345
      %v7347 = vsel %vm7344, %v7346, %v7342
      %v7348 = vmul.f32 1.0, %v7347
      %v7349 = vrcp.pop %v7065
      %v7350 = vmul.f32 %v7065, %v7349
      %v7351 = vsub.f32 1.0, %v7350
      %v7352 = vmul.f32 %v7349, %v7351
      %v7353 = vadd.f32 %v7349, %v7352
      %vm7354 = vweird.f32 %v7065
      %vm7355 = vweird.f32 %v7349
      %vm7356 = vmor %vm7354, %vm7355
      %v7357 = vsel %vm7356, %v7349, %v7353
      %v7358 = vand.u32 2147483647, %v7065
      %vm7359 = vcmp.eq.f32.partialorder %v7358, 8.507059e+37
      %v7360 = vand.u32 %v7065, 2147483648
      %v7361 = vor.u32 1.1754944e-38, %v7360
      %v7362 = vsel %vm7359, %v7361, %v7357
      %v7363 = vmul.f32 1.0, %v7362
      %v7364 = vrcp.pop %v7066
      %v7365 = vmul.f32 %v7066, %v7364
      %v7366 = vsub.f32 1.0, %v7365
      %v7367 = vmul.f32 %v7364, %v7366
      %v7368 = vadd.f32 %v7364, %v7367
      %vm7369 = vweird.f32 %v7066
      %vm7370 = vweird.f32 %v7364
      %vm7371 = vmor %vm7369, %vm7370
      %v7372 = vsel %vm7371, %v7364, %v7368
      %v7373 = vand.u32 2147483647, %v7066
      %vm7374 = vcmp.eq.f32.partialorder %v7373, 8.507059e+37
      %v7375 = vand.u32 %v7066, 2147483648
      %v7376 = vor.u32 1.1754944e-38, %v7375
      %v7377 = vsel %vm7374, %v7376, %v7372
      %v7378 = vmul.f32 1.0, %v7377
      %v7379 = vrcp.pop %v7067
      %v7380 = vmul.f32 %v7067, %v7379
      %v7381 = vsub.f32 1.0, %v7380
      %v7382 = vmul.f32 %v7379, %v7381
      %v7383 = vadd.f32 %v7379, %v7382
      %vm7384 = vweird.f32 %v7067
      %vm7385 = vweird.f32 %v7379
      %vm7386 = vmor %vm7384, %vm7385
      %v7387 = vsel %vm7386, %v7379, %v7383
      %v7388 = vand.u32 2147483647, %v7067
      %vm7389 = vcmp.eq.f32.partialorder %v7388, 8.507059e+37
      %v7390 = vand.u32 %v7067, 2147483648
      %v7391 = vor.u32 1.1754944e-38, %v7390
      %v7392 = vsel %vm7389, %v7391, %v7387
      %v7393 = vmul.f32 1.0, %v7392
      %v7394 = vrcp.pop %v7068
      %v7395 = vmul.f32 %v7068, %v7394
      %v7396 = vsub.f32 1.0, %v7395
      %v7397 = vmul.f32 %v7394, %v7396
      %v7398 = vadd.f32 %v7394, %v7397
      %vm7399 = vweird.f32 %v7068
      %vm7400 = vweird.f32 %v7394
      %vm7401 = vmor %vm7399, %vm7400
      %v7402 = vsel %vm7401, %v7394, %v7398
      %v7403 = vand.u32 2147483647, %v7068
      %vm7404 = vcmp.eq.f32.partialorder %v7403, 8.507059e+37
      %v7405 = vand.u32 %v7068, 2147483648
      %v7406 = vor.u32 1.1754944e-38, %v7405
      %v7407 = vsel %vm7404, %v7406, %v7402
      %v7408 = vmul.f32 1.0, %v7407
      %v7409 = vrcp.pop %v7069
      %v7410 = vmul.f32 %v7069, %v7409
      %v7411 = vsub.f32 1.0, %v7410
      %v7412 = vmul.f32 %v7409, %v7411
      %v7413 = vadd.f32 %v7409, %v7412
      %vm7414 = vweird.f32 %v7069
      %vm7415 = vweird.f32 %v7409
      %vm7416 = vmor %vm7414, %vm7415
      %v7417 = vsel %vm7416, %v7409, %v7413
      %v7418 = vand.u32 2147483647, %v7069
      %vm7419 = vcmp.eq.f32.partialorder %v7418, 8.507059e+37
      %v7420 = vand.u32 %v7069, 2147483648
      %v7421 = vor.u32 1.1754944e-38, %v7420
      %v7422 = vsel %vm7419, %v7421, %v7417
      %v7423 = vmul.f32 1.0, %v7422
      %v7424 = vrcp.pop %v7070
      %v7425 = vmul.f32 %v7070, %v7424
      %v7426 = vsub.f32 1.0, %v7425
      %v7427 = vmul.f32 %v7424, %v7426
      %v7428 = vadd.f32 %v7424, %v7427
      %vm7429 = vweird.f32 %v7070
      %vm7430 = vweird.f32 %v7424
      %vm7431 = vmor %vm7429, %vm7430
      %v7432 = vsel %vm7431, %v7424, %v7428
      %v7433 = vand.u32 2147483647, %v7070
      %vm7434 = vcmp.eq.f32.partialorder %v7433, 8.507059e+37
      %v7435 = vand.u32 %v7070, 2147483648
      %v7436 = vor.u32 1.1754944e-38, %v7435
      %v7437 = vsel %vm7434, %v7436, %v7432
      %v7438 = vmul.f32 1.0, %v7437
      %v7439 = vrcp.pop %v7071
      %v7440 = vmul.f32 %v7071, %v7439
      %v7441 = vsub.f32 1.0, %v7440
      %v7442 = vmul.f32 %v7439, %v7441
      %v7443 = vadd.f32 %v7439, %v7442
      %vm7444 = vweird.f32 %v7071
      %vm7445 = vweird.f32 %v7439
      %vm7446 = vmor %vm7444, %vm7445
      %v7447 = vsel %vm7446, %v7439, %v7443
      %v7448 = vand.u32 2147483647, %v7071
      %vm7449 = vcmp.eq.f32.partialorder %v7448, 8.507059e+37
      %v7450 = vand.u32 %v7071, 2147483648
      %v7451 = vor.u32 1.1754944e-38, %v7450
      %v7452 = vsel %vm7449, %v7451, %v7447
      %v7453 = vmul.f32 1.0, %v7452
      %v7454 = vrcp.pop %v7072
      %v7455 = vmul.f32 %v7072, %v7454
      %v7456 = vsub.f32 1.0, %v7455
      %v7457 = vmul.f32 %v7454, %v7456
      %v7458 = vadd.f32 %v7454, %v7457
      %vm7459 = vweird.f32 %v7072
      %vm7460 = vweird.f32 %v7454
      %vm7461 = vmor %vm7459, %vm7460
      %v7462 = vsel %vm7461, %v7454, %v7458
      %v7463 = vand.u32 2147483647, %v7072
      %vm7464 = vcmp.eq.f32.partialorder %v7463, 8.507059e+37
      %v7465 = vand.u32 %v7072, 2147483648
      %v7466 = vor.u32 1.1754944e-38, %v7465
      %v7467 = vsel %vm7464, %v7466, %v7462
      %v7468 = vmul.f32 1.0, %v7467
      %v7469 = vrcp.pop %v7073
      %v7470 = vmul.f32 %v7073, %v7469
      %v7471 = vsub.f32 1.0, %v7470
      %v7472 = vmul.f32 %v7469, %v7471
      %v7473 = vadd.f32 %v7469, %v7472
      %vm7474 = vweird.f32 %v7073
      %vm7475 = vweird.f32 %v7469
      %vm7476 = vmor %vm7474, %vm7475
      %v7477 = vsel %vm7476, %v7469, %v7473
      %v7478 = vand.u32 2147483647, %v7073
      %vm7479 = vcmp.eq.f32.partialorder %v7478, 8.507059e+37
      %v7480 = vand.u32 %v7073, 2147483648
      %v7481 = vor.u32 1.1754944e-38, %v7480
      %v7482 = vsel %vm7479, %v7481, %v7477
      %v7483 = vmul.f32 1.0, %v7482
      %v7484 = vrcp.pop %v7074
      %v7485 = vmul.f32 %v7074, %v7484
      %v7486 = vsub.f32 1.0, %v7485
      %v7487 = vmul.f32 %v7484, %v7486
      %v7488 = vadd.f32 %v7484, %v7487
      %vm7489 = vweird.f32 %v7074
      %vm7490 = vweird.f32 %v7484
      %vm7491 = vmor %vm7489, %vm7490
      %v7492 = vsel %vm7491, %v7484, %v7488
      %v7493 = vand.u32 2147483647, %v7074
      %vm7494 = vcmp.eq.f32.partialorder %v7493, 8.507059e+37
      %v7495 = vand.u32 %v7074, 2147483648
      %v7496 = vor.u32 1.1754944e-38, %v7495
      %v7497 = vsel %vm7494, %v7496, %v7492
      %v7498 = vmul.f32 1.0, %v7497
      %v7499 = vrcp.pop %v7075
      %v7500 = vmul.f32 %v7075, %v7499
      %v7501 = vsub.f32 1.0, %v7500
      %v7502 = vmul.f32 %v7499, %v7501
      %v7503 = vadd.f32 %v7499, %v7502
      %vm7504 = vweird.f32 %v7075
      %vm7505 = vweird.f32 %v7499
      %vm7506 = vmor %vm7504, %vm7505
      %v7507 = vsel %vm7506, %v7499, %v7503
      %v7508 = vand.u32 2147483647, %v7075
      %vm7509 = vcmp.eq.f32.partialorder %v7508, 8.507059e+37
      %v7510 = vand.u32 %v7075, 2147483648
      %v7511 = vor.u32 1.1754944e-38, %v7510
      %v7512 = vsel %vm7509, %v7511, %v7507
      %v7513 = vmul.f32 1.0, %v7512
      %v7514 = vrcp.pop %v7076
      %v7515 = vmul.f32 %v7076, %v7514
      %v7516 = vsub.f32 1.0, %v7515
      %v7517 = vmul.f32 %v7514, %v7516
      %v7518 = vadd.f32 %v7514, %v7517
      %vm7519 = vweird.f32 %v7076
      %vm7520 = vweird.f32 %v7514
      %vm7521 = vmor %vm7519, %vm7520
      %v7522 = vsel %vm7521, %v7514, %v7518
      %v7523 = vand.u32 2147483647, %v7076
      %vm7524 = vcmp.eq.f32.partialorder %v7523, 8.507059e+37
      %v7525 = vand.u32 %v7076, 2147483648
      %v7526 = vor.u32 1.1754944e-38, %v7525
      %v7527 = vsel %vm7524, %v7526, %v7522
      %v7528 = vmul.f32 1.0, %v7527
      %v7529 = vrcp.pop %v7077
      %v7530 = vmul.f32 %v7077, %v7529
      %v7531 = vsub.f32 1.0, %v7530
      %v7532 = vmul.f32 %v7529, %v7531
      %v7533 = vadd.f32 %v7529, %v7532
      %vm7534 = vweird.f32 %v7077
      %vm7535 = vweird.f32 %v7529
      %vm7536 = vmor %vm7534, %vm7535
      %v7537 = vsel %vm7536, %v7529, %v7533
      %v7538 = vand.u32 2147483647, %v7077
      %vm7539 = vcmp.eq.f32.partialorder %v7538, 8.507059e+37
      %v7540 = vand.u32 %v7077, 2147483648
      %v7541 = vor.u32 1.1754944e-38, %v7540
      %v7542 = vsel %vm7539, %v7541, %v7537
      %v7543 = vmul.f32 1.0, %v7542
      %v7544 = vrcp.pop %v7078
      %v7545 = vmul.f32 %v7078, %v7544
      %v7546 = vsub.f32 1.0, %v7545
      %v7547 = vmul.f32 %v7544, %v7546
      %v7548 = vadd.f32 %v7544, %v7547
      %vm7549 = vweird.f32 %v7078
      %vm7550 = vweird.f32 %v7544
      %vm7551 = vmor %vm7549, %vm7550
      %v7552 = vsel %vm7551, %v7544, %v7548
      %v7553 = vand.u32 2147483647, %v7078
      %vm7554 = vcmp.eq.f32.partialorder %v7553, 8.507059e+37
      %v7555 = vand.u32 %v7078, 2147483648
      %v7556 = vor.u32 1.1754944e-38, %v7555
      %v7557 = vsel %vm7554, %v7556, %v7552
      %v7558 = vmul.f32 1.0, %v7557
      %v7559 = vtanh.pop %v6872
      %v7560 = vtanh.pop %v6874
      %v7561 = vtanh.pop %v6877
      %v7562 = vtanh.pop %v6879
      %v7563 = vtanh.pop %v6882
      %v7564 = vtanh.pop %v6884
      %v7565 = vtanh.pop %v6887
      %v7566 = vtanh.pop %v6889
      %v7567 = vtanh.pop %v6892
      %v7568 = vtanh.pop %v6894
      %v7569 = vtanh.pop %v6897
      %v7570 = vtanh.pop %v6899
      %v7571 = vtanh.pop %v6902
      %v7572 = vtanh.pop %v6904
      %v7573 = vtanh.pop %v6907
      %v7574 = vtanh.pop %v6909
      %v7575 = vtanh.pop %v6912
      %v7576 = vtanh.pop %v6914
      %v7577 = vtanh.pop %v6917
      %v7578 = vtanh.pop %v6919
      %v7579 = vtanh.pop %v6922
      %v7580 = vtanh.pop %v6924
      %v7581 = vtanh.pop %v6927
      %v7582 = vtanh.pop %v6929
      %v7583 = vtanh.pop %v6932
      %v7584 = vtanh.pop %v6934
      %v7585 = vtanh.pop %v6937
      %v7586 = vtanh.pop %v6939
      %v7587 = vtanh.pop %v6942
      %v7588 = vtanh.pop %v6944
      %v7589 = vtanh.pop %v6947
      %v7590 = vtanh.pop %v6949
      %v7591 = vld [vmem:[%s185] sm:$0xff]
      %v7592 = vld [vmem:[%s185 + $0x8] sm:$0xff]
      %v7593 = vld [vmem:[%s185 + $0x10] sm:$0xff]
      %v7594 = vld [vmem:[%s185 + $0x18] sm:$0xff]
      %v7595 = vld [vmem:[%s185 + $0x20] sm:$0xff]
      %v7596 = vld [vmem:[%s185 + $0x28] sm:$0xff]
      %v7597 = vld [vmem:[%s185 + $0x30] sm:$0xff]
      %v7598 = vld [vmem:[%s185 + $0x38] sm:$0xff]
      %v7599 = vld [vmem:[%s185 + $0x40] sm:$0xff]
      %v7600 = vld [vmem:[%s185 + $0x48] sm:$0xff]
      %v7601 = vld [vmem:[%s185 + $0x50] sm:$0xff]
      %v7602 = vld [vmem:[%s185 + $0x58] sm:$0xff]
      %v7603 = vld [vmem:[%s185 + $0x60] sm:$0xff]
      %v7604 = vld [vmem:[%s185 + $0x68] sm:$0xff]
      %v7605 = vld [vmem:[%s185 + $0x70] sm:$0xff]
      %v7606 = vld [vmem:[%s185 + $0x78] sm:$0xff]
      %v7607 = vld [vmem:[%s185 + $0x80] sm:$0xff]
      %v7608 = vld [vmem:[%s185 + $0x88] sm:$0xff]
      %v7609 = vld [vmem:[%s185 + $0x90] sm:$0xff]
      %v7610 = vld [vmem:[%s185 + $0x98] sm:$0xff]
      %v7611 = vld [vmem:[%s185 + $0xa0] sm:$0xff]
      %v7612 = vld [vmem:[%s185 + $0xa8] sm:$0xff]
      %v7613 = vld [vmem:[%s185 + $0xb0] sm:$0xff]
      %v7614 = vld [vmem:[%s185 + $0xb8] sm:$0xff]
      %v7615 = vld [vmem:[%s185 + $0xc0] sm:$0xff]
      %v7616 = vld [vmem:[%s185 + $0xc8] sm:$0xff]
      %v7617 = vld [vmem:[%s185 + $0xd0] sm:$0xff]
      %v7618 = vld [vmem:[%s185 + $0xd8] sm:$0xff]
      %v7619 = vld [vmem:[%s185 + $0xe0] sm:$0xff]
      %v7620 = vld [vmem:[%s185 + $0xe8] sm:$0xff]
      %v7621 = vld [vmem:[%s185 + $0xf0] sm:$0xff]
      %v7622 = vld [vmem:[%s185 + $0xf8] sm:$0xff]
      %7655 = vrot.lane.b32.xlu0 %v7591, 32
      %v7656 = vpop.permute.xlu0 %7655
      %7657 = vrot.lane.b32.xlu0 %v7592, 32
      %v7658 = vpop.permute.xlu0 %7657
      %7659 = vrot.lane.b32.xlu0 %v7593, 32
      %v7660 = vpop.permute.xlu0 %7659
      %7661 = vrot.lane.b32.xlu0 %v7594, 32
      %v7662 = vpop.permute.xlu0 %7661
      %7663 = vrot.lane.b32.xlu0 %v7595, 32
      %v7664 = vpop.permute.xlu0 %7663
      %7665 = vrot.lane.b32.xlu0 %v7596, 32
      %v7666 = vpop.permute.xlu0 %7665
      %7667 = vrot.lane.b32.xlu0 %v7597, 32
      %v7668 = vpop.permute.xlu0 %7667
      %7669 = vrot.lane.b32.xlu0 %v7598, 32
      %v7670 = vpop.permute.xlu0 %7669
      %7671 = vrot.lane.b32.xlu0 %v7599, 32
      %v7672 = vpop.permute.xlu0 %7671
      %7673 = vrot.lane.b32.xlu0 %v7600, 32
      %v7674 = vpop.permute.xlu0 %7673
      %7675 = vrot.lane.b32.xlu0 %v7601, 32
      %v7676 = vpop.permute.xlu0 %7675
      %7677 = vrot.lane.b32.xlu0 %v7602, 32
      %v7678 = vpop.permute.xlu0 %7677
      %7679 = vrot.lane.b32.xlu0 %v7603, 32
      %v7680 = vpop.permute.xlu0 %7679
      %7681 = vrot.lane.b32.xlu0 %v7604, 32
      %v7682 = vpop.permute.xlu0 %7681
      %7683 = vrot.lane.b32.xlu0 %v7605, 32
      %v7684 = vpop.permute.xlu0 %7683
      %7685 = vrot.lane.b32.xlu0 %v7606, 32
      %v7686 = vpop.permute.xlu0 %7685
      %7687 = vrot.lane.b32.xlu0 %v7607, 32
      %v7688 = vpop.permute.xlu0 %7687
      %7689 = vrot.lane.b32.xlu0 %v7608, 32
      %v7690 = vpop.permute.xlu0 %7689
      %7691 = vrot.lane.b32.xlu0 %v7609, 32
      %v7692 = vpop.permute.xlu0 %7691
      %7693 = vrot.lane.b32.xlu0 %v7610, 32
      %v7694 = vpop.permute.xlu0 %7693
      %7695 = vrot.lane.b32.xlu0 %v7611, 32
      %v7696 = vpop.permute.xlu0 %7695
      %7697 = vrot.lane.b32.xlu0 %v7612, 32
      %v7698 = vpop.permute.xlu0 %7697
      %7699 = vrot.lane.b32.xlu0 %v7613, 32
      %v7700 = vpop.permute.xlu0 %7699
      %7701 = vrot.lane.b32.xlu0 %v7614, 32
      %v7702 = vpop.permute.xlu0 %7701
      %7703 = vrot.lane.b32.xlu0 %v7615, 32
      %v7704 = vpop.permute.xlu0 %7703
      %7705 = vrot.lane.b32.xlu0 %v7616, 32
      %v7706 = vpop.permute.xlu0 %7705
      %7707 = vrot.lane.b32.xlu0 %v7617, 32
      %v7708 = vpop.permute.xlu0 %7707
      %7709 = vrot.lane.b32.xlu0 %v7618, 32
      %v7710 = vpop.permute.xlu0 %7709
      %7711 = vrot.lane.b32.xlu0 %v7619, 32
      %v7712 = vpop.permute.xlu0 %7711
      %7713 = vrot.lane.b32.xlu0 %v7620, 32
      %v7714 = vpop.permute.xlu0 %7713
      %7715 = vrot.lane.b32.xlu0 %v7621, 32
      %v7716 = vpop.permute.xlu0 %7715
      %7717 = vrot.lane.b32.xlu0 %v7622, 32
      %v7718 = vpop.permute.xlu0 %7717
      %v7751 = vmul.f32 %v7093, %v7656
      %v7752 = vmul.f32 %v7108, %v7658
      %v7753 = vmul.f32 %v7123, %v7660
      %v7754 = vmul.f32 %v7138, %v7662
      %v7755 = vmul.f32 %v7153, %v7664
      %v7756 = vmul.f32 %v7168, %v7666
      %v7757 = vmul.f32 %v7183, %v7668
      %v7758 = vmul.f32 %v7198, %v7670
      %v7759 = vmul.f32 %v7213, %v7672
      %v7760 = vmul.f32 %v7228, %v7674
      %v7761 = vmul.f32 %v7243, %v7676
      %v7762 = vmul.f32 %v7258, %v7678
      %v7763 = vmul.f32 %v7273, %v7680
      %v7764 = vmul.f32 %v7288, %v7682
      %v7765 = vmul.f32 %v7303, %v7684
      %v7766 = vmul.f32 %v7318, %v7686
      %v7767 = vmul.f32 %v7333, %v7688
      %v7768 = vmul.f32 %v7348, %v7690
      %v7769 = vmul.f32 %v7363, %v7692
      %v7770 = vmul.f32 %v7378, %v7694
      %v7771 = vmul.f32 %v7393, %v7696
      %v7772 = vmul.f32 %v7408, %v7698
      %v7773 = vmul.f32 %v7423, %v7700
      %v7774 = vmul.f32 %v7438, %v7702
      %v7775 = vmul.f32 %v7453, %v7704
      %v7776 = vmul.f32 %v7468, %v7706
      %v7777 = vmul.f32 %v7483, %v7708
      %v7778 = vmul.f32 %v7498, %v7710
      %v7779 = vmul.f32 %v7513, %v7712
      %v7780 = vmul.f32 %v7528, %v7714
      %v7781 = vmul.f32 %v7543, %v7716
      %v7782 = vmul.f32 %v7558, %v7718
      %7815 = vrot.lane.b32.xlu0 %v7559, 64
      %v7816 = vpop.permute.xlu0 %7815
      %7817 = vrot.lane.b32.xlu0 %v7560, 64
      %v7818 = vpop.permute.xlu0 %7817
      %7819 = vrot.lane.b32.xlu0 %v7561, 64
      %v7820 = vpop.permute.xlu0 %7819
      %7821 = vrot.lane.b32.xlu0 %v7562, 64
      %v7822 = vpop.permute.xlu0 %7821
      %7823 = vrot.lane.b32.xlu0 %v7563, 64
      %v7824 = vpop.permute.xlu0 %7823
      %7825 = vrot.lane.b32.xlu0 %v7564, 64
      %v7826 = vpop.permute.xlu0 %7825
      %7827 = vrot.lane.b32.xlu0 %v7565, 64
      %v7828 = vpop.permute.xlu0 %7827
      %7829 = vrot.lane.b32.xlu0 %v7566, 64
      %v7830 = vpop.permute.xlu0 %7829
      %7831 = vrot.lane.b32.xlu0 %v7567, 64
      %v7832 = vpop.permute.xlu0 %7831
      %7833 = vrot.lane.b32.xlu0 %v7568, 64
      %v7834 = vpop.permute.xlu0 %7833
      %7835 = vrot.lane.b32.xlu0 %v7569, 64
      %v7836 = vpop.permute.xlu0 %7835
      %7837 = vrot.lane.b32.xlu0 %v7570, 64
      %v7838 = vpop.permute.xlu0 %7837
      %7839 = vrot.lane.b32.xlu0 %v7571, 64
      %v7840 = vpop.permute.xlu0 %7839
      %7841 = vrot.lane.b32.xlu0 %v7572, 64
      %v7842 = vpop.permute.xlu0 %7841
      %7843 = vrot.lane.b32.xlu0 %v7573, 64
      %v7844 = vpop.permute.xlu0 %7843
      %7845 = vrot.lane.b32.xlu0 %v7574, 64
      %v7846 = vpop.permute.xlu0 %7845
      %7847 = vrot.lane.b32.xlu0 %v7575, 64
      %v7848 = vpop.permute.xlu0 %7847
      %7849 = vrot.lane.b32.xlu0 %v7576, 64
      %v7850 = vpop.permute.xlu0 %7849
      %7851 = vrot.lane.b32.xlu0 %v7577, 64
      %v7852 = vpop.permute.xlu0 %7851
      %7853 = vrot.lane.b32.xlu0 %v7578, 64
      %v7854 = vpop.permute.xlu0 %7853
      %7855 = vrot.lane.b32.xlu0 %v7579, 64
      %v7856 = vpop.permute.xlu0 %7855
      %7857 = vrot.lane.b32.xlu0 %v7580, 64
      %v7858 = vpop.permute.xlu0 %7857
      %7859 = vrot.lane.b32.xlu0 %v7581, 64
      %v7860 = vpop.permute.xlu0 %7859
      %7861 = vrot.lane.b32.xlu0 %v7582, 64
      %v7862 = vpop.permute.xlu0 %7861
      %7863 = vrot.lane.b32.xlu0 %v7583, 64
      %v7864 = vpop.permute.xlu0 %7863
      %7865 = vrot.lane.b32.xlu0 %v7584, 64
      %v7866 = vpop.permute.xlu0 %7865
      %7867 = vrot.lane.b32.xlu0 %v7585, 64
      %v7868 = vpop.permute.xlu0 %7867
      %7869 = vrot.lane.b32.xlu0 %v7586, 64
      %v7870 = vpop.permute.xlu0 %7869
      %7871 = vrot.lane.b32.xlu0 %v7587, 64
      %v7872 = vpop.permute.xlu0 %7871
      %7873 = vrot.lane.b32.xlu0 %v7588, 64
      %v7874 = vpop.permute.xlu0 %7873
      %7875 = vrot.lane.b32.xlu0 %v7589, 64
      %v7876 = vpop.permute.xlu0 %7875
      %7877 = vrot.lane.b32.xlu0 %v7590, 64
      %v7878 = vpop.permute.xlu0 %7877
      %v7911 = vmul.f32 %v7093, %v7816
      %v7912 = vmul.f32 %v7108, %v7818
      %v7913 = vmul.f32 %v7123, %v7820
      %v7914 = vmul.f32 %v7138, %v7822
      %v7915 = vmul.f32 %v7153, %v7824
      %v7916 = vmul.f32 %v7168, %v7826
      %v7917 = vmul.f32 %v7183, %v7828
      %v7918 = vmul.f32 %v7198, %v7830
      %v7919 = vmul.f32 %v7213, %v7832
      %v7920 = vmul.f32 %v7228, %v7834
      %v7921 = vmul.f32 %v7243, %v7836
      %v7922 = vmul.f32 %v7258, %v7838
      %v7923 = vmul.f32 %v7273, %v7840
      %v7924 = vmul.f32 %v7288, %v7842
      %v7925 = vmul.f32 %v7303, %v7844
      %v7926 = vmul.f32 %v7318, %v7846
      %v7927 = vmul.f32 %v7333, %v7848
      %v7928 = vmul.f32 %v7348, %v7850
      %v7929 = vmul.f32 %v7363, %v7852
      %v7930 = vmul.f32 %v7378, %v7854
      %v7931 = vmul.f32 %v7393, %v7856
      %v7932 = vmul.f32 %v7408, %v7858
      %v7933 = vmul.f32 %v7423, %v7860
      %v7934 = vmul.f32 %v7438, %v7862
      %v7935 = vmul.f32 %v7453, %v7864
      %v7936 = vmul.f32 %v7468, %v7866
      %v7937 = vmul.f32 %v7483, %v7868
      %v7938 = vmul.f32 %v7498, %v7870
      %v7939 = vmul.f32 %v7513, %v7872
      %v7940 = vmul.f32 %v7528, %v7874
      %v7941 = vmul.f32 %v7543, %v7876
      %v7942 = vmul.f32 %v7558, %v7878
      %7975 = vrot.lane.b32.xlu0 %v7911, 32
      %v7976 = vpop.permute.xlu0 %7975
      %7977 = vrot.lane.b32.xlu0 %v7912, 32
      %v7978 = vpop.permute.xlu0 %7977
      %7979 = vrot.lane.b32.xlu0 %v7913, 32
      %v7980 = vpop.permute.xlu0 %7979
      %7981 = vrot.lane.b32.xlu0 %v7914, 32
      %v7982 = vpop.permute.xlu0 %7981
      %7983 = vrot.lane.b32.xlu0 %v7915, 32
      %v7984 = vpop.permute.xlu0 %7983
      %7985 = vrot.lane.b32.xlu0 %v7916, 32
      %v7986 = vpop.permute.xlu0 %7985
      %7987 = vrot.lane.b32.xlu0 %v7917, 32
      %v7988 = vpop.permute.xlu0 %7987
      %7989 = vrot.lane.b32.xlu0 %v7918, 32
      %v7990 = vpop.permute.xlu0 %7989
      %7991 = vrot.lane.b32.xlu0 %v7919, 32
      %v7992 = vpop.permute.xlu0 %7991
      %7993 = vrot.lane.b32.xlu0 %v7920, 32
      %v7994 = vpop.permute.xlu0 %7993
      %7995 = vrot.lane.b32.xlu0 %v7921, 32
      %v7996 = vpop.permute.xlu0 %7995
      %7997 = vrot.lane.b32.xlu0 %v7922, 32
      %v7998 = vpop.permute.xlu0 %7997
      %7999 = vrot.lane.b32.xlu0 %v7923, 32
      %v8000 = vpop.permute.xlu0 %7999
      %8001 = vrot.lane.b32.xlu0 %v7924, 32
      %v8002 = vpop.permute.xlu0 %8001
      %8003 = vrot.lane.b32.xlu0 %v7925, 32
      %v8004 = vpop.permute.xlu0 %8003
      %8005 = vrot.lane.b32.xlu0 %v7926, 32
      %v8006 = vpop.permute.xlu0 %8005
      %8007 = vrot.lane.b32.xlu0 %v7927, 32
      %v8008 = vpop.permute.xlu0 %8007
      %8009 = vrot.lane.b32.xlu0 %v7928, 32
      %v8010 = vpop.permute.xlu0 %8009
      %8011 = vrot.lane.b32.xlu0 %v7929, 32
      %v8012 = vpop.permute.xlu0 %8011
      %8013 = vrot.lane.b32.xlu0 %v7930, 32
      %v8014 = vpop.permute.xlu0 %8013
      %8015 = vrot.lane.b32.xlu0 %v7931, 32
      %v8016 = vpop.permute.xlu0 %8015
      %8017 = vrot.lane.b32.xlu0 %v7932, 32
      %v8018 = vpop.permute.xlu0 %8017
      %8019 = vrot.lane.b32.xlu0 %v7933, 32
      %v8020 = vpop.permute.xlu0 %8019
      %8021 = vrot.lane.b32.xlu0 %v7934, 32
      %v8022 = vpop.permute.xlu0 %8021
      %8023 = vrot.lane.b32.xlu0 %v7935, 32
      %v8024 = vpop.permute.xlu0 %8023
      %8025 = vrot.lane.b32.xlu0 %v7936, 32
      %v8026 = vpop.permute.xlu0 %8025
      %8027 = vrot.lane.b32.xlu0 %v7937, 32
      %v8028 = vpop.permute.xlu0 %8027
      %8029 = vrot.lane.b32.xlu0 %v7938, 32
      %v8030 = vpop.permute.xlu0 %8029
      %8031 = vrot.lane.b32.xlu0 %v7939, 32
      %v8032 = vpop.permute.xlu0 %8031
      %8033 = vrot.lane.b32.xlu0 %v7940, 32
      %v8034 = vpop.permute.xlu0 %8033
      %8035 = vrot.lane.b32.xlu0 %v7941, 32
      %v8036 = vpop.permute.xlu0 %8035
      %8037 = vrot.lane.b32.xlu0 %v7942, 32
      %v8038 = vpop.permute.xlu0 %8037
      %v8071 = vadd.f32 %v7751, %v7976
      %v8072 = vadd.f32 %v7752, %v7978
      %v8073 = vadd.f32 %v7753, %v7980
      %v8074 = vadd.f32 %v7754, %v7982
      %v8075 = vadd.f32 %v7755, %v7984
      %v8076 = vadd.f32 %v7756, %v7986
      %v8077 = vadd.f32 %v7757, %v7988
      %v8078 = vadd.f32 %v7758, %v7990
      %v8079 = vadd.f32 %v7759, %v7992
      %v8080 = vadd.f32 %v7760, %v7994
      %v8081 = vadd.f32 %v7761, %v7996
      %v8082 = vadd.f32 %v7762, %v7998
      %v8083 = vadd.f32 %v7763, %v8000
      %v8084 = vadd.f32 %v7764, %v8002
      %v8085 = vadd.f32 %v7765, %v8004
      %v8086 = vadd.f32 %v7766, %v8006
      %v8087 = vadd.f32 %v7767, %v8008
      %v8088 = vadd.f32 %v7768, %v8010
      %v8089 = vadd.f32 %v7769, %v8012
      %v8090 = vadd.f32 %v7770, %v8014
      %v8091 = vadd.f32 %v7771, %v8016
      %v8092 = vadd.f32 %v7772, %v8018
      %v8093 = vadd.f32 %v7773, %v8020
      %v8094 = vadd.f32 %v7774, %v8022
      %v8095 = vadd.f32 %v7775, %v8024
      %v8096 = vadd.f32 %v7776, %v8026
      %v8097 = vadd.f32 %v7777, %v8028
      %v8098 = vadd.f32 %v7778, %v8030
      %v8099 = vadd.f32 %v7779, %v8032
      %v8100 = vadd.f32 %v7780, %v8034
      %v8101 = vadd.f32 %v7781, %v8036
      %v8102 = vadd.f32 %v7782, %v8038
      %8103 = vrot.lane.b32.xlu0 %v7559, 32
      %v8104 = vpop.permute.xlu0 %8103
      %8105 = vrot.lane.b32.xlu0 %v7560, 32
      %v8106 = vpop.permute.xlu0 %8105
      %8107 = vrot.lane.b32.xlu0 %v7561, 32
      %v8108 = vpop.permute.xlu0 %8107
      %8109 = vrot.lane.b32.xlu0 %v7562, 32
      %v8110 = vpop.permute.xlu0 %8109
      %8111 = vrot.lane.b32.xlu0 %v7563, 32
      %v8112 = vpop.permute.xlu0 %8111
      %8113 = vrot.lane.b32.xlu0 %v7564, 32
      %v8114 = vpop.permute.xlu0 %8113
      %8115 = vrot.lane.b32.xlu0 %v7565, 32
      %v8116 = vpop.permute.xlu0 %8115
      %8117 = vrot.lane.b32.xlu0 %v7566, 32
      %v8118 = vpop.permute.xlu0 %8117
      %8119 = vrot.lane.b32.xlu0 %v7567, 32
      %v8120 = vpop.permute.xlu0 %8119
      %8121 = vrot.lane.b32.xlu0 %v7568, 32
      %v8122 = vpop.permute.xlu0 %8121
      %8123 = vrot.lane.b32.xlu0 %v7569, 32
      %v8124 = vpop.permute.xlu0 %8123
      %8125 = vrot.lane.b32.xlu0 %v7570, 32
      %v8126 = vpop.permute.xlu0 %8125
      %8127 = vrot.lane.b32.xlu0 %v7571, 32
      %v8128 = vpop.permute.xlu0 %8127
      %8129 = vrot.lane.b32.xlu0 %v7572, 32
      %v8130 = vpop.permute.xlu0 %8129
      %8131 = vrot.lane.b32.xlu0 %v7573, 32
      %v8132 = vpop.permute.xlu0 %8131
      %8133 = vrot.lane.b32.xlu0 %v7574, 32
      %v8134 = vpop.permute.xlu0 %8133
      %8135 = vrot.lane.b32.xlu0 %v7575, 32
      %v8136 = vpop.permute.xlu0 %8135
      %8137 = vrot.lane.b32.xlu0 %v7576, 32
      %v8138 = vpop.permute.xlu0 %8137
      %8139 = vrot.lane.b32.xlu0 %v7577, 32
      %v8140 = vpop.permute.xlu0 %8139
      %8141 = vrot.lane.b32.xlu0 %v7578, 32
      %v8142 = vpop.permute.xlu0 %8141
      %8143 = vrot.lane.b32.xlu0 %v7579, 32
      %v8144 = vpop.permute.xlu0 %8143
      %8145 = vrot.lane.b32.xlu0 %v7580, 32
      %v8146 = vpop.permute.xlu0 %8145
      %8147 = vrot.lane.b32.xlu0 %v7581, 32
      %v8148 = vpop.permute.xlu0 %8147
      %8149 = vrot.lane.b32.xlu0 %v7582, 32
      %v8150 = vpop.permute.xlu0 %8149
      %8151 = vrot.lane.b32.xlu0 %v7583, 32
      %v8152 = vpop.permute.xlu0 %8151
      %8153 = vrot.lane.b32.xlu0 %v7584, 32
      %v8154 = vpop.permute.xlu0 %8153
      %8155 = vrot.lane.b32.xlu0 %v7585, 32
      %v8156 = vpop.permute.xlu0 %8155
      %8157 = vrot.lane.b32.xlu0 %v7586, 32
      %v8158 = vpop.permute.xlu0 %8157
      %8159 = vrot.lane.b32.xlu0 %v7587, 32
      %v8160 = vpop.permute.xlu0 %8159
      %8161 = vrot.lane.b32.xlu0 %v7588, 32
      %v8162 = vpop.permute.xlu0 %8161
      %8163 = vrot.lane.b32.xlu0 %v7589, 32
      %v8164 = vpop.permute.xlu0 %8163
      %8165 = vrot.lane.b32.xlu0 %v7590, 32
      %v8166 = vpop.permute.xlu0 %8165
      %v8199 = vmul.f32 %v7093, %v8104
      %v8200 = vmul.f32 %v7108, %v8106
      %v8201 = vmul.f32 %v7123, %v8108
      %v8202 = vmul.f32 %v7138, %v8110
      %v8203 = vmul.f32 %v7153, %v8112
      %v8204 = vmul.f32 %v7168, %v8114
      %v8205 = vmul.f32 %v7183, %v8116
      %v8206 = vmul.f32 %v7198, %v8118
      %v8207 = vmul.f32 %v7213, %v8120
      %v8208 = vmul.f32 %v7228, %v8122
      %v8209 = vmul.f32 %v7243, %v8124
      %v8210 = vmul.f32 %v7258, %v8126
      %v8211 = vmul.f32 %v7273, %v8128
      %v8212 = vmul.f32 %v7288, %v8130
      %v8213 = vmul.f32 %v7303, %v8132
      %v8214 = vmul.f32 %v7318, %v8134
      %v8215 = vmul.f32 %v7333, %v8136
      %v8216 = vmul.f32 %v7348, %v8138
      %v8217 = vmul.f32 %v7363, %v8140
      %v8218 = vmul.f32 %v7378, %v8142
      %v8219 = vmul.f32 %v7393, %v8144
      %v8220 = vmul.f32 %v7408, %v8146
      %v8221 = vmul.f32 %v7423, %v8148
      %v8222 = vmul.f32 %v7438, %v8150
      %v8223 = vmul.f32 %v7453, %v8152
      %v8224 = vmul.f32 %v7468, %v8154
      %v8225 = vmul.f32 %v7483, %v8156
      %v8226 = vmul.f32 %v7498, %v8158
      %v8227 = vmul.f32 %v7513, %v8160
      %v8228 = vmul.f32 %v7528, %v8162
      %v8229 = vmul.f32 %v7543, %v8164
      %v8230 = vmul.f32 %v7558, %v8166
      %8263 = vrot.lane.b32.xlu0 %v8199, 32
      %v8264 = vpop.permute.xlu0 %8263
      %8265 = vrot.lane.b32.xlu0 %v8200, 32
      %v8266 = vpop.permute.xlu0 %8265
      %8267 = vrot.lane.b32.xlu0 %v8201, 32
      %v8268 = vpop.permute.xlu0 %8267
      %8269 = vrot.lane.b32.xlu0 %v8202, 32
      %v8270 = vpop.permute.xlu0 %8269
      %8271 = vrot.lane.b32.xlu0 %v8203, 32
      %v8272 = vpop.permute.xlu0 %8271
      %8273 = vrot.lane.b32.xlu0 %v8204, 32
      %v8274 = vpop.permute.xlu0 %8273
      %8275 = vrot.lane.b32.xlu0 %v8205, 32
      %v8276 = vpop.permute.xlu0 %8275
      %8277 = vrot.lane.b32.xlu0 %v8206, 32
      %v8278 = vpop.permute.xlu0 %8277
      %8279 = vrot.lane.b32.xlu0 %v8207, 32
      %v8280 = vpop.permute.xlu0 %8279
      %8281 = vrot.lane.b32.xlu0 %v8208, 32
      %v8282 = vpop.permute.xlu0 %8281
      %8283 = vrot.lane.b32.xlu0 %v8209, 32
      %v8284 = vpop.permute.xlu0 %8283
      %8285 = vrot.lane.b32.xlu0 %v8210, 32
      %v8286 = vpop.permute.xlu0 %8285
      %8287 = vrot.lane.b32.xlu0 %v8211, 32
      %v8288 = vpop.permute.xlu0 %8287
      %8289 = vrot.lane.b32.xlu0 %v8212, 32
      %v8290 = vpop.permute.xlu0 %8289
      %8291 = vrot.lane.b32.xlu0 %v8213, 32
      %v8292 = vpop.permute.xlu0 %8291
      %8293 = vrot.lane.b32.xlu0 %v8214, 32
      %v8294 = vpop.permute.xlu0 %8293
      %8295 = vrot.lane.b32.xlu0 %v8215, 32
      %v8296 = vpop.permute.xlu0 %8295
      %8297 = vrot.lane.b32.xlu0 %v8216, 32
      %v8298 = vpop.permute.xlu0 %8297
      %8299 = vrot.lane.b32.xlu0 %v8217, 32
      %v8300 = vpop.permute.xlu0 %8299
      %8301 = vrot.lane.b32.xlu0 %v8218, 32
      %v8302 = vpop.permute.xlu0 %8301
      %8303 = vrot.lane.b32.xlu0 %v8219, 32
      %v8304 = vpop.permute.xlu0 %8303
      %8305 = vrot.lane.b32.xlu0 %v8220, 32
      %v8306 = vpop.permute.xlu0 %8305
      %8307 = vrot.lane.b32.xlu0 %v8221, 32
      %v8308 = vpop.permute.xlu0 %8307
      %8309 = vrot.lane.b32.xlu0 %v8222, 32
      %v8310 = vpop.permute.xlu0 %8309
      %8311 = vrot.lane.b32.xlu0 %v8223, 32
      %v8312 = vpop.permute.xlu0 %8311
      %8313 = vrot.lane.b32.xlu0 %v8224, 32
      %v8314 = vpop.permute.xlu0 %8313
      %8315 = vrot.lane.b32.xlu0 %v8225, 32
      %v8316 = vpop.permute.xlu0 %8315
      %8317 = vrot.lane.b32.xlu0 %v8226, 32
      %v8318 = vpop.permute.xlu0 %8317
      %8319 = vrot.lane.b32.xlu0 %v8227, 32
      %v8320 = vpop.permute.xlu0 %8319
      %8321 = vrot.lane.b32.xlu0 %v8228, 32
      %v8322 = vpop.permute.xlu0 %8321
      %8323 = vrot.lane.b32.xlu0 %v8229, 32
      %v8324 = vpop.permute.xlu0 %8323
      %8325 = vrot.lane.b32.xlu0 %v8230, 32
      %v8326 = vpop.permute.xlu0 %8325
      %vm8359 = vcmask 261120
      %v8360 = vsel %vm8359, %v8264, %v8071
      %v8361 = vsel %vm8359, %v8266, %v8072
      %v8362 = vsel %vm8359, %v8268, %v8073
      %v8363 = vsel %vm8359, %v8270, %v8074
      %v8364 = vsel %vm8359, %v8272, %v8075
      %v8365 = vsel %vm8359, %v8274, %v8076
      %v8366 = vsel %vm8359, %v8276, %v8077
      %v8367 = vsel %vm8359, %v8278, %v8078
      %v8368 = vsel %vm8359, %v8280, %v8079
      %v8369 = vsel %vm8359, %v8282, %v8080
      %v8370 = vsel %vm8359, %v8284, %v8081
      %v8371 = vsel %vm8359, %v8286, %v8082
      %v8372 = vsel %vm8359, %v8288, %v8083
      %v8373 = vsel %vm8359, %v8290, %v8084
      %v8374 = vsel %vm8359, %v8292, %v8085
      %v8375 = vsel %vm8359, %v8294, %v8086
      %v8376 = vsel %vm8359, %v8296, %v8087
      %v8377 = vsel %vm8359, %v8298, %v8088
      %v8378 = vsel %vm8359, %v8300, %v8089
      %v8379 = vsel %vm8359, %v8302, %v8090
      %v8380 = vsel %vm8359, %v8304, %v8091
      %v8381 = vsel %vm8359, %v8306, %v8092
      %v8382 = vsel %vm8359, %v8308, %v8093
      %v8383 = vsel %vm8359, %v8310, %v8094
      %v8384 = vsel %vm8359, %v8312, %v8095
      %v8385 = vsel %vm8359, %v8314, %v8096
      %v8386 = vsel %vm8359, %v8316, %v8097
      %v8387 = vsel %vm8359, %v8318, %v8098
      %v8388 = vsel %vm8359, %v8320, %v8099
      %v8389 = vsel %vm8359, %v8322, %v8100
      %v8390 = vsel %vm8359, %v8324, %v8101
      %v8391 = vsel %vm8359, %v8326, %v8102
      %vm8392 = vcmask 523264
      %8393 = vst.msk [vmem:[%s190] sm:$0xff] %vm8392, %v8360
      %8394 = vst.msk [vmem:[%s190 + $0x8] sm:$0xff] %vm8392, %v8361
      %8395 = vst.msk [vmem:[%s190 + $0x10] sm:$0xff] %vm8392, %v8362
      %8396 = vst.msk [vmem:[%s190 + $0x18] sm:$0xff] %vm8392, %v8363
      %8397 = vst.msk [vmem:[%s190 + $0x20] sm:$0xff] %vm8392, %v8364
      %8398 = vst.msk [vmem:[%s190 + $0x28] sm:$0xff] %vm8392, %v8365
      %8399 = vst.msk [vmem:[%s190 + $0x30] sm:$0xff] %vm8392, %v8366
      %8400 = vst.msk [vmem:[%s190 + $0x38] sm:$0xff] %vm8392, %v8367
      %8401 = vst.msk [vmem:[%s190 + $0x40] sm:$0xff] %vm8392, %v8368
      %8402 = vst.msk [vmem:[%s190 + $0x48] sm:$0xff] %vm8392, %v8369
      %8403 = vst.msk [vmem:[%s190 + $0x50] sm:$0xff] %vm8392, %v8370
      %8404 = vst.msk [vmem:[%s190 + $0x58] sm:$0xff] %vm8392, %v8371
      %8405 = vst.msk [vmem:[%s190 + $0x60] sm:$0xff] %vm8392, %v8372
      %8406 = vst.msk [vmem:[%s190 + $0x68] sm:$0xff] %vm8392, %v8373
      %8407 = vst.msk [vmem:[%s190 + $0x70] sm:$0xff] %vm8392, %v8374
      %8408 = vst.msk [vmem:[%s190 + $0x78] sm:$0xff] %vm8392, %v8375
      %8409 = vst.msk [vmem:[%s190 + $0x80] sm:$0xff] %vm8392, %v8376
      %8410 = vst.msk [vmem:[%s190 + $0x88] sm:$0xff] %vm8392, %v8377
      %8411 = vst.msk [vmem:[%s190 + $0x90] sm:$0xff] %vm8392, %v8378
      %8412 = vst.msk [vmem:[%s190 + $0x98] sm:$0xff] %vm8392, %v8379
      %8413 = vst.msk [vmem:[%s190 + $0xa0] sm:$0xff] %vm8392, %v8380
      %8414 = vst.msk [vmem:[%s190 + $0xa8] sm:$0xff] %vm8392, %v8381
      %8415 = vst.msk [vmem:[%s190 + $0xb0] sm:$0xff] %vm8392, %v8382
      %8416 = vst.msk [vmem:[%s190 + $0xb8] sm:$0xff] %vm8392, %v8383
      %8417 = vst.msk [vmem:[%s190 + $0xc0] sm:$0xff] %vm8392, %v8384
      %8418 = vst.msk [vmem:[%s190 + $0xc8] sm:$0xff] %vm8392, %v8385
      %8419 = vst.msk [vmem:[%s190 + $0xd0] sm:$0xff] %vm8392, %v8386
      %8420 = vst.msk [vmem:[%s190 + $0xd8] sm:$0xff] %vm8392, %v8387
      %8421 = vst.msk [vmem:[%s190 + $0xe0] sm:$0xff] %vm8392, %v8388
      %8422 = vst.msk [vmem:[%s190 + $0xe8] sm:$0xff] %vm8392, %v8389
      %8423 = vst.msk [vmem:[%s190 + $0xf0] sm:$0xff] %vm8392, %v8390
      %8424 = vst.msk [vmem:[%s190 + $0xf8] sm:$0xff] %vm8392, %v8391
      %p8425 = scmp.lt.s32.totalorder %s14, 1
      %s8426 = scalar_select %p8425, %s14, 1
      %s8427 = smul.addr %s8426, 32
      %s8428 = smul.addr %s8427, 8
      %s8429 = scalar_lea.vmem %s3, %s8428
      // Predicated region
      $region33: #{tpu_custom_call.1} parent=31 // pred_check
        %p8430 = pneg %p105
      $region34: #{tpu_custom_call.1} parent=31 // pred_check_branch
        %8432 = sbr.rel (%p8430) target = $region36
      $region35: #{tpu_custom_call.1} parent=31 // pred_region
        _
      $region36: #{tpu_custom_call.1} parent=31 // pred_fallthru
        _
    $region32: #{tpu_custom_call.1} parent=5 // pred_fallthru
      _
    %p8433 = scmp.le.s32.totalorder 2, %s9
    // Predicated region
    $region37: #{tpu_custom_call.1} parent=5 // pred_check
      %p8434 = pneg %p8433
    $region38: #{tpu_custom_call.1} parent=5 // pred_check_branch
      %8436 = sbr.rel (%p8434) target = $region40
    $region39: #{tpu_custom_call.1} parent=5 // pred_region
      %s8437 = ssub.s32 %s9, 2
      // Predicated region
      $region41: #{tpu_custom_call.1} parent=39 // pred_check
        %p8438 = pneg %p111
      $region42: #{tpu_custom_call.1} parent=39 // pred_check_branch
        %8440 = sbr.rel (%p8438) target = $region44
      $region43: #{tpu_custom_call.1} parent=39 // pred_region
        %p8441 = scmp.lt.s32.totalorder %s15, 1
        %s8442 = scalar_select %p8441, %s15, 1
        %s8443 = smul.addr %s8442, 32
        %s8444 = smul.addr %s8443, 8
        %s8445 = scalar_lea.vmem %s3, %s8444
      $region44: #{tpu_custom_call.1} parent=39 // pred_fallthru
        _
    $region40: #{tpu_custom_call.1} parent=5 // pred_fallthru
      _
  $region6: #{tpu_custom_call.1} parent=0 // loop_footer
    %s13 = sadd.s32 1, %s9
  $region7: #{tpu_custom_call.1} parent=0 // loop_footer_branch
    %8 = sbr.rel target = $region3
  $region8: #{tpu_custom_call.1} parent=0 // loop_exit
    _

</llo_original>
